<compile_context>
chip_gen: v7x
topology: tpu7x:2x2x1
jax: 0.10.0
libtpu: 0.0.40
codegen_flags: <defaults>
</compile_context>

<pallas_src>
import jax
import jax.numpy as jnp
from jax.experimental import pallas as pl
from jax.experimental.pallas import tpu as pltpu

# ----------------------------------------------------------------------------
# KAN (efficient-kan KANLinear) spline configuration (module defaults):
# grid_size=5, spline_order=3, grid_range=[-1, 1], SiLU base activation.
# ----------------------------------------------------------------------------
GRID_SIZE = 5
SPLINE_ORDER = 3
GRID_RANGE = (-1.0, 1.0)
NUM_BASES = GRID_SIZE + SPLINE_ORDER          # 8 cubic B-spline bases per input

_H = (GRID_RANGE[1] - GRID_RANGE[0]) / GRID_SIZE
_KNOTS = tuple(GRID_RANGE[0] + (i - SPLINE_ORDER) * _H
               for i in range(GRID_SIZE + 2 * SPLINE_ORDER + 1))  # 12 knots

# Uniform-knot Cox-de-Boor level scales prod_{k=1..3} 1/(k*h); folded into the
# host-fused spline weights so the in-kernel recursion needs no constant muls.
_SPLINE_FOLD = 1.0
for _k in range(1, SPLINE_ORDER + 1):
    _SPLINE_FOLD *= 1.0 / (_k * _H)

_LANE = 128                                    # register-block width (lanes)


def _silu(x):
    return x * jax.nn.sigmoid(x)


def _bspline_bases(x):
    """Reference (PyTorch-faithful) cubic B-spline bases, elementwise on x."""
    t = _KNOTS
    bases = [jnp.where((x >= t[i]) & (x < t[i + 1]), 1.0, 0.0).astype(x.dtype)
             for i in range(len(t) - 1)]       # 11 degree-0 indicator bases
    for k in range(1, SPLINE_ORDER + 1):
        bases = [
            (x - t[i]) * (1.0 / (t[i + k] - t[i])) * bases[i]
            + (t[i + k + 1] - x) * (1.0 / (t[i + k + 1] - t[i + 1])) * bases[i + 1]
            for i in range(len(bases) - 1)
        ]
    return bases                               # NUM_BASES arrays, shape of x


def _bspline_bases_unscaled(x):
    """Trimmed Cox-de-Boor recursion for the uniform knot grid (kernel path).

    Identities used (all knot spacings equal _H):
        ge[i]  = float(x >= t[i])                  (12 comparisons)
        b0[i]  = ge[i] - ge[i+1]                   (11 subs; no and/select)
        d[j]   = x - t[j]                          (12 subs, shared)
        bk[i]  = d[i]*b_{k-1}[i] - d[i+k+1]*b_{k-1}[i+1]
    The uniform per-level scale 1/(k*_H) is omitted here and folded into the
    spline weights on the host (_SPLINE_FOLD), so true bases = fold * these.
    """
    t = _KNOTS
    ge = [(x >= t[i]).astype(x.dtype) for i in range(len(t))]
    bases = [ge[i] - ge[i + 1] for i in range(len(t) - 1)]
    d = [x - t[i] for i in range(len(t))]
    for k in range(1, SPLINE_ORDER + 1):
        bases = [d[i] * bases[i] - d[i + k + 1] * bases[i + 1]
                 for i in range(len(bases) - 1)]
    return bases                               # NUM_BASES unscaled bases


def _round_up(v, m):
    return ((v + m - 1) // m) * m


# ----------------------------------------------------------------------------
# Pallas kernel: fused KAN "convolution" on transposed im2col patches.
#   p_ref   : (F_pad, TILE_N)            patches^T   (features on sublanes)
#   w_ref   : (C_out, (G+1)*F_pad)       fused [base | spline_0..7] weights^T
#   o_ref   : (C_out, TILE_N)            output^T    (lane-dense stores)
#   feat_ref: VMEM ((G+1)*F_pad, TILE_N) scratch holding [silu(x); B'_g(x)]
# ----------------------------------------------------------------------------
def kan_conv_kernel(p_ref, w_ref, o_ref, feat_ref):
    f_pad, tile_n = p_ref.shape                 # tile_n is a multiple of 128

    def lane_block(lb, carry):
        l0 = pl.multiple_of(lb * _LANE, _LANE)
        # Unrolled 8-row feature chunks: each (8, 128) register block keeps the
        # Cox-de-Boor live set ~15 vregs (no spills) and every feat_ref store
        # lands on a sublane-tile-aligned offset.
        for c0 in range(0, f_pad, 8):
            x = p_ref[pl.ds(c0, 8), pl.ds(l0, _LANE)]
            # SiLU base branch: exp and approximate reciprocal both live on the
            # EUP slot, keeping them off the binding VALU slot.
            feat_ref[pl.ds(c0, 8), pl.ds(l0, _LANE)] = (
                x * pl.reciprocal(1.0 + jnp.exp(-x), approx=True))
            bases = _bspline_bases_unscaled(x)   # 8 x (8, 128), pure VPU work
            for g in range(NUM_BASES):
                feat_ref[pl.ds((g + 1) * f_pad + c0, 8),
                         pl.ds(l0, _LANE)] = bases[g]
        return carry

    jax.lax.fori_loop(0, tile_n // _LANE, lane_block, 0)

    # Single fused MXU contraction over K = (G+1)*F_pad.  C_out (5/10) is a
    # degenerate M but the matmul is nowhere near the bottleneck and this
    # orientation keeps the output stores lane-dense and unmasked.
    o_ref[...] = jnp.dot(w_ref[...], feat_ref[...],
                         preferred_element_type=jnp.float32)


def _pick_tile_n(n, max_tile=2048, min_steps=2):
    """Lane tile: multiple of 128, capped at max_tile, keeping >= min_steps
    grid steps whenever n allows (so both v7x TensorCores get work; on
    v5e/v6e the extra step is cheap vs. the per-step compute at this size)."""
    t = _round_up(max(1, -(-n // min_steps)), 128)
    return int(max(128, min(max_tile, t)))


def kan_conv_layer(patches_t, w_all_t):
    """(F_pad, N) patches^T x (C_out, (G+1)*F_pad) fused weights -> (C_out, N)."""
    f_pad, n = patches_t.shape
    c_out, k_all = w_all_t.shape
    tile_n = _pick_tile_n(n)
    return pl.pallas_call(
        kan_conv_kernel,
        out_shape=jax.ShapeDtypeStruct((c_out, n), jnp.float32),
        grid=(pl.cdiv(n, tile_n),),
        in_specs=[
            pl.BlockSpec((f_pad, tile_n), lambda i: (0, i)),
            pl.BlockSpec((c_out, k_all), lambda i: (0, 0)),
        ],
        out_specs=pl.BlockSpec((c_out, tile_n), lambda i: (0, i)),
        scratch_shapes=[pltpu.VMEM((k_all, tile_n), jnp.float32)],
        compiler_params=pltpu.CompilerParams(
            dimension_semantics=("parallel",)),
    )(patches_t, w_all_t)


# ----------------------------------------------------------------------------
# Host-side layout glue: transposed im2col and weight fusion (tiny, no math).
# Feature ordering is f = c_in*9 + kh*3 + kw (matches the fused weights).
# ----------------------------------------------------------------------------
def extract_patches_t(x_cbhw, k, f_pad):
    """(C, B, H, W) -> patches^T of shape (F_pad, B*Ho*Wo), zero-padded feats."""
    c, b, h, w = x_cbhw.shape
    ho, wo = h - k + 1, w - k + 1
    views = [x_cbhw[ci, :, i:i + ho, j:j + wo]
             for ci in range(c) for i in range(k) for j in range(k)]
    views += [jnp.zeros_like(views[0])] * (f_pad - c * k * k)
    p = jnp.stack(views, axis=0).reshape(f_pad, b * ho * wo)
    return p, (b, ho, wo)


def fuse_kan_weights_t(wb, ws, f_pad):
    """wb:(F,C_out), ws:(G,F,C_out) -> W_all^T of shape (C_out, (G+1)*F_pad).

    Spline blocks are pre-multiplied by _SPLINE_FOLD, the constant the
    in-kernel unscaled Cox-de-Boor recursion omits.
    """
    f, _ = wb.shape
    pad = ((0, 0), (0, f_pad - f))
    blocks = [jnp.pad(wb.T, pad)]
    for g in range(ws.shape[0]):
        blocks.append(jnp.pad((_SPLINE_FOLD * ws[g]).T, pad))
    return jnp.concatenate(blocks, axis=1)


def maxpool2x2(y):
    """nn.MaxPool2d(2) (floor) on channel-major (C, B, H, W) activations.

    Left to XLA per the perf review: a Pallas kernel here has a size-2 lane
    axis and masked 13/5-wide stores; this tiny op fuses for free in XLA.
    """
    c, b, h, w = y.shape
    ho, wo = h // 2, w // 2
    v = y[:, :, :2 * ho, :2 * wo].reshape(c, b, ho, 2, wo, 2)
    return v.max(axis=(3, 5))


# ----------------------------------------------------------------------------
# Pallas kernel: fused Linear(250->100) -> Linear(100->10) -> log_softmax.
# ----------------------------------------------------------------------------
def mlp_kernel(x_ref, w1_ref, b1_ref, w2_ref, b2_ref, o_ref):
    x = x_ref[...]
    h = jnp.dot(x, w1_ref[...], preferred_element_type=jnp.float32) + b1_ref[...]
    logits = jnp.dot(h, w2_ref[...], preferred_element_type=jnp.float32) + b2_ref[...]
    s = logits - jnp.max(logits, axis=-1, keepdims=True)
    o_ref[...] = s - jnp.log(jnp.sum(jnp.exp(s), axis=-1, keepdims=True))


def mlp_logsoftmax(x, w1, b1, w2, b2):
    b, d_in = x.shape
    d_h, d_out = w1.shape[1], w2.shape[1]
    tb = b if b <= 512 else 512
    return pl.pallas_call(
        mlp_kernel,
        out_shape=jax.ShapeDtypeStruct((b, d_out), jnp.float32),
        grid=(pl.cdiv(b, tb),),
        in_specs=[
            pl.BlockSpec((tb, d_in), lambda i: (i, 0)),
            pl.BlockSpec((d_in, d_h), lambda i: (0, 0)),
            pl.BlockSpec((1, d_h), lambda i: (0, 0)),
            pl.BlockSpec((d_h, d_out), lambda i: (0, 0)),
            pl.BlockSpec((1, d_out), lambda i: (0, 0)),
        ],
        out_specs=pl.BlockSpec((tb, d_out), lambda i: (i, 0)),
        compiler_params=pltpu.CompilerParams(
            dimension_semantics=("parallel",)),
    )(x, w1, b1, w2, b2)


# ----------------------------------------------------------------------------
# Full forward pass of KANC_MLP_Big.
# ----------------------------------------------------------------------------
@jax.jit
def kanc_mlp_big_forward(x, wb1, ws1, wb2, ws2, w1, b1, w2, b2):
    # NCHW -> channel-major (C, B, H, W), done once on the tiny input.
    xc = jnp.transpose(x, (1, 0, 2, 3))                     # (1, B, 28, 28)

    # conv1: KAN conv 1 -> 5, 3x3:  (1,B,28,28) -> (5,B,26,26)
    f1_pad = _round_up(xc.shape[0] * 9, 8)                  # 16
    p1, (b, ho, wo) = extract_patches_t(xc, 3, f1_pad)      # (16, B*676)
    y1 = kan_conv_layer(p1, fuse_kan_weights_t(wb1, ws1, f1_pad))
    y1 = y1.reshape(wb1.shape[1], b, ho, wo)                # (5,B,26,26) reshape
    y1 = maxpool2x2(y1)                                     # (5,B,13,13)

    # conv2: KAN conv 5 -> 10, 3x3: -> (10,B,11,11)
    f2_pad = _round_up(y1.shape[0] * 9, 8)                  # 48
    p2, (b, ho, wo) = extract_patches_t(y1, 3, f2_pad)      # (48, B*121)
    y2 = kan_conv_layer(p2, fuse_kan_weights_t(wb2, ws2, f2_pad))
    y2 = y2.reshape(wb2.shape[1], b, ho, wo)                # (10,B,11,11)
    y2 = maxpool2x2(y2)                                     # (10,B,5,5)

    # nn.Flatten on NCHW: feature order c*25 + h*5 + w (single tiny permute).
    flat = jnp.transpose(y2, (1, 0, 2, 3)).reshape(b, -1)   # (B, 250)
    return mlp_logsoftmax(flat, w1, b1, w2, b2)             # (B, 10) log-probs


# ----------------------------------------------------------------------------
# Pure-JAX reference (mirrors the PyTorch semantics, NCHW) for validation.
# ----------------------------------------------------------------------------
def reference_forward(x, wb1, ws1, wb2, ws2, w1, b1, w2, b2):
    hp = jax.lax.Precision.HIGHEST

    def im2col(xn, k=3):
        bb, c, h, w = xn.shape
        ho, wo = h - k + 1, w - k + 1
        cols = [xn[:, ci, i:i + ho, j:j + wo]
                for ci in range(c) for i in range(k) for j in range(k)]
        return (jnp.stack(cols, axis=-1).reshape(bb * ho * wo, c * k * k),
                (bb, ho, wo))

    def kan(p, wb, ws):
        out = jnp.dot(_silu(p), wb, precision=hp)
        for g, bs in enumerate(_bspline_bases(p)):
            out = out + jnp.dot(bs, ws[g], precision=hp)
        return out

    def pool(xn):
        bb, c, h, w = xn.shape
        ho, wo = h // 2, w // 2
        v = xn[:, :, :2 * ho, :2 * wo].reshape(bb, c, ho, 2, wo, 2)
        return v.max(axis=(3, 5))

    p1, (bb, ho, wo) = im2col(x)
    y1 = kan(p1, wb1, ws1).reshape(bb, ho, wo, -1).transpose(0, 3, 1, 2)
    y1 = pool(y1)
    p2, (bb, ho, wo) = im2col(y1)
    y2 = kan(p2, wb2, ws2).reshape(bb, ho, wo, -1).transpose(0, 3, 1, 2)
    y2 = pool(y2)
    flat = y2.reshape(bb, -1)
    h1 = jnp.dot(flat, w1, precision=hp) + b1
    logits = jnp.dot(h1, w2, precision=hp) + b2
    return jax.nn.log_softmax(logits, axis=-1)


if __name__ == "__main__":
    key = jax.random.PRNGKey(0)
    ks = jax.random.split(key, 9)
    B = 2

    # MNIST-like NCHW input (linear1 in_features=250 implies 1x28x28 input).
    x = jax.random.normal(ks[0], (B, 1, 28, 28), jnp.float32)

    # Deterministic synthetic parameters (shapes dictated by the module).
    # conv1: fused base (9,5) and scaled-spline (8,9,5); conv2: (45,10)/(8,45,10).
    wb1 = 0.1 * jax.random.normal(ks[1], (9, 5), jnp.float32)
    ws1 = 0.1 * jax.random.normal(ks[2], (NUM_BASES, 9, 5), jnp.float32)
    wb2 = 0.1 * jax.random.normal(ks[3], (45, 10), jnp.float32)
    ws2 = 0.1 * jax.random.normal(ks[4], (NUM_BASES, 45, 10), jnp.float32)
    w1 = 0.05 * jax.random.normal(ks[5], (250, 100), jnp.float32)
    b1 = 0.05 * jax.random.normal(ks[6], (1, 100), jnp.float32)
    w2 = 0.05 * jax.random.normal(ks[7], (100, 10), jnp.float32)
    b2 = 0.05 * jax.random.normal(ks[8], (1, 10), jnp.float32)

    out = kanc_mlp_big_forward(x, wb1, ws1, wb2, ws2, w1, b1, w2, b2)
    out = jax.block_until_ready(out)

    assert out.shape == (B, 10)
    assert bool(jnp.all(jnp.isfinite(out)))
    # log_softmax rows should exp-sum to ~1
    assert bool(jnp.allclose(jnp.sum(jnp.exp(out), axis=1), 1.0, atol=1e-4))

    # Numerical parity against the pure-JAX reference of the same module.
    ref = reference_forward(x, wb1, ws1, wb2, ws2, w1, b1, w2, b2)
    assert bool(jnp.allclose(out, ref, atol=5e-3, rtol=5e-3)), (
        "max abs err = %f" % float(jnp.max(jnp.abs(out - ref))))

    print("KERNEL_OK")
</pallas_src>

<mosaic_0001>
module attributes {stable_mosaic.version = 11 : i64} {
  func.func @kan_conv_kernel(%arg0: i32, %arg1: memref<16x768xf32, #tpu.memory_space<vmem>>, %arg2: memref<5x144xf32, #tpu.memory_space<vmem>>, %arg3: memref<5x768xf32, #tpu.memory_space<vmem>>, %arg4: memref<144x768xf32, #tpu.memory_space<vmem>>) attributes {dimension_semantics = [#tpu.dimension_semantics<parallel>], iteration_bounds = array<i64: 2>, scalar_prefetch = 0 : i64, scratch_operands = 1 : i64, tpu.core_type = #tpu.core_type<tc>, window_params = [{transform_indices = @transform_0, window_bounds = array<i64: 16, 768>}, {pipeline_mode = #tpu.pipeline_mode<synchronous>, transform_indices = @transform_1, window_bounds = array<i64: 5, 144>}, {transform_indices = @transform_2, window_bounds = array<i64: 5, 768>}]} {
    %c0_i32 = arith.constant 0 : i32
    %c6_i32 = arith.constant 6 : i32
    %0 = arith.addi %c0_i32, %c6_i32 : i32
    %c1_i32 = arith.constant 1 : i32
    scf.for %arg5 = %c0_i32 to %0 step %c1_i32  : i32 {
      %c128_i32 = arith.constant 128 : i32
      %5 = arith.muli %arg5, %c128_i32 : i32
      %6 = tpu.assume_multiple %5, 128 : i32
      %c0_6 = arith.constant 0 : index
      %7 = arith.index_cast %6 : i32 to index
      %8 = vector.load %arg1[%c0_6, %7] : memref<16x768xf32, #tpu.memory_space<vmem>>, vector<8x128xf32>
      %cst_7 = arith.constant 0.000000e+00 : f32
      %9 = vector.broadcast %cst_7 : f32 to vector<8x128xf32>
      %10 = arith.subf %9, %8 : vector<8x128xf32>
      %11 = math.exp %10 : vector<8x128xf32>
      %cst_8 = arith.constant 1.000000e+00 : f32
      %12 = vector.broadcast %cst_8 : f32 to vector<8x128xf32>
      %13 = arith.addf %12, %11 : vector<8x128xf32>
      %14 = tpu.reciprocal %13 {approx = true} : vector<8x128xf32> -> vector<8x128xf32>
      %15 = arith.mulf %8, %14 : vector<8x128xf32>
      %c0_9 = arith.constant 0 : index
      %16 = arith.index_cast %6 : i32 to index
      %17 = vector.load %arg4[%c0_9, %16] : memref<144x768xf32, #tpu.memory_space<vmem>>, vector<8x128xf32>
      tpu.vector_store %arg4[%c0_9, %16], %15 {strides = array<i32>} : memref<144x768xf32, #tpu.memory_space<vmem>>, vector<8x128xf32>,
      %cst_10 = arith.constant -2.200000e+00 : f32
      %18 = vector.broadcast %cst_10 : f32 to vector<8x128xf32>
      %19 = arith.cmpf oge, %8, %18 : vector<8x128xf32>
      %20 = arith.extui %19 : vector<8x128xi1> to vector<8x128xi32>
      %21 = arith.sitofp %20 : vector<8x128xi32> to vector<8x128xf32>
      %cst_11 = arith.constant -1.800000e+00 : f32
      %22 = vector.broadcast %cst_11 : f32 to vector<8x128xf32>
      %23 = arith.cmpf oge, %8, %22 : vector<8x128xf32>
      %24 = arith.extui %23 : vector<8x128xi1> to vector<8x128xi32>
      %25 = arith.sitofp %24 : vector<8x128xi32> to vector<8x128xf32>
      %cst_12 = arith.constant -1.400000e+00 : f32
      %26 = vector.broadcast %cst_12 : f32 to vector<8x128xf32>
      %27 = arith.cmpf oge, %8, %26 : vector<8x128xf32>
      %28 = arith.extui %27 : vector<8x128xi1> to vector<8x128xi32>
      %29 = arith.sitofp %28 : vector<8x128xi32> to vector<8x128xf32>
      %cst_13 = arith.constant -1.000000e+00 : f32
      %30 = vector.broadcast %cst_13 : f32 to vector<8x128xf32>
      %31 = arith.cmpf oge, %8, %30 : vector<8x128xf32>
      %32 = arith.extui %31 : vector<8x128xi1> to vector<8x128xi32>
      %33 = arith.sitofp %32 : vector<8x128xi32> to vector<8x128xf32>
      %cst_14 = arith.constant -6.000000e-01 : f32
      %34 = vector.broadcast %cst_14 : f32 to vector<8x128xf32>
      %35 = arith.cmpf oge, %8, %34 : vector<8x128xf32>
      %36 = arith.extui %35 : vector<8x128xi1> to vector<8x128xi32>
      %37 = arith.sitofp %36 : vector<8x128xi32> to vector<8x128xf32>
      %cst_15 = arith.constant -2.000000e-01 : f32
      %38 = vector.broadcast %cst_15 : f32 to vector<8x128xf32>
      %39 = arith.cmpf oge, %8, %38 : vector<8x128xf32>
      %40 = arith.extui %39 : vector<8x128xi1> to vector<8x128xi32>
      %41 = arith.sitofp %40 : vector<8x128xi32> to vector<8x128xf32>
      %cst_16 = arith.constant 2.000000e-01 : f32
      %42 = vector.broadcast %cst_16 : f32 to vector<8x128xf32>
      %43 = arith.cmpf oge, %8, %42 : vector<8x128xf32>
      %44 = arith.extui %43 : vector<8x128xi1> to vector<8x128xi32>
      %45 = arith.sitofp %44 : vector<8x128xi32> to vector<8x128xf32>
      %cst_17 = arith.constant 6.000000e-01 : f32
      %46 = vector.broadcast %cst_17 : f32 to vector<8x128xf32>
      %47 = arith.cmpf oge, %8, %46 : vector<8x128xf32>
      %48 = arith.extui %47 : vector<8x128xi1> to vector<8x128xi32>
      %49 = arith.sitofp %48 : vector<8x128xi32> to vector<8x128xf32>
      %cst_18 = arith.constant 1.000000e+00 : f32
      %50 = vector.broadcast %cst_18 : f32 to vector<8x128xf32>
      %51 = arith.cmpf oge, %8, %50 : vector<8x128xf32>
      %52 = arith.extui %51 : vector<8x128xi1> to vector<8x128xi32>
      %53 = arith.sitofp %52 : vector<8x128xi32> to vector<8x128xf32>
      %cst_19 = arith.constant 1.400000e+00 : f32
      %54 = vector.broadcast %cst_19 : f32 to vector<8x128xf32>
      %55 = arith.cmpf oge, %8, %54 : vector<8x128xf32>
      %56 = arith.extui %55 : vector<8x128xi1> to vector<8x128xi32>
      %57 = arith.sitofp %56 : vector<8x128xi32> to vector<8x128xf32>
      %cst_20 = arith.constant 1.800000e+00 : f32
      %58 = vector.broadcast %cst_20 : f32 to vector<8x128xf32>
      %59 = arith.cmpf oge, %8, %58 : vector<8x128xf32>
      %60 = arith.extui %59 : vector<8x128xi1> to vector<8x128xi32>
      %61 = arith.sitofp %60 : vector<8x128xi32> to vector<8x128xf32>
      %cst_21 = arith.constant 2.200000e+00 : f32
      %62 = vector.broadcast %cst_21 : f32 to vector<8x128xf32>
      %63 = arith.cmpf oge, %8, %62 : vector<8x128xf32>
      %64 = arith.extui %63 : vector<8x128xi1> to vector<8x128xi32>
      %65 = arith.sitofp %64 : vector<8x128xi32> to vector<8x128xf32>
      %66 = arith.subf %21, %25 : vector<8x128xf32>
      %67 = arith.subf %25, %29 : vector<8x128xf32>
      %68 = arith.subf %29, %33 : vector<8x128xf32>
      %69 = arith.subf %33, %37 : vector<8x128xf32>
      %70 = arith.subf %37, %41 : vector<8x128xf32>
      %71 = arith.subf %41, %45 : vector<8x128xf32>
      %72 = arith.subf %45, %49 : vector<8x128xf32>
      %73 = arith.subf %49, %53 : vector<8x128xf32>
      %74 = arith.subf %53, %57 : vector<8x128xf32>
      %75 = arith.subf %57, %61 : vector<8x128xf32>
      %76 = arith.subf %61, %65 : vector<8x128xf32>
      %cst_22 = arith.constant -2.200000e+00 : f32
      %77 = vector.broadcast %cst_22 : f32 to vector<8x128xf32>
      %78 = arith.subf %8, %77 : vector<8x128xf32>
      %cst_23 = arith.constant -1.800000e+00 : f32
      %79 = vector.broadcast %cst_23 : f32 to vector<8x128xf32>
      %80 = arith.subf %8, %79 : vector<8x128xf32>
      %cst_24 = arith.constant -1.400000e+00 : f32
      %81 = vector.broadcast %cst_24 : f32 to vector<8x128xf32>
      %82 = arith.subf %8, %81 : vector<8x128xf32>
      %cst_25 = arith.constant -1.000000e+00 : f32
      %83 = vector.broadcast %cst_25 : f32 to vector<8x128xf32>
      %84 = arith.subf %8, %83 : vector<8x128xf32>
      %cst_26 = arith.constant -6.000000e-01 : f32
      %85 = vector.broadcast %cst_26 : f32 to vector<8x128xf32>
      %86 = arith.subf %8, %85 : vector<8x128xf32>
      %cst_27 = arith.constant -2.000000e-01 : f32
      %87 = vector.broadcast %cst_27 : f32 to vector<8x128xf32>
      %88 = arith.subf %8, %87 : vector<8x128xf32>
      %cst_28 = arith.constant 2.000000e-01 : f32
      %89 = vector.broadcast %cst_28 : f32 to vector<8x128xf32>
      %90 = arith.subf %8, %89 : vector<8x128xf32>
      %cst_29 = arith.constant 6.000000e-01 : f32
      %91 = vector.broadcast %cst_29 : f32 to vector<8x128xf32>
      %92 = arith.subf %8, %91 : vector<8x128xf32>
      %cst_30 = arith.constant 1.000000e+00 : f32
      %93 = vector.broadcast %cst_30 : f32 to vector<8x128xf32>
      %94 = arith.subf %8, %93 : vector<8x128xf32>
      %cst_31 = arith.constant 1.400000e+00 : f32
      %95 = vector.broadcast %cst_31 : f32 to vector<8x128xf32>
      %96 = arith.subf %8, %95 : vector<8x128xf32>
      %cst_32 = arith.constant 1.800000e+00 : f32
      %97 = vector.broadcast %cst_32 : f32 to vector<8x128xf32>
      %98 = arith.subf %8, %97 : vector<8x128xf32>
      %cst_33 = arith.constant 2.200000e+00 : f32
      %99 = vector.broadcast %cst_33 : f32 to vector<8x128xf32>
      %100 = arith.subf %8, %99 : vector<8x128xf32>
      %101 = arith.mulf %78, %66 : vector<8x128xf32>
      %102 = arith.mulf %82, %67 : vector<8x128xf32>
      %103 = arith.subf %101, %102 : vector<8x128xf32>
      %104 = arith.mulf %80, %67 : vector<8x128xf32>
      %105 = arith.mulf %84, %68 : vector<8x128xf32>
      %106 = arith.subf %104, %105 : vector<8x128xf32>
      %107 = arith.mulf %82, %68 : vector<8x128xf32>
      %108 = arith.mulf %86, %69 : vector<8x128xf32>
      %109 = arith.subf %107, %108 : vector<8x128xf32>
      %110 = arith.mulf %84, %69 : vector<8x128xf32>
      %111 = arith.mulf %88, %70 : vector<8x128xf32>
      %112 = arith.subf %110, %111 : vector<8x128xf32>
      %113 = arith.mulf %86, %70 : vector<8x128xf32>
      %114 = arith.mulf %90, %71 : vector<8x128xf32>
      %115 = arith.subf %113, %114 : vector<8x128xf32>
      %116 = arith.mulf %88, %71 : vector<8x128xf32>
      %117 = arith.mulf %92, %72 : vector<8x128xf32>
      %118 = arith.subf %116, %117 : vector<8x128xf32>
      %119 = arith.mulf %90, %72 : vector<8x128xf32>
      %120 = arith.mulf %94, %73 : vector<8x128xf32>
      %121 = arith.subf %119, %120 : vector<8x128xf32>
      %122 = arith.mulf %92, %73 : vector<8x128xf32>
      %123 = arith.mulf %96, %74 : vector<8x128xf32>
      %124 = arith.subf %122, %123 : vector<8x128xf32>
      %125 = arith.mulf %94, %74 : vector<8x128xf32>
      %126 = arith.mulf %98, %75 : vector<8x128xf32>
      %127 = arith.subf %125, %126 : vector<8x128xf32>
      %128 = arith.mulf %96, %75 : vector<8x128xf32>
      %129 = arith.mulf %100, %76 : vector<8x128xf32>
      %130 = arith.subf %128, %129 : vector<8x128xf32>
      %131 = arith.mulf %78, %103 : vector<8x128xf32>
      %132 = arith.mulf %84, %106 : vector<8x128xf32>
      %133 = arith.subf %131, %132 : vector<8x128xf32>
      %134 = arith.mulf %80, %106 : vector<8x128xf32>
      %135 = arith.mulf %86, %109 : vector<8x128xf32>
      %136 = arith.subf %134, %135 : vector<8x128xf32>
      %137 = arith.mulf %82, %109 : vector<8x128xf32>
      %138 = arith.mulf %88, %112 : vector<8x128xf32>
      %139 = arith.subf %137, %138 : vector<8x128xf32>
      %140 = arith.mulf %84, %112 : vector<8x128xf32>
      %141 = arith.mulf %90, %115 : vector<8x128xf32>
      %142 = arith.subf %140, %141 : vector<8x128xf32>
      %143 = arith.mulf %86, %115 : vector<8x128xf32>
      %144 = arith.mulf %92, %118 : vector<8x128xf32>
      %145 = arith.subf %143, %144 : vector<8x128xf32>
      %146 = arith.mulf %88, %118 : vector<8x128xf32>
      %147 = arith.mulf %94, %121 : vector<8x128xf32>
      %148 = arith.subf %146, %147 : vector<8x128xf32>
      %149 = arith.mulf %90, %121 : vector<8x128xf32>
      %150 = arith.mulf %96, %124 : vector<8x128xf32>
      %151 = arith.subf %149, %150 : vector<8x128xf32>
      %152 = arith.mulf %92, %124 : vector<8x128xf32>
      %153 = arith.mulf %98, %127 : vector<8x128xf32>
      %154 = arith.subf %152, %153 : vector<8x128xf32>
      %155 = arith.mulf %94, %127 : vector<8x128xf32>
      %156 = arith.mulf %100, %130 : vector<8x128xf32>
      %157 = arith.subf %155, %156 : vector<8x128xf32>
      %158 = arith.mulf %78, %133 : vector<8x128xf32>
      %159 = arith.mulf %86, %136 : vector<8x128xf32>
      %160 = arith.subf %158, %159 : vector<8x128xf32>
      %161 = arith.mulf %80, %136 : vector<8x128xf32>
      %162 = arith.mulf %88, %139 : vector<8x128xf32>
      %163 = arith.subf %161, %162 : vector<8x128xf32>
      %164 = arith.mulf %82, %139 : vector<8x128xf32>
      %165 = arith.mulf %90, %142 : vector<8x128xf32>
      %166 = arith.subf %164, %165 : vector<8x128xf32>
      %167 = arith.mulf %84, %142 : vector<8x128xf32>
      %168 = arith.mulf %92, %145 : vector<8x128xf32>
      %169 = arith.subf %167, %168 : vector<8x128xf32>
      %170 = arith.mulf %86, %145 : vector<8x128xf32>
      %171 = arith.mulf %94, %148 : vector<8x128xf32>
      %172 = arith.subf %170, %171 : vector<8x128xf32>
      %173 = arith.mulf %88, %148 : vector<8x128xf32>
      %174 = arith.mulf %96, %151 : vector<8x128xf32>
      %175 = arith.subf %173, %174 : vector<8x128xf32>
      %176 = arith.mulf %90, %151 : vector<8x128xf32>
      %177 = arith.mulf %98, %154 : vector<8x128xf32>
      %178 = arith.subf %176, %177 : vector<8x128xf32>
      %179 = arith.mulf %92, %154 : vector<8x128xf32>
      %180 = arith.mulf %100, %157 : vector<8x128xf32>
      %181 = arith.subf %179, %180 : vector<8x128xf32>
      %c16 = arith.constant 16 : index
      %182 = arith.index_cast %6 : i32 to index
      %183 = vector.load %arg4[%c16, %182] : memref<144x768xf32, #tpu.memory_space<vmem>>, vector<8x128xf32>
      tpu.vector_store %arg4[%c16, %182], %160 {strides = array<i32>} : memref<144x768xf32, #tpu.memory_space<vmem>>, vector<8x128xf32>,
      %c32 = arith.constant 32 : index
      %184 = arith.index_cast %6 : i32 to index
      %185 = vector.load %arg4[%c32, %184] : memref<144x768xf32, #tpu.memory_space<vmem>>, vector<8x128xf32>
      tpu.vector_store %arg4[%c32, %184], %163 {strides = array<i32>} : memref<144x768xf32, #tpu.memory_space<vmem>>, vector<8x128xf32>,
      %c48 = arith.constant 48 : index
      %186 = arith.index_cast %6 : i32 to index
      %187 = vector.load %arg4[%c48, %186] : memref<144x768xf32, #tpu.memory_space<vmem>>, vector<8x128xf32>
      tpu.vector_store %arg4[%c48, %186], %166 {strides = array<i32>} : memref<144x768xf32, #tpu.memory_space<vmem>>, vector<8x128xf32>,
      %c64 = arith.constant 64 : index
      %188 = arith.index_cast %6 : i32 to index
      %189 = vector.load %arg4[%c64, %188] : memref<144x768xf32, #tpu.memory_space<vmem>>, vector<8x128xf32>
      tpu.vector_store %arg4[%c64, %188], %169 {strides = array<i32>} : memref<144x768xf32, #tpu.memory_space<vmem>>, vector<8x128xf32>,
      %c80 = arith.constant 80 : index
      %190 = arith.index_cast %6 : i32 to index
      %191 = vector.load %arg4[%c80, %190] : memref<144x768xf32, #tpu.memory_space<vmem>>, vector<8x128xf32>
      tpu.vector_store %arg4[%c80, %190], %172 {strides = array<i32>} : memref<144x768xf32, #tpu.memory_space<vmem>>, vector<8x128xf32>,
      %c96 = arith.constant 96 : index
      %192 = arith.index_cast %6 : i32 to index
      %193 = vector.load %arg4[%c96, %192] : memref<144x768xf32, #tpu.memory_space<vmem>>, vector<8x128xf32>
      tpu.vector_store %arg4[%c96, %192], %175 {strides = array<i32>} : memref<144x768xf32, #tpu.memory_space<vmem>>, vector<8x128xf32>,
      %c112 = arith.constant 112 : index
      %194 = arith.index_cast %6 : i32 to index
      %195 = vector.load %arg4[%c112, %194] : memref<144x768xf32, #tpu.memory_space<vmem>>, vector<8x128xf32>
      tpu.vector_store %arg4[%c112, %194], %178 {strides = array<i32>} : memref<144x768xf32, #tpu.memory_space<vmem>>, vector<8x128xf32>,
      %c128 = arith.constant 128 : index
      %196 = arith.index_cast %6 : i32 to index
      %197 = vector.load %arg4[%c128, %196] : memref<144x768xf32, #tpu.memory_space<vmem>>, vector<8x128xf32>
      tpu.vector_store %arg4[%c128, %196], %181 {strides = array<i32>} : memref<144x768xf32, #tpu.memory_space<vmem>>, vector<8x128xf32>,
      %c8 = arith.constant 8 : index
      %198 = arith.index_cast %6 : i32 to index
      %199 = vector.load %arg1[%c8, %198] : memref<16x768xf32, #tpu.memory_space<vmem>>, vector<8x128xf32>
      %cst_34 = arith.constant 0.000000e+00 : f32
      %200 = vector.broadcast %cst_34 : f32 to vector<8x128xf32>
      %201 = arith.subf %200, %199 : vector<8x128xf32>
      %202 = math.exp %201 : vector<8x128xf32>
      %cst_35 = arith.constant 1.000000e+00 : f32
      %203 = vector.broadcast %cst_35 : f32 to vector<8x128xf32>
      %204 = arith.addf %203, %202 : vector<8x128xf32>
      %205 = tpu.reciprocal %204 {approx = true} : vector<8x128xf32> -> vector<8x128xf32>
      %206 = arith.mulf %199, %205 : vector<8x128xf32>
      %c8_36 = arith.constant 8 : index
      %207 = arith.index_cast %6 : i32 to index
      %208 = vector.load %arg4[%c8_36, %207] : memref<144x768xf32, #tpu.memory_space<vmem>>, vector<8x128xf32>
      tpu.vector_store %arg4[%c8_36, %207], %206 {strides = array<i32>} : memref<144x768xf32, #tpu.memory_space<vmem>>, vector<8x128xf32>,
      %cst_37 = arith.constant -2.200000e+00 : f32
      %209 = vector.broadcast %cst_37 : f32 to vector<8x128xf32>
      %210 = arith.cmpf oge, %199, %209 : vector<8x128xf32>
      %211 = arith.extui %210 : vector<8x128xi1> to vector<8x128xi32>
      %212 = arith.sitofp %211 : vector<8x128xi32> to vector<8x128xf32>
      %cst_38 = arith.constant -1.800000e+00 : f32
      %213 = vector.broadcast %cst_38 : f32 to vector<8x128xf32>
      %214 = arith.cmpf oge, %199, %213 : vector<8x128xf32>
      %215 = arith.extui %214 : vector<8x128xi1> to vector<8x128xi32>
      %216 = arith.sitofp %215 : vector<8x128xi32> to vector<8x128xf32>
      %cst_39 = arith.constant -1.400000e+00 : f32
      %217 = vector.broadcast %cst_39 : f32 to vector<8x128xf32>
      %218 = arith.cmpf oge, %199, %217 : vector<8x128xf32>
      %219 = arith.extui %218 : vector<8x128xi1> to vector<8x128xi32>
      %220 = arith.sitofp %219 : vector<8x128xi32> to vector<8x128xf32>
      %cst_40 = arith.constant -1.000000e+00 : f32
      %221 = vector.broadcast %cst_40 : f32 to vector<8x128xf32>
      %222 = arith.cmpf oge, %199, %221 : vector<8x128xf32>
      %223 = arith.extui %222 : vector<8x128xi1> to vector<8x128xi32>
      %224 = arith.sitofp %223 : vector<8x128xi32> to vector<8x128xf32>
      %cst_41 = arith.constant -6.000000e-01 : f32
      %225 = vector.broadcast %cst_41 : f32 to vector<8x128xf32>
      %226 = arith.cmpf oge, %199, %225 : vector<8x128xf32>
      %227 = arith.extui %226 : vector<8x128xi1> to vector<8x128xi32>
      %228 = arith.sitofp %227 : vector<8x128xi32> to vector<8x128xf32>
      %cst_42 = arith.constant -2.000000e-01 : f32
      %229 = vector.broadcast %cst_42 : f32 to vector<8x128xf32>
      %230 = arith.cmpf oge, %199, %229 : vector<8x128xf32>
      %231 = arith.extui %230 : vector<8x128xi1> to vector<8x128xi32>
      %232 = arith.sitofp %231 : vector<8x128xi32> to vector<8x128xf32>
      %cst_43 = arith.constant 2.000000e-01 : f32
      %233 = vector.broadcast %cst_43 : f32 to vector<8x128xf32>
      %234 = arith.cmpf oge, %199, %233 : vector<8x128xf32>
      %235 = arith.extui %234 : vector<8x128xi1> to vector<8x128xi32>
      %236 = arith.sitofp %235 : vector<8x128xi32> to vector<8x128xf32>
      %cst_44 = arith.constant 6.000000e-01 : f32
      %237 = vector.broadcast %cst_44 : f32 to vector<8x128xf32>
      %238 = arith.cmpf oge, %199, %237 : vector<8x128xf32>
      %239 = arith.extui %238 : vector<8x128xi1> to vector<8x128xi32>
      %240 = arith.sitofp %239 : vector<8x128xi32> to vector<8x128xf32>
      %cst_45 = arith.constant 1.000000e+00 : f32
      %241 = vector.broadcast %cst_45 : f32 to vector<8x128xf32>
      %242 = arith.cmpf oge, %199, %241 : vector<8x128xf32>
      %243 = arith.extui %242 : vector<8x128xi1> to vector<8x128xi32>
      %244 = arith.sitofp %243 : vector<8x128xi32> to vector<8x128xf32>
      %cst_46 = arith.constant 1.400000e+00 : f32
      %245 = vector.broadcast %cst_46 : f32 to vector<8x128xf32>
      %246 = arith.cmpf oge, %199, %245 : vector<8x128xf32>
      %247 = arith.extui %246 : vector<8x128xi1> to vector<8x128xi32>
      %248 = arith.sitofp %247 : vector<8x128xi32> to vector<8x128xf32>
      %cst_47 = arith.constant 1.800000e+00 : f32
      %249 = vector.broadcast %cst_47 : f32 to vector<8x128xf32>
      %250 = arith.cmpf oge, %199, %249 : vector<8x128xf32>
      %251 = arith.extui %250 : vector<8x128xi1> to vector<8x128xi32>
      %252 = arith.sitofp %251 : vector<8x128xi32> to vector<8x128xf32>
      %cst_48 = arith.constant 2.200000e+00 : f32
      %253 = vector.broadcast %cst_48 : f32 to vector<8x128xf32>
      %254 = arith.cmpf oge, %199, %253 : vector<8x128xf32>
      %255 = arith.extui %254 : vector<8x128xi1> to vector<8x128xi32>
      %256 = arith.sitofp %255 : vector<8x128xi32> to vector<8x128xf32>
      %257 = arith.subf %212, %216 : vector<8x128xf32>
      %258 = arith.subf %216, %220 : vector<8x128xf32>
      %259 = arith.subf %220, %224 : vector<8x128xf32>
      %260 = arith.subf %224, %228 : vector<8x128xf32>
      %261 = arith.subf %228, %232 : vector<8x128xf32>
      %262 = arith.subf %232, %236 : vector<8x128xf32>
      %263 = arith.subf %236, %240 : vector<8x128xf32>
      %264 = arith.subf %240, %244 : vector<8x128xf32>
      %265 = arith.subf %244, %248 : vector<8x128xf32>
      %266 = arith.subf %248, %252 : vector<8x128xf32>
      %267 = arith.subf %252, %256 : vector<8x128xf32>
      %cst_49 = arith.constant -2.200000e+00 : f32
      %268 = vector.broadcast %cst_49 : f32 to vector<8x128xf32>
      %269 = arith.subf %199, %268 : vector<8x128xf32>
      %cst_50 = arith.constant -1.800000e+00 : f32
      %270 = vector.broadcast %cst_50 : f32 to vector<8x128xf32>
      %271 = arith.subf %199, %270 : vector<8x128xf32>
      %cst_51 = arith.constant -1.400000e+00 : f32
      %272 = vector.broadcast %cst_51 : f32 to vector<8x128xf32>
      %273 = arith.subf %199, %272 : vector<8x128xf32>
      %cst_52 = arith.constant -1.000000e+00 : f32
      %274 = vector.broadcast %cst_52 : f32 to vector<8x128xf32>
      %275 = arith.subf %199, %274 : vector<8x128xf32>
      %cst_53 = arith.constant -6.000000e-01 : f32
      %276 = vector.broadcast %cst_53 : f32 to vector<8x128xf32>
      %277 = arith.subf %199, %276 : vector<8x128xf32>
      %cst_54 = arith.constant -2.000000e-01 : f32
      %278 = vector.broadcast %cst_54 : f32 to vector<8x128xf32>
      %279 = arith.subf %199, %278 : vector<8x128xf32>
      %cst_55 = arith.constant 2.000000e-01 : f32
      %280 = vector.broadcast %cst_55 : f32 to vector<8x128xf32>
      %281 = arith.subf %199, %280 : vector<8x128xf32>
      %cst_56 = arith.constant 6.000000e-01 : f32
      %282 = vector.broadcast %cst_56 : f32 to vector<8x128xf32>
      %283 = arith.subf %199, %282 : vector<8x128xf32>
      %cst_57 = arith.constant 1.000000e+00 : f32
      %284 = vector.broadcast %cst_57 : f32 to vector<8x128xf32>
      %285 = arith.subf %199, %284 : vector<8x128xf32>
      %cst_58 = arith.constant 1.400000e+00 : f32
      %286 = vector.broadcast %cst_58 : f32 to vector<8x128xf32>
      %287 = arith.subf %199, %286 : vector<8x128xf32>
      %cst_59 = arith.constant 1.800000e+00 : f32
      %288 = vector.broadcast %cst_59 : f32 to vector<8x128xf32>
      %289 = arith.subf %199, %288 : vector<8x128xf32>
      %cst_60 = arith.constant 2.200000e+00 : f32
      %290 = vector.broadcast %cst_60 : f32 to vector<8x128xf32>
      %291 = arith.subf %199, %290 : vector<8x128xf32>
      %292 = arith.mulf %269, %257 : vector<8x128xf32>
      %293 = arith.mulf %273, %258 : vector<8x128xf32>
      %294 = arith.subf %292, %293 : vector<8x128xf32>
      %295 = arith.mulf %271, %258 : vector<8x128xf32>
      %296 = arith.mulf %275, %259 : vector<8x128xf32>
      %297 = arith.subf %295, %296 : vector<8x128xf32>
      %298 = arith.mulf %273, %259 : vector<8x128xf32>
      %299 = arith.mulf %277, %260 : vector<8x128xf32>
      %300 = arith.subf %298, %299 : vector<8x128xf32>
      %301 = arith.mulf %275, %260 : vector<8x128xf32>
      %302 = arith.mulf %279, %261 : vector<8x128xf32>
      %303 = arith.subf %301, %302 : vector<8x128xf32>
      %304 = arith.mulf %277, %261 : vector<8x128xf32>
      %305 = arith.mulf %281, %262 : vector<8x128xf32>
      %306 = arith.subf %304, %305 : vector<8x128xf32>
      %307 = arith.mulf %279, %262 : vector<8x128xf32>
      %308 = arith.mulf %283, %263 : vector<8x128xf32>
      %309 = arith.subf %307, %308 : vector<8x128xf32>
      %310 = arith.mulf %281, %263 : vector<8x128xf32>
      %311 = arith.mulf %285, %264 : vector<8x128xf32>
      %312 = arith.subf %310, %311 : vector<8x128xf32>
      %313 = arith.mulf %283, %264 : vector<8x128xf32>
      %314 = arith.mulf %287, %265 : vector<8x128xf32>
      %315 = arith.subf %313, %314 : vector<8x128xf32>
      %316 = arith.mulf %285, %265 : vector<8x128xf32>
      %317 = arith.mulf %289, %266 : vector<8x128xf32>
      %318 = arith.subf %316, %317 : vector<8x128xf32>
      %319 = arith.mulf %287, %266 : vector<8x128xf32>
      %320 = arith.mulf %291, %267 : vector<8x128xf32>
      %321 = arith.subf %319, %320 : vector<8x128xf32>
      %322 = arith.mulf %269, %294 : vector<8x128xf32>
      %323 = arith.mulf %275, %297 : vector<8x128xf32>
      %324 = arith.subf %322, %323 : vector<8x128xf32>
      %325 = arith.mulf %271, %297 : vector<8x128xf32>
      %326 = arith.mulf %277, %300 : vector<8x128xf32>
      %327 = arith.subf %325, %326 : vector<8x128xf32>
      %328 = arith.mulf %273, %300 : vector<8x128xf32>
      %329 = arith.mulf %279, %303 : vector<8x128xf32>
      %330 = arith.subf %328, %329 : vector<8x128xf32>
      %331 = arith.mulf %275, %303 : vector<8x128xf32>
      %332 = arith.mulf %281, %306 : vector<8x128xf32>
      %333 = arith.subf %331, %332 : vector<8x128xf32>
      %334 = arith.mulf %277, %306 : vector<8x128xf32>
      %335 = arith.mulf %283, %309 : vector<8x128xf32>
      %336 = arith.subf %334, %335 : vector<8x128xf32>
      %337 = arith.mulf %279, %309 : vector<8x128xf32>
      %338 = arith.mulf %285, %312 : vector<8x128xf32>
      %339 = arith.subf %337, %338 : vector<8x128xf32>
      %340 = arith.mulf %281, %312 : vector<8x128xf32>
      %341 = arith.mulf %287, %315 : vector<8x128xf32>
      %342 = arith.subf %340, %341 : vector<8x128xf32>
      %343 = arith.mulf %283, %315 : vector<8x128xf32>
      %344 = arith.mulf %289, %318 : vector<8x128xf32>
      %345 = arith.subf %343, %344 : vector<8x128xf32>
      %346 = arith.mulf %285, %318 : vector<8x128xf32>
      %347 = arith.mulf %291, %321 : vector<8x128xf32>
      %348 = arith.subf %346, %347 : vector<8x128xf32>
      %349 = arith.mulf %269, %324 : vector<8x128xf32>
      %350 = arith.mulf %277, %327 : vector<8x128xf32>
      %351 = arith.subf %349, %350 : vector<8x128xf32>
      %352 = arith.mulf %271, %327 : vector<8x128xf32>
      %353 = arith.mulf %279, %330 : vector<8x128xf32>
      %354 = arith.subf %352, %353 : vector<8x128xf32>
      %355 = arith.mulf %273, %330 : vector<8x128xf32>
      %356 = arith.mulf %281, %333 : vector<8x128xf32>
      %357 = arith.subf %355, %356 : vector<8x128xf32>
      %358 = arith.mulf %275, %333 : vector<8x128xf32>
      %359 = arith.mulf %283, %336 : vector<8x128xf32>
      %360 = arith.subf %358, %359 : vector<8x128xf32>
      %361 = arith.mulf %277, %336 : vector<8x128xf32>
      %362 = arith.mulf %285, %339 : vector<8x128xf32>
      %363 = arith.subf %361, %362 : vector<8x128xf32>
      %364 = arith.mulf %279, %339 : vector<8x128xf32>
      %365 = arith.mulf %287, %342 : vector<8x128xf32>
      %366 = arith.subf %364, %365 : vector<8x128xf32>
      %367 = arith.mulf %281, %342 : vector<8x128xf32>
      %368 = arith.mulf %289, %345 : vector<8x128xf32>
      %369 = arith.subf %367, %368 : vector<8x128xf32>
      %370 = arith.mulf %283, %345 : vector<8x128xf32>
      %371 = arith.mulf %291, %348 : vector<8x128xf32>
      %372 = arith.subf %370, %371 : vector<8x128xf32>
      %c24 = arith.constant 24 : index
      %373 = arith.index_cast %6 : i32 to index
      %374 = vector.load %arg4[%c24, %373] : memref<144x768xf32, #tpu.memory_space<vmem>>, vector<8x128xf32>
      tpu.vector_store %arg4[%c24, %373], %351 {strides = array<i32>} : memref<144x768xf32, #tpu.memory_space<vmem>>, vector<8x128xf32>,
      %c40 = arith.constant 40 : index
      %375 = arith.index_cast %6 : i32 to index
      %376 = vector.load %arg4[%c40, %375] : memref<144x768xf32, #tpu.memory_space<vmem>>, vector<8x128xf32>
      tpu.vector_store %arg4[%c40, %375], %354 {strides = array<i32>} : memref<144x768xf32, #tpu.memory_space<vmem>>, vector<8x128xf32>,
      %c56 = arith.constant 56 : index
      %377 = arith.index_cast %6 : i32 to index
      %378 = vector.load %arg4[%c56, %377] : memref<144x768xf32, #tpu.memory_space<vmem>>, vector<8x128xf32>
      tpu.vector_store %arg4[%c56, %377], %357 {strides = array<i32>} : memref<144x768xf32, #tpu.memory_space<vmem>>, vector<8x128xf32>,
      %c72 = arith.constant 72 : index
      %379 = arith.index_cast %6 : i32 to index
      %380 = vector.load %arg4[%c72, %379] : memref<144x768xf32, #tpu.memory_space<vmem>>, vector<8x128xf32>
      tpu.vector_store %arg4[%c72, %379], %360 {strides = array<i32>} : memref<144x768xf32, #tpu.memory_space<vmem>>, vector<8x128xf32>,
      %c88 = arith.constant 88 : index
      %381 = arith.index_cast %6 : i32 to index
      %382 = vector.load %arg4[%c88, %381] : memref<144x768xf32, #tpu.memory_space<vmem>>, vector<8x128xf32>
      tpu.vector_store %arg4[%c88, %381], %363 {strides = array<i32>} : memref<144x768xf32, #tpu.memory_space<vmem>>, vector<8x128xf32>,
      %c104 = arith.constant 104 : index
      %383 = arith.index_cast %6 : i32 to index
      %384 = vector.load %arg4[%c104, %383] : memref<144x768xf32, #tpu.memory_space<vmem>>, vector<8x128xf32>
      tpu.vector_store %arg4[%c104, %383], %366 {strides = array<i32>} : memref<144x768xf32, #tpu.memory_space<vmem>>, vector<8x128xf32>,
      %c120 = arith.constant 120 : index
      %385 = arith.index_cast %6 : i32 to index
      %386 = vector.load %arg4[%c120, %385] : memref<144x768xf32, #tpu.memory_space<vmem>>, vector<8x128xf32>
      tpu.vector_store %arg4[%c120, %385], %369 {strides = array<i32>} : memref<144x768xf32, #tpu.memory_space<vmem>>, vector<8x128xf32>,
      %c136 = arith.constant 136 : index
      %387 = arith.index_cast %6 : i32 to index
      %388 = vector.load %arg4[%c136, %387] : memref<144x768xf32, #tpu.memory_space<vmem>>, vector<8x128xf32>
      tpu.vector_store %arg4[%c136, %387], %372 {strides = array<i32>} : memref<144x768xf32, #tpu.memory_space<vmem>>, vector<8x128xf32>,
    }
    %c6_i32_0 = arith.constant 6 : i32
    %c0 = arith.constant 0 : index
    %c0_1 = arith.constant 0 : index
    %1 = vector.load %arg2[%c0, %c0_1] : memref<5x144xf32, #tpu.memory_space<vmem>>, vector<5x144xf32>
    %c0_2 = arith.constant 0 : index
    %c0_3 = arith.constant 0 : index
    %2 = vector.load %arg4[%c0_2, %c0_3] : memref<144x768xf32, #tpu.memory_space<vmem>>, vector<144x768xf32>
    %cst = arith.constant dense<0.000000e+00> : vector<5x768xf32>
    %3 = tpu.matmul %1, %2, %cst {dimension_numbers = #tpu.dot_dimension_numbers<[1], [0], [0], [1], [0, 0, 1, 1], [], []>} : vector<5x144xf32>, vector<144x768xf32>, vector<5x768xf32> -> vector<5x768xf32>
    %c0_4 = arith.constant 0 : index
    %c0_5 = arith.constant 0 : index
    %4 = vector.load %arg3[%c0_4, %c0_5] : memref<5x768xf32, #tpu.memory_space<vmem>>, vector<5x768xf32>
    tpu.vector_store %arg3[%c0_4, %c0_5], %3 {strides = array<i32>} : memref<5x768xf32, #tpu.memory_space<vmem>>, vector<5x768xf32>,
    return
  }
  func.func @transform_0(%arg0: i32) -> (i32, i32) {
    %c0_i32 = arith.constant 0 : i32
    %c0_i32_0 = arith.constant 0 : i32
    return %c0_i32, %arg0 : i32, i32
  }
  func.func @transform_1(%arg0: i32) -> (i32, i32) {
    %c0_i32 = arith.constant 0 : i32
    %c0_i32_0 = arith.constant 0 : i32
    %c0_i32_1 = arith.constant 0 : i32
    return %c0_i32, %c0_i32_0 : i32, i32
  }
  func.func @transform_2(%arg0: i32) -> (i32, i32) {
    %c0_i32 = arith.constant 0 : i32
    %c0_i32_0 = arith.constant 0 : i32
    return %c0_i32, %arg0 : i32, i32
  }
}

module attributes {stable_mosaic.version = 11 : i64} {
  func.func @kan_conv_kernel(%arg0: i32, %arg1: memref<48x128xf32, #tpu.memory_space<vmem>>, %arg2: memref<10x432xf32, #tpu.memory_space<vmem>>, %arg3: memref<10x128xf32, #tpu.memory_space<vmem>>, %arg4: memref<432x128xf32, #tpu.memory_space<vmem>>) attributes {dimension_semantics = [#tpu.dimension_semantics<parallel>], iteration_bounds = array<i64: 2>, scalar_prefetch = 0 : i64, scratch_operands = 1 : i64, tpu.core_type = #tpu.core_type<tc>, window_params = [{transform_indices = @transform_0, window_bounds = array<i64: 48, 128>}, {pipeline_mode = #tpu.pipeline_mode<synchronous>, transform_indices = @transform_1, window_bounds = array<i64: 10, 432>}, {transform_indices = @transform_2, window_bounds = array<i64: 10, 128>}]} {
    %c0_i32 = arith.constant 0 : i32
    %c128_i32 = arith.constant 128 : i32
    %0 = arith.muli %c0_i32, %c128_i32 : i32
    %1 = tpu.assume_multiple %0, 128 : i32
    %c0 = arith.constant 0 : index
    %2 = arith.index_cast %1 : i32 to index
    %3 = vector.load %arg1[%c0, %2] : memref<48x128xf32, #tpu.memory_space<vmem>>, vector<8x128xf32>
    %cst = arith.constant 0.000000e+00 : f32
    %4 = vector.broadcast %cst : f32 to vector<8x128xf32>
    %5 = arith.subf %4, %3 : vector<8x128xf32>
    %6 = math.exp %5 : vector<8x128xf32>
    %cst_0 = arith.constant 1.000000e+00 : f32
    %7 = vector.broadcast %cst_0 : f32 to vector<8x128xf32>
    %8 = arith.addf %7, %6 : vector<8x128xf32>
    %9 = tpu.reciprocal %8 {approx = true} : vector<8x128xf32> -> vector<8x128xf32>
    %10 = arith.mulf %3, %9 : vector<8x128xf32>
    %c0_1 = arith.constant 0 : index
    %11 = arith.index_cast %1 : i32 to index
    %12 = vector.load %arg4[%c0_1, %11] : memref<432x128xf32, #tpu.memory_space<vmem>>, vector<8x128xf32>
    tpu.vector_store %arg4[%c0_1, %11], %10 {strides = array<i32>} : memref<432x128xf32, #tpu.memory_space<vmem>>, vector<8x128xf32>,
    %cst_2 = arith.constant -2.200000e+00 : f32
    %13 = vector.broadcast %cst_2 : f32 to vector<8x128xf32>
    %14 = arith.cmpf oge, %3, %13 : vector<8x128xf32>
    %15 = arith.extui %14 : vector<8x128xi1> to vector<8x128xi32>
    %16 = arith.sitofp %15 : vector<8x128xi32> to vector<8x128xf32>
    %cst_3 = arith.constant -1.800000e+00 : f32
    %17 = vector.broadcast %cst_3 : f32 to vector<8x128xf32>
    %18 = arith.cmpf oge, %3, %17 : vector<8x128xf32>
    %19 = arith.extui %18 : vector<8x128xi1> to vector<8x128xi32>
    %20 = arith.sitofp %19 : vector<8x128xi32> to vector<8x128xf32>
    %cst_4 = arith.constant -1.400000e+00 : f32
    %21 = vector.broadcast %cst_4 : f32 to vector<8x128xf32>
    %22 = arith.cmpf oge, %3, %21 : vector<8x128xf32>
    %23 = arith.extui %22 : vector<8x128xi1> to vector<8x128xi32>
    %24 = arith.sitofp %23 : vector<8x128xi32> to vector<8x128xf32>
    %cst_5 = arith.constant -1.000000e+00 : f32
    %25 = vector.broadcast %cst_5 : f32 to vector<8x128xf32>
    %26 = arith.cmpf oge, %3, %25 : vector<8x128xf32>
    %27 = arith.extui %26 : vector<8x128xi1> to vector<8x128xi32>
    %28 = arith.sitofp %27 : vector<8x128xi32> to vector<8x128xf32>
    %cst_6 = arith.constant -6.000000e-01 : f32
    %29 = vector.broadcast %cst_6 : f32 to vector<8x128xf32>
    %30 = arith.cmpf oge, %3, %29 : vector<8x128xf32>
    %31 = arith.extui %30 : vector<8x128xi1> to vector<8x128xi32>
    %32 = arith.sitofp %31 : vector<8x128xi32> to vector<8x128xf32>
    %cst_7 = arith.constant -2.000000e-01 : f32
    %33 = vector.broadcast %cst_7 : f32 to vector<8x128xf32>
    %34 = arith.cmpf oge, %3, %33 : vector<8x128xf32>
    %35 = arith.extui %34 : vector<8x128xi1> to vector<8x128xi32>
    %36 = arith.sitofp %35 : vector<8x128xi32> to vector<8x128xf32>
    %cst_8 = arith.constant 2.000000e-01 : f32
    %37 = vector.broadcast %cst_8 : f32 to vector<8x128xf32>
    %38 = arith.cmpf oge, %3, %37 : vector<8x128xf32>
    %39 = arith.extui %38 : vector<8x128xi1> to vector<8x128xi32>
    %40 = arith.sitofp %39 : vector<8x128xi32> to vector<8x128xf32>
    %cst_9 = arith.constant 6.000000e-01 : f32
    %41 = vector.broadcast %cst_9 : f32 to vector<8x128xf32>
    %42 = arith.cmpf oge, %3, %41 : vector<8x128xf32>
    %43 = arith.extui %42 : vector<8x128xi1> to vector<8x128xi32>
    %44 = arith.sitofp %43 : vector<8x128xi32> to vector<8x128xf32>
    %cst_10 = arith.constant 1.000000e+00 : f32
    %45 = vector.broadcast %cst_10 : f32 to vector<8x128xf32>
    %46 = arith.cmpf oge, %3, %45 : vector<8x128xf32>
    %47 = arith.extui %46 : vector<8x128xi1> to vector<8x128xi32>
    %48 = arith.sitofp %47 : vector<8x128xi32> to vector<8x128xf32>
    %cst_11 = arith.constant 1.400000e+00 : f32
    %49 = vector.broadcast %cst_11 : f32 to vector<8x128xf32>
    %50 = arith.cmpf oge, %3, %49 : vector<8x128xf32>
    %51 = arith.extui %50 : vector<8x128xi1> to vector<8x128xi32>
    %52 = arith.sitofp %51 : vector<8x128xi32> to vector<8x128xf32>
    %cst_12 = arith.constant 1.800000e+00 : f32
    %53 = vector.broadcast %cst_12 : f32 to vector<8x128xf32>
    %54 = arith.cmpf oge, %3, %53 : vector<8x128xf32>
    %55 = arith.extui %54 : vector<8x128xi1> to vector<8x128xi32>
    %56 = arith.sitofp %55 : vector<8x128xi32> to vector<8x128xf32>
    %cst_13 = arith.constant 2.200000e+00 : f32
    %57 = vector.broadcast %cst_13 : f32 to vector<8x128xf32>
    %58 = arith.cmpf oge, %3, %57 : vector<8x128xf32>
    %59 = arith.extui %58 : vector<8x128xi1> to vector<8x128xi32>
    %60 = arith.sitofp %59 : vector<8x128xi32> to vector<8x128xf32>
    %61 = arith.subf %16, %20 : vector<8x128xf32>
    %62 = arith.subf %20, %24 : vector<8x128xf32>
    %63 = arith.subf %24, %28 : vector<8x128xf32>
    %64 = arith.subf %28, %32 : vector<8x128xf32>
    %65 = arith.subf %32, %36 : vector<8x128xf32>
    %66 = arith.subf %36, %40 : vector<8x128xf32>
    %67 = arith.subf %40, %44 : vector<8x128xf32>
    %68 = arith.subf %44, %48 : vector<8x128xf32>
    %69 = arith.subf %48, %52 : vector<8x128xf32>
    %70 = arith.subf %52, %56 : vector<8x128xf32>
    %71 = arith.subf %56, %60 : vector<8x128xf32>
    %cst_14 = arith.constant -2.200000e+00 : f32
    %72 = vector.broadcast %cst_14 : f32 to vector<8x128xf32>
    %73 = arith.subf %3, %72 : vector<8x128xf32>
    %cst_15 = arith.constant -1.800000e+00 : f32
    %74 = vector.broadcast %cst_15 : f32 to vector<8x128xf32>
    %75 = arith.subf %3, %74 : vector<8x128xf32>
    %cst_16 = arith.constant -1.400000e+00 : f32
    %76 = vector.broadcast %cst_16 : f32 to vector<8x128xf32>
    %77 = arith.subf %3, %76 : vector<8x128xf32>
    %cst_17 = arith.constant -1.000000e+00 : f32
    %78 = vector.broadcast %cst_17 : f32 to vector<8x128xf32>
    %79 = arith.subf %3, %78 : vector<8x128xf32>
    %cst_18 = arith.constant -6.000000e-01 : f32
    %80 = vector.broadcast %cst_18 : f32 to vector<8x128xf32>
    %81 = arith.subf %3, %80 : vector<8x128xf32>
    %cst_19 = arith.constant -2.000000e-01 : f32
    %82 = vector.broadcast %cst_19 : f32 to vector<8x128xf32>
    %83 = arith.subf %3, %82 : vector<8x128xf32>
    %cst_20 = arith.constant 2.000000e-01 : f32
    %84 = vector.broadcast %cst_20 : f32 to vector<8x128xf32>
    %85 = arith.subf %3, %84 : vector<8x128xf32>
    %cst_21 = arith.constant 6.000000e-01 : f32
    %86 = vector.broadcast %cst_21 : f32 to vector<8x128xf32>
    %87 = arith.subf %3, %86 : vector<8x128xf32>
    %cst_22 = arith.constant 1.000000e+00 : f32
    %88 = vector.broadcast %cst_22 : f32 to vector<8x128xf32>
    %89 = arith.subf %3, %88 : vector<8x128xf32>
    %cst_23 = arith.constant 1.400000e+00 : f32
    %90 = vector.broadcast %cst_23 : f32 to vector<8x128xf32>
    %91 = arith.subf %3, %90 : vector<8x128xf32>
    %cst_24 = arith.constant 1.800000e+00 : f32
    %92 = vector.broadcast %cst_24 : f32 to vector<8x128xf32>
    %93 = arith.subf %3, %92 : vector<8x128xf32>
    %cst_25 = arith.constant 2.200000e+00 : f32
    %94 = vector.broadcast %cst_25 : f32 to vector<8x128xf32>
    %95 = arith.subf %3, %94 : vector<8x128xf32>
    %96 = arith.mulf %73, %61 : vector<8x128xf32>
    %97 = arith.mulf %77, %62 : vector<8x128xf32>
    %98 = arith.subf %96, %97 : vector<8x128xf32>
    %99 = arith.mulf %75, %62 : vector<8x128xf32>
    %100 = arith.mulf %79, %63 : vector<8x128xf32>
    %101 = arith.subf %99, %100 : vector<8x128xf32>
    %102 = arith.mulf %77, %63 : vector<8x128xf32>
    %103 = arith.mulf %81, %64 : vector<8x128xf32>
    %104 = arith.subf %102, %103 : vector<8x128xf32>
    %105 = arith.mulf %79, %64 : vector<8x128xf32>
    %106 = arith.mulf %83, %65 : vector<8x128xf32>
    %107 = arith.subf %105, %106 : vector<8x128xf32>
    %108 = arith.mulf %81, %65 : vector<8x128xf32>
    %109 = arith.mulf %85, %66 : vector<8x128xf32>
    %110 = arith.subf %108, %109 : vector<8x128xf32>
    %111 = arith.mulf %83, %66 : vector<8x128xf32>
    %112 = arith.mulf %87, %67 : vector<8x128xf32>
    %113 = arith.subf %111, %112 : vector<8x128xf32>
    %114 = arith.mulf %85, %67 : vector<8x128xf32>
    %115 = arith.mulf %89, %68 : vector<8x128xf32>
    %116 = arith.subf %114, %115 : vector<8x128xf32>
    %117 = arith.mulf %87, %68 : vector<8x128xf32>
    %118 = arith.mulf %91, %69 : vector<8x128xf32>
    %119 = arith.subf %117, %118 : vector<8x128xf32>
    %120 = arith.mulf %89, %69 : vector<8x128xf32>
    %121 = arith.mulf %93, %70 : vector<8x128xf32>
    %122 = arith.subf %120, %121 : vector<8x128xf32>
    %123 = arith.mulf %91, %70 : vector<8x128xf32>
    %124 = arith.mulf %95, %71 : vector<8x128xf32>
    %125 = arith.subf %123, %124 : vector<8x128xf32>
    %126 = arith.mulf %73, %98 : vector<8x128xf32>
    %127 = arith.mulf %79, %101 : vector<8x128xf32>
    %128 = arith.subf %126, %127 : vector<8x128xf32>
    %129 = arith.mulf %75, %101 : vector<8x128xf32>
    %130 = arith.mulf %81, %104 : vector<8x128xf32>
    %131 = arith.subf %129, %130 : vector<8x128xf32>
    %132 = arith.mulf %77, %104 : vector<8x128xf32>
    %133 = arith.mulf %83, %107 : vector<8x128xf32>
    %134 = arith.subf %132, %133 : vector<8x128xf32>
    %135 = arith.mulf %79, %107 : vector<8x128xf32>
    %136 = arith.mulf %85, %110 : vector<8x128xf32>
    %137 = arith.subf %135, %136 : vector<8x128xf32>
    %138 = arith.mulf %81, %110 : vector<8x128xf32>
    %139 = arith.mulf %87, %113 : vector<8x128xf32>
    %140 = arith.subf %138, %139 : vector<8x128xf32>
    %141 = arith.mulf %83, %113 : vector<8x128xf32>
    %142 = arith.mulf %89, %116 : vector<8x128xf32>
    %143 = arith.subf %141, %142 : vector<8x128xf32>
    %144 = arith.mulf %85, %116 : vector<8x128xf32>
    %145 = arith.mulf %91, %119 : vector<8x128xf32>
    %146 = arith.subf %144, %145 : vector<8x128xf32>
    %147 = arith.mulf %87, %119 : vector<8x128xf32>
    %148 = arith.mulf %93, %122 : vector<8x128xf32>
    %149 = arith.subf %147, %148 : vector<8x128xf32>
    %150 = arith.mulf %89, %122 : vector<8x128xf32>
    %151 = arith.mulf %95, %125 : vector<8x128xf32>
    %152 = arith.subf %150, %151 : vector<8x128xf32>
    %153 = arith.mulf %73, %128 : vector<8x128xf32>
    %154 = arith.mulf %81, %131 : vector<8x128xf32>
    %155 = arith.subf %153, %154 : vector<8x128xf32>
    %156 = arith.mulf %75, %131 : vector<8x128xf32>
    %157 = arith.mulf %83, %134 : vector<8x128xf32>
    %158 = arith.subf %156, %157 : vector<8x128xf32>
    %159 = arith.mulf %77, %134 : vector<8x128xf32>
    %160 = arith.mulf %85, %137 : vector<8x128xf32>
    %161 = arith.subf %159, %160 : vector<8x128xf32>
    %162 = arith.mulf %79, %137 : vector<8x128xf32>
    %163 = arith.mulf %87, %140 : vector<8x128xf32>
    %164 = arith.subf %162, %163 : vector<8x128xf32>
    %165 = arith.mulf %81, %140 : vector<8x128xf32>
    %166 = arith.mulf %89, %143 : vector<8x128xf32>
    %167 = arith.subf %165, %166 : vector<8x128xf32>
    %168 = arith.mulf %83, %143 : vector<8x128xf32>
    %169 = arith.mulf %91, %146 : vector<8x128xf32>
    %170 = arith.subf %168, %169 : vector<8x128xf32>
    %171 = arith.mulf %85, %146 : vector<8x128xf32>
    %172 = arith.mulf %93, %149 : vector<8x128xf32>
    %173 = arith.subf %171, %172 : vector<8x128xf32>
    %174 = arith.mulf %87, %149 : vector<8x128xf32>
    %175 = arith.mulf %95, %152 : vector<8x128xf32>
    %176 = arith.subf %174, %175 : vector<8x128xf32>
    %c48 = arith.constant 48 : index
    %177 = arith.index_cast %1 : i32 to index
    %178 = vector.load %arg4[%c48, %177] : memref<432x128xf32, #tpu.memory_space<vmem>>, vector<8x128xf32>
    tpu.vector_store %arg4[%c48, %177], %155 {strides = array<i32>} : memref<432x128xf32, #tpu.memory_space<vmem>>, vector<8x128xf32>,
    %c96 = arith.constant 96 : index
    %179 = arith.index_cast %1 : i32 to index
    %180 = vector.load %arg4[%c96, %179] : memref<432x128xf32, #tpu.memory_space<vmem>>, vector<8x128xf32>
    tpu.vector_store %arg4[%c96, %179], %158 {strides = array<i32>} : memref<432x128xf32, #tpu.memory_space<vmem>>, vector<8x128xf32>,
    %c144 = arith.constant 144 : index
    %181 = arith.index_cast %1 : i32 to index
    %182 = vector.load %arg4[%c144, %181] : memref<432x128xf32, #tpu.memory_space<vmem>>, vector<8x128xf32>
    tpu.vector_store %arg4[%c144, %181], %161 {strides = array<i32>} : memref<432x128xf32, #tpu.memory_space<vmem>>, vector<8x128xf32>,
    %c192 = arith.constant 192 : index
    %183 = arith.index_cast %1 : i32 to index
    %184 = vector.load %arg4[%c192, %183] : memref<432x128xf32, #tpu.memory_space<vmem>>, vector<8x128xf32>
    tpu.vector_store %arg4[%c192, %183], %164 {strides = array<i32>} : memref<432x128xf32, #tpu.memory_space<vmem>>, vector<8x128xf32>,
    %c240 = arith.constant 240 : index
    %185 = arith.index_cast %1 : i32 to index
    %186 = vector.load %arg4[%c240, %185] : memref<432x128xf32, #tpu.memory_space<vmem>>, vector<8x128xf32>
    tpu.vector_store %arg4[%c240, %185], %167 {strides = array<i32>} : memref<432x128xf32, #tpu.memory_space<vmem>>, vector<8x128xf32>,
    %c288 = arith.constant 288 : index
    %187 = arith.index_cast %1 : i32 to index
    %188 = vector.load %arg4[%c288, %187] : memref<432x128xf32, #tpu.memory_space<vmem>>, vector<8x128xf32>
    tpu.vector_store %arg4[%c288, %187], %170 {strides = array<i32>} : memref<432x128xf32, #tpu.memory_space<vmem>>, vector<8x128xf32>,
    %c336 = arith.constant 336 : index
    %189 = arith.index_cast %1 : i32 to index
    %190 = vector.load %arg4[%c336, %189] : memref<432x128xf32, #tpu.memory_space<vmem>>, vector<8x128xf32>
    tpu.vector_store %arg4[%c336, %189], %173 {strides = array<i32>} : memref<432x128xf32, #tpu.memory_space<vmem>>, vector<8x128xf32>,
    %c384 = arith.constant 384 : index
    %191 = arith.index_cast %1 : i32 to index
    %192 = vector.load %arg4[%c384, %191] : memref<432x128xf32, #tpu.memory_space<vmem>>, vector<8x128xf32>
    tpu.vector_store %arg4[%c384, %191], %176 {strides = array<i32>} : memref<432x128xf32, #tpu.memory_space<vmem>>, vector<8x128xf32>,
    %c8 = arith.constant 8 : index
    %193 = arith.index_cast %1 : i32 to index
    %194 = vector.load %arg1[%c8, %193] : memref<48x128xf32, #tpu.memory_space<vmem>>, vector<8x128xf32>
    %cst_26 = arith.constant 0.000000e+00 : f32
    %195 = vector.broadcast %cst_26 : f32 to vector<8x128xf32>
    %196 = arith.subf %195, %194 : vector<8x128xf32>
    %197 = math.exp %196 : vector<8x128xf32>
    %cst_27 = arith.constant 1.000000e+00 : f32
    %198 = vector.broadcast %cst_27 : f32 to vector<8x128xf32>
    %199 = arith.addf %198, %197 : vector<8x128xf32>
    %200 = tpu.reciprocal %199 {approx = true} : vector<8x128xf32> -> vector<8x128xf32>
    %201 = arith.mulf %194, %200 : vector<8x128xf32>
    %c8_28 = arith.constant 8 : index
    %202 = arith.index_cast %1 : i32 to index
    %203 = vector.load %arg4[%c8_28, %202] : memref<432x128xf32, #tpu.memory_space<vmem>>, vector<8x128xf32>
    tpu.vector_store %arg4[%c8_28, %202], %201 {strides = array<i32>} : memref<432x128xf32, #tpu.memory_space<vmem>>, vector<8x128xf32>,
    %cst_29 = arith.constant -2.200000e+00 : f32
    %204 = vector.broadcast %cst_29 : f32 to vector<8x128xf32>
    %205 = arith.cmpf oge, %194, %204 : vector<8x128xf32>
    %206 = arith.extui %205 : vector<8x128xi1> to vector<8x128xi32>
    %207 = arith.sitofp %206 : vector<8x128xi32> to vector<8x128xf32>
    %cst_30 = arith.constant -1.800000e+00 : f32
    %208 = vector.broadcast %cst_30 : f32 to vector<8x128xf32>
    %209 = arith.cmpf oge, %194, %208 : vector<8x128xf32>
    %210 = arith.extui %209 : vector<8x128xi1> to vector<8x128xi32>
    %211 = arith.sitofp %210 : vector<8x128xi32> to vector<8x128xf32>
    %cst_31 = arith.constant -1.400000e+00 : f32
    %212 = vector.broadcast %cst_31 : f32 to vector<8x128xf32>
    %213 = arith.cmpf oge, %194, %212 : vector<8x128xf32>
    %214 = arith.extui %213 : vector<8x128xi1> to vector<8x128xi32>
    %215 = arith.sitofp %214 : vector<8x128xi32> to vector<8x128xf32>
    %cst_32 = arith.constant -1.000000e+00 : f32
    %216 = vector.broadcast %cst_32 : f32 to vector<8x128xf32>
    %217 = arith.cmpf oge, %194, %216 : vector<8x128xf32>
    %218 = arith.extui %217 : vector<8x128xi1> to vector<8x128xi32>
    %219 = arith.sitofp %218 : vector<8x128xi32> to vector<8x128xf32>
    %cst_33 = arith.constant -6.000000e-01 : f32
    %220 = vector.broadcast %cst_33 : f32 to vector<8x128xf32>
    %221 = arith.cmpf oge, %194, %220 : vector<8x128xf32>
    %222 = arith.extui %221 : vector<8x128xi1> to vector<8x128xi32>
    %223 = arith.sitofp %222 : vector<8x128xi32> to vector<8x128xf32>
    %cst_34 = arith.constant -2.000000e-01 : f32
    %224 = vector.broadcast %cst_34 : f32 to vector<8x128xf32>
    %225 = arith.cmpf oge, %194, %224 : vector<8x128xf32>
    %226 = arith.extui %225 : vector<8x128xi1> to vector<8x128xi32>
    %227 = arith.sitofp %226 : vector<8x128xi32> to vector<8x128xf32>
    %cst_35 = arith.constant 2.000000e-01 : f32
    %228 = vector.broadcast %cst_35 : f32 to vector<8x128xf32>
    %229 = arith.cmpf oge, %194, %228 : vector<8x128xf32>
    %230 = arith.extui %229 : vector<8x128xi1> to vector<8x128xi32>
    %231 = arith.sitofp %230 : vector<8x128xi32> to vector<8x128xf32>
    %cst_36 = arith.constant 6.000000e-01 : f32
    %232 = vector.broadcast %cst_36 : f32 to vector<8x128xf32>
    %233 = arith.cmpf oge, %194, %232 : vector<8x128xf32>
    %234 = arith.extui %233 : vector<8x128xi1> to vector<8x128xi32>
    %235 = arith.sitofp %234 : vector<8x128xi32> to vector<8x128xf32>
    %cst_37 = arith.constant 1.000000e+00 : f32
    %236 = vector.broadcast %cst_37 : f32 to vector<8x128xf32>
    %237 = arith.cmpf oge, %194, %236 : vector<8x128xf32>
    %238 = arith.extui %237 : vector<8x128xi1> to vector<8x128xi32>
    %239 = arith.sitofp %238 : vector<8x128xi32> to vector<8x128xf32>
    %cst_38 = arith.constant 1.400000e+00 : f32
    %240 = vector.broadcast %cst_38 : f32 to vector<8x128xf32>
    %241 = arith.cmpf oge, %194, %240 : vector<8x128xf32>
    %242 = arith.extui %241 : vector<8x128xi1> to vector<8x128xi32>
    %243 = arith.sitofp %242 : vector<8x128xi32> to vector<8x128xf32>
    %cst_39 = arith.constant 1.800000e+00 : f32
    %244 = vector.broadcast %cst_39 : f32 to vector<8x128xf32>
    %245 = arith.cmpf oge, %194, %244 : vector<8x128xf32>
    %246 = arith.extui %245 : vector<8x128xi1> to vector<8x128xi32>
    %247 = arith.sitofp %246 : vector<8x128xi32> to vector<8x128xf32>
    %cst_40 = arith.constant 2.200000e+00 : f32
    %248 = vector.broadcast %cst_40 : f32 to vector<8x128xf32>
    %249 = arith.cmpf oge, %194, %248 : vector<8x128xf32>
    %250 = arith.extui %249 : vector<8x128xi1> to vector<8x128xi32>
    %251 = arith.sitofp %250 : vector<8x128xi32> to vector<8x128xf32>
    %252 = arith.subf %207, %211 : vector<8x128xf32>
    %253 = arith.subf %211, %215 : vector<8x128xf32>
    %254 = arith.subf %215, %219 : vector<8x128xf32>
    %255 = arith.subf %219, %223 : vector<8x128xf32>
    %256 = arith.subf %223, %227 : vector<8x128xf32>
    %257 = arith.subf %227, %231 : vector<8x128xf32>
    %258 = arith.subf %231, %235 : vector<8x128xf32>
    %259 = arith.subf %235, %239 : vector<8x128xf32>
    %260 = arith.subf %239, %243 : vector<8x128xf32>
    %261 = arith.subf %243, %247 : vector<8x128xf32>
    %262 = arith.subf %247, %251 : vector<8x128xf32>
    %cst_41 = arith.constant -2.200000e+00 : f32
    %263 = vector.broadcast %cst_41 : f32 to vector<8x128xf32>
    %264 = arith.subf %194, %263 : vector<8x128xf32>
    %cst_42 = arith.constant -1.800000e+00 : f32
    %265 = vector.broadcast %cst_42 : f32 to vector<8x128xf32>
    %266 = arith.subf %194, %265 : vector<8x128xf32>
    %cst_43 = arith.constant -1.400000e+00 : f32
    %267 = vector.broadcast %cst_43 : f32 to vector<8x128xf32>
    %268 = arith.subf %194, %267 : vector<8x128xf32>
    %cst_44 = arith.constant -1.000000e+00 : f32
    %269 = vector.broadcast %cst_44 : f32 to vector<8x128xf32>
    %270 = arith.subf %194, %269 : vector<8x128xf32>
    %cst_45 = arith.constant -6.000000e-01 : f32
    %271 = vector.broadcast %cst_45 : f32 to vector<8x128xf32>
    %272 = arith.subf %194, %271 : vector<8x128xf32>
    %cst_46 = arith.constant -2.000000e-01 : f32
    %273 = vector.broadcast %cst_46 : f32 to vector<8x128xf32>
    %274 = arith.subf %194, %273 : vector<8x128xf32>
    %cst_47 = arith.constant 2.000000e-01 : f32
    %275 = vector.broadcast %cst_47 : f32 to vector<8x128xf32>
    %276 = arith.subf %194, %275 : vector<8x128xf32>
    %cst_48 = arith.constant 6.000000e-01 : f32
    %277 = vector.broadcast %cst_48 : f32 to vector<8x128xf32>
    %278 = arith.subf %194, %277 : vector<8x128xf32>
    %cst_49 = arith.constant 1.000000e+00 : f32
    %279 = vector.broadcast %cst_49 : f32 to vector<8x128xf32>
    %280 = arith.subf %194, %279 : vector<8x128xf32>
    %cst_50 = arith.constant 1.400000e+00 : f32
    %281 = vector.broadcast %cst_50 : f32 to vector<8x128xf32>
    %282 = arith.subf %194, %281 : vector<8x128xf32>
    %cst_51 = arith.constant 1.800000e+00 : f32
    %283 = vector.broadcast %cst_51 : f32 to vector<8x128xf32>
    %284 = arith.subf %194, %283 : vector<8x128xf32>
    %cst_52 = arith.constant 2.200000e+00 : f32
    %285 = vector.broadcast %cst_52 : f32 to vector<8x128xf32>
    %286 = arith.subf %194, %285 : vector<8x128xf32>
    %287 = arith.mulf %264, %252 : vector<8x128xf32>
    %288 = arith.mulf %268, %253 : vector<8x128xf32>
    %289 = arith.subf %287, %288 : vector<8x128xf32>
    %290 = arith.mulf %266, %253 : vector<8x128xf32>
    %291 = arith.mulf %270, %254 : vector<8x128xf32>
    %292 = arith.subf %290, %291 : vector<8x128xf32>
    %293 = arith.mulf %268, %254 : vector<8x128xf32>
    %294 = arith.mulf %272, %255 : vector<8x128xf32>
    %295 = arith.subf %293, %294 : vector<8x128xf32>
    %296 = arith.mulf %270, %255 : vector<8x128xf32>
    %297 = arith.mulf %274, %256 : vector<8x128xf32>
    %298 = arith.subf %296, %297 : vector<8x128xf32>
    %299 = arith.mulf %272, %256 : vector<8x128xf32>
    %300 = arith.mulf %276, %257 : vector<8x128xf32>
    %301 = arith.subf %299, %300 : vector<8x128xf32>
    %302 = arith.mulf %274, %257 : vector<8x128xf32>
    %303 = arith.mulf %278, %258 : vector<8x128xf32>
    %304 = arith.subf %302, %303 : vector<8x128xf32>
    %305 = arith.mulf %276, %258 : vector<8x128xf32>
    %306 = arith.mulf %280, %259 : vector<8x128xf32>
    %307 = arith.subf %305, %306 : vector<8x128xf32>
    %308 = arith.mulf %278, %259 : vector<8x128xf32>
    %309 = arith.mulf %282, %260 : vector<8x128xf32>
    %310 = arith.subf %308, %309 : vector<8x128xf32>
    %311 = arith.mulf %280, %260 : vector<8x128xf32>
    %312 = arith.mulf %284, %261 : vector<8x128xf32>
    %313 = arith.subf %311, %312 : vector<8x128xf32>
    %314 = arith.mulf %282, %261 : vector<8x128xf32>
    %315 = arith.mulf %286, %262 : vector<8x128xf32>
    %316 = arith.subf %314, %315 : vector<8x128xf32>
    %317 = arith.mulf %264, %289 : vector<8x128xf32>
    %318 = arith.mulf %270, %292 : vector<8x128xf32>
    %319 = arith.subf %317, %318 : vector<8x128xf32>
    %320 = arith.mulf %266, %292 : vector<8x128xf32>
    %321 = arith.mulf %272, %295 : vector<8x128xf32>
    %322 = arith.subf %320, %321 : vector<8x128xf32>
    %323 = arith.mulf %268, %295 : vector<8x128xf32>
    %324 = arith.mulf %274, %298 : vector<8x128xf32>
    %325 = arith.subf %323, %324 : vector<8x128xf32>
    %326 = arith.mulf %270, %298 : vector<8x128xf32>
    %327 = arith.mulf %276, %301 : vector<8x128xf32>
    %328 = arith.subf %326, %327 : vector<8x128xf32>
    %329 = arith.mulf %272, %301 : vector<8x128xf32>
    %330 = arith.mulf %278, %304 : vector<8x128xf32>
    %331 = arith.subf %329, %330 : vector<8x128xf32>
    %332 = arith.mulf %274, %304 : vector<8x128xf32>
    %333 = arith.mulf %280, %307 : vector<8x128xf32>
    %334 = arith.subf %332, %333 : vector<8x128xf32>
    %335 = arith.mulf %276, %307 : vector<8x128xf32>
    %336 = arith.mulf %282, %310 : vector<8x128xf32>
    %337 = arith.subf %335, %336 : vector<8x128xf32>
    %338 = arith.mulf %278, %310 : vector<8x128xf32>
    %339 = arith.mulf %284, %313 : vector<8x128xf32>
    %340 = arith.subf %338, %339 : vector<8x128xf32>
    %341 = arith.mulf %280, %313 : vector<8x128xf32>
    %342 = arith.mulf %286, %316 : vector<8x128xf32>
    %343 = arith.subf %341, %342 : vector<8x128xf32>
    %344 = arith.mulf %264, %319 : vector<8x128xf32>
    %345 = arith.mulf %272, %322 : vector<8x128xf32>
    %346 = arith.subf %344, %345 : vector<8x128xf32>
    %347 = arith.mulf %266, %322 : vector<8x128xf32>
    %348 = arith.mulf %274, %325 : vector<8x128xf32>
    %349 = arith.subf %347, %348 : vector<8x128xf32>
    %350 = arith.mulf %268, %325 : vector<8x128xf32>
    %351 = arith.mulf %276, %328 : vector<8x128xf32>
    %352 = arith.subf %350, %351 : vector<8x128xf32>
    %353 = arith.mulf %270, %328 : vector<8x128xf32>
    %354 = arith.mulf %278, %331 : vector<8x128xf32>
    %355 = arith.subf %353, %354 : vector<8x128xf32>
    %356 = arith.mulf %272, %331 : vector<8x128xf32>
    %357 = arith.mulf %280, %334 : vector<8x128xf32>
    %358 = arith.subf %356, %357 : vector<8x128xf32>
    %359 = arith.mulf %274, %334 : vector<8x128xf32>
    %360 = arith.mulf %282, %337 : vector<8x128xf32>
    %361 = arith.subf %359, %360 : vector<8x128xf32>
    %362 = arith.mulf %276, %337 : vector<8x128xf32>
    %363 = arith.mulf %284, %340 : vector<8x128xf32>
    %364 = arith.subf %362, %363 : vector<8x128xf32>
    %365 = arith.mulf %278, %340 : vector<8x128xf32>
    %366 = arith.mulf %286, %343 : vector<8x128xf32>
    %367 = arith.subf %365, %366 : vector<8x128xf32>
    %c56 = arith.constant 56 : index
    %368 = arith.index_cast %1 : i32 to index
    %369 = vector.load %arg4[%c56, %368] : memref<432x128xf32, #tpu.memory_space<vmem>>, vector<8x128xf32>
    tpu.vector_store %arg4[%c56, %368], %346 {strides = array<i32>} : memref<432x128xf32, #tpu.memory_space<vmem>>, vector<8x128xf32>,
    %c104 = arith.constant 104 : index
    %370 = arith.index_cast %1 : i32 to index
    %371 = vector.load %arg4[%c104, %370] : memref<432x128xf32, #tpu.memory_space<vmem>>, vector<8x128xf32>
    tpu.vector_store %arg4[%c104, %370], %349 {strides = array<i32>} : memref<432x128xf32, #tpu.memory_space<vmem>>, vector<8x128xf32>,
    %c152 = arith.constant 152 : index
    %372 = arith.index_cast %1 : i32 to index
    %373 = vector.load %arg4[%c152, %372] : memref<432x128xf32, #tpu.memory_space<vmem>>, vector<8x128xf32>
    tpu.vector_store %arg4[%c152, %372], %352 {strides = array<i32>} : memref<432x128xf32, #tpu.memory_space<vmem>>, vector<8x128xf32>,
    %c200 = arith.constant 200 : index
    %374 = arith.index_cast %1 : i32 to index
    %375 = vector.load %arg4[%c200, %374] : memref<432x128xf32, #tpu.memory_space<vmem>>, vector<8x128xf32>
    tpu.vector_store %arg4[%c200, %374], %355 {strides = array<i32>} : memref<432x128xf32, #tpu.memory_space<vmem>>, vector<8x128xf32>,
    %c248 = arith.constant 248 : index
    %376 = arith.index_cast %1 : i32 to index
    %377 = vector.load %arg4[%c248, %376] : memref<432x128xf32, #tpu.memory_space<vmem>>, vector<8x128xf32>
    tpu.vector_store %arg4[%c248, %376], %358 {strides = array<i32>} : memref<432x128xf32, #tpu.memory_space<vmem>>, vector<8x128xf32>,
    %c296 = arith.constant 296 : index
    %378 = arith.index_cast %1 : i32 to index
    %379 = vector.load %arg4[%c296, %378] : memref<432x128xf32, #tpu.memory_space<vmem>>, vector<8x128xf32>
    tpu.vector_store %arg4[%c296, %378], %361 {strides = array<i32>} : memref<432x128xf32, #tpu.memory_space<vmem>>, vector<8x128xf32>,
    %c344 = arith.constant 344 : index
    %380 = arith.index_cast %1 : i32 to index
    %381 = vector.load %arg4[%c344, %380] : memref<432x128xf32, #tpu.memory_space<vmem>>, vector<8x128xf32>
    tpu.vector_store %arg4[%c344, %380], %364 {strides = array<i32>} : memref<432x128xf32, #tpu.memory_space<vmem>>, vector<8x128xf32>,
    %c392 = arith.constant 392 : index
    %382 = arith.index_cast %1 : i32 to index
    %383 = vector.load %arg4[%c392, %382] : memref<432x128xf32, #tpu.memory_space<vmem>>, vector<8x128xf32>
    tpu.vector_store %arg4[%c392, %382], %367 {strides = array<i32>} : memref<432x128xf32, #tpu.memory_space<vmem>>, vector<8x128xf32>,
    %c16 = arith.constant 16 : index
    %384 = arith.index_cast %1 : i32 to index
    %385 = vector.load %arg1[%c16, %384] : memref<48x128xf32, #tpu.memory_space<vmem>>, vector<8x128xf32>
    %cst_53 = arith.constant 0.000000e+00 : f32
    %386 = vector.broadcast %cst_53 : f32 to vector<8x128xf32>
    %387 = arith.subf %386, %385 : vector<8x128xf32>
    %388 = math.exp %387 : vector<8x128xf32>
    %cst_54 = arith.constant 1.000000e+00 : f32
    %389 = vector.broadcast %cst_54 : f32 to vector<8x128xf32>
    %390 = arith.addf %389, %388 : vector<8x128xf32>
    %391 = tpu.reciprocal %390 {approx = true} : vector<8x128xf32> -> vector<8x128xf32>
    %392 = arith.mulf %385, %391 : vector<8x128xf32>
    %c16_55 = arith.constant 16 : index
    %393 = arith.index_cast %1 : i32 to index
    %394 = vector.load %arg4[%c16_55, %393] : memref<432x128xf32, #tpu.memory_space<vmem>>, vector<8x128xf32>
    tpu.vector_store %arg4[%c16_55, %393], %392 {strides = array<i32>} : memref<432x128xf32, #tpu.memory_space<vmem>>, vector<8x128xf32>,
    %cst_56 = arith.constant -2.200000e+00 : f32
    %395 = vector.broadcast %cst_56 : f32 to vector<8x128xf32>
    %396 = arith.cmpf oge, %385, %395 : vector<8x128xf32>
    %397 = arith.extui %396 : vector<8x128xi1> to vector<8x128xi32>
    %398 = arith.sitofp %397 : vector<8x128xi32> to vector<8x128xf32>
    %cst_57 = arith.constant -1.800000e+00 : f32
    %399 = vector.broadcast %cst_57 : f32 to vector<8x128xf32>
    %400 = arith.cmpf oge, %385, %399 : vector<8x128xf32>
    %401 = arith.extui %400 : vector<8x128xi1> to vector<8x128xi32>
    %402 = arith.sitofp %401 : vector<8x128xi32> to vector<8x128xf32>
    %cst_58 = arith.constant -1.400000e+00 : f32
    %403 = vector.broadcast %cst_58 : f32 to vector<8x128xf32>
    %404 = arith.cmpf oge, %385, %403 : vector<8x128xf32>
    %405 = arith.extui %404 : vector<8x128xi1> to vector<8x128xi32>
    %406 = arith.sitofp %405 : vector<8x128xi32> to vector<8x128xf32>
    %cst_59 = arith.constant -1.000000e+00 : f32
    %407 = vector.broadcast %cst_59 : f32 to vector<8x128xf32>
    %408 = arith.cmpf oge, %385, %407 : vector<8x128xf32>
    %409 = arith.extui %408 : vector<8x128xi1> to vector<8x128xi32>
    %410 = arith.sitofp %409 : vector<8x128xi32> to vector<8x128xf32>
    %cst_60 = arith.constant -6.000000e-01 : f32
    %411 = vector.broadcast %cst_60 : f32 to vector<8x128xf32>
    %412 = arith.cmpf oge, %385, %411 : vector<8x128xf32>
    %413 = arith.extui %412 : vector<8x128xi1> to vector<8x128xi32>
    %414 = arith.sitofp %413 : vector<8x128xi32> to vector<8x128xf32>
    %cst_61 = arith.constant -2.000000e-01 : f32
    %415 = vector.broadcast %cst_61 : f32 to vector<8x128xf32>
    %416 = arith.cmpf oge, %385, %415 : vector<8x128xf32>
    %417 = arith.extui %416 : vector<8x128xi1> to vector<8x128xi32>
    %418 = arith.sitofp %417 : vector<8x128xi32> to vector<8x128xf32>
    %cst_62 = arith.constant 2.000000e-01 : f32
    %419 = vector.broadcast %cst_62 : f32 to vector<8x128xf32>
    %420 = arith.cmpf oge, %385, %419 : vector<8x128xf32>
    %421 = arith.extui %420 : vector<8x128xi1> to vector<8x128xi32>
    %422 = arith.sitofp %421 : vector<8x128xi32> to vector<8x128xf32>
    %cst_63 = arith.constant 6.000000e-01 : f32
    %423 = vector.broadcast %cst_63 : f32 to vector<8x128xf32>
    %424 = arith.cmpf oge, %385, %423 : vector<8x128xf32>
    %425 = arith.extui %424 : vector<8x128xi1> to vector<8x128xi32>
    %426 = arith.sitofp %425 : vector<8x128xi32> to vector<8x128xf32>
    %cst_64 = arith.constant 1.000000e+00 : f32
    %427 = vector.broadcast %cst_64 : f32 to vector<8x128xf32>
    %428 = arith.cmpf oge, %385, %427 : vector<8x128xf32>
    %429 = arith.extui %428 : vector<8x128xi1> to vector<8x128xi32>
    %430 = arith.sitofp %429 : vector<8x128xi32> to vector<8x128xf32>
    %cst_65 = arith.constant 1.400000e+00 : f32
    %431 = vector.broadcast %cst_65 : f32 to vector<8x128xf32>
    %432 = arith.cmpf oge, %385, %431 : vector<8x128xf32>
    %433 = arith.extui %432 : vector<8x128xi1> to vector<8x128xi32>
    %434 = arith.sitofp %433 : vector<8x128xi32> to vector<8x128xf32>
    %cst_66 = arith.constant 1.800000e+00 : f32
    %435 = vector.broadcast %cst_66 : f32 to vector<8x128xf32>
    %436 = arith.cmpf oge, %385, %435 : vector<8x128xf32>
    %437 = arith.extui %436 : vector<8x128xi1> to vector<8x128xi32>
    %438 = arith.sitofp %437 : vector<8x128xi32> to vector<8x128xf32>
    %cst_67 = arith.constant 2.200000e+00 : f32
    %439 = vector.broadcast %cst_67 : f32 to vector<8x128xf32>
    %440 = arith.cmpf oge, %385, %439 : vector<8x128xf32>
    %441 = arith.extui %440 : vector<8x128xi1> to vector<8x128xi32>
    %442 = arith.sitofp %441 : vector<8x128xi32> to vector<8x128xf32>
    %443 = arith.subf %398, %402 : vector<8x128xf32>
    %444 = arith.subf %402, %406 : vector<8x128xf32>
    %445 = arith.subf %406, %410 : vector<8x128xf32>
    %446 = arith.subf %410, %414 : vector<8x128xf32>
    %447 = arith.subf %414, %418 : vector<8x128xf32>
    %448 = arith.subf %418, %422 : vector<8x128xf32>
    %449 = arith.subf %422, %426 : vector<8x128xf32>
    %450 = arith.subf %426, %430 : vector<8x128xf32>
    %451 = arith.subf %430, %434 : vector<8x128xf32>
    %452 = arith.subf %434, %438 : vector<8x128xf32>
    %453 = arith.subf %438, %442 : vector<8x128xf32>
    %cst_68 = arith.constant -2.200000e+00 : f32
    %454 = vector.broadcast %cst_68 : f32 to vector<8x128xf32>
    %455 = arith.subf %385, %454 : vector<8x128xf32>
    %cst_69 = arith.constant -1.800000e+00 : f32
    %456 = vector.broadcast %cst_69 : f32 to vector<8x128xf32>
    %457 = arith.subf %385, %456 : vector<8x128xf32>
    %cst_70 = arith.constant -1.400000e+00 : f32
    %458 = vector.broadcast %cst_70 : f32 to vector<8x128xf32>
    %459 = arith.subf %385, %458 : vector<8x128xf32>
    %cst_71 = arith.constant -1.000000e+00 : f32
    %460 = vector.broadcast %cst_71 : f32 to vector<8x128xf32>
    %461 = arith.subf %385, %460 : vector<8x128xf32>
    %cst_72 = arith.constant -6.000000e-01 : f32
    %462 = vector.broadcast %cst_72 : f32 to vector<8x128xf32>
    %463 = arith.subf %385, %462 : vector<8x128xf32>
    %cst_73 = arith.constant -2.000000e-01 : f32
    %464 = vector.broadcast %cst_73 : f32 to vector<8x128xf32>
    %465 = arith.subf %385, %464 : vector<8x128xf32>
    %cst_74 = arith.constant 2.000000e-01 : f32
    %466 = vector.broadcast %cst_74 : f32 to vector<8x128xf32>
    %467 = arith.subf %385, %466 : vector<8x128xf32>
    %cst_75 = arith.constant 6.000000e-01 : f32
    %468 = vector.broadcast %cst_75 : f32 to vector<8x128xf32>
    %469 = arith.subf %385, %468 : vector<8x128xf32>
    %cst_76 = arith.constant 1.000000e+00 : f32
    %470 = vector.broadcast %cst_76 : f32 to vector<8x128xf32>
    %471 = arith.subf %385, %470 : vector<8x128xf32>
    %cst_77 = arith.constant 1.400000e+00 : f32
    %472 = vector.broadcast %cst_77 : f32 to vector<8x128xf32>
    %473 = arith.subf %385, %472 : vector<8x128xf32>
    %cst_78 = arith.constant 1.800000e+00 : f32
    %474 = vector.broadcast %cst_78 : f32 to vector<8x128xf32>
    %475 = arith.subf %385, %474 : vector<8x128xf32>
    %cst_79 = arith.constant 2.200000e+00 : f32
    %476 = vector.broadcast %cst_79 : f32 to vector<8x128xf32>
    %477 = arith.subf %385, %476 : vector<8x128xf32>
    %478 = arith.mulf %455, %443 : vector<8x128xf32>
    %479 = arith.mulf %459, %444 : vector<8x128xf32>
    %480 = arith.subf %478, %479 : vector<8x128xf32>
    %481 = arith.mulf %457, %444 : vector<8x128xf32>
    %482 = arith.mulf %461, %445 : vector<8x128xf32>
    %483 = arith.subf %481, %482 : vector<8x128xf32>
    %484 = arith.mulf %459, %445 : vector<8x128xf32>
    %485 = arith.mulf %463, %446 : vector<8x128xf32>
    %486 = arith.subf %484, %485 : vector<8x128xf32>
    %487 = arith.mulf %461, %446 : vector<8x128xf32>
    %488 = arith.mulf %465, %447 : vector<8x128xf32>
    %489 = arith.subf %487, %488 : vector<8x128xf32>
    %490 = arith.mulf %463, %447 : vector<8x128xf32>
    %491 = arith.mulf %467, %448 : vector<8x128xf32>
    %492 = arith.subf %490, %491 : vector<8x128xf32>
    %493 = arith.mulf %465, %448 : vector<8x128xf32>
    %494 = arith.mulf %469, %449 : vector<8x128xf32>
    %495 = arith.subf %493, %494 : vector<8x128xf32>
    %496 = arith.mulf %467, %449 : vector<8x128xf32>
    %497 = arith.mulf %471, %450 : vector<8x128xf32>
    %498 = arith.subf %496, %497 : vector<8x128xf32>
    %499 = arith.mulf %469, %450 : vector<8x128xf32>
    %500 = arith.mulf %473, %451 : vector<8x128xf32>
    %501 = arith.subf %499, %500 : vector<8x128xf32>
    %502 = arith.mulf %471, %451 : vector<8x128xf32>
    %503 = arith.mulf %475, %452 : vector<8x128xf32>
    %504 = arith.subf %502, %503 : vector<8x128xf32>
    %505 = arith.mulf %473, %452 : vector<8x128xf32>
    %506 = arith.mulf %477, %453 : vector<8x128xf32>
    %507 = arith.subf %505, %506 : vector<8x128xf32>
    %508 = arith.mulf %455, %480 : vector<8x128xf32>
    %509 = arith.mulf %461, %483 : vector<8x128xf32>
    %510 = arith.subf %508, %509 : vector<8x128xf32>
    %511 = arith.mulf %457, %483 : vector<8x128xf32>
    %512 = arith.mulf %463, %486 : vector<8x128xf32>
    %513 = arith.subf %511, %512 : vector<8x128xf32>
    %514 = arith.mulf %459, %486 : vector<8x128xf32>
    %515 = arith.mulf %465, %489 : vector<8x128xf32>
    %516 = arith.subf %514, %515 : vector<8x128xf32>
    %517 = arith.mulf %461, %489 : vector<8x128xf32>
    %518 = arith.mulf %467, %492 : vector<8x128xf32>
    %519 = arith.subf %517, %518 : vector<8x128xf32>
    %520 = arith.mulf %463, %492 : vector<8x128xf32>
    %521 = arith.mulf %469, %495 : vector<8x128xf32>
    %522 = arith.subf %520, %521 : vector<8x128xf32>
    %523 = arith.mulf %465, %495 : vector<8x128xf32>
    %524 = arith.mulf %471, %498 : vector<8x128xf32>
    %525 = arith.subf %523, %524 : vector<8x128xf32>
    %526 = arith.mulf %467, %498 : vector<8x128xf32>
    %527 = arith.mulf %473, %501 : vector<8x128xf32>
    %528 = arith.subf %526, %527 : vector<8x128xf32>
    %529 = arith.mulf %469, %501 : vector<8x128xf32>
    %530 = arith.mulf %475, %504 : vector<8x128xf32>
    %531 = arith.subf %529, %530 : vector<8x128xf32>
    %532 = arith.mulf %471, %504 : vector<8x128xf32>
    %533 = arith.mulf %477, %507 : vector<8x128xf32>
    %534 = arith.subf %532, %533 : vector<8x128xf32>
    %535 = arith.mulf %455, %510 : vector<8x128xf32>
    %536 = arith.mulf %463, %513 : vector<8x128xf32>
    %537 = arith.subf %535, %536 : vector<8x128xf32>
    %538 = arith.mulf %457, %513 : vector<8x128xf32>
    %539 = arith.mulf %465, %516 : vector<8x128xf32>
    %540 = arith.subf %538, %539 : vector<8x128xf32>
    %541 = arith.mulf %459, %516 : vector<8x128xf32>
    %542 = arith.mulf %467, %519 : vector<8x128xf32>
    %543 = arith.subf %541, %542 : vector<8x128xf32>
    %544 = arith.mulf %461, %519 : vector<8x128xf32>
    %545 = arith.mulf %469, %522 : vector<8x128xf32>
    %546 = arith.subf %544, %545 : vector<8x128xf32>
    %547 = arith.mulf %463, %522 : vector<8x128xf32>
    %548 = arith.mulf %471, %525 : vector<8x128xf32>
    %549 = arith.subf %547, %548 : vector<8x128xf32>
    %550 = arith.mulf %465, %525 : vector<8x128xf32>
    %551 = arith.mulf %473, %528 : vector<8x128xf32>
    %552 = arith.subf %550, %551 : vector<8x128xf32>
    %553 = arith.mulf %467, %528 : vector<8x128xf32>
    %554 = arith.mulf %475, %531 : vector<8x128xf32>
    %555 = arith.subf %553, %554 : vector<8x128xf32>
    %556 = arith.mulf %469, %531 : vector<8x128xf32>
    %557 = arith.mulf %477, %534 : vector<8x128xf32>
    %558 = arith.subf %556, %557 : vector<8x128xf32>
    %c64 = arith.constant 64 : index
    %559 = arith.index_cast %1 : i32 to index
    %560 = vector.load %arg4[%c64, %559] : memref<432x128xf32, #tpu.memory_space<vmem>>, vector<8x128xf32>
    tpu.vector_store %arg4[%c64, %559], %537 {strides = array<i32>} : memref<432x128xf32, #tpu.memory_space<vmem>>, vector<8x128xf32>,
    %c112 = arith.constant 112 : index
    %561 = arith.index_cast %1 : i32 to index
    %562 = vector.load %arg4[%c112, %561] : memref<432x128xf32, #tpu.memory_space<vmem>>, vector<8x128xf32>
    tpu.vector_store %arg4[%c112, %561], %540 {strides = array<i32>} : memref<432x128xf32, #tpu.memory_space<vmem>>, vector<8x128xf32>,
    %c160 = arith.constant 160 : index
    %563 = arith.index_cast %1 : i32 to index
    %564 = vector.load %arg4[%c160, %563] : memref<432x128xf32, #tpu.memory_space<vmem>>, vector<8x128xf32>
    tpu.vector_store %arg4[%c160, %563], %543 {strides = array<i32>} : memref<432x128xf32, #tpu.memory_space<vmem>>, vector<8x128xf32>,
    %c208 = arith.constant 208 : index
    %565 = arith.index_cast %1 : i32 to index
    %566 = vector.load %arg4[%c208, %565] : memref<432x128xf32, #tpu.memory_space<vmem>>, vector<8x128xf32>
    tpu.vector_store %arg4[%c208, %565], %546 {strides = array<i32>} : memref<432x128xf32, #tpu.memory_space<vmem>>, vector<8x128xf32>,
    %c256 = arith.constant 256 : index
    %567 = arith.index_cast %1 : i32 to index
    %568 = vector.load %arg4[%c256, %567] : memref<432x128xf32, #tpu.memory_space<vmem>>, vector<8x128xf32>
    tpu.vector_store %arg4[%c256, %567], %549 {strides = array<i32>} : memref<432x128xf32, #tpu.memory_space<vmem>>, vector<8x128xf32>,
    %c304 = arith.constant 304 : index
    %569 = arith.index_cast %1 : i32 to index
    %570 = vector.load %arg4[%c304, %569] : memref<432x128xf32, #tpu.memory_space<vmem>>, vector<8x128xf32>
    tpu.vector_store %arg4[%c304, %569], %552 {strides = array<i32>} : memref<432x128xf32, #tpu.memory_space<vmem>>, vector<8x128xf32>,
    %c352 = arith.constant 352 : index
    %571 = arith.index_cast %1 : i32 to index
    %572 = vector.load %arg4[%c352, %571] : memref<432x128xf32, #tpu.memory_space<vmem>>, vector<8x128xf32>
    tpu.vector_store %arg4[%c352, %571], %555 {strides = array<i32>} : memref<432x128xf32, #tpu.memory_space<vmem>>, vector<8x128xf32>,
    %c400 = arith.constant 400 : index
    %573 = arith.index_cast %1 : i32 to index
    %574 = vector.load %arg4[%c400, %573] : memref<432x128xf32, #tpu.memory_space<vmem>>, vector<8x128xf32>
    tpu.vector_store %arg4[%c400, %573], %558 {strides = array<i32>} : memref<432x128xf32, #tpu.memory_space<vmem>>, vector<8x128xf32>,
    %c24 = arith.constant 24 : index
    %575 = arith.index_cast %1 : i32 to index
    %576 = vector.load %arg1[%c24, %575] : memref<48x128xf32, #tpu.memory_space<vmem>>, vector<8x128xf32>
    %cst_80 = arith.constant 0.000000e+00 : f32
    %577 = vector.broadcast %cst_80 : f32 to vector<8x128xf32>
    %578 = arith.subf %577, %576 : vector<8x128xf32>
    %579 = math.exp %578 : vector<8x128xf32>
    %cst_81 = arith.constant 1.000000e+00 : f32
    %580 = vector.broadcast %cst_81 : f32 to vector<8x128xf32>
    %581 = arith.addf %580, %579 : vector<8x128xf32>
    %582 = tpu.reciprocal %581 {approx = true} : vector<8x128xf32> -> vector<8x128xf32>
    %583 = arith.mulf %576, %582 : vector<8x128xf32>
    %c24_82 = arith.constant 24 : index
    %584 = arith.index_cast %1 : i32 to index
    %585 = vector.load %arg4[%c24_82, %584] : memref<432x128xf32, #tpu.memory_space<vmem>>, vector<8x128xf32>
    tpu.vector_store %arg4[%c24_82, %584], %583 {strides = array<i32>} : memref<432x128xf32, #tpu.memory_space<vmem>>, vector<8x128xf32>,
    %cst_83 = arith.constant -2.200000e+00 : f32
    %586 = vector.broadcast %cst_83 : f32 to vector<8x128xf32>
    %587 = arith.cmpf oge, %576, %586 : vector<8x128xf32>
    %588 = arith.extui %587 : vector<8x128xi1> to vector<8x128xi32>
    %589 = arith.sitofp %588 : vector<8x128xi32> to vector<8x128xf32>
    %cst_84 = arith.constant -1.800000e+00 : f32
    %590 = vector.broadcast %cst_84 : f32 to vector<8x128xf32>
    %591 = arith.cmpf oge, %576, %590 : vector<8x128xf32>
    %592 = arith.extui %591 : vector<8x128xi1> to vector<8x128xi32>
    %593 = arith.sitofp %592 : vector<8x128xi32> to vector<8x128xf32>
    %cst_85 = arith.constant -1.400000e+00 : f32
    %594 = vector.broadcast %cst_85 : f32 to vector<8x128xf32>
    %595 = arith.cmpf oge, %576, %594 : vector<8x128xf32>
    %596 = arith.extui %595 : vector<8x128xi1> to vector<8x128xi32>
    %597 = arith.sitofp %596 : vector<8x128xi32> to vector<8x128xf32>
    %cst_86 = arith.constant -1.000000e+00 : f32
    %598 = vector.broadcast %cst_86 : f32 to vector<8x128xf32>
    %599 = arith.cmpf oge, %576, %598 : vector<8x128xf32>
    %600 = arith.extui %599 : vector<8x128xi1> to vector<8x128xi32>
    %601 = arith.sitofp %600 : vector<8x128xi32> to vector<8x128xf32>
    %cst_87 = arith.constant -6.000000e-01 : f32
    %602 = vector.broadcast %cst_87 : f32 to vector<8x128xf32>
    %603 = arith.cmpf oge, %576, %602 : vector<8x128xf32>
    %604 = arith.extui %603 : vector<8x128xi1> to vector<8x128xi32>
    %605 = arith.sitofp %604 : vector<8x128xi32> to vector<8x128xf32>
    %cst_88 = arith.constant -2.000000e-01 : f32
    %606 = vector.broadcast %cst_88 : f32 to vector<8x128xf32>
    %607 = arith.cmpf oge, %576, %606 : vector<8x128xf32>
    %608 = arith.extui %607 : vector<8x128xi1> to vector<8x128xi32>
    %609 = arith.sitofp %608 : vector<8x128xi32> to vector<8x128xf32>
    %cst_89 = arith.constant 2.000000e-01 : f32
    %610 = vector.broadcast %cst_89 : f32 to vector<8x128xf32>
    %611 = arith.cmpf oge, %576, %610 : vector<8x128xf32>
    %612 = arith.extui %611 : vector<8x128xi1> to vector<8x128xi32>
    %613 = arith.sitofp %612 : vector<8x128xi32> to vector<8x128xf32>
    %cst_90 = arith.constant 6.000000e-01 : f32
    %614 = vector.broadcast %cst_90 : f32 to vector<8x128xf32>
    %615 = arith.cmpf oge, %576, %614 : vector<8x128xf32>
    %616 = arith.extui %615 : vector<8x128xi1> to vector<8x128xi32>
    %617 = arith.sitofp %616 : vector<8x128xi32> to vector<8x128xf32>
    %cst_91 = arith.constant 1.000000e+00 : f32
    %618 = vector.broadcast %cst_91 : f32 to vector<8x128xf32>
    %619 = arith.cmpf oge, %576, %618 : vector<8x128xf32>
    %620 = arith.extui %619 : vector<8x128xi1> to vector<8x128xi32>
    %621 = arith.sitofp %620 : vector<8x128xi32> to vector<8x128xf32>
    %cst_92 = arith.constant 1.400000e+00 : f32
    %622 = vector.broadcast %cst_92 : f32 to vector<8x128xf32>
    %623 = arith.cmpf oge, %576, %622 : vector<8x128xf32>
    %624 = arith.extui %623 : vector<8x128xi1> to vector<8x128xi32>
    %625 = arith.sitofp %624 : vector<8x128xi32> to vector<8x128xf32>
    %cst_93 = arith.constant 1.800000e+00 : f32
    %626 = vector.broadcast %cst_93 : f32 to vector<8x128xf32>
    %627 = arith.cmpf oge, %576, %626 : vector<8x128xf32>
    %628 = arith.extui %627 : vector<8x128xi1> to vector<8x128xi32>
    %629 = arith.sitofp %628 : vector<8x128xi32> to vector<8x128xf32>
    %cst_94 = arith.constant 2.200000e+00 : f32
    %630 = vector.broadcast %cst_94 : f32 to vector<8x128xf32>
    %631 = arith.cmpf oge, %576, %630 : vector<8x128xf32>
    %632 = arith.extui %631 : vector<8x128xi1> to vector<8x128xi32>
    %633 = arith.sitofp %632 : vector<8x128xi32> to vector<8x128xf32>
    %634 = arith.subf %589, %593 : vector<8x128xf32>
    %635 = arith.subf %593, %597 : vector<8x128xf32>
    %636 = arith.subf %597, %601 : vector<8x128xf32>
    %637 = arith.subf %601, %605 : vector<8x128xf32>
    %638 = arith.subf %605, %609 : vector<8x128xf32>
    %639 = arith.subf %609, %613 : vector<8x128xf32>
    %640 = arith.subf %613, %617 : vector<8x128xf32>
    %641 = arith.subf %617, %621 : vector<8x128xf32>
    %642 = arith.subf %621, %625 : vector<8x128xf32>
    %643 = arith.subf %625, %629 : vector<8x128xf32>
    %644 = arith.subf %629, %633 : vector<8x128xf32>
    %cst_95 = arith.constant -2.200000e+00 : f32
    %645 = vector.broadcast %cst_95 : f32 to vector<8x128xf32>
    %646 = arith.subf %576, %645 : vector<8x128xf32>
    %cst_96 = arith.constant -1.800000e+00 : f32
    %647 = vector.broadcast %cst_96 : f32 to vector<8x128xf32>
    %648 = arith.subf %576, %647 : vector<8x128xf32>
    %cst_97 = arith.constant -1.400000e+00 : f32
    %649 = vector.broadcast %cst_97 : f32 to vector<8x128xf32>
    %650 = arith.subf %576, %649 : vector<8x128xf32>
    %cst_98 = arith.constant -1.000000e+00 : f32
    %651 = vector.broadcast %cst_98 : f32 to vector<8x128xf32>
    %652 = arith.subf %576, %651 : vector<8x128xf32>
    %cst_99 = arith.constant -6.000000e-01 : f32
    %653 = vector.broadcast %cst_99 : f32 to vector<8x128xf32>
    %654 = arith.subf %576, %653 : vector<8x128xf32>
    %cst_100 = arith.constant -2.000000e-01 : f32
    %655 = vector.broadcast %cst_100 : f32 to vector<8x128xf32>
    %656 = arith.subf %576, %655 : vector<8x128xf32>
    %cst_101 = arith.constant 2.000000e-01 : f32
    %657 = vector.broadcast %cst_101 : f32 to vector<8x128xf32>
    %658 = arith.subf %576, %657 : vector<8x128xf32>
    %cst_102 = arith.constant 6.000000e-01 : f32
    %659 = vector.broadcast %cst_102 : f32 to vector<8x128xf32>
    %660 = arith.subf %576, %659 : vector<8x128xf32>
    %cst_103 = arith.constant 1.000000e+00 : f32
    %661 = vector.broadcast %cst_103 : f32 to vector<8x128xf32>
    %662 = arith.subf %576, %661 : vector<8x128xf32>
    %cst_104 = arith.constant 1.400000e+00 : f32
    %663 = vector.broadcast %cst_104 : f32 to vector<8x128xf32>
    %664 = arith.subf %576, %663 : vector<8x128xf32>
    %cst_105 = arith.constant 1.800000e+00 : f32
    %665 = vector.broadcast %cst_105 : f32 to vector<8x128xf32>
    %666 = arith.subf %576, %665 : vector<8x128xf32>
    %cst_106 = arith.constant 2.200000e+00 : f32
    %667 = vector.broadcast %cst_106 : f32 to vector<8x128xf32>
    %668 = arith.subf %576, %667 : vector<8x128xf32>
    %669 = arith.mulf %646, %634 : vector<8x128xf32>
    %670 = arith.mulf %650, %635 : vector<8x128xf32>
    %671 = arith.subf %669, %670 : vector<8x128xf32>
    %672 = arith.mulf %648, %635 : vector<8x128xf32>
    %673 = arith.mulf %652, %636 : vector<8x128xf32>
    %674 = arith.subf %672, %673 : vector<8x128xf32>
    %675 = arith.mulf %650, %636 : vector<8x128xf32>
    %676 = arith.mulf %654, %637 : vector<8x128xf32>
    %677 = arith.subf %675, %676 : vector<8x128xf32>
    %678 = arith.mulf %652, %637 : vector<8x128xf32>
    %679 = arith.mulf %656, %638 : vector<8x128xf32>
    %680 = arith.subf %678, %679 : vector<8x128xf32>
    %681 = arith.mulf %654, %638 : vector<8x128xf32>
    %682 = arith.mulf %658, %639 : vector<8x128xf32>
    %683 = arith.subf %681, %682 : vector<8x128xf32>
    %684 = arith.mulf %656, %639 : vector<8x128xf32>
    %685 = arith.mulf %660, %640 : vector<8x128xf32>
    %686 = arith.subf %684, %685 : vector<8x128xf32>
    %687 = arith.mulf %658, %640 : vector<8x128xf32>
    %688 = arith.mulf %662, %641 : vector<8x128xf32>
    %689 = arith.subf %687, %688 : vector<8x128xf32>
    %690 = arith.mulf %660, %641 : vector<8x128xf32>
    %691 = arith.mulf %664, %642 : vector<8x128xf32>
    %692 = arith.subf %690, %691 : vector<8x128xf32>
    %693 = arith.mulf %662, %642 : vector<8x128xf32>
    %694 = arith.mulf %666, %643 : vector<8x128xf32>
    %695 = arith.subf %693, %694 : vector<8x128xf32>
    %696 = arith.mulf %664, %643 : vector<8x128xf32>
    %697 = arith.mulf %668, %644 : vector<8x128xf32>
    %698 = arith.subf %696, %697 : vector<8x128xf32>
    %699 = arith.mulf %646, %671 : vector<8x128xf32>
    %700 = arith.mulf %652, %674 : vector<8x128xf32>
    %701 = arith.subf %699, %700 : vector<8x128xf32>
    %702 = arith.mulf %648, %674 : vector<8x128xf32>
    %703 = arith.mulf %654, %677 : vector<8x128xf32>
    %704 = arith.subf %702, %703 : vector<8x128xf32>
    %705 = arith.mulf %650, %677 : vector<8x128xf32>
    %706 = arith.mulf %656, %680 : vector<8x128xf32>
    %707 = arith.subf %705, %706 : vector<8x128xf32>
    %708 = arith.mulf %652, %680 : vector<8x128xf32>
    %709 = arith.mulf %658, %683 : vector<8x128xf32>
    %710 = arith.subf %708, %709 : vector<8x128xf32>
    %711 = arith.mulf %654, %683 : vector<8x128xf32>
    %712 = arith.mulf %660, %686 : vector<8x128xf32>
    %713 = arith.subf %711, %712 : vector<8x128xf32>
    %714 = arith.mulf %656, %686 : vector<8x128xf32>
    %715 = arith.mulf %662, %689 : vector<8x128xf32>
    %716 = arith.subf %714, %715 : vector<8x128xf32>
    %717 = arith.mulf %658, %689 : vector<8x128xf32>
    %718 = arith.mulf %664, %692 : vector<8x128xf32>
    %719 = arith.subf %717, %718 : vector<8x128xf32>
    %720 = arith.mulf %660, %692 : vector<8x128xf32>
    %721 = arith.mulf %666, %695 : vector<8x128xf32>
    %722 = arith.subf %720, %721 : vector<8x128xf32>
    %723 = arith.mulf %662, %695 : vector<8x128xf32>
    %724 = arith.mulf %668, %698 : vector<8x128xf32>
    %725 = arith.subf %723, %724 : vector<8x128xf32>
    %726 = arith.mulf %646, %701 : vector<8x128xf32>
    %727 = arith.mulf %654, %704 : vector<8x128xf32>
    %728 = arith.subf %726, %727 : vector<8x128xf32>
    %729 = arith.mulf %648, %704 : vector<8x128xf32>
    %730 = arith.mulf %656, %707 : vector<8x128xf32>
    %731 = arith.subf %729, %730 : vector<8x128xf32>
    %732 = arith.mulf %650, %707 : vector<8x128xf32>
    %733 = arith.mulf %658, %710 : vector<8x128xf32>
    %734 = arith.subf %732, %733 : vector<8x128xf32>
    %735 = arith.mulf %652, %710 : vector<8x128xf32>
    %736 = arith.mulf %660, %713 : vector<8x128xf32>
    %737 = arith.subf %735, %736 : vector<8x128xf32>
    %738 = arith.mulf %654, %713 : vector<8x128xf32>
    %739 = arith.mulf %662, %716 : vector<8x128xf32>
    %740 = arith.subf %738, %739 : vector<8x128xf32>
    %741 = arith.mulf %656, %716 : vector<8x128xf32>
    %742 = arith.mulf %664, %719 : vector<8x128xf32>
    %743 = arith.subf %741, %742 : vector<8x128xf32>
    %744 = arith.mulf %658, %719 : vector<8x128xf32>
    %745 = arith.mulf %666, %722 : vector<8x128xf32>
    %746 = arith.subf %744, %745 : vector<8x128xf32>
    %747 = arith.mulf %660, %722 : vector<8x128xf32>
    %748 = arith.mulf %668, %725 : vector<8x128xf32>
    %749 = arith.subf %747, %748 : vector<8x128xf32>
    %c72 = arith.constant 72 : index
    %750 = arith.index_cast %1 : i32 to index
    %751 = vector.load %arg4[%c72, %750] : memref<432x128xf32, #tpu.memory_space<vmem>>, vector<8x128xf32>
    tpu.vector_store %arg4[%c72, %750], %728 {strides = array<i32>} : memref<432x128xf32, #tpu.memory_space<vmem>>, vector<8x128xf32>,
    %c120 = arith.constant 120 : index
    %752 = arith.index_cast %1 : i32 to index
    %753 = vector.load %arg4[%c120, %752] : memref<432x128xf32, #tpu.memory_space<vmem>>, vector<8x128xf32>
    tpu.vector_store %arg4[%c120, %752], %731 {strides = array<i32>} : memref<432x128xf32, #tpu.memory_space<vmem>>, vector<8x128xf32>,
    %c168 = arith.constant 168 : index
    %754 = arith.index_cast %1 : i32 to index
    %755 = vector.load %arg4[%c168, %754] : memref<432x128xf32, #tpu.memory_space<vmem>>, vector<8x128xf32>
    tpu.vector_store %arg4[%c168, %754], %734 {strides = array<i32>} : memref<432x128xf32, #tpu.memory_space<vmem>>, vector<8x128xf32>,
    %c216 = arith.constant 216 : index
    %756 = arith.index_cast %1 : i32 to index
    %757 = vector.load %arg4[%c216, %756] : memref<432x128xf32, #tpu.memory_space<vmem>>, vector<8x128xf32>
    tpu.vector_store %arg4[%c216, %756], %737 {strides = array<i32>} : memref<432x128xf32, #tpu.memory_space<vmem>>, vector<8x128xf32>,
    %c264 = arith.constant 264 : index
    %758 = arith.index_cast %1 : i32 to index
    %759 = vector.load %arg4[%c264, %758] : memref<432x128xf32, #tpu.memory_space<vmem>>, vector<8x128xf32>
    tpu.vector_store %arg4[%c264, %758], %740 {strides = array<i32>} : memref<432x128xf32, #tpu.memory_space<vmem>>, vector<8x128xf32>,
    %c312 = arith.constant 312 : index
    %760 = arith.index_cast %1 : i32 to index
    %761 = vector.load %arg4[%c312, %760] : memref<432x128xf32, #tpu.memory_space<vmem>>, vector<8x128xf32>
    tpu.vector_store %arg4[%c312, %760], %743 {strides = array<i32>} : memref<432x128xf32, #tpu.memory_space<vmem>>, vector<8x128xf32>,
    %c360 = arith.constant 360 : index
    %762 = arith.index_cast %1 : i32 to index
    %763 = vector.load %arg4[%c360, %762] : memref<432x128xf32, #tpu.memory_space<vmem>>, vector<8x128xf32>
    tpu.vector_store %arg4[%c360, %762], %746 {strides = array<i32>} : memref<432x128xf32, #tpu.memory_space<vmem>>, vector<8x128xf32>,
    %c408 = arith.constant 408 : index
    %764 = arith.index_cast %1 : i32 to index
    %765 = vector.load %arg4[%c408, %764] : memref<432x128xf32, #tpu.memory_space<vmem>>, vector<8x128xf32>
    tpu.vector_store %arg4[%c408, %764], %749 {strides = array<i32>} : memref<432x128xf32, #tpu.memory_space<vmem>>, vector<8x128xf32>,
    %c32 = arith.constant 32 : index
    %766 = arith.index_cast %1 : i32 to index
    %767 = vector.load %arg1[%c32, %766] : memref<48x128xf32, #tpu.memory_space<vmem>>, vector<8x128xf32>
    %cst_107 = arith.constant 0.000000e+00 : f32
    %768 = vector.broadcast %cst_107 : f32 to vector<8x128xf32>
    %769 = arith.subf %768, %767 : vector<8x128xf32>
    %770 = math.exp %769 : vector<8x128xf32>
    %cst_108 = arith.constant 1.000000e+00 : f32
    %771 = vector.broadcast %cst_108 : f32 to vector<8x128xf32>
    %772 = arith.addf %771, %770 : vector<8x128xf32>
    %773 = tpu.reciprocal %772 {approx = true} : vector<8x128xf32> -> vector<8x128xf32>
    %774 = arith.mulf %767, %773 : vector<8x128xf32>
    %c32_109 = arith.constant 32 : index
    %775 = arith.index_cast %1 : i32 to index
    %776 = vector.load %arg4[%c32_109, %775] : memref<432x128xf32, #tpu.memory_space<vmem>>, vector<8x128xf32>
    tpu.vector_store %arg4[%c32_109, %775], %774 {strides = array<i32>} : memref<432x128xf32, #tpu.memory_space<vmem>>, vector<8x128xf32>,
    %cst_110 = arith.constant -2.200000e+00 : f32
    %777 = vector.broadcast %cst_110 : f32 to vector<8x128xf32>
    %778 = arith.cmpf oge, %767, %777 : vector<8x128xf32>
    %779 = arith.extui %778 : vector<8x128xi1> to vector<8x128xi32>
    %780 = arith.sitofp %779 : vector<8x128xi32> to vector<8x128xf32>
    %cst_111 = arith.constant -1.800000e+00 : f32
    %781 = vector.broadcast %cst_111 : f32 to vector<8x128xf32>
    %782 = arith.cmpf oge, %767, %781 : vector<8x128xf32>
    %783 = arith.extui %782 : vector<8x128xi1> to vector<8x128xi32>
    %784 = arith.sitofp %783 : vector<8x128xi32> to vector<8x128xf32>
    %cst_112 = arith.constant -1.400000e+00 : f32
    %785 = vector.broadcast %cst_112 : f32 to vector<8x128xf32>
    %786 = arith.cmpf oge, %767, %785 : vector<8x128xf32>
    %787 = arith.extui %786 : vector<8x128xi1> to vector<8x128xi32>
    %788 = arith.sitofp %787 : vector<8x128xi32> to vector<8x128xf32>
    %cst_113 = arith.constant -1.000000e+00 : f32
    %789 = vector.broadcast %cst_113 : f32 to vector<8x128xf32>
    %790 = arith.cmpf oge, %767, %789 : vector<8x128xf32>
    %791 = arith.extui %790 : vector<8x128xi1> to vector<8x128xi32>
    %792 = arith.sitofp %791 : vector<8x128xi32> to vector<8x128xf32>
    %cst_114 = arith.constant -6.000000e-01 : f32
    %793 = vector.broadcast %cst_114 : f32 to vector<8x128xf32>
    %794 = arith.cmpf oge, %767, %793 : vector<8x128xf32>
    %795 = arith.extui %794 : vector<8x128xi1> to vector<8x128xi32>
    %796 = arith.sitofp %795 : vector<8x128xi32> to vector<8x128xf32>
    %cst_115 = arith.constant -2.000000e-01 : f32
    %797 = vector.broadcast %cst_115 : f32 to vector<8x128xf32>
    %798 = arith.cmpf oge, %767, %797 : vector<8x128xf32>
    %799 = arith.extui %798 : vector<8x128xi1> to vector<8x128xi32>
    %800 = arith.sitofp %799 : vector<8x128xi32> to vector<8x128xf32>
    %cst_116 = arith.constant 2.000000e-01 : f32
    %801 = vector.broadcast %cst_116 : f32 to vector<8x128xf32>
    %802 = arith.cmpf oge, %767, %801 : vector<8x128xf32>
    %803 = arith.extui %802 : vector<8x128xi1> to vector<8x128xi32>
    %804 = arith.sitofp %803 : vector<8x128xi32> to vector<8x128xf32>
    %cst_117 = arith.constant 6.000000e-01 : f32
    %805 = vector.broadcast %cst_117 : f32 to vector<8x128xf32>
    %806 = arith.cmpf oge, %767, %805 : vector<8x128xf32>
    %807 = arith.extui %806 : vector<8x128xi1> to vector<8x128xi32>
    %808 = arith.sitofp %807 : vector<8x128xi32> to vector<8x128xf32>
    %cst_118 = arith.constant 1.000000e+00 : f32
    %809 = vector.broadcast %cst_118 : f32 to vector<8x128xf32>
    %810 = arith.cmpf oge, %767, %809 : vector<8x128xf32>
    %811 = arith.extui %810 : vector<8x128xi1> to vector<8x128xi32>
    %812 = arith.sitofp %811 : vector<8x128xi32> to vector<8x128xf32>
    %cst_119 = arith.constant 1.400000e+00 : f32
    %813 = vector.broadcast %cst_119 : f32 to vector<8x128xf32>
    %814 = arith.cmpf oge, %767, %813 : vector<8x128xf32>
    %815 = arith.extui %814 : vector<8x128xi1> to vector<8x128xi32>
    %816 = arith.sitofp %815 : vector<8x128xi32> to vector<8x128xf32>
    %cst_120 = arith.constant 1.800000e+00 : f32
    %817 = vector.broadcast %cst_120 : f32 to vector<8x128xf32>
    %818 = arith.cmpf oge, %767, %817 : vector<8x128xf32>
    %819 = arith.extui %818 : vector<8x128xi1> to vector<8x128xi32>
    %820 = arith.sitofp %819 : vector<8x128xi32> to vector<8x128xf32>
    %cst_121 = arith.constant 2.200000e+00 : f32
    %821 = vector.broadcast %cst_121 : f32 to vector<8x128xf32>
    %822 = arith.cmpf oge, %767, %821 : vector<8x128xf32>
    %823 = arith.extui %822 : vector<8x128xi1> to vector<8x128xi32>
    %824 = arith.sitofp %823 : vector<8x128xi32> to vector<8x128xf32>
    %825 = arith.subf %780, %784 : vector<8x128xf32>
    %826 = arith.subf %784, %788 : vector<8x128xf32>
    %827 = arith.subf %788, %792 : vector<8x128xf32>
    %828 = arith.subf %792, %796 : vector<8x128xf32>
    %829 = arith.subf %796, %800 : vector<8x128xf32>
    %830 = arith.subf %800, %804 : vector<8x128xf32>
    %831 = arith.subf %804, %808 : vector<8x128xf32>
    %832 = arith.subf %808, %812 : vector<8x128xf32>
    %833 = arith.subf %812, %816 : vector<8x128xf32>
    %834 = arith.subf %816, %820 : vector<8x128xf32>
    %835 = arith.subf %820, %824 : vector<8x128xf32>
    %cst_122 = arith.constant -2.200000e+00 : f32
    %836 = vector.broadcast %cst_122 : f32 to vector<8x128xf32>
    %837 = arith.subf %767, %836 : vector<8x128xf32>
    %cst_123 = arith.constant -1.800000e+00 : f32
    %838 = vector.broadcast %cst_123 : f32 to vector<8x128xf32>
    %839 = arith.subf %767, %838 : vector<8x128xf32>
    %cst_124 = arith.constant -1.400000e+00 : f32
    %840 = vector.broadcast %cst_124 : f32 to vector<8x128xf32>
    %841 = arith.subf %767, %840 : vector<8x128xf32>
    %cst_125 = arith.constant -1.000000e+00 : f32
    %842 = vector.broadcast %cst_125 : f32 to vector<8x128xf32>
    %843 = arith.subf %767, %842 : vector<8x128xf32>
    %cst_126 = arith.constant -6.000000e-01 : f32
    %844 = vector.broadcast %cst_126 : f32 to vector<8x128xf32>
    %845 = arith.subf %767, %844 : vector<8x128xf32>
    %cst_127 = arith.constant -2.000000e-01 : f32
    %846 = vector.broadcast %cst_127 : f32 to vector<8x128xf32>
    %847 = arith.subf %767, %846 : vector<8x128xf32>
    %cst_128 = arith.constant 2.000000e-01 : f32
    %848 = vector.broadcast %cst_128 : f32 to vector<8x128xf32>
    %849 = arith.subf %767, %848 : vector<8x128xf32>
    %cst_129 = arith.constant 6.000000e-01 : f32
    %850 = vector.broadcast %cst_129 : f32 to vector<8x128xf32>
    %851 = arith.subf %767, %850 : vector<8x128xf32>
    %cst_130 = arith.constant 1.000000e+00 : f32
    %852 = vector.broadcast %cst_130 : f32 to vector<8x128xf32>
    %853 = arith.subf %767, %852 : vector<8x128xf32>
    %cst_131 = arith.constant 1.400000e+00 : f32
    %854 = vector.broadcast %cst_131 : f32 to vector<8x128xf32>
    %855 = arith.subf %767, %854 : vector<8x128xf32>
    %cst_132 = arith.constant 1.800000e+00 : f32
    %856 = vector.broadcast %cst_132 : f32 to vector<8x128xf32>
    %857 = arith.subf %767, %856 : vector<8x128xf32>
    %cst_133 = arith.constant 2.200000e+00 : f32
    %858 = vector.broadcast %cst_133 : f32 to vector<8x128xf32>
    %859 = arith.subf %767, %858 : vector<8x128xf32>
    %860 = arith.mulf %837, %825 : vector<8x128xf32>
    %861 = arith.mulf %841, %826 : vector<8x128xf32>
    %862 = arith.subf %860, %861 : vector<8x128xf32>
    %863 = arith.mulf %839, %826 : vector<8x128xf32>
    %864 = arith.mulf %843, %827 : vector<8x128xf32>
    %865 = arith.subf %863, %864 : vector<8x128xf32>
    %866 = arith.mulf %841, %827 : vector<8x128xf32>
    %867 = arith.mulf %845, %828 : vector<8x128xf32>
    %868 = arith.subf %866, %867 : vector<8x128xf32>
    %869 = arith.mulf %843, %828 : vector<8x128xf32>
    %870 = arith.mulf %847, %829 : vector<8x128xf32>
    %871 = arith.subf %869, %870 : vector<8x128xf32>
    %872 = arith.mulf %845, %829 : vector<8x128xf32>
    %873 = arith.mulf %849, %830 : vector<8x128xf32>
    %874 = arith.subf %872, %873 : vector<8x128xf32>
    %875 = arith.mulf %847, %830 : vector<8x128xf32>
    %876 = arith.mulf %851, %831 : vector<8x128xf32>
    %877 = arith.subf %875, %876 : vector<8x128xf32>
    %878 = arith.mulf %849, %831 : vector<8x128xf32>
    %879 = arith.mulf %853, %832 : vector<8x128xf32>
    %880 = arith.subf %878, %879 : vector<8x128xf32>
    %881 = arith.mulf %851, %832 : vector<8x128xf32>
    %882 = arith.mulf %855, %833 : vector<8x128xf32>
    %883 = arith.subf %881, %882 : vector<8x128xf32>
    %884 = arith.mulf %853, %833 : vector<8x128xf32>
    %885 = arith.mulf %857, %834 : vector<8x128xf32>
    %886 = arith.subf %884, %885 : vector<8x128xf32>
    %887 = arith.mulf %855, %834 : vector<8x128xf32>
    %888 = arith.mulf %859, %835 : vector<8x128xf32>
    %889 = arith.subf %887, %888 : vector<8x128xf32>
    %890 = arith.mulf %837, %862 : vector<8x128xf32>
    %891 = arith.mulf %843, %865 : vector<8x128xf32>
    %892 = arith.subf %890, %891 : vector<8x128xf32>
    %893 = arith.mulf %839, %865 : vector<8x128xf32>
    %894 = arith.mulf %845, %868 : vector<8x128xf32>
    %895 = arith.subf %893, %894 : vector<8x128xf32>
    %896 = arith.mulf %841, %868 : vector<8x128xf32>
    %897 = arith.mulf %847, %871 : vector<8x128xf32>
    %898 = arith.subf %896, %897 : vector<8x128xf32>
    %899 = arith.mulf %843, %871 : vector<8x128xf32>
    %900 = arith.mulf %849, %874 : vector<8x128xf32>
    %901 = arith.subf %899, %900 : vector<8x128xf32>
    %902 = arith.mulf %845, %874 : vector<8x128xf32>
    %903 = arith.mulf %851, %877 : vector<8x128xf32>
    %904 = arith.subf %902, %903 : vector<8x128xf32>
    %905 = arith.mulf %847, %877 : vector<8x128xf32>
    %906 = arith.mulf %853, %880 : vector<8x128xf32>
    %907 = arith.subf %905, %906 : vector<8x128xf32>
    %908 = arith.mulf %849, %880 : vector<8x128xf32>
    %909 = arith.mulf %855, %883 : vector<8x128xf32>
    %910 = arith.subf %908, %909 : vector<8x128xf32>
    %911 = arith.mulf %851, %883 : vector<8x128xf32>
    %912 = arith.mulf %857, %886 : vector<8x128xf32>
    %913 = arith.subf %911, %912 : vector<8x128xf32>
    %914 = arith.mulf %853, %886 : vector<8x128xf32>
    %915 = arith.mulf %859, %889 : vector<8x128xf32>
    %916 = arith.subf %914, %915 : vector<8x128xf32>
    %917 = arith.mulf %837, %892 : vector<8x128xf32>
    %918 = arith.mulf %845, %895 : vector<8x128xf32>
    %919 = arith.subf %917, %918 : vector<8x128xf32>
    %920 = arith.mulf %839, %895 : vector<8x128xf32>
    %921 = arith.mulf %847, %898 : vector<8x128xf32>
    %922 = arith.subf %920, %921 : vector<8x128xf32>
    %923 = arith.mulf %841, %898 : vector<8x128xf32>
    %924 = arith.mulf %849, %901 : vector<8x128xf32>
    %925 = arith.subf %923, %924 : vector<8x128xf32>
    %926 = arith.mulf %843, %901 : vector<8x128xf32>
    %927 = arith.mulf %851, %904 : vector<8x128xf32>
    %928 = arith.subf %926, %927 : vector<8x128xf32>
    %929 = arith.mulf %845, %904 : vector<8x128xf32>
    %930 = arith.mulf %853, %907 : vector<8x128xf32>
    %931 = arith.subf %929, %930 : vector<8x128xf32>
    %932 = arith.mulf %847, %907 : vector<8x128xf32>
    %933 = arith.mulf %855, %910 : vector<8x128xf32>
    %934 = arith.subf %932, %933 : vector<8x128xf32>
    %935 = arith.mulf %849, %910 : vector<8x128xf32>
    %936 = arith.mulf %857, %913 : vector<8x128xf32>
    %937 = arith.subf %935, %936 : vector<8x128xf32>
    %938 = arith.mulf %851, %913 : vector<8x128xf32>
    %939 = arith.mulf %859, %916 : vector<8x128xf32>
    %940 = arith.subf %938, %939 : vector<8x128xf32>
    %c80 = arith.constant 80 : index
    %941 = arith.index_cast %1 : i32 to index
    %942 = vector.load %arg4[%c80, %941] : memref<432x128xf32, #tpu.memory_space<vmem>>, vector<8x128xf32>
    tpu.vector_store %arg4[%c80, %941], %919 {strides = array<i32>} : memref<432x128xf32, #tpu.memory_space<vmem>>, vector<8x128xf32>,
    %c128 = arith.constant 128 : index
    %943 = arith.index_cast %1 : i32 to index
    %944 = vector.load %arg4[%c128, %943] : memref<432x128xf32, #tpu.memory_space<vmem>>, vector<8x128xf32>
    tpu.vector_store %arg4[%c128, %943], %922 {strides = array<i32>} : memref<432x128xf32, #tpu.memory_space<vmem>>, vector<8x128xf32>,
    %c176 = arith.constant 176 : index
    %945 = arith.index_cast %1 : i32 to index
    %946 = vector.load %arg4[%c176, %945] : memref<432x128xf32, #tpu.memory_space<vmem>>, vector<8x128xf32>
    tpu.vector_store %arg4[%c176, %945], %925 {strides = array<i32>} : memref<432x128xf32, #tpu.memory_space<vmem>>, vector<8x128xf32>,
    %c224 = arith.constant 224 : index
    %947 = arith.index_cast %1 : i32 to index
    %948 = vector.load %arg4[%c224, %947] : memref<432x128xf32, #tpu.memory_space<vmem>>, vector<8x128xf32>
    tpu.vector_store %arg4[%c224, %947], %928 {strides = array<i32>} : memref<432x128xf32, #tpu.memory_space<vmem>>, vector<8x128xf32>,
    %c272 = arith.constant 272 : index
    %949 = arith.index_cast %1 : i32 to index
    %950 = vector.load %arg4[%c272, %949] : memref<432x128xf32, #tpu.memory_space<vmem>>, vector<8x128xf32>
    tpu.vector_store %arg4[%c272, %949], %931 {strides = array<i32>} : memref<432x128xf32, #tpu.memory_space<vmem>>, vector<8x128xf32>,
    %c320 = arith.constant 320 : index
    %951 = arith.index_cast %1 : i32 to index
    %952 = vector.load %arg4[%c320, %951] : memref<432x128xf32, #tpu.memory_space<vmem>>, vector<8x128xf32>
    tpu.vector_store %arg4[%c320, %951], %934 {strides = array<i32>} : memref<432x128xf32, #tpu.memory_space<vmem>>, vector<8x128xf32>,
    %c368 = arith.constant 368 : index
    %953 = arith.index_cast %1 : i32 to index
    %954 = vector.load %arg4[%c368, %953] : memref<432x128xf32, #tpu.memory_space<vmem>>, vector<8x128xf32>
    tpu.vector_store %arg4[%c368, %953], %937 {strides = array<i32>} : memref<432x128xf32, #tpu.memory_space<vmem>>, vector<8x128xf32>,
    %c416 = arith.constant 416 : index
    %955 = arith.index_cast %1 : i32 to index
    %956 = vector.load %arg4[%c416, %955] : memref<432x128xf32, #tpu.memory_space<vmem>>, vector<8x128xf32>
    tpu.vector_store %arg4[%c416, %955], %940 {strides = array<i32>} : memref<432x128xf32, #tpu.memory_space<vmem>>, vector<8x128xf32>,
    %c40 = arith.constant 40 : index
    %957 = arith.index_cast %1 : i32 to index
    %958 = vector.load %arg1[%c40, %957] : memref<48x128xf32, #tpu.memory_space<vmem>>, vector<8x128xf32>
    %cst_134 = arith.constant 0.000000e+00 : f32
    %959 = vector.broadcast %cst_134 : f32 to vector<8x128xf32>
    %960 = arith.subf %959, %958 : vector<8x128xf32>
    %961 = math.exp %960 : vector<8x128xf32>
    %cst_135 = arith.constant 1.000000e+00 : f32
    %962 = vector.broadcast %cst_135 : f32 to vector<8x128xf32>
    %963 = arith.addf %962, %961 : vector<8x128xf32>
    %964 = tpu.reciprocal %963 {approx = true} : vector<8x128xf32> -> vector<8x128xf32>
    %965 = arith.mulf %958, %964 : vector<8x128xf32>
    %c40_136 = arith.constant 40 : index
    %966 = arith.index_cast %1 : i32 to index
    %967 = vector.load %arg4[%c40_136, %966] : memref<432x128xf32, #tpu.memory_space<vmem>>, vector<8x128xf32>
    tpu.vector_store %arg4[%c40_136, %966], %965 {strides = array<i32>} : memref<432x128xf32, #tpu.memory_space<vmem>>, vector<8x128xf32>,
    %cst_137 = arith.constant -2.200000e+00 : f32
    %968 = vector.broadcast %cst_137 : f32 to vector<8x128xf32>
    %969 = arith.cmpf oge, %958, %968 : vector<8x128xf32>
    %970 = arith.extui %969 : vector<8x128xi1> to vector<8x128xi32>
    %971 = arith.sitofp %970 : vector<8x128xi32> to vector<8x128xf32>
    %cst_138 = arith.constant -1.800000e+00 : f32
    %972 = vector.broadcast %cst_138 : f32 to vector<8x128xf32>
    %973 = arith.cmpf oge, %958, %972 : vector<8x128xf32>
    %974 = arith.extui %973 : vector<8x128xi1> to vector<8x128xi32>
    %975 = arith.sitofp %974 : vector<8x128xi32> to vector<8x128xf32>
    %cst_139 = arith.constant -1.400000e+00 : f32
    %976 = vector.broadcast %cst_139 : f32 to vector<8x128xf32>
    %977 = arith.cmpf oge, %958, %976 : vector<8x128xf32>
    %978 = arith.extui %977 : vector<8x128xi1> to vector<8x128xi32>
    %979 = arith.sitofp %978 : vector<8x128xi32> to vector<8x128xf32>
    %cst_140 = arith.constant -1.000000e+00 : f32
    %980 = vector.broadcast %cst_140 : f32 to vector<8x128xf32>
    %981 = arith.cmpf oge, %958, %980 : vector<8x128xf32>
    %982 = arith.extui %981 : vector<8x128xi1> to vector<8x128xi32>
    %983 = arith.sitofp %982 : vector<8x128xi32> to vector<8x128xf32>
    %cst_141 = arith.constant -6.000000e-01 : f32
    %984 = vector.broadcast %cst_141 : f32 to vector<8x128xf32>
    %985 = arith.cmpf oge, %958, %984 : vector<8x128xf32>
    %986 = arith.extui %985 : vector<8x128xi1> to vector<8x128xi32>
    %987 = arith.sitofp %986 : vector<8x128xi32> to vector<8x128xf32>
    %cst_142 = arith.constant -2.000000e-01 : f32
    %988 = vector.broadcast %cst_142 : f32 to vector<8x128xf32>
    %989 = arith.cmpf oge, %958, %988 : vector<8x128xf32>
    %990 = arith.extui %989 : vector<8x128xi1> to vector<8x128xi32>
    %991 = arith.sitofp %990 : vector<8x128xi32> to vector<8x128xf32>
    %cst_143 = arith.constant 2.000000e-01 : f32
    %992 = vector.broadcast %cst_143 : f32 to vector<8x128xf32>
    %993 = arith.cmpf oge, %958, %992 : vector<8x128xf32>
    %994 = arith.extui %993 : vector<8x128xi1> to vector<8x128xi32>
    %995 = arith.sitofp %994 : vector<8x128xi32> to vector<8x128xf32>
    %cst_144 = arith.constant 6.000000e-01 : f32
    %996 = vector.broadcast %cst_144 : f32 to vector<8x128xf32>
    %997 = arith.cmpf oge, %958, %996 : vector<8x128xf32>
    %998 = arith.extui %997 : vector<8x128xi1> to vector<8x128xi32>
    %999 = arith.sitofp %998 : vector<8x128xi32> to vector<8x128xf32>
    %cst_145 = arith.constant 1.000000e+00 : f32
    %1000 = vector.broadcast %cst_145 : f32 to vector<8x128xf32>
    %1001 = arith.cmpf oge, %958, %1000 : vector<8x128xf32>
    %1002 = arith.extui %1001 : vector<8x128xi1> to vector<8x128xi32>
    %1003 = arith.sitofp %1002 : vector<8x128xi32> to vector<8x128xf32>
    %cst_146 = arith.constant 1.400000e+00 : f32
    %1004 = vector.broadcast %cst_146 : f32 to vector<8x128xf32>
    %1005 = arith.cmpf oge, %958, %1004 : vector<8x128xf32>
    %1006 = arith.extui %1005 : vector<8x128xi1> to vector<8x128xi32>
    %1007 = arith.sitofp %1006 : vector<8x128xi32> to vector<8x128xf32>
    %cst_147 = arith.constant 1.800000e+00 : f32
    %1008 = vector.broadcast %cst_147 : f32 to vector<8x128xf32>
    %1009 = arith.cmpf oge, %958, %1008 : vector<8x128xf32>
    %1010 = arith.extui %1009 : vector<8x128xi1> to vector<8x128xi32>
    %1011 = arith.sitofp %1010 : vector<8x128xi32> to vector<8x128xf32>
    %cst_148 = arith.constant 2.200000e+00 : f32
    %1012 = vector.broadcast %cst_148 : f32 to vector<8x128xf32>
    %1013 = arith.cmpf oge, %958, %1012 : vector<8x128xf32>
    %1014 = arith.extui %1013 : vector<8x128xi1> to vector<8x128xi32>
    %1015 = arith.sitofp %1014 : vector<8x128xi32> to vector<8x128xf32>
    %1016 = arith.subf %971, %975 : vector<8x128xf32>
    %1017 = arith.subf %975, %979 : vector<8x128xf32>
    %1018 = arith.subf %979, %983 : vector<8x128xf32>
    %1019 = arith.subf %983, %987 : vector<8x128xf32>
    %1020 = arith.subf %987, %991 : vector<8x128xf32>
    %1021 = arith.subf %991, %995 : vector<8x128xf32>
    %1022 = arith.subf %995, %999 : vector<8x128xf32>
    %1023 = arith.subf %999, %1003 : vector<8x128xf32>
    %1024 = arith.subf %1003, %1007 : vector<8x128xf32>
    %1025 = arith.subf %1007, %1011 : vector<8x128xf32>
    %1026 = arith.subf %1011, %1015 : vector<8x128xf32>
    %cst_149 = arith.constant -2.200000e+00 : f32
    %1027 = vector.broadcast %cst_149 : f32 to vector<8x128xf32>
    %1028 = arith.subf %958, %1027 : vector<8x128xf32>
    %cst_150 = arith.constant -1.800000e+00 : f32
    %1029 = vector.broadcast %cst_150 : f32 to vector<8x128xf32>
    %1030 = arith.subf %958, %1029 : vector<8x128xf32>
    %cst_151 = arith.constant -1.400000e+00 : f32
    %1031 = vector.broadcast %cst_151 : f32 to vector<8x128xf32>
    %1032 = arith.subf %958, %1031 : vector<8x128xf32>
    %cst_152 = arith.constant -1.000000e+00 : f32
    %1033 = vector.broadcast %cst_152 : f32 to vector<8x128xf32>
    %1034 = arith.subf %958, %1033 : vector<8x128xf32>
    %cst_153 = arith.constant -6.000000e-01 : f32
    %1035 = vector.broadcast %cst_153 : f32 to vector<8x128xf32>
    %1036 = arith.subf %958, %1035 : vector<8x128xf32>
    %cst_154 = arith.constant -2.000000e-01 : f32
    %1037 = vector.broadcast %cst_154 : f32 to vector<8x128xf32>
    %1038 = arith.subf %958, %1037 : vector<8x128xf32>
    %cst_155 = arith.constant 2.000000e-01 : f32
    %1039 = vector.broadcast %cst_155 : f32 to vector<8x128xf32>
    %1040 = arith.subf %958, %1039 : vector<8x128xf32>
    %cst_156 = arith.constant 6.000000e-01 : f32
    %1041 = vector.broadcast %cst_156 : f32 to vector<8x128xf32>
    %1042 = arith.subf %958, %1041 : vector<8x128xf32>
    %cst_157 = arith.constant 1.000000e+00 : f32
    %1043 = vector.broadcast %cst_157 : f32 to vector<8x128xf32>
    %1044 = arith.subf %958, %1043 : vector<8x128xf32>
    %cst_158 = arith.constant 1.400000e+00 : f32
    %1045 = vector.broadcast %cst_158 : f32 to vector<8x128xf32>
    %1046 = arith.subf %958, %1045 : vector<8x128xf32>
    %cst_159 = arith.constant 1.800000e+00 : f32
    %1047 = vector.broadcast %cst_159 : f32 to vector<8x128xf32>
    %1048 = arith.subf %958, %1047 : vector<8x128xf32>
    %cst_160 = arith.constant 2.200000e+00 : f32
    %1049 = vector.broadcast %cst_160 : f32 to vector<8x128xf32>
    %1050 = arith.subf %958, %1049 : vector<8x128xf32>
    %1051 = arith.mulf %1028, %1016 : vector<8x128xf32>
    %1052 = arith.mulf %1032, %1017 : vector<8x128xf32>
    %1053 = arith.subf %1051, %1052 : vector<8x128xf32>
    %1054 = arith.mulf %1030, %1017 : vector<8x128xf32>
    %1055 = arith.mulf %1034, %1018 : vector<8x128xf32>
    %1056 = arith.subf %1054, %1055 : vector<8x128xf32>
    %1057 = arith.mulf %1032, %1018 : vector<8x128xf32>
    %1058 = arith.mulf %1036, %1019 : vector<8x128xf32>
    %1059 = arith.subf %1057, %1058 : vector<8x128xf32>
    %1060 = arith.mulf %1034, %1019 : vector<8x128xf32>
    %1061 = arith.mulf %1038, %1020 : vector<8x128xf32>
    %1062 = arith.subf %1060, %1061 : vector<8x128xf32>
    %1063 = arith.mulf %1036, %1020 : vector<8x128xf32>
    %1064 = arith.mulf %1040, %1021 : vector<8x128xf32>
    %1065 = arith.subf %1063, %1064 : vector<8x128xf32>
    %1066 = arith.mulf %1038, %1021 : vector<8x128xf32>
    %1067 = arith.mulf %1042, %1022 : vector<8x128xf32>
    %1068 = arith.subf %1066, %1067 : vector<8x128xf32>
    %1069 = arith.mulf %1040, %1022 : vector<8x128xf32>
    %1070 = arith.mulf %1044, %1023 : vector<8x128xf32>
    %1071 = arith.subf %1069, %1070 : vector<8x128xf32>
    %1072 = arith.mulf %1042, %1023 : vector<8x128xf32>
    %1073 = arith.mulf %1046, %1024 : vector<8x128xf32>
    %1074 = arith.subf %1072, %1073 : vector<8x128xf32>
    %1075 = arith.mulf %1044, %1024 : vector<8x128xf32>
    %1076 = arith.mulf %1048, %1025 : vector<8x128xf32>
    %1077 = arith.subf %1075, %1076 : vector<8x128xf32>
    %1078 = arith.mulf %1046, %1025 : vector<8x128xf32>
    %1079 = arith.mulf %1050, %1026 : vector<8x128xf32>
    %1080 = arith.subf %1078, %1079 : vector<8x128xf32>
    %1081 = arith.mulf %1028, %1053 : vector<8x128xf32>
    %1082 = arith.mulf %1034, %1056 : vector<8x128xf32>
    %1083 = arith.subf %1081, %1082 : vector<8x128xf32>
    %1084 = arith.mulf %1030, %1056 : vector<8x128xf32>
    %1085 = arith.mulf %1036, %1059 : vector<8x128xf32>
    %1086 = arith.subf %1084, %1085 : vector<8x128xf32>
    %1087 = arith.mulf %1032, %1059 : vector<8x128xf32>
    %1088 = arith.mulf %1038, %1062 : vector<8x128xf32>
    %1089 = arith.subf %1087, %1088 : vector<8x128xf32>
    %1090 = arith.mulf %1034, %1062 : vector<8x128xf32>
    %1091 = arith.mulf %1040, %1065 : vector<8x128xf32>
    %1092 = arith.subf %1090, %1091 : vector<8x128xf32>
    %1093 = arith.mulf %1036, %1065 : vector<8x128xf32>
    %1094 = arith.mulf %1042, %1068 : vector<8x128xf32>
    %1095 = arith.subf %1093, %1094 : vector<8x128xf32>
    %1096 = arith.mulf %1038, %1068 : vector<8x128xf32>
    %1097 = arith.mulf %1044, %1071 : vector<8x128xf32>
    %1098 = arith.subf %1096, %1097 : vector<8x128xf32>
    %1099 = arith.mulf %1040, %1071 : vector<8x128xf32>
    %1100 = arith.mulf %1046, %1074 : vector<8x128xf32>
    %1101 = arith.subf %1099, %1100 : vector<8x128xf32>
    %1102 = arith.mulf %1042, %1074 : vector<8x128xf32>
    %1103 = arith.mulf %1048, %1077 : vector<8x128xf32>
    %1104 = arith.subf %1102, %1103 : vector<8x128xf32>
    %1105 = arith.mulf %1044, %1077 : vector<8x128xf32>
    %1106 = arith.mulf %1050, %1080 : vector<8x128xf32>
    %1107 = arith.subf %1105, %1106 : vector<8x128xf32>
    %1108 = arith.mulf %1028, %1083 : vector<8x128xf32>
    %1109 = arith.mulf %1036, %1086 : vector<8x128xf32>
    %1110 = arith.subf %1108, %1109 : vector<8x128xf32>
    %1111 = arith.mulf %1030, %1086 : vector<8x128xf32>
    %1112 = arith.mulf %1038, %1089 : vector<8x128xf32>
    %1113 = arith.subf %1111, %1112 : vector<8x128xf32>
    %1114 = arith.mulf %1032, %1089 : vector<8x128xf32>
    %1115 = arith.mulf %1040, %1092 : vector<8x128xf32>
    %1116 = arith.subf %1114, %1115 : vector<8x128xf32>
    %1117 = arith.mulf %1034, %1092 : vector<8x128xf32>
    %1118 = arith.mulf %1042, %1095 : vector<8x128xf32>
    %1119 = arith.subf %1117, %1118 : vector<8x128xf32>
    %1120 = arith.mulf %1036, %1095 : vector<8x128xf32>
    %1121 = arith.mulf %1044, %1098 : vector<8x128xf32>
    %1122 = arith.subf %1120, %1121 : vector<8x128xf32>
    %1123 = arith.mulf %1038, %1098 : vector<8x128xf32>
    %1124 = arith.mulf %1046, %1101 : vector<8x128xf32>
    %1125 = arith.subf %1123, %1124 : vector<8x128xf32>
    %1126 = arith.mulf %1040, %1101 : vector<8x128xf32>
    %1127 = arith.mulf %1048, %1104 : vector<8x128xf32>
    %1128 = arith.subf %1126, %1127 : vector<8x128xf32>
    %1129 = arith.mulf %1042, %1104 : vector<8x128xf32>
    %1130 = arith.mulf %1050, %1107 : vector<8x128xf32>
    %1131 = arith.subf %1129, %1130 : vector<8x128xf32>
    %c88 = arith.constant 88 : index
    %1132 = arith.index_cast %1 : i32 to index
    %1133 = vector.load %arg4[%c88, %1132] : memref<432x128xf32, #tpu.memory_space<vmem>>, vector<8x128xf32>
    tpu.vector_store %arg4[%c88, %1132], %1110 {strides = array<i32>} : memref<432x128xf32, #tpu.memory_space<vmem>>, vector<8x128xf32>,
    %c136 = arith.constant 136 : index
    %1134 = arith.index_cast %1 : i32 to index
    %1135 = vector.load %arg4[%c136, %1134] : memref<432x128xf32, #tpu.memory_space<vmem>>, vector<8x128xf32>
    tpu.vector_store %arg4[%c136, %1134], %1113 {strides = array<i32>} : memref<432x128xf32, #tpu.memory_space<vmem>>, vector<8x128xf32>,
    %c184 = arith.constant 184 : index
    %1136 = arith.index_cast %1 : i32 to index
    %1137 = vector.load %arg4[%c184, %1136] : memref<432x128xf32, #tpu.memory_space<vmem>>, vector<8x128xf32>
    tpu.vector_store %arg4[%c184, %1136], %1116 {strides = array<i32>} : memref<432x128xf32, #tpu.memory_space<vmem>>, vector<8x128xf32>,
    %c232 = arith.constant 232 : index
    %1138 = arith.index_cast %1 : i32 to index
    %1139 = vector.load %arg4[%c232, %1138] : memref<432x128xf32, #tpu.memory_space<vmem>>, vector<8x128xf32>
    tpu.vector_store %arg4[%c232, %1138], %1119 {strides = array<i32>} : memref<432x128xf32, #tpu.memory_space<vmem>>, vector<8x128xf32>,
    %c280 = arith.constant 280 : index
    %1140 = arith.index_cast %1 : i32 to index
    %1141 = vector.load %arg4[%c280, %1140] : memref<432x128xf32, #tpu.memory_space<vmem>>, vector<8x128xf32>
    tpu.vector_store %arg4[%c280, %1140], %1122 {strides = array<i32>} : memref<432x128xf32, #tpu.memory_space<vmem>>, vector<8x128xf32>,
    %c328 = arith.constant 328 : index
    %1142 = arith.index_cast %1 : i32 to index
    %1143 = vector.load %arg4[%c328, %1142] : memref<432x128xf32, #tpu.memory_space<vmem>>, vector<8x128xf32>
    tpu.vector_store %arg4[%c328, %1142], %1125 {strides = array<i32>} : memref<432x128xf32, #tpu.memory_space<vmem>>, vector<8x128xf32>,
    %c376 = arith.constant 376 : index
    %1144 = arith.index_cast %1 : i32 to index
    %1145 = vector.load %arg4[%c376, %1144] : memref<432x128xf32, #tpu.memory_space<vmem>>, vector<8x128xf32>
    tpu.vector_store %arg4[%c376, %1144], %1128 {strides = array<i32>} : memref<432x128xf32, #tpu.memory_space<vmem>>, vector<8x128xf32>,
    %c424 = arith.constant 424 : index
    %1146 = arith.index_cast %1 : i32 to index
    %1147 = vector.load %arg4[%c424, %1146] : memref<432x128xf32, #tpu.memory_space<vmem>>, vector<8x128xf32>
    tpu.vector_store %arg4[%c424, %1146], %1131 {strides = array<i32>} : memref<432x128xf32, #tpu.memory_space<vmem>>, vector<8x128xf32>,
    %c1_i32 = arith.constant 1 : i32
    %c0_161 = arith.constant 0 : index
    %c0_162 = arith.constant 0 : index
    %1148 = vector.load %arg2[%c0_161, %c0_162] : memref<10x432xf32, #tpu.memory_space<vmem>>, vector<10x432xf32>
    %c0_163 = arith.constant 0 : index
    %c0_164 = arith.constant 0 : index
    %1149 = vector.load %arg4[%c0_163, %c0_164] : memref<432x128xf32, #tpu.memory_space<vmem>>, vector<432x128xf32>
    %cst_165 = arith.constant dense<0.000000e+00> : vector<10x128xf32>
    %1150 = tpu.matmul %1148, %1149, %cst_165 {dimension_numbers = #tpu.dot_dimension_numbers<[1], [0], [0], [1], [0, 0, 1, 1], [], []>} : vector<10x432xf32>, vector<432x128xf32>, vector<10x128xf32> -> vector<10x128xf32>
    %c0_166 = arith.constant 0 : index
    %c0_167 = arith.constant 0 : index
    %1151 = vector.load %arg3[%c0_166, %c0_167] : memref<10x128xf32, #tpu.memory_space<vmem>>, vector<10x128xf32>
    tpu.vector_store %arg3[%c0_166, %c0_167], %1150 {strides = array<i32>} : memref<10x128xf32, #tpu.memory_space<vmem>>, vector<10x128xf32>,
    return
  }
  func.func @transform_0(%arg0: i32) -> (i32, i32) {
    %c0_i32 = arith.constant 0 : i32
    %c0_i32_0 = arith.constant 0 : i32
    return %c0_i32, %arg0 : i32, i32
  }
  func.func @transform_1(%arg0: i32) -> (i32, i32) {
    %c0_i32 = arith.constant 0 : i32
    %c0_i32_0 = arith.constant 0 : i32
    %c0_i32_1 = arith.constant 0 : i32
    return %c0_i32, %c0_i32_0 : i32, i32
  }
  func.func @transform_2(%arg0: i32) -> (i32, i32) {
    %c0_i32 = arith.constant 0 : i32
    %c0_i32_0 = arith.constant 0 : i32
    return %c0_i32, %arg0 : i32, i32
  }
}

module attributes {stable_mosaic.version = 11 : i64} {
  func.func @mlp_kernel(%arg0: i32, %arg1: memref<2x250xf32, #tpu.memory_space<vmem>>, %arg2: memref<250x100xf32, #tpu.memory_space<vmem>>, %arg3: memref<1x100xf32, #tpu.memory_space<vmem>>, %arg4: memref<100x10xf32, #tpu.memory_space<vmem>>, %arg5: memref<1x10xf32, #tpu.memory_space<vmem>>, %arg6: memref<2x10xf32, #tpu.memory_space<vmem>>) attributes {dimension_semantics = [#tpu.dimension_semantics<parallel>], iteration_bounds = array<i64: 1>, scalar_prefetch = 0 : i64, scratch_operands = 0 : i64, tpu.core_type = #tpu.core_type<tc>, window_params = [{transform_indices = @transform_0, window_bounds = array<i64: 2, 250>}, {pipeline_mode = #tpu.pipeline_mode<synchronous>, transform_indices = @transform_1, window_bounds = array<i64: 250, 100>}, {pipeline_mode = #tpu.pipeline_mode<synchronous>, transform_indices = @transform_2, window_bounds = array<i64: 1, 100>}, {pipeline_mode = #tpu.pipeline_mode<synchronous>, transform_indices = @transform_3, window_bounds = array<i64: 100, 10>}, {pipeline_mode = #tpu.pipeline_mode<synchronous>, transform_indices = @transform_4, window_bounds = array<i64: 1, 10>}, {transform_indices = @transform_5, window_bounds = array<i64: 2, 10>}]} {
    %c0 = arith.constant 0 : index
    %c0_0 = arith.constant 0 : index
    %0 = vector.load %arg1[%c0, %c0_0] : memref<2x250xf32, #tpu.memory_space<vmem>>, vector<2x250xf32>
    %c0_1 = arith.constant 0 : index
    %c0_2 = arith.constant 0 : index
    %1 = vector.load %arg2[%c0_1, %c0_2] : memref<250x100xf32, #tpu.memory_space<vmem>>, vector<250x100xf32>
    %cst = arith.constant dense<0.000000e+00> : vector<2x100xf32>
    %2 = tpu.matmul %0, %1, %cst {dimension_numbers = #tpu.dot_dimension_numbers<[1], [0], [0], [1], [0, 0, 1, 1], [], []>} : vector<2x250xf32>, vector<250x100xf32>, vector<2x100xf32> -> vector<2x100xf32>
    %c0_3 = arith.constant 0 : index
    %c0_4 = arith.constant 0 : index
    %3 = vector.load %arg3[%c0_3, %c0_4] : memref<1x100xf32, #tpu.memory_space<vmem>>, vector<1x100xf32>
    %4 = vector.broadcast %3 : vector<1x100xf32> to vector<2x100xf32>
    %5 = arith.addf %2, %4 : vector<2x100xf32>
    %c0_5 = arith.constant 0 : index
    %c0_6 = arith.constant 0 : index
    %6 = vector.load %arg4[%c0_5, %c0_6] : memref<100x10xf32, #tpu.memory_space<vmem>>, vector<100x10xf32>
    %cst_7 = arith.constant dense<0.000000e+00> : vector<2x10xf32>
    %7 = tpu.matmul %5, %6, %cst_7 {dimension_numbers = #tpu.dot_dimension_numbers<[1], [0], [0], [1], [0, 0, 1, 1], [], []>} : vector<2x100xf32>, vector<100x10xf32>, vector<2x10xf32> -> vector<2x10xf32>
    %c0_8 = arith.constant 0 : index
    %c0_9 = arith.constant 0 : index
    %8 = vector.load %arg5[%c0_8, %c0_9] : memref<1x10xf32, #tpu.memory_space<vmem>>, vector<1x10xf32>
    %9 = vector.broadcast %8 : vector<1x10xf32> to vector<2x10xf32>
    %10 = arith.addf %7, %9 : vector<2x10xf32>
    %cst_10 = arith.constant dense<0xFF800000> : vector<2xf32>
    %11 = vector.multi_reduction <maximumf>, %10, %cst_10 [1] : vector<2x10xf32> to vector<2xf32>
    %12 = vector.shape_cast %11 : vector<2xf32> to vector<2x1xf32>
    %13 = vector.broadcast %12 : vector<2x1xf32> to vector<2x10xf32>
    %14 = arith.subf %10, %13 : vector<2x10xf32>
    %15 = math.exp %14 : vector<2x10xf32>
    %cst_11 = arith.constant dense<0.000000e+00> : vector<2xf32>
    %16 = vector.multi_reduction <add>, %15, %cst_11 [1] : vector<2x10xf32> to vector<2xf32>
    %17 = vector.shape_cast %16 : vector<2xf32> to vector<2x1xf32>
    %18 = math.log %17 : vector<2x1xf32>
    %19 = vector.broadcast %18 : vector<2x1xf32> to vector<2x10xf32>
    %20 = arith.subf %14, %19 : vector<2x10xf32>
    %c0_12 = arith.constant 0 : index
    %c0_13 = arith.constant 0 : index
    %21 = vector.load %arg6[%c0_12, %c0_13] : memref<2x10xf32, #tpu.memory_space<vmem>>, vector<2x10xf32>
    tpu.vector_store %arg6[%c0_12, %c0_13], %20 {strides = array<i32>} : memref<2x10xf32, #tpu.memory_space<vmem>>, vector<2x10xf32>,
    return
  }
  func.func @transform_0(%arg0: i32) -> (i32, i32) {
    %c0_i32 = arith.constant 0 : i32
    %c0_i32_0 = arith.constant 0 : i32
    return %arg0, %c0_i32 : i32, i32
  }
  func.func @transform_1(%arg0: i32) -> (i32, i32) {
    %c0_i32 = arith.constant 0 : i32
    %c0_i32_0 = arith.constant 0 : i32
    %c0_i32_1 = arith.constant 0 : i32
    return %c0_i32, %c0_i32_0 : i32, i32
  }
  func.func @transform_2(%arg0: i32) -> (i32, i32) {
    %c0_i32 = arith.constant 0 : i32
    %c0_i32_0 = arith.constant 0 : i32
    %c0_i32_1 = arith.constant 0 : i32
    return %c0_i32, %c0_i32_0 : i32, i32
  }
  func.func @transform_3(%arg0: i32) -> (i32, i32) {
    %c0_i32 = arith.constant 0 : i32
    %c0_i32_0 = arith.constant 0 : i32
    %c0_i32_1 = arith.constant 0 : i32
    return %c0_i32, %c0_i32_0 : i32, i32
  }
  func.func @transform_4(%arg0: i32) -> (i32, i32) {
    %c0_i32 = arith.constant 0 : i32
    %c0_i32_0 = arith.constant 0 : i32
    %c0_i32_1 = arith.constant 0 : i32
    return %c0_i32, %c0_i32_0 : i32, i32
  }
  func.func @transform_5(%arg0: i32) -> (i32, i32) {
    %c0_i32 = arith.constant 0 : i32
    %c0_i32_0 = arith.constant 0 : i32
    return %arg0, %c0_i32 : i32, i32
  }
}

</mosaic_0001>

<llo_original>
// kernel: kanc_mlp_big_forward.3
$region0: #{kanc_mlp_big_forward.3}
  #allocation0 [shape = 'u32[]', space=smem, size = 0x4, offset = 0x4, fixed_abs, tag = 'smem constant byte address 0x4 - core index']
  #allocation1 [shape = 'u32[144,128]{1,0:T(1,128)}', space=vmem, size = 0x12000, scoped, tag = 'internal scratch']
  #allocation2 [shape = 'f32[144,768]{1,0:T(8,128)}', space=vmem, size = 0x6c000, scoped, tag = 'scratch operand']
  %s0 = inlined_call_operand.vmem [shape: f32[16,1352], index: 0, kind: input, shape index: {}]
  %s1 = inlined_call_operand.vmem [shape: f32[5,144], index: 1, kind: input, shape index: {}]
  %s2 = inlined_call_operand.vmem [shape: f32[5,1352], index: 2, kind: output, shape index: {}]
  %s3 = sld [smem:[#allocation0]]
  $region176: #{kanc_mlp_big_forward.3} parent=0
    _
  %s5 = ssub.s32 1, %s3
  %s6 = scalar_select 0, %s5, %s3
  $region1: #{kanc_mlp_big_forward.3} parent=0
    #allocation3 [shape = 'u8[98304]{0}', space=vmem, size = 0x18000, scoped, tag = 'input window, operand 0']
    #allocation4 [shape = 'u8[49152]{0}', space=vmem, size = 0xc000, scoped, tag = 'output window, operand 0']
    loop: start=0, step=1, limit=4
    $region2: #{kanc_mlp_big_forward.3} parent=1 // loop_pre_header
      _
    $region3: #{kanc_mlp_big_forward.3} parent=1 // loop_header
      %s8 = sphi 0, %s12
      %p9 = scmp.ge.s32.totalorder %s8, 4
      %s18 = sphi 0, %s20
      %s21 = sphi 0, %s18
      %s22 = sphi 0, %s21
      %s38 = sphi 0, %s22
      %s42 = sphi 0, %s42
      %s44 = sphi 0, %s42
      %s45 = sphi 0, %s44
      %s59 = sphi 0, %s45
      %s65 = sphi 0, %s67
      %s68 = sphi 0, %s65
      %s69 = sphi 0, %s68
      %s85 = sphi 0, %s69
    $region4: #{kanc_mlp_big_forward.3} parent=1 // loop_header_branch
      %11 = sbr.rel (%p9) target = $region8
    $region5: #{kanc_mlp_big_forward.3} parent=1 // loop_body
      %s13 = ssub.s32 %s8, 1
      %s14 = ssub.s32 %s8, 2
      %s15 = sadd.s32 %s8, 1
      %s16 = ssub.s32 %s8, %s15
      %p17 = scmp.eq.s32.totalorder %s16, 0
      %s19 = sadd.s32 %s18, 1
      %s20 = scalar_select %p17, %s18, %s19
      %p23 = pneg %p17
      %p24 = scmp.eq.s32.totalorder %s8, 1
      %p25 = por %p23, %p24
      %p26 = scmp.ne.s32.totalorder %s18, %s21
      %p27 = scmp.eq.s32.totalorder %s8, 0
      %p28 = por %p26, %p27
      %p29 = scmp.ne.s32.totalorder %s18, %s21
      %p30 = scmp.eq.s32.totalorder %s13, 1
      %p31 = por %p29, %p30
      %p32 = scmp.ne.s32.totalorder %s21, %s22
      %p33 = scmp.eq.s32.totalorder %s13, 0
      %p34 = por %p32, %p33
      %p35 = scmp.ne.s32.totalorder %s21, %s22
      %p36 = scmp.eq.s32.totalorder %s14, 1
      %p37 = por %p35, %p36
      %p39 = scmp.ne.s32.totalorder %s22, %s38
      %p40 = scmp.eq.s32.totalorder %s14, 0
      %p41 = por %p39, %p40
      %s43 = sadd.s32 %s42, 1
      %p46 = scmp.eq.s32.totalorder %s8, 1
      %p47 = scmp.ne.s32.totalorder %s42, %s44
      %p48 = scmp.eq.s32.totalorder %s8, 0
      %p49 = por %p47, %p48
      %p50 = scmp.ne.s32.totalorder %s42, %s44
      %p51 = scmp.eq.s32.totalorder %s13, 1
      %p52 = por %p50, %p51
      %p53 = scmp.ne.s32.totalorder %s44, %s45
      %p54 = scmp.eq.s32.totalorder %s13, 0
      %p55 = por %p53, %p54
      %p56 = scmp.ne.s32.totalorder %s44, %s45
      %p57 = scmp.eq.s32.totalorder %s14, 1
      %p58 = por %p56, %p57
      %p60 = scmp.ne.s32.totalorder %s45, %s59
      %p61 = scmp.eq.s32.totalorder %s14, 0
      %p62 = por %p60, %p61
      %s63 = ssub.s32 %s8, %s15
      %p64 = scmp.eq.s32.totalorder %s63, 0
      %s66 = sadd.s32 %s65, 1
      %s67 = scalar_select %p64, %s65, %s66
      %p70 = pneg %p64
      %p71 = scmp.eq.s32.totalorder %s8, 1
      %p72 = por %p70, %p71
      %p73 = scmp.ne.s32.totalorder %s65, %s68
      %p74 = scmp.eq.s32.totalorder %s8, 0
      %p75 = por %p73, %p74
      %p76 = scmp.ne.s32.totalorder %s65, %s68
      %p77 = scmp.eq.s32.totalorder %s13, 1
      %p78 = por %p76, %p77
      %p79 = scmp.ne.s32.totalorder %s68, %s69
      %p80 = scmp.eq.s32.totalorder %s13, 0
      %p81 = por %p79, %p80
      %p82 = scmp.ne.s32.totalorder %s68, %s69
      %p83 = scmp.eq.s32.totalorder %s14, 1
      %p84 = por %p82, %p83
      %p86 = scmp.ne.s32.totalorder %s69, %s85
      %p87 = scmp.eq.s32.totalorder %s14, 0
      %p88 = por %p86, %p87
      %p89 = scmp.le.s32.totalorder 1, %s8
      %p90 = scmp.lt.s32.totalorder %s8, 3
      %p91 = pnand %p89, %p90
      %p92 = pneg %p91
      // Predicated region
      $region9: #{kanc_mlp_big_forward.3} parent=5 // pred_check
        _
      $region10: #{kanc_mlp_big_forward.3} parent=5 // pred_check_branch
        %94 = sbr.rel (%p91) target = $region12
      $region11: #{kanc_mlp_big_forward.3} parent=5 // pred_region
        %s95 = ssub.s32 %s8, 1
        // Predicated region
        $region13: #{kanc_mlp_big_forward.3} parent=11 // pred_check
          %p96 = pneg %p55
        $region14: #{kanc_mlp_big_forward.3} parent=11 // pred_check_branch
          %98 = sbr.rel (%p96) target = $region16
        $region15: #{kanc_mlp_big_forward.3} parent=11 // pred_region
          _
        $region16: #{kanc_mlp_big_forward.3} parent=11 // pred_fallthru
          _
      $region12: #{kanc_mlp_big_forward.3} parent=5 // pred_fallthru
        _
      %p99 = scmp.lt.s32.totalorder %s8, 2
      // Predicated region
      $region17: #{kanc_mlp_big_forward.3} parent=5 // pred_check
        %p100 = pneg %p99
      $region18: #{kanc_mlp_big_forward.3} parent=5 // pred_check_branch
        %102 = sbr.rel (%p100) target = $region20
      $region19: #{kanc_mlp_big_forward.3} parent=5 // pred_region
        // Predicated region
        $region21: #{kanc_mlp_big_forward.3} parent=19 // pred_check
          %p103 = pneg %p28
        $region22: #{kanc_mlp_big_forward.3} parent=19 // pred_check_branch
          %105 = sbr.rel (%p103) target = $region24
        $region23: #{kanc_mlp_big_forward.3} parent=19 // pred_region
          %s106 = sand.u32 %s18, 1
          %s107 = sand.u32 %s18, 1
          %s108 = smul.addr %s107, 96
          %s109 = scalar_lea.vmem [#allocation3], %s108
          %s110 = smul.u32 6, %s8
          %s111 = ssub.s32 11, %s110
          %p112 = scmp.lt.s32.totalorder %s111, 6
          %s113 = scalar_select %p112, %s111, 6
          %s114 = smul.u32 256, %s113
          %p115 = scmp.ne.s32.totalorder 0, %s114
          %s116 = smul.addr %s110, 8
          %s117 = scalar_lea.vmem %s0, %s116
          %s118 = smul.u32 %s113, 8
          // Predicated region
          $region25: #{kanc_mlp_big_forward.3} parent=23 // pred_check
            %p119 = pneg %p115
          $region26: #{kanc_mlp_big_forward.3} parent=23 // pred_check_branch
            %121 = sbr.rel (%p119) target = $region28
          $region27: #{kanc_mlp_big_forward.3} parent=23 // pred_region
            %p122 = scmp.lt.u32.totalorder %s118, 8
            %p123 = pneg %p122
            // Predicated region
            $region29: #{kanc_mlp_big_forward.3} parent=27 // pred_check
              _
            $region30: #{kanc_mlp_big_forward.3} parent=27 // pred_check_branch
              %125 = sbr.rel (%p122) target = $region32
            $region31: #{kanc_mlp_big_forward.3} parent=27 // pred_region
              %s142 = sand.u32 %s118, 7
              %p143 = scmp.eq.s32.totalorder %s142, 0
              // Predicated region
              $region44: #{kanc_mlp_big_forward.3} parent=31 // pred_check
                %p144 = pneg %p143
              $region45: #{kanc_mlp_big_forward.3} parent=31 // pred_check_branch
                %146 = sbr.rel (%p144) target = $region47
              $region46: #{kanc_mlp_big_forward.3} parent=31 // pred_region
                %s147 = sshrl.u32 %s118, 3
                %s148 = sshrl.u32 %s147, 5
                // While loop
                $region48: #{kanc_mlp_big_forward.3} parent=46 // loop_pre_header
                  _
                $region49: #{kanc_mlp_big_forward.3} parent=46 // loop_header
                  %s152 = sphi 0, %s154
                  %p153 = scmp.ge.s32.totalorder %s152, %s148
                  %s157 = sphi 0, %s290
                  %s158 = sphi %s117, %s293
                  %s159 = sphi %s109, %s294
                $region50: #{kanc_mlp_big_forward.3} parent=46 // loop_header_branch
                  %156 = sbr.rel (%p153) target = $region54
                $region51: #{kanc_mlp_big_forward.3} parent=46 // loop_body
                  %v160 = vld [vmem:[%s158] sm:$0xff]
                  %161 = vst [vmem:[%s159] sm:$0xff] %v160
                  %v162 = vld [vmem:[%s158 + $0x8] sm:$0xff]
                  %163 = vst [vmem:[%s159 + $0x8] sm:$0xff] %v162
                  %v164 = vld [vmem:[%s158 + $0x10] sm:$0xff]
                  %165 = vst [vmem:[%s159 + $0x10] sm:$0xff] %v164
                  %v166 = vld [vmem:[%s158 + $0x18] sm:$0xff]
                  %167 = vst [vmem:[%s159 + $0x18] sm:$0xff] %v166
                  %v168 = vld [vmem:[%s158 + $0x20] sm:$0xff]
                  %169 = vst [vmem:[%s159 + $0x20] sm:$0xff] %v168
                  %v170 = vld [vmem:[%s158 + $0x28] sm:$0xff]
                  %171 = vst [vmem:[%s159 + $0x28] sm:$0xff] %v170
                  %v172 = vld [vmem:[%s158 + $0x30] sm:$0xff]
                  %173 = vst [vmem:[%s159 + $0x30] sm:$0xff] %v172
                  %v174 = vld [vmem:[%s158 + $0x38] sm:$0xff]
                  %175 = vst [vmem:[%s159 + $0x38] sm:$0xff] %v174
                  %v176 = vld [vmem:[%s158 + $0x40] sm:$0xff]
                  %177 = vst [vmem:[%s159 + $0x40] sm:$0xff] %v176
                  %v178 = vld [vmem:[%s158 + $0x48] sm:$0xff]
                  %179 = vst [vmem:[%s159 + $0x48] sm:$0xff] %v178
                  %v180 = vld [vmem:[%s158 + $0x50] sm:$0xff]
                  %181 = vst [vmem:[%s159 + $0x50] sm:$0xff] %v180
                  %v182 = vld [vmem:[%s158 + $0x58] sm:$0xff]
                  %183 = vst [vmem:[%s159 + $0x58] sm:$0xff] %v182
                  %v184 = vld [vmem:[%s158 + $0x60] sm:$0xff]
                  %185 = vst [vmem:[%s159 + $0x60] sm:$0xff] %v184
                  %v186 = vld [vmem:[%s158 + $0x68] sm:$0xff]
                  %187 = vst [vmem:[%s159 + $0x68] sm:$0xff] %v186
                  %v188 = vld [vmem:[%s158 + $0x70] sm:$0xff]
                  %189 = vst [vmem:[%s159 + $0x70] sm:$0xff] %v188
                  %v190 = vld [vmem:[%s158 + $0x78] sm:$0xff]
                  %191 = vst [vmem:[%s159 + $0x78] sm:$0xff] %v190
                  %v192 = vld [vmem:[%s158 + $0x80] sm:$0xff]
                  %193 = vst [vmem:[%s159 + $0x80] sm:$0xff] %v192
                  %v194 = vld [vmem:[%s158 + $0x88] sm:$0xff]
                  %195 = vst [vmem:[%s159 + $0x88] sm:$0xff] %v194
                  %v196 = vld [vmem:[%s158 + $0x90] sm:$0xff]
                  %197 = vst [vmem:[%s159 + $0x90] sm:$0xff] %v196
                  %v198 = vld [vmem:[%s158 + $0x98] sm:$0xff]
                  %199 = vst [vmem:[%s159 + $0x98] sm:$0xff] %v198
                  %v200 = vld [vmem:[%s158 + $0xa0] sm:$0xff]
                  %201 = vst [vmem:[%s159 + $0xa0] sm:$0xff] %v200
                  %v202 = vld [vmem:[%s158 + $0xa8] sm:$0xff]
                  %203 = vst [vmem:[%s159 + $0xa8] sm:$0xff] %v202
                  %v204 = vld [vmem:[%s158 + $0xb0] sm:$0xff]
                  %205 = vst [vmem:[%s159 + $0xb0] sm:$0xff] %v204
                  %v206 = vld [vmem:[%s158 + $0xb8] sm:$0xff]
                  %207 = vst [vmem:[%s159 + $0xb8] sm:$0xff] %v206
                  %v208 = vld [vmem:[%s158 + $0xc0] sm:$0xff]
                  %209 = vst [vmem:[%s159 + $0xc0] sm:$0xff] %v208
                  %v210 = vld [vmem:[%s158 + $0xc8] sm:$0xff]
                  %211 = vst [vmem:[%s159 + $0xc8] sm:$0xff] %v210
                  %v212 = vld [vmem:[%s158 + $0xd0] sm:$0xff]
                  %213 = vst [vmem:[%s159 + $0xd0] sm:$0xff] %v212
                  %v214 = vld [vmem:[%s158 + $0xd8] sm:$0xff]
                  %215 = vst [vmem:[%s159 + $0xd8] sm:$0xff] %v214
                  %v216 = vld [vmem:[%s158 + $0xe0] sm:$0xff]
                  %217 = vst [vmem:[%s159 + $0xe0] sm:$0xff] %v216
                  %v218 = vld [vmem:[%s158 + $0xe8] sm:$0xff]
                  %219 = vst [vmem:[%s159 + $0xe8] sm:$0xff] %v218
                  %v220 = vld [vmem:[%s158 + $0xf0] sm:$0xff]
                  %221 = vst [vmem:[%s159 + $0xf0] sm:$0xff] %v220
                  %v222 = vld [vmem:[%s158 + $0xf8] sm:$0xff]
                  %223 = vst [vmem:[%s159 + $0xf8] sm:$0xff] %v222
                  %v224 = vld [vmem:[%s158 + $0x58] sm:$0xff]
                  %225 = vst [vmem:[%s159 + $0x30] sm:$0xff] %v224
                  %v226 = vld [vmem:[%s158 + $0x60] sm:$0xff]
                  %227 = vst [vmem:[%s159 + $0x38] sm:$0xff] %v226
                  %v228 = vld [vmem:[%s158 + $0x68] sm:$0xff]
                  %229 = vst [vmem:[%s159 + $0x40] sm:$0xff] %v228
                  %v230 = vld [vmem:[%s158 + $0x70] sm:$0xff]
                  %231 = vst [vmem:[%s159 + $0x48] sm:$0xff] %v230
                  %v232 = vld [vmem:[%s158 + $0x78] sm:$0xff]
                  %233 = vst [vmem:[%s159 + $0x50] sm:$0xff] %v232
                  %v234 = vld [vmem:[%s158 + $0x80] sm:$0xff]
                  %235 = vst [vmem:[%s159 + $0x58] sm:$0xff] %v234
                  %v236 = vld [vmem:[%s158 + $0x88] sm:$0xff]
                  %237 = vst [vmem:[%s159 + $0x60] sm:$0xff] %v236
                  %v238 = vld [vmem:[%s158 + $0x90] sm:$0xff]
                  %239 = vst [vmem:[%s159 + $0x68] sm:$0xff] %v238
                  %v240 = vld [vmem:[%s158 + $0x98] sm:$0xff]
                  %241 = vst [vmem:[%s159 + $0x70] sm:$0xff] %v240
                  %v242 = vld [vmem:[%s158 + $0xa0] sm:$0xff]
                  %243 = vst [vmem:[%s159 + $0x78] sm:$0xff] %v242
                  %v244 = vld [vmem:[%s158 + $0xa8] sm:$0xff]
                  %245 = vst [vmem:[%s159 + $0x80] sm:$0xff] %v244
                  %v246 = vld [vmem:[%s158 + $0xb0] sm:$0xff]
                  %247 = vst [vmem:[%s159 + $0x88] sm:$0xff] %v246
                  %v248 = vld [vmem:[%s158 + $0xb8] sm:$0xff]
                  %249 = vst [vmem:[%s159 + $0x90] sm:$0xff] %v248
                  %v250 = vld [vmem:[%s158 + $0xc0] sm:$0xff]
                  %251 = vst [vmem:[%s159 + $0x98] sm:$0xff] %v250
                  %v252 = vld [vmem:[%s158 + $0xc8] sm:$0xff]
                  %253 = vst [vmem:[%s159 + $0xa0] sm:$0xff] %v252
                  %v254 = vld [vmem:[%s158 + $0xd0] sm:$0xff]
                  %255 = vst [vmem:[%s159 + $0xa8] sm:$0xff] %v254
                  %v256 = vld [vmem:[%s158 + $0xd8] sm:$0xff]
                  %257 = vst [vmem:[%s159 + $0xb0] sm:$0xff] %v256
                  %v258 = vld [vmem:[%s158 + $0xe0] sm:$0xff]
                  %259 = vst [vmem:[%s159 + $0xb8] sm:$0xff] %v258
                  %v260 = vld [vmem:[%s158 + $0xe8] sm:$0xff]
                  %261 = vst [vmem:[%s159 + $0xc0] sm:$0xff] %v260
                  %v262 = vld [vmem:[%s158 + $0xf0] sm:$0xff]
                  %263 = vst [vmem:[%s159 + $0xc8] sm:$0xff] %v262
                  %v264 = vld [vmem:[%s158 + $0xf8] sm:$0xff]
                  %265 = vst [vmem:[%s159 + $0xd0] sm:$0xff] %v264
                  %v266 = vld [vmem:[%s158 + $0x100] sm:$0xff]
                  %267 = vst [vmem:[%s159 + $0xd8] sm:$0xff] %v266
                  %v268 = vld [vmem:[%s158 + $0x108] sm:$0xff]
                  %269 = vst [vmem:[%s159 + $0xe0] sm:$0xff] %v268
                  %v270 = vld [vmem:[%s158 + $0x110] sm:$0xff]
                  %271 = vst [vmem:[%s159 + $0xe8] sm:$0xff] %v270
                  %v272 = vld [vmem:[%s158 + $0x118] sm:$0xff]
                  %273 = vst [vmem:[%s159 + $0xf0] sm:$0xff] %v272
                  %v274 = vld [vmem:[%s158 + $0x120] sm:$0xff]
                  %275 = vst [vmem:[%s159 + $0xf8] sm:$0xff] %v274
                  %v276 = vld [vmem:[%s158 + $0x128] sm:$0xff]
                  %277 = vst [vmem:[%s159 + $0x100] sm:$0xff] %v276
                  %v278 = vld [vmem:[%s158 + $0x130] sm:$0xff]
                  %279 = vst [vmem:[%s159 + $0x108] sm:$0xff] %v278
                  %v280 = vld [vmem:[%s158 + $0x138] sm:$0xff]
                  %281 = vst [vmem:[%s159 + $0x110] sm:$0xff] %v280
                  %v282 = vld [vmem:[%s158 + $0x140] sm:$0xff]
                  %283 = vst [vmem:[%s159 + $0x118] sm:$0xff] %v282
                  %v284 = vld [vmem:[%s158 + $0x148] sm:$0xff]
                  %285 = vst [vmem:[%s159 + $0x120] sm:$0xff] %v284
                  %v286 = vld [vmem:[%s158 + $0x150] sm:$0xff]
                  %287 = vst [vmem:[%s159 + $0x128] sm:$0xff] %v286
                  %s288 = sadd.s32 1, %s157
                  %p289 = scmp.ge.s32.totalorder %s288, %s148
                  %s290 = scalar_select %p289, 0, %s288
                  %s291 = smul.u32 %s290, 256
                  %s292 = smul.u32 %s290, 256
                  %s293 = scalar_lea.vmem %s117, %s291
                  %s294 = scalar_lea.vmem %s109, %s292 [#allocation3]
                $region52: #{kanc_mlp_big_forward.3} parent=46 // loop_footer
                  %s154 = sadd.s32 %s152, 1
                $region53: #{kanc_mlp_big_forward.3} parent=46 // loop_footer_branch
                  %151 = sbr.rel target = $region49
                $region54: #{kanc_mlp_big_forward.3} parent=46 // loop_exit
                  _
                %s295 = sshrl.u32 %s147, 5
                %s296 = sand.u32 %s147, 31
                %s297 = smul.u32 %s295, 32
                %s298 = smul.u32 128, %s297
                %s299 = sshra.s32 %s298, 4
                %s300 = scalar_lea.vmem %s117, %s299
                %s301 = smul.u32 128, %s297
                %s302 = sshra.s32 %s301, 4
                %s303 = scalar_lea.vmem %s109, %s302 [#allocation3]
                // While loop
                $region55: #{kanc_mlp_big_forward.3} parent=46 // loop_pre_header
                  _
                $region56: #{kanc_mlp_big_forward.3} parent=46 // loop_header
                  %s307 = sphi 0, %s309
                  %p308 = scmp.ge.s32.totalorder %s307, %s296
                  %s312 = sphi 0, %s321
                  %s313 = sphi %s300, %s324
                  %s314 = sphi %s303, %s325
                $region57: #{kanc_mlp_big_forward.3} parent=46 // loop_header_branch
                  %311 = sbr.rel (%p308) target = $region61
                $region58: #{kanc_mlp_big_forward.3} parent=46 // loop_body
                  %v315 = vld [vmem:[%s313] sm:$0xff]
                  %316 = vst [vmem:[%s314] sm:$0xff] %v315
                  %v317 = vld [vmem:[%s313 + $0x58] sm:$0xff]
                  %318 = vst [vmem:[%s314 + $0x30] sm:$0xff] %v317
                  %s319 = sadd.s32 1, %s312
                  %p320 = scmp.ge.s32.totalorder %s319, %s296
                  %s321 = scalar_select %p320, 0, %s319
                  %s322 = smul.u32 %s321, 8
                  %s323 = smul.u32 %s321, 8
                  %s324 = scalar_lea.vmem %s300, %s322
                  %s325 = scalar_lea.vmem %s303, %s323 [#allocation3]
                $region59: #{kanc_mlp_big_forward.3} parent=46 // loop_footer
                  %s309 = sadd.s32 %s307, 1
                $region60: #{kanc_mlp_big_forward.3} parent=46 // loop_footer_branch
                  %306 = sbr.rel target = $region56
                $region61: #{kanc_mlp_big_forward.3} parent=46 // loop_exit
                  _
              $region47: #{kanc_mlp_big_forward.3} parent=31 // pred_fallthru
                _
              %p326 = pneg %p143
              // Predicated region
              $region62: #{kanc_mlp_big_forward.3} parent=31 // pred_check
                _
              $region63: #{kanc_mlp_big_forward.3} parent=31 // pred_check_branch
                %328 = sbr.rel (%p143) target = $region65
              $region64: #{kanc_mlp_big_forward.3} parent=31 // pred_region
                %s329 = sand.u32 %s118, 7
                %s330 = ssub.s32 %s118, %s329
                %s331 = scalar_lea.vmem %s117, %s330
                %s332 = ssub.s32 %s118, %s329
                %s333 = scalar_lea.vmem %s109, %s332 [#allocation3]
                %s334 = sshrl.u32 %s118, 3
                %s335 = sshrl.u32 %s334, 5
                // While loop
                $region66: #{kanc_mlp_big_forward.3} parent=64 // loop_pre_header
                  _
                $region67: #{kanc_mlp_big_forward.3} parent=64 // loop_header
                  %s339 = sphi 0, %s341
                  %p340 = scmp.ge.s32.totalorder %s339, %s335
                  %s344 = sphi 0, %s477
                  %s345 = sphi %s117, %s480
                  %s346 = sphi %s109, %s481
                $region68: #{kanc_mlp_big_forward.3} parent=64 // loop_header_branch
                  %343 = sbr.rel (%p340) target = $region72
                $region69: #{kanc_mlp_big_forward.3} parent=64 // loop_body
                  %v347 = vld [vmem:[%s345] sm:$0xff]
                  %348 = vst [vmem:[%s346] sm:$0xff] %v347
                  %v349 = vld [vmem:[%s345 + $0x8] sm:$0xff]
                  %350 = vst [vmem:[%s346 + $0x8] sm:$0xff] %v349
                  %v351 = vld [vmem:[%s345 + $0x10] sm:$0xff]
                  %352 = vst [vmem:[%s346 + $0x10] sm:$0xff] %v351
                  %v353 = vld [vmem:[%s345 + $0x18] sm:$0xff]
                  %354 = vst [vmem:[%s346 + $0x18] sm:$0xff] %v353
                  %v355 = vld [vmem:[%s345 + $0x20] sm:$0xff]
                  %356 = vst [vmem:[%s346 + $0x20] sm:$0xff] %v355
                  %v357 = vld [vmem:[%s345 + $0x28] sm:$0xff]
                  %358 = vst [vmem:[%s346 + $0x28] sm:$0xff] %v357
                  %v359 = vld [vmem:[%s345 + $0x30] sm:$0xff]
                  %360 = vst [vmem:[%s346 + $0x30] sm:$0xff] %v359
                  %v361 = vld [vmem:[%s345 + $0x38] sm:$0xff]
                  %362 = vst [vmem:[%s346 + $0x38] sm:$0xff] %v361
                  %v363 = vld [vmem:[%s345 + $0x40] sm:$0xff]
                  %364 = vst [vmem:[%s346 + $0x40] sm:$0xff] %v363
                  %v365 = vld [vmem:[%s345 + $0x48] sm:$0xff]
                  %366 = vst [vmem:[%s346 + $0x48] sm:$0xff] %v365
                  %v367 = vld [vmem:[%s345 + $0x50] sm:$0xff]
                  %368 = vst [vmem:[%s346 + $0x50] sm:$0xff] %v367
                  %v369 = vld [vmem:[%s345 + $0x58] sm:$0xff]
                  %370 = vst [vmem:[%s346 + $0x58] sm:$0xff] %v369
                  %v371 = vld [vmem:[%s345 + $0x60] sm:$0xff]
                  %372 = vst [vmem:[%s346 + $0x60] sm:$0xff] %v371
                  %v373 = vld [vmem:[%s345 + $0x68] sm:$0xff]
                  %374 = vst [vmem:[%s346 + $0x68] sm:$0xff] %v373
                  %v375 = vld [vmem:[%s345 + $0x70] sm:$0xff]
                  %376 = vst [vmem:[%s346 + $0x70] sm:$0xff] %v375
                  %v377 = vld [vmem:[%s345 + $0x78] sm:$0xff]
                  %378 = vst [vmem:[%s346 + $0x78] sm:$0xff] %v377
                  %v379 = vld [vmem:[%s345 + $0x80] sm:$0xff]
                  %380 = vst [vmem:[%s346 + $0x80] sm:$0xff] %v379
                  %v381 = vld [vmem:[%s345 + $0x88] sm:$0xff]
                  %382 = vst [vmem:[%s346 + $0x88] sm:$0xff] %v381
                  %v383 = vld [vmem:[%s345 + $0x90] sm:$0xff]
                  %384 = vst [vmem:[%s346 + $0x90] sm:$0xff] %v383
                  %v385 = vld [vmem:[%s345 + $0x98] sm:$0xff]
                  %386 = vst [vmem:[%s346 + $0x98] sm:$0xff] %v385
                  %v387 = vld [vmem:[%s345 + $0xa0] sm:$0xff]
                  %388 = vst [vmem:[%s346 + $0xa0] sm:$0xff] %v387
                  %v389 = vld [vmem:[%s345 + $0xa8] sm:$0xff]
                  %390 = vst [vmem:[%s346 + $0xa8] sm:$0xff] %v389
                  %v391 = vld [vmem:[%s345 + $0xb0] sm:$0xff]
                  %392 = vst [vmem:[%s346 + $0xb0] sm:$0xff] %v391
                  %v393 = vld [vmem:[%s345 + $0xb8] sm:$0xff]
                  %394 = vst [vmem:[%s346 + $0xb8] sm:$0xff] %v393
                  %v395 = vld [vmem:[%s345 + $0xc0] sm:$0xff]
                  %396 = vst [vmem:[%s346 + $0xc0] sm:$0xff] %v395
                  %v397 = vld [vmem:[%s345 + $0xc8] sm:$0xff]
                  %398 = vst [vmem:[%s346 + $0xc8] sm:$0xff] %v397
                  %v399 = vld [vmem:[%s345 + $0xd0] sm:$0xff]
                  %400 = vst [vmem:[%s346 + $0xd0] sm:$0xff] %v399
                  %v401 = vld [vmem:[%s345 + $0xd8] sm:$0xff]
                  %402 = vst [vmem:[%s346 + $0xd8] sm:$0xff] %v401
                  %v403 = vld [vmem:[%s345 + $0xe0] sm:$0xff]
                  %404 = vst [vmem:[%s346 + $0xe0] sm:$0xff] %v403
                  %v405 = vld [vmem:[%s345 + $0xe8] sm:$0xff]
                  %406 = vst [vmem:[%s346 + $0xe8] sm:$0xff] %v405
                  %v407 = vld [vmem:[%s345 + $0xf0] sm:$0xff]
                  %408 = vst [vmem:[%s346 + $0xf0] sm:$0xff] %v407
                  %v409 = vld [vmem:[%s345 + $0xf8] sm:$0xff]
                  %410 = vst [vmem:[%s346 + $0xf8] sm:$0xff] %v409
                  %v411 = vld [vmem:[%s345 + $0x58] sm:$0xff]
                  %412 = vst [vmem:[%s346 + $0x30] sm:$0xff] %v411
                  %v413 = vld [vmem:[%s345 + $0x60] sm:$0xff]
                  %414 = vst [vmem:[%s346 + $0x38] sm:$0xff] %v413
                  %v415 = vld [vmem:[%s345 + $0x68] sm:$0xff]
                  %416 = vst [vmem:[%s346 + $0x40] sm:$0xff] %v415
                  %v417 = vld [vmem:[%s345 + $0x70] sm:$0xff]
                  %418 = vst [vmem:[%s346 + $0x48] sm:$0xff] %v417
                  %v419 = vld [vmem:[%s345 + $0x78] sm:$0xff]
                  %420 = vst [vmem:[%s346 + $0x50] sm:$0xff] %v419
                  %v421 = vld [vmem:[%s345 + $0x80] sm:$0xff]
                  %422 = vst [vmem:[%s346 + $0x58] sm:$0xff] %v421
                  %v423 = vld [vmem:[%s345 + $0x88] sm:$0xff]
                  %424 = vst [vmem:[%s346 + $0x60] sm:$0xff] %v423
                  %v425 = vld [vmem:[%s345 + $0x90] sm:$0xff]
                  %426 = vst [vmem:[%s346 + $0x68] sm:$0xff] %v425
                  %v427 = vld [vmem:[%s345 + $0x98] sm:$0xff]
                  %428 = vst [vmem:[%s346 + $0x70] sm:$0xff] %v427
                  %v429 = vld [vmem:[%s345 + $0xa0] sm:$0xff]
                  %430 = vst [vmem:[%s346 + $0x78] sm:$0xff] %v429
                  %v431 = vld [vmem:[%s345 + $0xa8] sm:$0xff]
                  %432 = vst [vmem:[%s346 + $0x80] sm:$0xff] %v431
                  %v433 = vld [vmem:[%s345 + $0xb0] sm:$0xff]
                  %434 = vst [vmem:[%s346 + $0x88] sm:$0xff] %v433
                  %v435 = vld [vmem:[%s345 + $0xb8] sm:$0xff]
                  %436 = vst [vmem:[%s346 + $0x90] sm:$0xff] %v435
                  %v437 = vld [vmem:[%s345 + $0xc0] sm:$0xff]
                  %438 = vst [vmem:[%s346 + $0x98] sm:$0xff] %v437
                  %v439 = vld [vmem:[%s345 + $0xc8] sm:$0xff]
                  %440 = vst [vmem:[%s346 + $0xa0] sm:$0xff] %v439
                  %v441 = vld [vmem:[%s345 + $0xd0] sm:$0xff]
                  %442 = vst [vmem:[%s346 + $0xa8] sm:$0xff] %v441
                  %v443 = vld [vmem:[%s345 + $0xd8] sm:$0xff]
                  %444 = vst [vmem:[%s346 + $0xb0] sm:$0xff] %v443
                  %v445 = vld [vmem:[%s345 + $0xe0] sm:$0xff]
                  %446 = vst [vmem:[%s346 + $0xb8] sm:$0xff] %v445
                  %v447 = vld [vmem:[%s345 + $0xe8] sm:$0xff]
                  %448 = vst [vmem:[%s346 + $0xc0] sm:$0xff] %v447
                  %v449 = vld [vmem:[%s345 + $0xf0] sm:$0xff]
                  %450 = vst [vmem:[%s346 + $0xc8] sm:$0xff] %v449
                  %v451 = vld [vmem:[%s345 + $0xf8] sm:$0xff]
                  %452 = vst [vmem:[%s346 + $0xd0] sm:$0xff] %v451
                  %v453 = vld [vmem:[%s345 + $0x100] sm:$0xff]
                  %454 = vst [vmem:[%s346 + $0xd8] sm:$0xff] %v453
                  %v455 = vld [vmem:[%s345 + $0x108] sm:$0xff]
                  %456 = vst [vmem:[%s346 + $0xe0] sm:$0xff] %v455
                  %v457 = vld [vmem:[%s345 + $0x110] sm:$0xff]
                  %458 = vst [vmem:[%s346 + $0xe8] sm:$0xff] %v457
                  %v459 = vld [vmem:[%s345 + $0x118] sm:$0xff]
                  %460 = vst [vmem:[%s346 + $0xf0] sm:$0xff] %v459
                  %v461 = vld [vmem:[%s345 + $0x120] sm:$0xff]
                  %462 = vst [vmem:[%s346 + $0xf8] sm:$0xff] %v461
                  %v463 = vld [vmem:[%s345 + $0x128] sm:$0xff]
                  %464 = vst [vmem:[%s346 + $0x100] sm:$0xff] %v463
                  %v465 = vld [vmem:[%s345 + $0x130] sm:$0xff]
                  %466 = vst [vmem:[%s346 + $0x108] sm:$0xff] %v465
                  %v467 = vld [vmem:[%s345 + $0x138] sm:$0xff]
                  %468 = vst [vmem:[%s346 + $0x110] sm:$0xff] %v467
                  %v469 = vld [vmem:[%s345 + $0x140] sm:$0xff]
                  %470 = vst [vmem:[%s346 + $0x118] sm:$0xff] %v469
                  %v471 = vld [vmem:[%s345 + $0x148] sm:$0xff]
                  %472 = vst [vmem:[%s346 + $0x120] sm:$0xff] %v471
                  %v473 = vld [vmem:[%s345 + $0x150] sm:$0xff]
                  %474 = vst [vmem:[%s346 + $0x128] sm:$0xff] %v473
                  %s475 = sadd.s32 1, %s344
                  %p476 = scmp.ge.s32.totalorder %s475, %s335
                  %s477 = scalar_select %p476, 0, %s475
                  %s478 = smul.u32 %s477, 256
                  %s479 = smul.u32 %s477, 256
                  %s480 = scalar_lea.vmem %s117, %s478
                  %s481 = scalar_lea.vmem %s109, %s479 [#allocation3]
                $region70: #{kanc_mlp_big_forward.3} parent=64 // loop_footer
                  %s341 = sadd.s32 %s339, 1
                $region71: #{kanc_mlp_big_forward.3} parent=64 // loop_footer_branch
                  %338 = sbr.rel target = $region67
                $region72: #{kanc_mlp_big_forward.3} parent=64 // loop_exit
                  _
                %s482 = sshrl.u32 %s334, 5
                %s483 = sand.u32 %s334, 31
                %s484 = smul.u32 %s482, 32
                %s485 = smul.u32 128, %s484
                %s486 = sshra.s32 %s485, 4
                %s487 = scalar_lea.vmem %s117, %s486
                %s488 = smul.u32 128, %s484
                %s489 = sshra.s32 %s488, 4
                %s490 = scalar_lea.vmem %s109, %s489 [#allocation3]
                // While loop
                $region73: #{kanc_mlp_big_forward.3} parent=64 // loop_pre_header
                  _
                $region74: #{kanc_mlp_big_forward.3} parent=64 // loop_header
                  %s494 = sphi 0, %s496
                  %p495 = scmp.ge.s32.totalorder %s494, %s483
                  %s499 = sphi 0, %s508
                  %s500 = sphi %s487, %s511
                  %s501 = sphi %s490, %s512
                $region75: #{kanc_mlp_big_forward.3} parent=64 // loop_header_branch
                  %498 = sbr.rel (%p495) target = $region79
                $region76: #{kanc_mlp_big_forward.3} parent=64 // loop_body
                  %v502 = vld [vmem:[%s500] sm:$0xff]
                  %503 = vst [vmem:[%s501] sm:$0xff] %v502
                  %v504 = vld [vmem:[%s500 + $0x58] sm:$0xff]
                  %505 = vst [vmem:[%s501 + $0x30] sm:$0xff] %v504
                  %s506 = sadd.s32 1, %s499
                  %p507 = scmp.ge.s32.totalorder %s506, %s483
                  %s508 = scalar_select %p507, 0, %s506
                  %s509 = smul.u32 %s508, 8
                  %s510 = smul.u32 %s508, 8
                  %s511 = scalar_lea.vmem %s487, %s509
                  %s512 = scalar_lea.vmem %s490, %s510 [#allocation3]
                $region77: #{kanc_mlp_big_forward.3} parent=64 // loop_footer
                  %s496 = sadd.s32 %s494, 1
                $region78: #{kanc_mlp_big_forward.3} parent=64 // loop_footer_branch
                  %493 = sbr.rel target = $region74
                $region79: #{kanc_mlp_big_forward.3} parent=64 // loop_exit
                  _
                %s513 = sshllo.u32 0, %s329
                loop: start=0, step=1, limit=1
                $region80: #{kanc_mlp_big_forward.3} parent=64 // loop_pre_header
                  _
                $region81: #{kanc_mlp_big_forward.3} parent=64 // loop_header
                  %s515 = sphi 0, %s519
                  %p516 = scmp.ge.s32.totalorder %s515, 1
                  %s520 = sphi %s331, %s331
                  %s521 = sphi %s333, %s333
                $region82: #{kanc_mlp_big_forward.3} parent=64 // loop_header_branch
                  %518 = sbr.rel (%p516) target = $region86
                $region83: #{kanc_mlp_big_forward.3} parent=64 // loop_body
                  %v522 = vld [vmem:[%s520] sm:%s513]
                  %523 = vst [vmem:[%s521] sm:%s513] %v522
                  %v524 = vld [vmem:[%s520 + $0x58] sm:%s513]
                  %525 = vst [vmem:[%s521 + $0x30] sm:%s513] %v524
                $region84: #{kanc_mlp_big_forward.3} parent=64 // loop_footer
                  %s519 = sadd.s32 1, %s515
                $region85: #{kanc_mlp_big_forward.3} parent=64 // loop_footer_branch
                  %514 = sbr.rel target = $region81
                $region86: #{kanc_mlp_big_forward.3} parent=64 // loop_exit
                  _
              $region65: #{kanc_mlp_big_forward.3} parent=31 // pred_fallthru
                _
            $region32: #{kanc_mlp_big_forward.3} parent=27 // pred_fallthru
              _
            // Predicated region
            $region33: #{kanc_mlp_big_forward.3} parent=27 // pred_check
              %p126 = pneg %p122
            $region34: #{kanc_mlp_big_forward.3} parent=27 // pred_check_branch
              %128 = sbr.rel (%p126) target = $region36
            $region35: #{kanc_mlp_big_forward.3} parent=27 // pred_region
              %s129 = sshllo.u32 0, %s118
              loop: start=0, step=1, limit=1
              $region37: #{kanc_mlp_big_forward.3} parent=35 // loop_pre_header
                _
              $region38: #{kanc_mlp_big_forward.3} parent=35 // loop_header
                %s131 = sphi 0, %s135
                %p132 = scmp.ge.s32.totalorder %s131, 1
                %s136 = sphi %s117, %s117
                %s137 = sphi %s109, %s109
              $region39: #{kanc_mlp_big_forward.3} parent=35 // loop_header_branch
                %134 = sbr.rel (%p132) target = $region43
              $region40: #{kanc_mlp_big_forward.3} parent=35 // loop_body
                %v138 = vld [vmem:[%s136] sm:%s129]
                %139 = vst [vmem:[%s137] sm:%s129] %v138
                %v140 = vld [vmem:[%s136 + $0x58] sm:%s129]
                %141 = vst [vmem:[%s137 + $0x30] sm:%s129] %v140
              $region41: #{kanc_mlp_big_forward.3} parent=35 // loop_footer
                %s135 = sadd.s32 1, %s131
              $region42: #{kanc_mlp_big_forward.3} parent=35 // loop_footer_branch
                %130 = sbr.rel target = $region38
              $region43: #{kanc_mlp_big_forward.3} parent=35 // loop_exit
                _
            $region36: #{kanc_mlp_big_forward.3} parent=27 // pred_fallthru
              _
          $region28: #{kanc_mlp_big_forward.3} parent=23 // pred_fallthru
            _
          %526 = vnop
        $region24: #{kanc_mlp_big_forward.3} parent=19 // pred_fallthru
          _
      $region20: #{kanc_mlp_big_forward.3} parent=5 // pred_fallthru
        _
      %p527 = scmp.le.s32.totalorder 1, %s8
      %p528 = scmp.lt.s32.totalorder %s8, 3
      %p529 = pnand %p527, %p528
      %p530 = pneg %p529
      // Predicated region
      $region87: #{kanc_mlp_big_forward.3} parent=5 // pred_check
        _
      $region88: #{kanc_mlp_big_forward.3} parent=5 // pred_check_branch
        %532 = sbr.rel (%p529) target = $region90
      $region89: #{kanc_mlp_big_forward.3} parent=5 // pred_region
        %s533 = ssub.s32 %s8, 1
        %s534 = sand.u32 %s21, 1
        %s535 = sand.u32 %s21, 1
        %s536 = smul.addr %s535, 96
        %s537 = scalar_lea.vmem [#allocation3], %s536
        // Predicated region
        $region91: #{kanc_mlp_big_forward.3} parent=89 // pred_check
          %p538 = pneg %p34
        $region92: #{kanc_mlp_big_forward.3} parent=89 // pred_check_branch
          %540 = sbr.rel (%p538) target = $region94
        $region93: #{kanc_mlp_big_forward.3} parent=89 // pred_region
          _
        $region94: #{kanc_mlp_big_forward.3} parent=89 // pred_fallthru
          _
        %s541 = sand.u32 %s21, 1
        %s542 = sand.u32 %s21, 1
        %s543 = smul.addr %s542, 96
        %s544 = scalar_lea.vmem [#allocation3], %s543
        %p545 = pneg %p34
        %p546 = pneg %p31
        %p547 = pneg %p55
        %p548 = pneg %p52
        %p549 = pneg %p81
        %p550 = pneg %p78
        %s551 = sand.u32 %s68, 1
        %s552 = sand.u32 %s68, 1
        %s553 = smul.addr %s552, 48
        %s554 = scalar_lea.vmem [#allocation4], %s553
        %s555 = smul.u32 6, %s13
        %s556 = ssub.s32 11, %s555
        %p557 = scmp.lt.s32.totalorder %s556, 6
        %s558 = scalar_select %p557, %s556, 6
        %s559 = smul.u32 256, %s558
        %s560 = smul.u32 6, %s13
        %s561 = ssub.s32 11, %s560
        %p562 = scmp.lt.s32.totalorder %s561, 6
        %s563 = scalar_select %p562, %s561, 6
        %s564 = smul.u32 128, %s563
        loop: start=0, step=1, limit=6
        $region95: #{kanc_mlp_big_forward.3} parent=89 // loop_pre_header
          _
        $region96: #{kanc_mlp_big_forward.3} parent=89 // loop_header
          %s566 = sphi 0, %s570
          %p567 = scmp.ge.s32.totalorder %s566, 6
        $region97: #{kanc_mlp_big_forward.3} parent=89 // loop_header_branch
          %569 = sbr.rel (%p567) target = $region101
        $region98: #{kanc_mlp_big_forward.3} parent=89 // loop_body
          %s571 = smul.u32 %s566, 128
          %s572 = sshra.s32 %s571, 7
          %s573 = sand.u32 %s571, 127
          %s574 = smul.addr %s572, 8
          %s575 = scalar_lea.vmem %s537, %s574 [#allocation3]
          %v576 = vld [vmem:[%s575] sm:$0xff]
          %v577 = vsub.f32 0.0, %v576
          %v578 = vmul.f32 %v577, 1.442695
          %v579 = vpow.pop %v578
          %v580 = vadd.f32 %v579, 1.0
          %v581 = vrcp.pop %v580
          %v582 = vmul.f32 %v576, %v581
          %s583 = smul.addr %s572, 8
          %s584 = scalar_lea.vmem [#allocation2], %s583
          %585 = vst [vmem:[%s584] sm:$0xff] %v582
          %vm586 = vcmp.ge.f32.partialorder %v576, -2.2
          %v587 = vsel %vm586, 1, 0
          %v588 = vcvt.s32.f32 %v587
          %vm589 = vcmp.ge.f32.partialorder %v576, -1.8
          %v590 = vsel %vm589, 1, 0
          %v591 = vcvt.s32.f32 %v590
          %vm592 = vcmp.ge.f32.partialorder %v576, -1.4
          %v593 = vsel %vm592, 1, 0
          %v594 = vcvt.s32.f32 %v593
          %vm595 = vcmp.ge.f32.partialorder %v576, -1.0
          %v596 = vsel %vm595, 1, 0
          %v597 = vcvt.s32.f32 %v596
          %vm598 = vcmp.ge.f32.partialorder %v576, -0.6
          %v599 = vsel %vm598, 1, 0
          %v600 = vcvt.s32.f32 %v599
          %vm601 = vcmp.ge.f32.partialorder %v576, -0.2
          %v602 = vsel %vm601, 1, 0
          %v603 = vcvt.s32.f32 %v602
          %vm604 = vcmp.ge.f32.partialorder %v576, 0.2
          %v605 = vsel %vm604, 1, 0
          %v606 = vcvt.s32.f32 %v605
          %vm607 = vcmp.ge.f32.partialorder %v576, 0.6
          %v608 = vsel %vm607, 1, 0
          %v609 = vcvt.s32.f32 %v608
          %vm610 = vcmp.ge.f32.partialorder %v576, 1.0
          %v611 = vsel %vm610, 1, 0
          %v612 = vcvt.s32.f32 %v611
          %vm613 = vcmp.ge.f32.partialorder %v576, 1.4
          %v614 = vsel %vm613, 1, 0
          %v615 = vcvt.s32.f32 %v614
          %vm616 = vcmp.ge.f32.partialorder %v576, 1.8
          %v617 = vsel %vm616, 1, 0
          %v618 = vcvt.s32.f32 %v617
          %vm619 = vcmp.ge.f32.partialorder %v576, 2.2
          %v620 = vsel %vm619, 1, 0
          %v621 = vcvt.s32.f32 %v620
          %v622 = vsub.f32 %v588, %v591
          %v623 = vsub.f32 %v591, %v594
          %v624 = vsub.f32 %v594, %v597
          %v625 = vsub.f32 %v597, %v600
          %v626 = vsub.f32 %v600, %v603
          %v627 = vsub.f32 %v603, %v606
          %v628 = vsub.f32 %v606, %v609
          %v629 = vsub.f32 %v609, %v612
          %v630 = vsub.f32 %v612, %v615
          %v631 = vsub.f32 %v615, %v618
          %v632 = vsub.f32 %v618, %v621
          %v633 = vsub.f32 %v576, -2.2
          %v634 = vsub.f32 %v576, -1.8
          %v635 = vsub.f32 %v576, -1.4
          %v636 = vsub.f32 %v576, -1.0
          %v637 = vsub.f32 %v576, -0.6
          %v638 = vsub.f32 %v576, -0.2
          %v639 = vsub.f32 %v576, 0.2
          %v640 = vsub.f32 %v576, 0.6
          %v641 = vsub.f32 %v576, 1.0
          %v642 = vsub.f32 %v576, 1.4
          %v643 = vsub.f32 %v576, 1.8
          %v644 = vsub.f32 %v576, 2.2
          %v645 = vmul.f32 %v633, %v622
          %v646 = vmul.f32 %v635, %v623
          %v647 = vsub.f32 %v645, %v646
          %v648 = vmul.f32 %v634, %v623
          %v649 = vmul.f32 %v636, %v624
          %v650 = vsub.f32 %v648, %v649
          %v651 = vmul.f32 %v635, %v624
          %v652 = vmul.f32 %v637, %v625
          %v653 = vsub.f32 %v651, %v652
          %v654 = vmul.f32 %v636, %v625
          %v655 = vmul.f32 %v638, %v626
          %v656 = vsub.f32 %v654, %v655
          %v657 = vmul.f32 %v637, %v626
          %v658 = vmul.f32 %v639, %v627
          %v659 = vsub.f32 %v657, %v658
          %v660 = vmul.f32 %v638, %v627
          %v661 = vmul.f32 %v640, %v628
          %v662 = vsub.f32 %v660, %v661
          %v663 = vmul.f32 %v639, %v628
          %v664 = vmul.f32 %v641, %v629
          %v665 = vsub.f32 %v663, %v664
          %v666 = vmul.f32 %v640, %v629
          %v667 = vmul.f32 %v642, %v630
          %v668 = vsub.f32 %v666, %v667
          %v669 = vmul.f32 %v641, %v630
          %v670 = vmul.f32 %v643, %v631
          %v671 = vsub.f32 %v669, %v670
          %v672 = vmul.f32 %v642, %v631
          %v673 = vmul.f32 %v644, %v632
          %v674 = vsub.f32 %v672, %v673
          %v675 = vmul.f32 %v633, %v647
          %v676 = vmul.f32 %v636, %v650
          %v677 = vsub.f32 %v675, %v676
          %v678 = vmul.f32 %v634, %v650
          %v679 = vmul.f32 %v637, %v653
          %v680 = vsub.f32 %v678, %v679
          %v681 = vmul.f32 %v635, %v653
          %v682 = vmul.f32 %v638, %v656
          %v683 = vsub.f32 %v681, %v682
          %v684 = vmul.f32 %v636, %v656
          %v685 = vmul.f32 %v639, %v659
          %v686 = vsub.f32 %v684, %v685
          %v687 = vmul.f32 %v637, %v659
          %v688 = vmul.f32 %v640, %v662
          %v689 = vsub.f32 %v687, %v688
          %v690 = vmul.f32 %v638, %v662
          %v691 = vmul.f32 %v641, %v665
          %v692 = vsub.f32 %v690, %v691
          %v693 = vmul.f32 %v639, %v665
          %v694 = vmul.f32 %v642, %v668
          %v695 = vsub.f32 %v693, %v694
          %v696 = vmul.f32 %v640, %v668
          %v697 = vmul.f32 %v643, %v671
          %v698 = vsub.f32 %v696, %v697
          %v699 = vmul.f32 %v641, %v671
          %v700 = vmul.f32 %v644, %v674
          %v701 = vsub.f32 %v699, %v700
          %v702 = vmul.f32 %v633, %v677
          %v703 = vmul.f32 %v637, %v680
          %v704 = vsub.f32 %v702, %v703
          %v705 = vmul.f32 %v634, %v680
          %v706 = vmul.f32 %v638, %v683
          %v707 = vsub.f32 %v705, %v706
          %v708 = vmul.f32 %v635, %v683
          %v709 = vmul.f32 %v639, %v686
          %v710 = vsub.f32 %v708, %v709
          %v711 = vmul.f32 %v636, %v686
          %v712 = vmul.f32 %v640, %v689
          %v713 = vsub.f32 %v711, %v712
          %v714 = vmul.f32 %v637, %v689
          %v715 = vmul.f32 %v641, %v692
          %v716 = vsub.f32 %v714, %v715
          %v717 = vmul.f32 %v638, %v692
          %v718 = vmul.f32 %v642, %v695
          %v719 = vsub.f32 %v717, %v718
          %v720 = vmul.f32 %v639, %v695
          %v721 = vmul.f32 %v643, %v698
          %v722 = vsub.f32 %v720, %v721
          %v723 = vmul.f32 %v640, %v698
          %v724 = vmul.f32 %v644, %v701
          %v725 = vsub.f32 %v723, %v724
          %726 = vst [vmem:[%s584 + $0x60] sm:$0xff] %v704
          %727 = vst [vmem:[%s584 + $0xc0] sm:$0xff] %v707
          %728 = vst [vmem:[%s584 + $0x120] sm:$0xff] %v710
          %729 = vst [vmem:[%s584 + $0x180] sm:$0xff] %v713
          %730 = vst [vmem:[%s584 + $0x1e0] sm:$0xff] %v716
          %731 = vst [vmem:[%s584 + $0x240] sm:$0xff] %v719
          %732 = vst [vmem:[%s584 + $0x2a0] sm:$0xff] %v722
          %733 = vst [vmem:[%s584 + $0x300] sm:$0xff] %v725
          %v734 = vld [vmem:[%s575 + $0x30] sm:$0xff]
          %v735 = vsub.f32 0.0, %v734
          %v736 = vmul.f32 %v735, 1.442695
          %v737 = vpow.pop %v736
          %v738 = vadd.f32 %v737, 1.0
          %v739 = vrcp.pop %v738
          %v740 = vmul.f32 %v734, %v739
          %741 = vst [vmem:[%s584 + $0x30] sm:$0xff] %v740
          %vm742 = vcmp.ge.f32.partialorder %v734, -2.2
          %v743 = vsel %vm742, 1, 0
          %v744 = vcvt.s32.f32 %v743
          %vm745 = vcmp.ge.f32.partialorder %v734, -1.8
          %v746 = vsel %vm745, 1, 0
          %v747 = vcvt.s32.f32 %v746
          %vm748 = vcmp.ge.f32.partialorder %v734, -1.4
          %v749 = vsel %vm748, 1, 0
          %v750 = vcvt.s32.f32 %v749
          %vm751 = vcmp.ge.f32.partialorder %v734, -1.0
          %v752 = vsel %vm751, 1, 0
          %v753 = vcvt.s32.f32 %v752
          %vm754 = vcmp.ge.f32.partialorder %v734, -0.6
          %v755 = vsel %vm754, 1, 0
          %v756 = vcvt.s32.f32 %v755
          %vm757 = vcmp.ge.f32.partialorder %v734, -0.2
          %v758 = vsel %vm757, 1, 0
          %v759 = vcvt.s32.f32 %v758
          %vm760 = vcmp.ge.f32.partialorder %v734, 0.2
          %v761 = vsel %vm760, 1, 0
          %v762 = vcvt.s32.f32 %v761
          %vm763 = vcmp.ge.f32.partialorder %v734, 0.6
          %v764 = vsel %vm763, 1, 0
          %v765 = vcvt.s32.f32 %v764
          %vm766 = vcmp.ge.f32.partialorder %v734, 1.0
          %v767 = vsel %vm766, 1, 0
          %v768 = vcvt.s32.f32 %v767
          %vm769 = vcmp.ge.f32.partialorder %v734, 1.4
          %v770 = vsel %vm769, 1, 0
          %v771 = vcvt.s32.f32 %v770
          %vm772 = vcmp.ge.f32.partialorder %v734, 1.8
          %v773 = vsel %vm772, 1, 0
          %v774 = vcvt.s32.f32 %v773
          %vm775 = vcmp.ge.f32.partialorder %v734, 2.2
          %v776 = vsel %vm775, 1, 0
          %v777 = vcvt.s32.f32 %v776
          %v778 = vsub.f32 %v744, %v747
          %v779 = vsub.f32 %v747, %v750
          %v780 = vsub.f32 %v750, %v753
          %v781 = vsub.f32 %v753, %v756
          %v782 = vsub.f32 %v756, %v759
          %v783 = vsub.f32 %v759, %v762
          %v784 = vsub.f32 %v762, %v765
          %v785 = vsub.f32 %v765, %v768
          %v786 = vsub.f32 %v768, %v771
          %v787 = vsub.f32 %v771, %v774
          %v788 = vsub.f32 %v774, %v777
          %v789 = vsub.f32 %v734, -2.2
          %v790 = vsub.f32 %v734, -1.8
          %v791 = vsub.f32 %v734, -1.4
          %v792 = vsub.f32 %v734, -1.0
          %v793 = vsub.f32 %v734, -0.6
          %v794 = vsub.f32 %v734, -0.2
          %v795 = vsub.f32 %v734, 0.2
          %v796 = vsub.f32 %v734, 0.6
          %v797 = vsub.f32 %v734, 1.0
          %v798 = vsub.f32 %v734, 1.4
          %v799 = vsub.f32 %v734, 1.8
          %v800 = vsub.f32 %v734, 2.2
          %v801 = vmul.f32 %v789, %v778
          %v802 = vmul.f32 %v791, %v779
          %v803 = vsub.f32 %v801, %v802
          %v804 = vmul.f32 %v790, %v779
          %v805 = vmul.f32 %v792, %v780
          %v806 = vsub.f32 %v804, %v805
          %v807 = vmul.f32 %v791, %v780
          %v808 = vmul.f32 %v793, %v781
          %v809 = vsub.f32 %v807, %v808
          %v810 = vmul.f32 %v792, %v781
          %v811 = vmul.f32 %v794, %v782
          %v812 = vsub.f32 %v810, %v811
          %v813 = vmul.f32 %v793, %v782
          %v814 = vmul.f32 %v795, %v783
          %v815 = vsub.f32 %v813, %v814
          %v816 = vmul.f32 %v794, %v783
          %v817 = vmul.f32 %v796, %v784
          %v818 = vsub.f32 %v816, %v817
          %v819 = vmul.f32 %v795, %v784
          %v820 = vmul.f32 %v797, %v785
          %v821 = vsub.f32 %v819, %v820
          %v822 = vmul.f32 %v796, %v785
          %v823 = vmul.f32 %v798, %v786
          %v824 = vsub.f32 %v822, %v823
          %v825 = vmul.f32 %v797, %v786
          %v826 = vmul.f32 %v799, %v787
          %v827 = vsub.f32 %v825, %v826
          %v828 = vmul.f32 %v798, %v787
          %v829 = vmul.f32 %v800, %v788
          %v830 = vsub.f32 %v828, %v829
          %v831 = vmul.f32 %v789, %v803
          %v832 = vmul.f32 %v792, %v806
          %v833 = vsub.f32 %v831, %v832
          %v834 = vmul.f32 %v790, %v806
          %v835 = vmul.f32 %v793, %v809
          %v836 = vsub.f32 %v834, %v835
          %v837 = vmul.f32 %v791, %v809
          %v838 = vmul.f32 %v794, %v812
          %v839 = vsub.f32 %v837, %v838
          %v840 = vmul.f32 %v792, %v812
          %v841 = vmul.f32 %v795, %v815
          %v842 = vsub.f32 %v840, %v841
          %v843 = vmul.f32 %v793, %v815
          %v844 = vmul.f32 %v796, %v818
          %v845 = vsub.f32 %v843, %v844
          %v846 = vmul.f32 %v794, %v818
          %v847 = vmul.f32 %v797, %v821
          %v848 = vsub.f32 %v846, %v847
          %v849 = vmul.f32 %v795, %v821
          %v850 = vmul.f32 %v798, %v824
          %v851 = vsub.f32 %v849, %v850
          %v852 = vmul.f32 %v796, %v824
          %v853 = vmul.f32 %v799, %v827
          %v854 = vsub.f32 %v852, %v853
          %v855 = vmul.f32 %v797, %v827
          %v856 = vmul.f32 %v800, %v830
          %v857 = vsub.f32 %v855, %v856
          %v858 = vmul.f32 %v789, %v833
          %v859 = vmul.f32 %v793, %v836
          %v860 = vsub.f32 %v858, %v859
          %v861 = vmul.f32 %v790, %v836
          %v862 = vmul.f32 %v794, %v839
          %v863 = vsub.f32 %v861, %v862
          %v864 = vmul.f32 %v791, %v839
          %v865 = vmul.f32 %v795, %v842
          %v866 = vsub.f32 %v864, %v865
          %v867 = vmul.f32 %v792, %v842
          %v868 = vmul.f32 %v796, %v845
          %v869 = vsub.f32 %v867, %v868
          %v870 = vmul.f32 %v793, %v845
          %v871 = vmul.f32 %v797, %v848
          %v872 = vsub.f32 %v870, %v871
          %v873 = vmul.f32 %v794, %v848
          %v874 = vmul.f32 %v798, %v851
          %v875 = vsub.f32 %v873, %v874
          %v876 = vmul.f32 %v795, %v851
          %v877 = vmul.f32 %v799, %v854
          %v878 = vsub.f32 %v876, %v877
          %v879 = vmul.f32 %v796, %v854
          %v880 = vmul.f32 %v800, %v857
          %v881 = vsub.f32 %v879, %v880
          %882 = vst [vmem:[%s584 + $0x90] sm:$0xff] %v860
          %883 = vst [vmem:[%s584 + $0xf0] sm:$0xff] %v863
          %884 = vst [vmem:[%s584 + $0x150] sm:$0xff] %v866
          %885 = vst [vmem:[%s584 + $0x1b0] sm:$0xff] %v869
          %886 = vst [vmem:[%s584 + $0x210] sm:$0xff] %v872
          %887 = vst [vmem:[%s584 + $0x270] sm:$0xff] %v875
          %888 = vst [vmem:[%s584 + $0x2d0] sm:$0xff] %v878
          %889 = vst [vmem:[%s584 + $0x330] sm:$0xff] %v881
        $region99: #{kanc_mlp_big_forward.3} parent=89 // loop_footer
          %s570 = sadd.s32 1, %s566
        $region100: #{kanc_mlp_big_forward.3} parent=89 // loop_footer_branch
          %565 = sbr.rel target = $region96
        $region101: #{kanc_mlp_big_forward.3} parent=89 // loop_exit
          _
        %v890 = vld [vmem:[%s1] sm:$0x1f]
        %v891 = vld [vmem:[%s1 + $0x8] sm:$0x1f]
        %v892 = vld [vmem:[#allocation2] sm:$0xff]
        %v893 = vld [vmem:[#allocation2 + $0x8] sm:$0xff]
        %v894 = vld [vmem:[#allocation2 + $0x10] sm:$0xff]
        %v895 = vld [vmem:[#allocation2 + $0x18] sm:$0xff]
        %v896 = vld [vmem:[#allocation2 + $0x20] sm:$0xff]
        %v897 = vld [vmem:[#allocation2 + $0x28] sm:$0xff]
        %v898 = vld [vmem:[#allocation2 + $0x30] sm:$0xff]
        %v899 = vld [vmem:[#allocation2 + $0x38] sm:$0xff]
        %v900 = vld [vmem:[#allocation2 + $0x40] sm:$0xff]
        %v901 = vld [vmem:[#allocation2 + $0x48] sm:$0xff]
        %v902 = vld [vmem:[#allocation2 + $0x50] sm:$0xff]
        %v903 = vld [vmem:[#allocation2 + $0x58] sm:$0xff]
        %v904 = vld [vmem:[#allocation2 + $0x60] sm:$0xff]
        %v905 = vld [vmem:[#allocation2 + $0x68] sm:$0xff]
        %v906 = vld [vmem:[#allocation2 + $0x70] sm:$0xff]
        %v907 = vld [vmem:[#allocation2 + $0x78] sm:$0xff]
        %v908 = vld [vmem:[#allocation2 + $0x80] sm:$0xff]
        %v909 = vld [vmem:[#allocation2 + $0x88] sm:$0xff]
        %v910 = vld [vmem:[#allocation2 + $0x90] sm:$0xff]
        %v911 = vld [vmem:[#allocation2 + $0x98] sm:$0xff]
        %v912 = vld [vmem:[#allocation2 + $0xa0] sm:$0xff]
        %v913 = vld [vmem:[#allocation2 + $0xa8] sm:$0xff]
        %v914 = vld [vmem:[#allocation2 + $0xb0] sm:$0xff]
        %v915 = vld [vmem:[#allocation2 + $0xb8] sm:$0xff]
        %v916 = vld [vmem:[#allocation2 + $0xc0] sm:$0xff]
        %v917 = vld [vmem:[#allocation2 + $0xc8] sm:$0xff]
        %v918 = vld [vmem:[#allocation2 + $0xd0] sm:$0xff]
        %v919 = vld [vmem:[#allocation2 + $0xd8] sm:$0xff]
        %v920 = vld [vmem:[#allocation2 + $0xe0] sm:$0xff]
        %v921 = vld [vmem:[#allocation2 + $0xe8] sm:$0xff]
        %v922 = vld [vmem:[#allocation2 + $0xf0] sm:$0xff]
        %v923 = vld [vmem:[#allocation2 + $0xf8] sm:$0xff]
        %v924 = vld [vmem:[#allocation2 + $0x100] sm:$0xff]
        %v925 = vld [vmem:[#allocation2 + $0x108] sm:$0xff]
        %v926 = vld [vmem:[#allocation2 + $0x110] sm:$0xff]
        %v927 = vld [vmem:[#allocation2 + $0x118] sm:$0xff]
        %v928 = vld [vmem:[#allocation2 + $0x120] sm:$0xff]
        %v929 = vld [vmem:[#allocation2 + $0x128] sm:$0xff]
        %v930 = vld [vmem:[#allocation2 + $0x130] sm:$0xff]
        %v931 = vld [vmem:[#allocation2 + $0x138] sm:$0xff]
        %v932 = vld [vmem:[#allocation2 + $0x140] sm:$0xff]
        %v933 = vld [vmem:[#allocation2 + $0x148] sm:$0xff]
        %v934 = vld [vmem:[#allocation2 + $0x150] sm:$0xff]
        %v935 = vld [vmem:[#allocation2 + $0x158] sm:$0xff]
        %v936 = vld [vmem:[#allocation2 + $0x160] sm:$0xff]
        %v937 = vld [vmem:[#allocation2 + $0x168] sm:$0xff]
        %v938 = vld [vmem:[#allocation2 + $0x170] sm:$0xff]
        %v939 = vld [vmem:[#allocation2 + $0x178] sm:$0xff]
        %v940 = vld [vmem:[#allocation2 + $0x180] sm:$0xff]
        %v941 = vld [vmem:[#allocation2 + $0x188] sm:$0xff]
        %v942 = vld [vmem:[#allocation2 + $0x190] sm:$0xff]
        %v943 = vld [vmem:[#allocation2 + $0x198] sm:$0xff]
        %v944 = vld [vmem:[#allocation2 + $0x1a0] sm:$0xff]
        %v945 = vld [vmem:[#allocation2 + $0x1a8] sm:$0xff]
        %v946 = vld [vmem:[#allocation2 + $0x1b0] sm:$0xff]
        %v947 = vld [vmem:[#allocation2 + $0x1b8] sm:$0xff]
        %v948 = vld [vmem:[#allocation2 + $0x1c0] sm:$0xff]
        %v949 = vld [vmem:[#allocation2 + $0x1c8] sm:$0xff]
        %v950 = vld [vmem:[#allocation2 + $0x1d0] sm:$0xff]
        %v951 = vld [vmem:[#allocation2 + $0x1d8] sm:$0xff]
        %v952 = vld [vmem:[#allocation2 + $0x1e0] sm:$0xff]
        %v953 = vld [vmem:[#allocation2 + $0x1e8] sm:$0xff]
        %v954 = vld [vmem:[#allocation2 + $0x1f0] sm:$0xff]
        %v955 = vld [vmem:[#allocation2 + $0x1f8] sm:$0xff]
        %v956 = vld [vmem:[#allocation2 + $0x200] sm:$0xff]
        %v957 = vld [vmem:[#allocation2 + $0x208] sm:$0xff]
        %v958 = vld [vmem:[#allocation2 + $0x210] sm:$0xff]
        %v959 = vld [vmem:[#allocation2 + $0x218] sm:$0xff]
        %v960 = vld [vmem:[#allocation2 + $0x220] sm:$0xff]
        %v961 = vld [vmem:[#allocation2 + $0x228] sm:$0xff]
        %v962 = vld [vmem:[#allocation2 + $0x230] sm:$0xff]
        %v963 = vld [vmem:[#allocation2 + $0x238] sm:$0xff]
        %v964 = vld [vmem:[#allocation2 + $0x240] sm:$0xff]
        %v965 = vld [vmem:[#allocation2 + $0x248] sm:$0xff]
        %v966 = vld [vmem:[#allocation2 + $0x250] sm:$0xff]
        %v967 = vld [vmem:[#allocation2 + $0x258] sm:$0xff]
        %v968 = vld [vmem:[#allocation2 + $0x260] sm:$0xff]
        %v969 = vld [vmem:[#allocation2 + $0x268] sm:$0xff]
        %v970 = vld [vmem:[#allocation2 + $0x270] sm:$0xff]
        %v971 = vld [vmem:[#allocation2 + $0x278] sm:$0xff]
        %v972 = vld [vmem:[#allocation2 + $0x280] sm:$0xff]
        %v973 = vld [vmem:[#allocation2 + $0x288] sm:$0xff]
        %v974 = vld [vmem:[#allocation2 + $0x290] sm:$0xff]
        %v975 = vld [vmem:[#allocation2 + $0x298] sm:$0xff]
        %v976 = vld [vmem:[#allocation2 + $0x2a0] sm:$0xff]
        %v977 = vld [vmem:[#allocation2 + $0x2a8] sm:$0xff]
        %v978 = vld [vmem:[#allocation2 + $0x2b0] sm:$0xff]
        %v979 = vld [vmem:[#allocation2 + $0x2b8] sm:$0xff]
        %v980 = vld [vmem:[#allocation2 + $0x2c0] sm:$0xff]
        %v981 = vld [vmem:[#allocation2 + $0x2c8] sm:$0xff]
        %v982 = vld [vmem:[#allocation2 + $0x2d0] sm:$0xff]
        %v983 = vld [vmem:[#allocation2 + $0x2d8] sm:$0xff]
        %v984 = vld [vmem:[#allocation2 + $0x2e0] sm:$0xff]
        %v985 = vld [vmem:[#allocation2 + $0x2e8] sm:$0xff]
        %v986 = vld [vmem:[#allocation2 + $0x2f0] sm:$0xff]
        %v987 = vld [vmem:[#allocation2 + $0x2f8] sm:$0xff]
        %v988 = vld [vmem:[#allocation2 + $0x300] sm:$0xff]
        %v989 = vld [vmem:[#allocation2 + $0x308] sm:$0xff]
        %v990 = vld [vmem:[#allocation2 + $0x310] sm:$0xff]
        %v991 = vld [vmem:[#allocation2 + $0x318] sm:$0xff]
        %v992 = vld [vmem:[#allocation2 + $0x320] sm:$0xff]
        %v993 = vld [vmem:[#allocation2 + $0x328] sm:$0xff]
        %v994 = vld [vmem:[#allocation2 + $0x330] sm:$0xff]
        %v995 = vld [vmem:[#allocation2 + $0x338] sm:$0xff]
        %v996 = vld [vmem:[#allocation2 + $0x340] sm:$0xff]
        %v997 = vld [vmem:[#allocation2 + $0x348] sm:$0xff]
        %v998 = vld [vmem:[#allocation2 + $0x350] sm:$0xff]
        %v999 = vld [vmem:[#allocation2 + $0x358] sm:$0xff]
        %vm1000 = vcmask 130048
        %v1002 = vsel %vm1000, %v891, 0
        %1004 = vmatprep.subr.mxu0 %v893
        %1005 = vmatpush1.msra.mxu0 %v892
        %1006 = vmatprep.subr.mxu0 %v899
        %1007 = vmatpush1.msra.mxu0 %v898
        %1008 = vmatprep.subr.mxu0 %v905
        %1009 = vmatpush1.msra.mxu0 %v904
        %1010 = vmatprep.subr.mxu0 %v911
        %1011 = vmatpush1.msra.mxu0 %v910
        %1012 = vmatprep.subr.mxu0 %v917
        %1013 = vmatpush1.msra.mxu0 %v916
        %1014 = vmatprep.subr.mxu0 %v923
        %1015 = vmatpush1.msra.mxu0 %v922
        %1016 = vmatprep.subr.mxu0 %v929
        %1017 = vmatpush1.msra.mxu0 %v928
        %1018 = vmatprep.subr.mxu0 %v935
        %1019 = vmatpush1.msra.mxu0 %v934
        %1020 = vmatprep.subr.mxu0 %v941
        %1021 = vmatpush1.msra.mxu0 %v940
        %1022 = vmatprep.subr.mxu0 %v947
        %1023 = vmatpush1.msra.mxu0 %v946
        %1024 = vmatprep.subr.mxu0 %v953
        %1025 = vmatpush1.msra.mxu0 %v952
        %1026 = vmatprep.subr.mxu0 %v959
        %1027 = vmatpush1.msra.mxu0 %v958
        %1028 = vmatprep.subr.mxu0 %v965
        %1029 = vmatpush1.msra.mxu0 %v964
        %1030 = vmatprep.subr.mxu0 %v971
        %1031 = vmatpush1.msra.mxu0 %v970
        %1032 = vmatprep.subr.mxu0 %v977
        %1033 = vmatpush1.msra.mxu0 %v976
        %1034 = vmatprep.subr.mxu0 %v983
        %1035 = vmatpush1.msra.mxu0 %v982
        %1036 = vmatprep.subr.mxu0 %v989
        %1037 = vmatpush1.msra.mxu0 %v988
        %1038 = vmatprep.subr.mxu0 %v995
        %1039 = vmatpush1.msra.mxu0 %v994
        %1040 = vmatprep.subr.mxu0 0.0
        %1041 = vmatpush1.msra.mxu0 0.0
        %1042 = vmatprep.subr.mxu0 0.0
        %1043 = vmatpush1.msra.mxu0 0.0
        %1044 = vmatprep.subr.mxu0 0.0
        %1045 = vmatpush1.msra.mxu0 0.0
        %1046 = vmatprep.subr.mxu0 0.0
        %1047 = vmatpush1.msra.mxu0 0.0
        %1048 = vmatprep.subr.mxu0 0.0
        %1049 = vmatpush1.msra.mxu0 0.0
        %1050 = vmatprep.subr.mxu0 0.0
        %1051 = vmatpush1.msra.mxu0 0.0
        %1052 = vmatprep.subr.mxu0 0.0
        %1053 = vmatpush1.msra.mxu0 0.0
        %1054 = vmatprep.subr.mxu0 0.0
        %1055 = vmatpush1.msra.mxu0 0.0
        %1056 = vmatprep.subr.mxu0 0.0
        %1057 = vmatpush1.msra.mxu0 0.0
        %1058 = vmatprep.subr.mxu0 0.0
        %1059 = vmatpush1.msra.mxu0 0.0
        %1060 = vmatprep.subr.mxu0 0.0
        %1061 = vmatpush1.msra.mxu0 0.0
        %1062 = vmatprep.subr.mxu0 0.0
        %1063 = vmatpush1.msra.mxu0 0.0
        %1064 = vmatprep.subr.mxu0 0.0
        %1065 = vmatpush1.msra.mxu0 0.0
        %1066 = vmatprep.subr.mxu0 0.0
        %1067 = vmatpush1.msra.mxu0 0.0
        %1068 = vmatprep.mubr.f32.mxu0 %v1002
        %1069 = vmatmul.mubr.f32.gmra.mrb[0].mxu0 %v890
        %v1070 = vpop.f32.mrb[0].mxu0
        %v1071 = vadd.f32 0.0, %v1070
        %v1072 = vpop.f32.mrb[0].mxu0
        %v1073 = vadd.f32 0.0, %v1072
        %1074 = vdwg.mxu0
        %1075 = vmatprep.subr.mxu0 %v895
        %1076 = vmatpush1.msra.mxu0 %v894
        %1077 = vmatprep.subr.mxu0 %v901
        %1078 = vmatpush1.msra.mxu0 %v900
        %1079 = vmatprep.subr.mxu0 %v907
        %1080 = vmatpush1.msra.mxu0 %v906
        %1081 = vmatprep.subr.mxu0 %v913
        %1082 = vmatpush1.msra.mxu0 %v912
        %1083 = vmatprep.subr.mxu0 %v919
        %1084 = vmatpush1.msra.mxu0 %v918
        %1085 = vmatprep.subr.mxu0 %v925
        %1086 = vmatpush1.msra.mxu0 %v924
        %1087 = vmatprep.subr.mxu0 %v931
        %1088 = vmatpush1.msra.mxu0 %v930
        %1089 = vmatprep.subr.mxu0 %v937
        %1090 = vmatpush1.msra.mxu0 %v936
        %1091 = vmatprep.subr.mxu0 %v943
        %1092 = vmatpush1.msra.mxu0 %v942
        %1093 = vmatprep.subr.mxu0 %v949
        %1094 = vmatpush1.msra.mxu0 %v948
        %1095 = vmatprep.subr.mxu0 %v955
        %1096 = vmatpush1.msra.mxu0 %v954
        %1097 = vmatprep.subr.mxu0 %v961
        %1098 = vmatpush1.msra.mxu0 %v960
        %1099 = vmatprep.subr.mxu0 %v967
        %1100 = vmatpush1.msra.mxu0 %v966
        %1101 = vmatprep.subr.mxu0 %v973
        %1102 = vmatpush1.msra.mxu0 %v972
        %1103 = vmatprep.subr.mxu0 %v979
        %1104 = vmatpush1.msra.mxu0 %v978
        %1105 = vmatprep.subr.mxu0 %v985
        %1106 = vmatpush1.msra.mxu0 %v984
        %1107 = vmatprep.subr.mxu0 %v991
        %1108 = vmatpush1.msra.mxu0 %v990
        %1109 = vmatprep.subr.mxu0 %v997
        %1110 = vmatpush1.msra.mxu0 %v996
        %1111 = vmatprep.subr.mxu0 0.0
        %1112 = vmatpush1.msra.mxu0 0.0
        %1113 = vmatprep.subr.mxu0 0.0
        %1114 = vmatpush1.msra.mxu0 0.0
        %1115 = vmatprep.subr.mxu0 0.0
        %1116 = vmatpush1.msra.mxu0 0.0
        %1117 = vmatprep.subr.mxu0 0.0
        %1118 = vmatpush1.msra.mxu0 0.0
        %1119 = vmatprep.subr.mxu0 0.0
        %1120 = vmatpush1.msra.mxu0 0.0
        %1121 = vmatprep.subr.mxu0 0.0
        %1122 = vmatpush1.msra.mxu0 0.0
        %1123 = vmatprep.subr.mxu0 0.0
        %1124 = vmatpush1.msra.mxu0 0.0
        %1125 = vmatprep.subr.mxu0 0.0
        %1126 = vmatpush1.msra.mxu0 0.0
        %1127 = vmatprep.subr.mxu0 0.0
        %1128 = vmatpush1.msra.mxu0 0.0
        %1129 = vmatprep.subr.mxu0 0.0
        %1130 = vmatpush1.msra.mxu0 0.0
        %1131 = vmatprep.subr.mxu0 0.0
        %1132 = vmatpush1.msra.mxu0 0.0
        %1133 = vmatprep.subr.mxu0 0.0
        %1134 = vmatpush1.msra.mxu0 0.0
        %1135 = vmatprep.subr.mxu0 0.0
        %1136 = vmatpush1.msra.mxu0 0.0
        %1137 = vmatprep.subr.mxu0 0.0
        %1138 = vmatpush1.msra.mxu0 0.0
        %1139 = vmatprep.mubr.f32.mxu0 %v1002
        %1140 = vmatmul.mubr.f32.gmra.mrb[0].mxu0 %v890
        %v1141 = vpop.f32.mrb[0].mxu0
        %v1142 = vadd.f32 0.0, %v1141
        %v1143 = vpop.f32.mrb[0].mxu0
        %v1144 = vadd.f32 0.0, %v1143
        %1145 = vdwg.mxu0
        %1146 = vmatprep.subr.mxu0 %v897
        %1147 = vmatpush1.msra.mxu0 %v896
        %1148 = vmatprep.subr.mxu0 %v903
        %1149 = vmatpush1.msra.mxu0 %v902
        %1150 = vmatprep.subr.mxu0 %v909
        %1151 = vmatpush1.msra.mxu0 %v908
        %1152 = vmatprep.subr.mxu0 %v915
        %1153 = vmatpush1.msra.mxu0 %v914
        %1154 = vmatprep.subr.mxu0 %v921
        %1155 = vmatpush1.msra.mxu0 %v920
        %1156 = vmatprep.subr.mxu0 %v927
        %1157 = vmatpush1.msra.mxu0 %v926
        %1158 = vmatprep.subr.mxu0 %v933
        %1159 = vmatpush1.msra.mxu0 %v932
        %1160 = vmatprep.subr.mxu0 %v939
        %1161 = vmatpush1.msra.mxu0 %v938
        %1162 = vmatprep.subr.mxu0 %v945
        %1163 = vmatpush1.msra.mxu0 %v944
        %1164 = vmatprep.subr.mxu0 %v951
        %1165 = vmatpush1.msra.mxu0 %v950
        %1166 = vmatprep.subr.mxu0 %v957
        %1167 = vmatpush1.msra.mxu0 %v956
        %1168 = vmatprep.subr.mxu0 %v963
        %1169 = vmatpush1.msra.mxu0 %v962
        %1170 = vmatprep.subr.mxu0 %v969
        %1171 = vmatpush1.msra.mxu0 %v968
        %1172 = vmatprep.subr.mxu0 %v975
        %1173 = vmatpush1.msra.mxu0 %v974
        %1174 = vmatprep.subr.mxu0 %v981
        %1175 = vmatpush1.msra.mxu0 %v980
        %1176 = vmatprep.subr.mxu0 %v987
        %1177 = vmatpush1.msra.mxu0 %v986
        %1178 = vmatprep.subr.mxu0 %v993
        %1179 = vmatpush1.msra.mxu0 %v992
        %1180 = vmatprep.subr.mxu0 %v999
        %1181 = vmatpush1.msra.mxu0 %v998
        %1182 = vmatprep.subr.mxu0 0.0
        %1183 = vmatpush1.msra.mxu0 0.0
        %1184 = vmatprep.subr.mxu0 0.0
        %1185 = vmatpush1.msra.mxu0 0.0
        %1186 = vmatprep.subr.mxu0 0.0
        %1187 = vmatpush1.msra.mxu0 0.0
        %1188 = vmatprep.subr.mxu0 0.0
        %1189 = vmatpush1.msra.mxu0 0.0
        %1190 = vmatprep.subr.mxu0 0.0
        %1191 = vmatpush1.msra.mxu0 0.0
        %1192 = vmatprep.subr.mxu0 0.0
        %1193 = vmatpush1.msra.mxu0 0.0
        %1194 = vmatprep.subr.mxu0 0.0
        %1195 = vmatpush1.msra.mxu0 0.0
        %1196 = vmatprep.subr.mxu0 0.0
        %1197 = vmatpush1.msra.mxu0 0.0
        %1198 = vmatprep.subr.mxu0 0.0
        %1199 = vmatpush1.msra.mxu0 0.0
        %1200 = vmatprep.subr.mxu0 0.0
        %1201 = vmatpush1.msra.mxu0 0.0
        %1202 = vmatprep.subr.mxu0 0.0
        %1203 = vmatpush1.msra.mxu0 0.0
        %1204 = vmatprep.subr.mxu0 0.0
        %1205 = vmatpush1.msra.mxu0 0.0
        %1206 = vmatprep.subr.mxu0 0.0
        %1207 = vmatpush1.msra.mxu0 0.0
        %1208 = vmatprep.subr.mxu0 0.0
        %1209 = vmatpush1.msra.mxu0 0.0
        %1210 = vmatprep.mubr.f32.mxu0 %v1002
        %1211 = vmatmul.mubr.f32.gmra.mrb[0].mxu0 %v890
        %v1212 = vpop.f32.mrb[0].mxu0
        %v1213 = vadd.f32 0.0, %v1212
        %v1214 = vpop.f32.mrb[0].mxu0
        %v1215 = vadd.f32 0.0, %v1214
        %1216 = vdwg.mxu0
        %1217 = vst [vmem:[%s554] sm:$0x1f] %v1071
        %1218 = vst [vmem:[%s554 + $0x8] sm:$0x1f] %v1073
        %1219 = vst [vmem:[%s554 + $0x10] sm:$0x1f] %v1142
        %1220 = vst [vmem:[%s554 + $0x18] sm:$0x1f] %v1144
        %1221 = vst [vmem:[%s554 + $0x20] sm:$0x1f] %v1213
        %1222 = vst [vmem:[%s554 + $0x28] sm:$0x1f] %v1215
        %s1223 = sand.u32 %s68, 1
        %s1224 = sand.u32 %s68, 1
        %s1225 = smul.addr %s1224, 48
        %s1226 = scalar_lea.vmem [#allocation4], %s1225
        // Predicated region
        $region102: #{kanc_mlp_big_forward.3} parent=89 // pred_check
          %p1227 = pneg %p78
        $region103: #{kanc_mlp_big_forward.3} parent=89 // pred_check_branch
          %1229 = sbr.rel (%p1227) target = $region105
        $region104: #{kanc_mlp_big_forward.3} parent=89 // pred_region
          %s1230 = smul.u32 6, %s13
          %s1231 = ssub.s32 11, %s1230
          %p1232 = scmp.lt.s32.totalorder %s1231, 6
          %s1233 = scalar_select %p1232, %s1231, 6
          %s1234 = smul.u32 128, %s1233
          %p1235 = scmp.ne.s32.totalorder 0, %s1234
          %s1236 = smul.addr %s1230, 8
          %s1237 = scalar_lea.vmem %s2, %s1236
          %s1238 = smul.u32 %s1233, 8
          // Predicated region
          $region106: #{kanc_mlp_big_forward.3} parent=104 // pred_check
            %p1239 = pneg %p1235
          $region107: #{kanc_mlp_big_forward.3} parent=104 // pred_check_branch
            %1241 = sbr.rel (%p1239) target = $region109
          $region108: #{kanc_mlp_big_forward.3} parent=104 // pred_region
            %p1242 = scmp.lt.u32.totalorder %s1238, 8
            %p1243 = pneg %p1242
            // Predicated region
            $region110: #{kanc_mlp_big_forward.3} parent=108 // pred_check
              _
            $region111: #{kanc_mlp_big_forward.3} parent=108 // pred_check_branch
              %1245 = sbr.rel (%p1242) target = $region113
            $region112: #{kanc_mlp_big_forward.3} parent=108 // pred_region
              %s1260 = sand.u32 %s1238, 7
              %p1261 = scmp.eq.s32.totalorder %s1260, 0
              // Predicated region
              $region125: #{kanc_mlp_big_forward.3} parent=112 // pred_check
                %p1262 = pneg %p1261
              $region126: #{kanc_mlp_big_forward.3} parent=112 // pred_check_branch
                %1264 = sbr.rel (%p1262) target = $region128
              $region127: #{kanc_mlp_big_forward.3} parent=112 // pred_region
                %s1265 = sshrl.u32 %s1238, 3
                %s1266 = sshrl.u32 %s1265, 6
                // While loop
                $region129: #{kanc_mlp_big_forward.3} parent=127 // loop_pre_header
                  _
                $region130: #{kanc_mlp_big_forward.3} parent=127 // loop_header
                  %s1270 = sphi 0, %s1272
                  %p1271 = scmp.ge.s32.totalorder %s1270, %s1266
                  %s1275 = sphi 0, %s1408
                  %s1276 = sphi %s1226, %s1411
                  %s1277 = sphi %s1237, %s1412
                $region131: #{kanc_mlp_big_forward.3} parent=127 // loop_header_branch
                  %1274 = sbr.rel (%p1271) target = $region135
                $region132: #{kanc_mlp_big_forward.3} parent=127 // loop_body
                  %v1278 = vld [vmem:[%s1276] sm:$0xff]
                  %1279 = vst [vmem:[%s1277] sm:$0xff] %v1278
                  %v1280 = vld [vmem:[%s1276 + $0x8] sm:$0xff]
                  %1281 = vst [vmem:[%s1277 + $0x8] sm:$0xff] %v1280
                  %v1282 = vld [vmem:[%s1276 + $0x10] sm:$0xff]
                  %1283 = vst [vmem:[%s1277 + $0x10] sm:$0xff] %v1282
                  %v1284 = vld [vmem:[%s1276 + $0x18] sm:$0xff]
                  %1285 = vst [vmem:[%s1277 + $0x18] sm:$0xff] %v1284
                  %v1286 = vld [vmem:[%s1276 + $0x20] sm:$0xff]
                  %1287 = vst [vmem:[%s1277 + $0x20] sm:$0xff] %v1286
                  %v1288 = vld [vmem:[%s1276 + $0x28] sm:$0xff]
                  %1289 = vst [vmem:[%s1277 + $0x28] sm:$0xff] %v1288
                  %v1290 = vld [vmem:[%s1276 + $0x30] sm:$0xff]
                  %1291 = vst [vmem:[%s1277 + $0x30] sm:$0xff] %v1290
                  %v1292 = vld [vmem:[%s1276 + $0x38] sm:$0xff]
                  %1293 = vst [vmem:[%s1277 + $0x38] sm:$0xff] %v1292
                  %v1294 = vld [vmem:[%s1276 + $0x40] sm:$0xff]
                  %1295 = vst [vmem:[%s1277 + $0x40] sm:$0xff] %v1294
                  %v1296 = vld [vmem:[%s1276 + $0x48] sm:$0xff]
                  %1297 = vst [vmem:[%s1277 + $0x48] sm:$0xff] %v1296
                  %v1298 = vld [vmem:[%s1276 + $0x50] sm:$0xff]
                  %1299 = vst [vmem:[%s1277 + $0x50] sm:$0xff] %v1298
                  %v1300 = vld [vmem:[%s1276 + $0x58] sm:$0xff]
                  %1301 = vst [vmem:[%s1277 + $0x58] sm:$0xff] %v1300
                  %v1302 = vld [vmem:[%s1276 + $0x60] sm:$0xff]
                  %1303 = vst [vmem:[%s1277 + $0x60] sm:$0xff] %v1302
                  %v1304 = vld [vmem:[%s1276 + $0x68] sm:$0xff]
                  %1305 = vst [vmem:[%s1277 + $0x68] sm:$0xff] %v1304
                  %v1306 = vld [vmem:[%s1276 + $0x70] sm:$0xff]
                  %1307 = vst [vmem:[%s1277 + $0x70] sm:$0xff] %v1306
                  %v1308 = vld [vmem:[%s1276 + $0x78] sm:$0xff]
                  %1309 = vst [vmem:[%s1277 + $0x78] sm:$0xff] %v1308
                  %v1310 = vld [vmem:[%s1276 + $0x80] sm:$0xff]
                  %1311 = vst [vmem:[%s1277 + $0x80] sm:$0xff] %v1310
                  %v1312 = vld [vmem:[%s1276 + $0x88] sm:$0xff]
                  %1313 = vst [vmem:[%s1277 + $0x88] sm:$0xff] %v1312
                  %v1314 = vld [vmem:[%s1276 + $0x90] sm:$0xff]
                  %1315 = vst [vmem:[%s1277 + $0x90] sm:$0xff] %v1314
                  %v1316 = vld [vmem:[%s1276 + $0x98] sm:$0xff]
                  %1317 = vst [vmem:[%s1277 + $0x98] sm:$0xff] %v1316
                  %v1318 = vld [vmem:[%s1276 + $0xa0] sm:$0xff]
                  %1319 = vst [vmem:[%s1277 + $0xa0] sm:$0xff] %v1318
                  %v1320 = vld [vmem:[%s1276 + $0xa8] sm:$0xff]
                  %1321 = vst [vmem:[%s1277 + $0xa8] sm:$0xff] %v1320
                  %v1322 = vld [vmem:[%s1276 + $0xb0] sm:$0xff]
                  %1323 = vst [vmem:[%s1277 + $0xb0] sm:$0xff] %v1322
                  %v1324 = vld [vmem:[%s1276 + $0xb8] sm:$0xff]
                  %1325 = vst [vmem:[%s1277 + $0xb8] sm:$0xff] %v1324
                  %v1326 = vld [vmem:[%s1276 + $0xc0] sm:$0xff]
                  %1327 = vst [vmem:[%s1277 + $0xc0] sm:$0xff] %v1326
                  %v1328 = vld [vmem:[%s1276 + $0xc8] sm:$0xff]
                  %1329 = vst [vmem:[%s1277 + $0xc8] sm:$0xff] %v1328
                  %v1330 = vld [vmem:[%s1276 + $0xd0] sm:$0xff]
                  %1331 = vst [vmem:[%s1277 + $0xd0] sm:$0xff] %v1330
                  %v1332 = vld [vmem:[%s1276 + $0xd8] sm:$0xff]
                  %1333 = vst [vmem:[%s1277 + $0xd8] sm:$0xff] %v1332
                  %v1334 = vld [vmem:[%s1276 + $0xe0] sm:$0xff]
                  %1335 = vst [vmem:[%s1277 + $0xe0] sm:$0xff] %v1334
                  %v1336 = vld [vmem:[%s1276 + $0xe8] sm:$0xff]
                  %1337 = vst [vmem:[%s1277 + $0xe8] sm:$0xff] %v1336
                  %v1338 = vld [vmem:[%s1276 + $0xf0] sm:$0xff]
                  %1339 = vst [vmem:[%s1277 + $0xf0] sm:$0xff] %v1338
                  %v1340 = vld [vmem:[%s1276 + $0xf8] sm:$0xff]
                  %1341 = vst [vmem:[%s1277 + $0xf8] sm:$0xff] %v1340
                  %v1342 = vld [vmem:[%s1276 + $0x100] sm:$0xff]
                  %1343 = vst [vmem:[%s1277 + $0x100] sm:$0xff] %v1342
                  %v1344 = vld [vmem:[%s1276 + $0x108] sm:$0xff]
                  %1345 = vst [vmem:[%s1277 + $0x108] sm:$0xff] %v1344
                  %v1346 = vld [vmem:[%s1276 + $0x110] sm:$0xff]
                  %1347 = vst [vmem:[%s1277 + $0x110] sm:$0xff] %v1346
                  %v1348 = vld [vmem:[%s1276 + $0x118] sm:$0xff]
                  %1349 = vst [vmem:[%s1277 + $0x118] sm:$0xff] %v1348
                  %v1350 = vld [vmem:[%s1276 + $0x120] sm:$0xff]
                  %1351 = vst [vmem:[%s1277 + $0x120] sm:$0xff] %v1350
                  %v1352 = vld [vmem:[%s1276 + $0x128] sm:$0xff]
                  %1353 = vst [vmem:[%s1277 + $0x128] sm:$0xff] %v1352
                  %v1354 = vld [vmem:[%s1276 + $0x130] sm:$0xff]
                  %1355 = vst [vmem:[%s1277 + $0x130] sm:$0xff] %v1354
                  %v1356 = vld [vmem:[%s1276 + $0x138] sm:$0xff]
                  %1357 = vst [vmem:[%s1277 + $0x138] sm:$0xff] %v1356
                  %v1358 = vld [vmem:[%s1276 + $0x140] sm:$0xff]
                  %1359 = vst [vmem:[%s1277 + $0x140] sm:$0xff] %v1358
                  %v1360 = vld [vmem:[%s1276 + $0x148] sm:$0xff]
                  %1361 = vst [vmem:[%s1277 + $0x148] sm:$0xff] %v1360
                  %v1362 = vld [vmem:[%s1276 + $0x150] sm:$0xff]
                  %1363 = vst [vmem:[%s1277 + $0x150] sm:$0xff] %v1362
                  %v1364 = vld [vmem:[%s1276 + $0x158] sm:$0xff]
                  %1365 = vst [vmem:[%s1277 + $0x158] sm:$0xff] %v1364
                  %v1366 = vld [vmem:[%s1276 + $0x160] sm:$0xff]
                  %1367 = vst [vmem:[%s1277 + $0x160] sm:$0xff] %v1366
                  %v1368 = vld [vmem:[%s1276 + $0x168] sm:$0xff]
                  %1369 = vst [vmem:[%s1277 + $0x168] sm:$0xff] %v1368
                  %v1370 = vld [vmem:[%s1276 + $0x170] sm:$0xff]
                  %1371 = vst [vmem:[%s1277 + $0x170] sm:$0xff] %v1370
                  %v1372 = vld [vmem:[%s1276 + $0x178] sm:$0xff]
                  %1373 = vst [vmem:[%s1277 + $0x178] sm:$0xff] %v1372
                  %v1374 = vld [vmem:[%s1276 + $0x180] sm:$0xff]
                  %1375 = vst [vmem:[%s1277 + $0x180] sm:$0xff] %v1374
                  %v1376 = vld [vmem:[%s1276 + $0x188] sm:$0xff]
                  %1377 = vst [vmem:[%s1277 + $0x188] sm:$0xff] %v1376
                  %v1378 = vld [vmem:[%s1276 + $0x190] sm:$0xff]
                  %1379 = vst [vmem:[%s1277 + $0x190] sm:$0xff] %v1378
                  %v1380 = vld [vmem:[%s1276 + $0x198] sm:$0xff]
                  %1381 = vst [vmem:[%s1277 + $0x198] sm:$0xff] %v1380
                  %v1382 = vld [vmem:[%s1276 + $0x1a0] sm:$0xff]
                  %1383 = vst [vmem:[%s1277 + $0x1a0] sm:$0xff] %v1382
                  %v1384 = vld [vmem:[%s1276 + $0x1a8] sm:$0xff]
                  %1385 = vst [vmem:[%s1277 + $0x1a8] sm:$0xff] %v1384
                  %v1386 = vld [vmem:[%s1276 + $0x1b0] sm:$0xff]
                  %1387 = vst [vmem:[%s1277 + $0x1b0] sm:$0xff] %v1386
                  %v1388 = vld [vmem:[%s1276 + $0x1b8] sm:$0xff]
                  %1389 = vst [vmem:[%s1277 + $0x1b8] sm:$0xff] %v1388
                  %v1390 = vld [vmem:[%s1276 + $0x1c0] sm:$0xff]
                  %1391 = vst [vmem:[%s1277 + $0x1c0] sm:$0xff] %v1390
                  %v1392 = vld [vmem:[%s1276 + $0x1c8] sm:$0xff]
                  %1393 = vst [vmem:[%s1277 + $0x1c8] sm:$0xff] %v1392
                  %v1394 = vld [vmem:[%s1276 + $0x1d0] sm:$0xff]
                  %1395 = vst [vmem:[%s1277 + $0x1d0] sm:$0xff] %v1394
                  %v1396 = vld [vmem:[%s1276 + $0x1d8] sm:$0xff]
                  %1397 = vst [vmem:[%s1277 + $0x1d8] sm:$0xff] %v1396
                  %v1398 = vld [vmem:[%s1276 + $0x1e0] sm:$0xff]
                  %1399 = vst [vmem:[%s1277 + $0x1e0] sm:$0xff] %v1398
                  %v1400 = vld [vmem:[%s1276 + $0x1e8] sm:$0xff]
                  %1401 = vst [vmem:[%s1277 + $0x1e8] sm:$0xff] %v1400
                  %v1402 = vld [vmem:[%s1276 + $0x1f0] sm:$0xff]
                  %1403 = vst [vmem:[%s1277 + $0x1f0] sm:$0xff] %v1402
                  %v1404 = vld [vmem:[%s1276 + $0x1f8] sm:$0xff]
                  %1405 = vst [vmem:[%s1277 + $0x1f8] sm:$0xff] %v1404
                  %s1406 = sadd.s32 1, %s1275
                  %p1407 = scmp.ge.s32.totalorder %s1406, %s1266
                  %s1408 = scalar_select %p1407, 0, %s1406
                  %s1409 = smul.u32 %s1408, 512
                  %s1410 = smul.u32 %s1408, 512
                  %s1411 = scalar_lea.vmem %s1226, %s1409 [#allocation4]
                  %s1412 = scalar_lea.vmem %s1237, %s1410
                $region133: #{kanc_mlp_big_forward.3} parent=127 // loop_footer
                  %s1272 = sadd.s32 %s1270, 1
                $region134: #{kanc_mlp_big_forward.3} parent=127 // loop_footer_branch
                  %1269 = sbr.rel target = $region130
                $region135: #{kanc_mlp_big_forward.3} parent=127 // loop_exit
                  _
                %s1413 = sshrl.u32 %s1265, 6
                %s1414 = sand.u32 %s1265, 63
                %s1415 = smul.u32 %s1413, 64
                %s1416 = smul.u32 128, %s1415
                %s1417 = sshra.s32 %s1416, 4
                %s1418 = scalar_lea.vmem %s1226, %s1417 [#allocation4]
                %s1419 = smul.u32 128, %s1415
                %s1420 = sshra.s32 %s1419, 4
                %s1421 = scalar_lea.vmem %s1237, %s1420
                // While loop
                $region136: #{kanc_mlp_big_forward.3} parent=127 // loop_pre_header
                  _
                $region137: #{kanc_mlp_big_forward.3} parent=127 // loop_header
                  %s1425 = sphi 0, %s1427
                  %p1426 = scmp.ge.s32.totalorder %s1425, %s1414
                  %s1430 = sphi 0, %s1437
                  %s1431 = sphi %s1418, %s1440
                  %s1432 = sphi %s1421, %s1441
                $region138: #{kanc_mlp_big_forward.3} parent=127 // loop_header_branch
                  %1429 = sbr.rel (%p1426) target = $region142
                $region139: #{kanc_mlp_big_forward.3} parent=127 // loop_body
                  %v1433 = vld [vmem:[%s1431] sm:$0xff]
                  %1434 = vst [vmem:[%s1432] sm:$0xff] %v1433
                  %s1435 = sadd.s32 1, %s1430
                  %p1436 = scmp.ge.s32.totalorder %s1435, %s1414
                  %s1437 = scalar_select %p1436, 0, %s1435
                  %s1438 = smul.u32 %s1437, 8
                  %s1439 = smul.u32 %s1437, 8
                  %s1440 = scalar_lea.vmem %s1418, %s1438 [#allocation4]
                  %s1441 = scalar_lea.vmem %s1421, %s1439
                $region140: #{kanc_mlp_big_forward.3} parent=127 // loop_footer
                  %s1427 = sadd.s32 %s1425, 1
                $region141: #{kanc_mlp_big_forward.3} parent=127 // loop_footer_branch
                  %1424 = sbr.rel target = $region137
                $region142: #{kanc_mlp_big_forward.3} parent=127 // loop_exit
                  _
              $region128: #{kanc_mlp_big_forward.3} parent=112 // pred_fallthru
                _
              %p1442 = pneg %p1261
              // Predicated region
              $region143: #{kanc_mlp_big_forward.3} parent=112 // pred_check
                _
              $region144: #{kanc_mlp_big_forward.3} parent=112 // pred_check_branch
                %1444 = sbr.rel (%p1261) target = $region146
              $region145: #{kanc_mlp_big_forward.3} parent=112 // pred_region
                %s1445 = sand.u32 %s1238, 7
                %s1446 = ssub.s32 %s1238, %s1445
                %s1447 = scalar_lea.vmem %s1226, %s1446 [#allocation4]
                %s1448 = ssub.s32 %s1238, %s1445
                %s1449 = scalar_lea.vmem %s1237, %s1448
                %s1450 = sshrl.u32 %s1238, 3
                %s1451 = sshrl.u32 %s1450, 6
                // While loop
                $region147: #{kanc_mlp_big_forward.3} parent=145 // loop_pre_header
                  _
                $region148: #{kanc_mlp_big_forward.3} parent=145 // loop_header
                  %s1455 = sphi 0, %s1457
                  %p1456 = scmp.ge.s32.totalorder %s1455, %s1451
                  %s1460 = sphi 0, %s1593
                  %s1461 = sphi %s1226, %s1596
                  %s1462 = sphi %s1237, %s1597
                $region149: #{kanc_mlp_big_forward.3} parent=145 // loop_header_branch
                  %1459 = sbr.rel (%p1456) target = $region153
                $region150: #{kanc_mlp_big_forward.3} parent=145 // loop_body
                  %v1463 = vld [vmem:[%s1461] sm:$0xff]
                  %1464 = vst [vmem:[%s1462] sm:$0xff] %v1463
                  %v1465 = vld [vmem:[%s1461 + $0x8] sm:$0xff]
                  %1466 = vst [vmem:[%s1462 + $0x8] sm:$0xff] %v1465
                  %v1467 = vld [vmem:[%s1461 + $0x10] sm:$0xff]
                  %1468 = vst [vmem:[%s1462 + $0x10] sm:$0xff] %v1467
                  %v1469 = vld [vmem:[%s1461 + $0x18] sm:$0xff]
                  %1470 = vst [vmem:[%s1462 + $0x18] sm:$0xff] %v1469
                  %v1471 = vld [vmem:[%s1461 + $0x20] sm:$0xff]
                  %1472 = vst [vmem:[%s1462 + $0x20] sm:$0xff] %v1471
                  %v1473 = vld [vmem:[%s1461 + $0x28] sm:$0xff]
                  %1474 = vst [vmem:[%s1462 + $0x28] sm:$0xff] %v1473
                  %v1475 = vld [vmem:[%s1461 + $0x30] sm:$0xff]
                  %1476 = vst [vmem:[%s1462 + $0x30] sm:$0xff] %v1475
                  %v1477 = vld [vmem:[%s1461 + $0x38] sm:$0xff]
                  %1478 = vst [vmem:[%s1462 + $0x38] sm:$0xff] %v1477
                  %v1479 = vld [vmem:[%s1461 + $0x40] sm:$0xff]
                  %1480 = vst [vmem:[%s1462 + $0x40] sm:$0xff] %v1479
                  %v1481 = vld [vmem:[%s1461 + $0x48] sm:$0xff]
                  %1482 = vst [vmem:[%s1462 + $0x48] sm:$0xff] %v1481
                  %v1483 = vld [vmem:[%s1461 + $0x50] sm:$0xff]
                  %1484 = vst [vmem:[%s1462 + $0x50] sm:$0xff] %v1483
                  %v1485 = vld [vmem:[%s1461 + $0x58] sm:$0xff]
                  %1486 = vst [vmem:[%s1462 + $0x58] sm:$0xff] %v1485
                  %v1487 = vld [vmem:[%s1461 + $0x60] sm:$0xff]
                  %1488 = vst [vmem:[%s1462 + $0x60] sm:$0xff] %v1487
                  %v1489 = vld [vmem:[%s1461 + $0x68] sm:$0xff]
                  %1490 = vst [vmem:[%s1462 + $0x68] sm:$0xff] %v1489
                  %v1491 = vld [vmem:[%s1461 + $0x70] sm:$0xff]
                  %1492 = vst [vmem:[%s1462 + $0x70] sm:$0xff] %v1491
                  %v1493 = vld [vmem:[%s1461 + $0x78] sm:$0xff]
                  %1494 = vst [vmem:[%s1462 + $0x78] sm:$0xff] %v1493
                  %v1495 = vld [vmem:[%s1461 + $0x80] sm:$0xff]
                  %1496 = vst [vmem:[%s1462 + $0x80] sm:$0xff] %v1495
                  %v1497 = vld [vmem:[%s1461 + $0x88] sm:$0xff]
                  %1498 = vst [vmem:[%s1462 + $0x88] sm:$0xff] %v1497
                  %v1499 = vld [vmem:[%s1461 + $0x90] sm:$0xff]
                  %1500 = vst [vmem:[%s1462 + $0x90] sm:$0xff] %v1499
                  %v1501 = vld [vmem:[%s1461 + $0x98] sm:$0xff]
                  %1502 = vst [vmem:[%s1462 + $0x98] sm:$0xff] %v1501
                  %v1503 = vld [vmem:[%s1461 + $0xa0] sm:$0xff]
                  %1504 = vst [vmem:[%s1462 + $0xa0] sm:$0xff] %v1503
                  %v1505 = vld [vmem:[%s1461 + $0xa8] sm:$0xff]
                  %1506 = vst [vmem:[%s1462 + $0xa8] sm:$0xff] %v1505
                  %v1507 = vld [vmem:[%s1461 + $0xb0] sm:$0xff]
                  %1508 = vst [vmem:[%s1462 + $0xb0] sm:$0xff] %v1507
                  %v1509 = vld [vmem:[%s1461 + $0xb8] sm:$0xff]
                  %1510 = vst [vmem:[%s1462 + $0xb8] sm:$0xff] %v1509
                  %v1511 = vld [vmem:[%s1461 + $0xc0] sm:$0xff]
                  %1512 = vst [vmem:[%s1462 + $0xc0] sm:$0xff] %v1511
                  %v1513 = vld [vmem:[%s1461 + $0xc8] sm:$0xff]
                  %1514 = vst [vmem:[%s1462 + $0xc8] sm:$0xff] %v1513
                  %v1515 = vld [vmem:[%s1461 + $0xd0] sm:$0xff]
                  %1516 = vst [vmem:[%s1462 + $0xd0] sm:$0xff] %v1515
                  %v1517 = vld [vmem:[%s1461 + $0xd8] sm:$0xff]
                  %1518 = vst [vmem:[%s1462 + $0xd8] sm:$0xff] %v1517
                  %v1519 = vld [vmem:[%s1461 + $0xe0] sm:$0xff]
                  %1520 = vst [vmem:[%s1462 + $0xe0] sm:$0xff] %v1519
                  %v1521 = vld [vmem:[%s1461 + $0xe8] sm:$0xff]
                  %1522 = vst [vmem:[%s1462 + $0xe8] sm:$0xff] %v1521
                  %v1523 = vld [vmem:[%s1461 + $0xf0] sm:$0xff]
                  %1524 = vst [vmem:[%s1462 + $0xf0] sm:$0xff] %v1523
                  %v1525 = vld [vmem:[%s1461 + $0xf8] sm:$0xff]
                  %1526 = vst [vmem:[%s1462 + $0xf8] sm:$0xff] %v1525
                  %v1527 = vld [vmem:[%s1461 + $0x100] sm:$0xff]
                  %1528 = vst [vmem:[%s1462 + $0x100] sm:$0xff] %v1527
                  %v1529 = vld [vmem:[%s1461 + $0x108] sm:$0xff]
                  %1530 = vst [vmem:[%s1462 + $0x108] sm:$0xff] %v1529
                  %v1531 = vld [vmem:[%s1461 + $0x110] sm:$0xff]
                  %1532 = vst [vmem:[%s1462 + $0x110] sm:$0xff] %v1531
                  %v1533 = vld [vmem:[%s1461 + $0x118] sm:$0xff]
                  %1534 = vst [vmem:[%s1462 + $0x118] sm:$0xff] %v1533
                  %v1535 = vld [vmem:[%s1461 + $0x120] sm:$0xff]
                  %1536 = vst [vmem:[%s1462 + $0x120] sm:$0xff] %v1535
                  %v1537 = vld [vmem:[%s1461 + $0x128] sm:$0xff]
                  %1538 = vst [vmem:[%s1462 + $0x128] sm:$0xff] %v1537
                  %v1539 = vld [vmem:[%s1461 + $0x130] sm:$0xff]
                  %1540 = vst [vmem:[%s1462 + $0x130] sm:$0xff] %v1539
                  %v1541 = vld [vmem:[%s1461 + $0x138] sm:$0xff]
                  %1542 = vst [vmem:[%s1462 + $0x138] sm:$0xff] %v1541
                  %v1543 = vld [vmem:[%s1461 + $0x140] sm:$0xff]
                  %1544 = vst [vmem:[%s1462 + $0x140] sm:$0xff] %v1543
                  %v1545 = vld [vmem:[%s1461 + $0x148] sm:$0xff]
                  %1546 = vst [vmem:[%s1462 + $0x148] sm:$0xff] %v1545
                  %v1547 = vld [vmem:[%s1461 + $0x150] sm:$0xff]
                  %1548 = vst [vmem:[%s1462 + $0x150] sm:$0xff] %v1547
                  %v1549 = vld [vmem:[%s1461 + $0x158] sm:$0xff]
                  %1550 = vst [vmem:[%s1462 + $0x158] sm:$0xff] %v1549
                  %v1551 = vld [vmem:[%s1461 + $0x160] sm:$0xff]
                  %1552 = vst [vmem:[%s1462 + $0x160] sm:$0xff] %v1551
                  %v1553 = vld [vmem:[%s1461 + $0x168] sm:$0xff]
                  %1554 = vst [vmem:[%s1462 + $0x168] sm:$0xff] %v1553
                  %v1555 = vld [vmem:[%s1461 + $0x170] sm:$0xff]
                  %1556 = vst [vmem:[%s1462 + $0x170] sm:$0xff] %v1555
                  %v1557 = vld [vmem:[%s1461 + $0x178] sm:$0xff]
                  %1558 = vst [vmem:[%s1462 + $0x178] sm:$0xff] %v1557
                  %v1559 = vld [vmem:[%s1461 + $0x180] sm:$0xff]
                  %1560 = vst [vmem:[%s1462 + $0x180] sm:$0xff] %v1559
                  %v1561 = vld [vmem:[%s1461 + $0x188] sm:$0xff]
                  %1562 = vst [vmem:[%s1462 + $0x188] sm:$0xff] %v1561
                  %v1563 = vld [vmem:[%s1461 + $0x190] sm:$0xff]
                  %1564 = vst [vmem:[%s1462 + $0x190] sm:$0xff] %v1563
                  %v1565 = vld [vmem:[%s1461 + $0x198] sm:$0xff]
                  %1566 = vst [vmem:[%s1462 + $0x198] sm:$0xff] %v1565
                  %v1567 = vld [vmem:[%s1461 + $0x1a0] sm:$0xff]
                  %1568 = vst [vmem:[%s1462 + $0x1a0] sm:$0xff] %v1567
                  %v1569 = vld [vmem:[%s1461 + $0x1a8] sm:$0xff]
                  %1570 = vst [vmem:[%s1462 + $0x1a8] sm:$0xff] %v1569
                  %v1571 = vld [vmem:[%s1461 + $0x1b0] sm:$0xff]
                  %1572 = vst [vmem:[%s1462 + $0x1b0] sm:$0xff] %v1571
                  %v1573 = vld [vmem:[%s1461 + $0x1b8] sm:$0xff]
                  %1574 = vst [vmem:[%s1462 + $0x1b8] sm:$0xff] %v1573
                  %v1575 = vld [vmem:[%s1461 + $0x1c0] sm:$0xff]
                  %1576 = vst [vmem:[%s1462 + $0x1c0] sm:$0xff] %v1575
                  %v1577 = vld [vmem:[%s1461 + $0x1c8] sm:$0xff]
                  %1578 = vst [vmem:[%s1462 + $0x1c8] sm:$0xff] %v1577
                  %v1579 = vld [vmem:[%s1461 + $0x1d0] sm:$0xff]
                  %1580 = vst [vmem:[%s1462 + $0x1d0] sm:$0xff] %v1579
                  %v1581 = vld [vmem:[%s1461 + $0x1d8] sm:$0xff]
                  %1582 = vst [vmem:[%s1462 + $0x1d8] sm:$0xff] %v1581
                  %v1583 = vld [vmem:[%s1461 + $0x1e0] sm:$0xff]
                  %1584 = vst [vmem:[%s1462 + $0x1e0] sm:$0xff] %v1583
                  %v1585 = vld [vmem:[%s1461 + $0x1e8] sm:$0xff]
                  %1586 = vst [vmem:[%s1462 + $0x1e8] sm:$0xff] %v1585
                  %v1587 = vld [vmem:[%s1461 + $0x1f0] sm:$0xff]
                  %1588 = vst [vmem:[%s1462 + $0x1f0] sm:$0xff] %v1587
                  %v1589 = vld [vmem:[%s1461 + $0x1f8] sm:$0xff]
                  %1590 = vst [vmem:[%s1462 + $0x1f8] sm:$0xff] %v1589
                  %s1591 = sadd.s32 1, %s1460
                  %p1592 = scmp.ge.s32.totalorder %s1591, %s1451
                  %s1593 = scalar_select %p1592, 0, %s1591
                  %s1594 = smul.u32 %s1593, 512
                  %s1595 = smul.u32 %s1593, 512
                  %s1596 = scalar_lea.vmem %s1226, %s1594 [#allocation4]
                  %s1597 = scalar_lea.vmem %s1237, %s1595
                $region151: #{kanc_mlp_big_forward.3} parent=145 // loop_footer
                  %s1457 = sadd.s32 %s1455, 1
                $region152: #{kanc_mlp_big_forward.3} parent=145 // loop_footer_branch
                  %1454 = sbr.rel target = $region148
                $region153: #{kanc_mlp_big_forward.3} parent=145 // loop_exit
                  _
                %s1598 = sshrl.u32 %s1450, 6
                %s1599 = sand.u32 %s1450, 63
                %s1600 = smul.u32 %s1598, 64
                %s1601 = smul.u32 128, %s1600
                %s1602 = sshra.s32 %s1601, 4
                %s1603 = scalar_lea.vmem %s1226, %s1602 [#allocation4]
                %s1604 = smul.u32 128, %s1600
                %s1605 = sshra.s32 %s1604, 4
                %s1606 = scalar_lea.vmem %s1237, %s1605
                // While loop
                $region154: #{kanc_mlp_big_forward.3} parent=145 // loop_pre_header
                  _
                $region155: #{kanc_mlp_big_forward.3} parent=145 // loop_header
                  %s1610 = sphi 0, %s1612
                  %p1611 = scmp.ge.s32.totalorder %s1610, %s1599
                  %s1615 = sphi 0, %s1622
                  %s1616 = sphi %s1603, %s1625
                  %s1617 = sphi %s1606, %s1626
                $region156: #{kanc_mlp_big_forward.3} parent=145 // loop_header_branch
                  %1614 = sbr.rel (%p1611) target = $region160
                $region157: #{kanc_mlp_big_forward.3} parent=145 // loop_body
                  %v1618 = vld [vmem:[%s1616] sm:$0xff]
                  %1619 = vst [vmem:[%s1617] sm:$0xff] %v1618
                  %s1620 = sadd.s32 1, %s1615
                  %p1621 = scmp.ge.s32.totalorder %s1620, %s1599
                  %s1622 = scalar_select %p1621, 0, %s1620
                  %s1623 = smul.u32 %s1622, 8
                  %s1624 = smul.u32 %s1622, 8
                  %s1625 = scalar_lea.vmem %s1603, %s1623 [#allocation4]
                  %s1626 = scalar_lea.vmem %s1606, %s1624
                $region158: #{kanc_mlp_big_forward.3} parent=145 // loop_footer
                  %s1612 = sadd.s32 %s1610, 1
                $region159: #{kanc_mlp_big_forward.3} parent=145 // loop_footer_branch
                  %1609 = sbr.rel target = $region155
                $region160: #{kanc_mlp_big_forward.3} parent=145 // loop_exit
                  _
                %s1627 = sshllo.u32 0, %s1445
                loop: start=0, step=1, limit=1
                $region161: #{kanc_mlp_big_forward.3} parent=145 // loop_pre_header
                  _
                $region162: #{kanc_mlp_big_forward.3} parent=145 // loop_header
                  %s1629 = sphi 0, %s1633
                  %p1630 = scmp.ge.s32.totalorder %s1629, 1
                  %s1634 = sphi %s1447, %s1447
                  %s1635 = sphi %s1449, %s1449
                $region163: #{kanc_mlp_big_forward.3} parent=145 // loop_header_branch
                  %1632 = sbr.rel (%p1630) target = $region167
                $region164: #{kanc_mlp_big_forward.3} parent=145 // loop_body
                  %v1636 = vld [vmem:[%s1634] sm:%s1627]
                  %1637 = vst [vmem:[%s1635] sm:%s1627] %v1636
                $region165: #{kanc_mlp_big_forward.3} parent=145 // loop_footer
                  %s1633 = sadd.s32 1, %s1629
                $region166: #{kanc_mlp_big_forward.3} parent=145 // loop_footer_branch
                  %1628 = sbr.rel target = $region162
                $region167: #{kanc_mlp_big_forward.3} parent=145 // loop_exit
                  _
              $region146: #{kanc_mlp_big_forward.3} parent=112 // pred_fallthru
                _
            $region113: #{kanc_mlp_big_forward.3} parent=108 // pred_fallthru
              _
            // Predicated region
            $region114: #{kanc_mlp_big_forward.3} parent=108 // pred_check
              %p1246 = pneg %p1242
            $region115: #{kanc_mlp_big_forward.3} parent=108 // pred_check_branch
              %1248 = sbr.rel (%p1246) target = $region117
            $region116: #{kanc_mlp_big_forward.3} parent=108 // pred_region
              %s1249 = sshllo.u32 0, %s1238
              loop: start=0, step=1, limit=1
              $region118: #{kanc_mlp_big_forward.3} parent=116 // loop_pre_header
                _
              $region119: #{kanc_mlp_big_forward.3} parent=116 // loop_header
                %s1251 = sphi 0, %s1255
                %p1252 = scmp.ge.s32.totalorder %s1251, 1
                %s1256 = sphi %s1226, %s1226
                %s1257 = sphi %s1237, %s1237
              $region120: #{kanc_mlp_big_forward.3} parent=116 // loop_header_branch
                %1254 = sbr.rel (%p1252) target = $region124
              $region121: #{kanc_mlp_big_forward.3} parent=116 // loop_body
                %v1258 = vld [vmem:[%s1256] sm:%s1249]
                %1259 = vst [vmem:[%s1257] sm:%s1249] %v1258
              $region122: #{kanc_mlp_big_forward.3} parent=116 // loop_footer
                %s1255 = sadd.s32 1, %s1251
              $region123: #{kanc_mlp_big_forward.3} parent=116 // loop_footer_branch
                %1250 = sbr.rel target = $region119
              $region124: #{kanc_mlp_big_forward.3} parent=116 // loop_exit
                _
            $region117: #{kanc_mlp_big_forward.3} parent=108 // pred_fallthru
              _
          $region109: #{kanc_mlp_big_forward.3} parent=104 // pred_fallthru
            _
          %1638 = vnop
        $region105: #{kanc_mlp_big_forward.3} parent=89 // pred_fallthru
          _
      $region90: #{kanc_mlp_big_forward.3} parent=5 // pred_fallthru
        _
      %p1639 = scmp.le.s32.totalorder 2, %s8
      // Predicated region
      $region168: #{kanc_mlp_big_forward.3} parent=5 // pred_check
        %p1640 = pneg %p1639
      $region169: #{kanc_mlp_big_forward.3} parent=5 // pred_check_branch
        %1642 = sbr.rel (%p1640) target = $region171
      $region170: #{kanc_mlp_big_forward.3} parent=5 // pred_region
        %s1643 = ssub.s32 %s8, 2
        // Predicated region
        $region172: #{kanc_mlp_big_forward.3} parent=170 // pred_check
          %p1644 = pneg %p84
        $region173: #{kanc_mlp_big_forward.3} parent=170 // pred_check_branch
          %1646 = sbr.rel (%p1644) target = $region175
        $region174: #{kanc_mlp_big_forward.3} parent=170 // pred_region
          %s1647 = sand.u32 %s69, 1
          %s1648 = sand.u32 %s69, 1
          %s1649 = smul.addr %s1648, 48
          %s1650 = scalar_lea.vmem [#allocation4], %s1649
        $region175: #{kanc_mlp_big_forward.3} parent=170 // pred_fallthru
          _
      $region171: #{kanc_mlp_big_forward.3} parent=5 // pred_fallthru
        _
    $region6: #{kanc_mlp_big_forward.3} parent=1 // loop_footer
      %s12 = sadd.s32 1, %s8
    $region7: #{kanc_mlp_big_forward.3} parent=1 // loop_footer_branch
      %7 = sbr.rel target = $region3
    $region8: #{kanc_mlp_big_forward.3} parent=1 // loop_exit
      _

// kernel: kanc_mlp_big_forward.4
$region0: #{kanc_mlp_big_forward.4}
  #allocation0 [shape = 'u32[]', space=smem, size = 0x4, offset = 0x4, fixed_abs, tag = 'smem constant byte address 0x4 - core index']
  #allocation1 [shape = 'u32[144,128]{1,0:T(1,128)}', space=vmem, size = 0x12000, scoped, tag = 'internal scratch']
  #allocation2 [shape = 'f32[432,128]{1,0:T(8,128)}', space=vmem, size = 0x36000, scoped, tag = 'scratch operand']
  %s0 = inlined_call_operand.vmem [shape: f32[48,242], index: 0, kind: input, shape index: {}]
  %s1 = inlined_call_operand.vmem [shape: f32[10,432], index: 1, kind: input, shape index: {}]
  %s2 = inlined_call_operand.vmem [shape: f32[10,242], index: 2, kind: output, shape index: {}]
  %s3 = sld [smem:[#allocation0]]
  $region113: #{kanc_mlp_big_forward.4} parent=0
    _
  %s5 = ssub.s32 1, %s3
  %s6 = scalar_select 0, %s5, %s3
  $region1: #{kanc_mlp_big_forward.4} parent=0
    #allocation3 [shape = 'u8[49152]{0}', space=vmem, size = 0xc000, scoped, tag = 'input window, operand 0']
    #allocation4 [shape = 'u8[16384]{0}', space=vmem, size = 0x4000, scoped, tag = 'output window, operand 0']
    loop: start=0, step=1, limit=4
    $region2: #{kanc_mlp_big_forward.4} parent=1 // loop_pre_header
      _
    $region3: #{kanc_mlp_big_forward.4} parent=1 // loop_header
      %s8 = sphi 0, %s12
      %p9 = scmp.ge.s32.totalorder %s8, 4
      %s18 = sphi 0, %s20
      %s21 = sphi 0, %s18
      %s22 = sphi 0, %s21
      %s38 = sphi 0, %s22
      %s42 = sphi 0, %s42
      %s44 = sphi 0, %s42
      %s45 = sphi 0, %s44
      %s59 = sphi 0, %s45
      %s65 = sphi 0, %s67
      %s68 = sphi 0, %s65
      %s69 = sphi 0, %s68
      %s85 = sphi 0, %s69
    $region4: #{kanc_mlp_big_forward.4} parent=1 // loop_header_branch
      %11 = sbr.rel (%p9) target = $region8
    $region5: #{kanc_mlp_big_forward.4} parent=1 // loop_body
      %s13 = ssub.s32 %s8, 1
      %s14 = ssub.s32 %s8, 2
      %s15 = sadd.s32 %s8, 1
      %s16 = ssub.s32 %s8, %s15
      %p17 = scmp.eq.s32.totalorder %s16, 0
      %s19 = sadd.s32 %s18, 1
      %s20 = scalar_select %p17, %s18, %s19
      %p23 = pneg %p17
      %p24 = scmp.eq.s32.totalorder %s8, 1
      %p25 = por %p23, %p24
      %p26 = scmp.ne.s32.totalorder %s18, %s21
      %p27 = scmp.eq.s32.totalorder %s8, 0
      %p28 = por %p26, %p27
      %p29 = scmp.ne.s32.totalorder %s18, %s21
      %p30 = scmp.eq.s32.totalorder %s13, 1
      %p31 = por %p29, %p30
      %p32 = scmp.ne.s32.totalorder %s21, %s22
      %p33 = scmp.eq.s32.totalorder %s13, 0
      %p34 = por %p32, %p33
      %p35 = scmp.ne.s32.totalorder %s21, %s22
      %p36 = scmp.eq.s32.totalorder %s14, 1
      %p37 = por %p35, %p36
      %p39 = scmp.ne.s32.totalorder %s22, %s38
      %p40 = scmp.eq.s32.totalorder %s14, 0
      %p41 = por %p39, %p40
      %s43 = sadd.s32 %s42, 1
      %p46 = scmp.eq.s32.totalorder %s8, 1
      %p47 = scmp.ne.s32.totalorder %s42, %s44
      %p48 = scmp.eq.s32.totalorder %s8, 0
      %p49 = por %p47, %p48
      %p50 = scmp.ne.s32.totalorder %s42, %s44
      %p51 = scmp.eq.s32.totalorder %s13, 1
      %p52 = por %p50, %p51
      %p53 = scmp.ne.s32.totalorder %s44, %s45
      %p54 = scmp.eq.s32.totalorder %s13, 0
      %p55 = por %p53, %p54
      %p56 = scmp.ne.s32.totalorder %s44, %s45
      %p57 = scmp.eq.s32.totalorder %s14, 1
      %p58 = por %p56, %p57
      %p60 = scmp.ne.s32.totalorder %s45, %s59
      %p61 = scmp.eq.s32.totalorder %s14, 0
      %p62 = por %p60, %p61
      %s63 = ssub.s32 %s8, %s15
      %p64 = scmp.eq.s32.totalorder %s63, 0
      %s66 = sadd.s32 %s65, 1
      %s67 = scalar_select %p64, %s65, %s66
      %p70 = pneg %p64
      %p71 = scmp.eq.s32.totalorder %s8, 1
      %p72 = por %p70, %p71
      %p73 = scmp.ne.s32.totalorder %s65, %s68
      %p74 = scmp.eq.s32.totalorder %s8, 0
      %p75 = por %p73, %p74
      %p76 = scmp.ne.s32.totalorder %s65, %s68
      %p77 = scmp.eq.s32.totalorder %s13, 1
      %p78 = por %p76, %p77
      %p79 = scmp.ne.s32.totalorder %s68, %s69
      %p80 = scmp.eq.s32.totalorder %s13, 0
      %p81 = por %p79, %p80
      %p82 = scmp.ne.s32.totalorder %s68, %s69
      %p83 = scmp.eq.s32.totalorder %s14, 1
      %p84 = por %p82, %p83
      %p86 = scmp.ne.s32.totalorder %s69, %s85
      %p87 = scmp.eq.s32.totalorder %s14, 0
      %p88 = por %p86, %p87
      %p89 = scmp.le.s32.totalorder 1, %s8
      %p90 = scmp.lt.s32.totalorder %s8, 3
      %p91 = pnand %p89, %p90
      %p92 = pneg %p91
      // Predicated region
      $region9: #{kanc_mlp_big_forward.4} parent=5 // pred_check
        _
      $region10: #{kanc_mlp_big_forward.4} parent=5 // pred_check_branch
        %94 = sbr.rel (%p91) target = $region12
      $region11: #{kanc_mlp_big_forward.4} parent=5 // pred_region
        %s95 = ssub.s32 %s8, 1
        // Predicated region
        $region13: #{kanc_mlp_big_forward.4} parent=11 // pred_check
          %p96 = pneg %p55
        $region14: #{kanc_mlp_big_forward.4} parent=11 // pred_check_branch
          %98 = sbr.rel (%p96) target = $region16
        $region15: #{kanc_mlp_big_forward.4} parent=11 // pred_region
          _
        $region16: #{kanc_mlp_big_forward.4} parent=11 // pred_fallthru
          _
      $region12: #{kanc_mlp_big_forward.4} parent=5 // pred_fallthru
        _
      %p99 = scmp.lt.s32.totalorder %s8, 2
      // Predicated region
      $region17: #{kanc_mlp_big_forward.4} parent=5 // pred_check
        %p100 = pneg %p99
      $region18: #{kanc_mlp_big_forward.4} parent=5 // pred_check_branch
        %102 = sbr.rel (%p100) target = $region20
      $region19: #{kanc_mlp_big_forward.4} parent=5 // pred_region
        // Predicated region
        $region21: #{kanc_mlp_big_forward.4} parent=19 // pred_check
          %p103 = pneg %p28
        $region22: #{kanc_mlp_big_forward.4} parent=19 // pred_check_branch
          %105 = sbr.rel (%p103) target = $region24
        $region23: #{kanc_mlp_big_forward.4} parent=19 // pred_region
          %s106 = sand.u32 %s18, 1
          %s107 = sand.u32 %s18, 1
          %s108 = smul.addr %s107, 48
          %s109 = scalar_lea.vmem [#allocation3], %s108
          %s110 = smul.addr %s8, 8
          %s111 = scalar_lea.vmem %s0, %s110
          // Predicated region
          $region25: #{kanc_mlp_big_forward.4} parent=23 // pred_check
            _
          $region26: #{kanc_mlp_big_forward.4} parent=23 // pred_check_branch
            %113 = sbr.rel (0) target = $region28
          $region27: #{kanc_mlp_big_forward.4} parent=23 // pred_region
            // Predicated region
            $region29: #{kanc_mlp_big_forward.4} parent=27 // pred_check
              _
            $region30: #{kanc_mlp_big_forward.4} parent=27 // pred_check_branch
              %115 = sbr.rel (0) target = $region32
            $region31: #{kanc_mlp_big_forward.4} parent=27 // pred_region
              // Predicated region
              $region44: #{kanc_mlp_big_forward.4} parent=31 // pred_check
                _
              $region45: #{kanc_mlp_big_forward.4} parent=31 // pred_check_branch
                %140 = sbr.rel (0) target = $region47
              $region46: #{kanc_mlp_big_forward.4} parent=31 // pred_region
                loop: start=0, step=1, limit=1
                $region48: #{kanc_mlp_big_forward.4} parent=46 // loop_pre_header
                  _
                $region49: #{kanc_mlp_big_forward.4} parent=46 // loop_header
                  %s142 = sphi 0, %s146
                  %p143 = scmp.ge.s32.totalorder %s142, 1
                  %s147 = sphi %s111, %s111
                  %s148 = sphi %s109, %s109
                $region50: #{kanc_mlp_big_forward.4} parent=46 // loop_header_branch
                  %145 = sbr.rel (%p143) target = $region54
                $region51: #{kanc_mlp_big_forward.4} parent=46 // loop_body
                  %v149 = vld [vmem:[%s147] sm:$0xff]
                  %150 = vst [vmem:[%s148] sm:$0xff] %v149
                  %v151 = vld [vmem:[%s147 + $0x10] sm:$0xff]
                  %152 = vst [vmem:[%s148 + $0x8] sm:$0xff] %v151
                  %v153 = vld [vmem:[%s147 + $0x20] sm:$0xff]
                  %154 = vst [vmem:[%s148 + $0x10] sm:$0xff] %v153
                  %v155 = vld [vmem:[%s147 + $0x30] sm:$0xff]
                  %156 = vst [vmem:[%s148 + $0x18] sm:$0xff] %v155
                  %v157 = vld [vmem:[%s147 + $0x40] sm:$0xff]
                  %158 = vst [vmem:[%s148 + $0x20] sm:$0xff] %v157
                  %v159 = vld [vmem:[%s147 + $0x50] sm:$0xff]
                  %160 = vst [vmem:[%s148 + $0x28] sm:$0xff] %v159
                $region52: #{kanc_mlp_big_forward.4} parent=46 // loop_footer
                  %s146 = sadd.s32 1, %s142
                $region53: #{kanc_mlp_big_forward.4} parent=46 // loop_footer_branch
                  %141 = sbr.rel target = $region49
                $region54: #{kanc_mlp_big_forward.4} parent=46 // loop_exit
                  _
              $region47: #{kanc_mlp_big_forward.4} parent=31 // pred_fallthru
                _
              // Predicated region
              $region55: #{kanc_mlp_big_forward.4} parent=31 // pred_check
                _
              $region56: #{kanc_mlp_big_forward.4} parent=31 // pred_check_branch
                %162 = sbr.rel target = $region58
              $region57: #{kanc_mlp_big_forward.4} parent=31 // pred_region
                _
              $region58: #{kanc_mlp_big_forward.4} parent=31 // pred_fallthru
                _
            $region32: #{kanc_mlp_big_forward.4} parent=27 // pred_fallthru
              _
            // Predicated region
            $region33: #{kanc_mlp_big_forward.4} parent=27 // pred_check
              _
            $region34: #{kanc_mlp_big_forward.4} parent=27 // pred_check_branch
              %117 = sbr.rel target = $region36
            $region35: #{kanc_mlp_big_forward.4} parent=27 // pred_region
              loop: start=0, step=1, limit=1
              $region37: #{kanc_mlp_big_forward.4} parent=35 // loop_pre_header
                _
              $region38: #{kanc_mlp_big_forward.4} parent=35 // loop_header
                %s120 = sphi 0, %s124
                %p121 = scmp.ge.s32.totalorder %s120, 1
                %s125 = sphi %s111, %s111
                %s126 = sphi %s109, %s109
              $region39: #{kanc_mlp_big_forward.4} parent=35 // loop_header_branch
                %123 = sbr.rel (%p121) target = $region43
              $region40: #{kanc_mlp_big_forward.4} parent=35 // loop_body
                %v127 = vld [vmem:[%s125] sm:$0xff]
                %128 = vst [vmem:[%s126] sm:$0xff] %v127
                %v129 = vld [vmem:[%s125 + $0x10] sm:$0xff]
                %130 = vst [vmem:[%s126 + $0x8] sm:$0xff] %v129
                %v131 = vld [vmem:[%s125 + $0x20] sm:$0xff]
                %132 = vst [vmem:[%s126 + $0x10] sm:$0xff] %v131
                %v133 = vld [vmem:[%s125 + $0x30] sm:$0xff]
                %134 = vst [vmem:[%s126 + $0x18] sm:$0xff] %v133
                %v135 = vld [vmem:[%s125 + $0x40] sm:$0xff]
                %136 = vst [vmem:[%s126 + $0x20] sm:$0xff] %v135
                %v137 = vld [vmem:[%s125 + $0x50] sm:$0xff]
                %138 = vst [vmem:[%s126 + $0x28] sm:$0xff] %v137
              $region41: #{kanc_mlp_big_forward.4} parent=35 // loop_footer
                %s124 = sadd.s32 1, %s120
              $region42: #{kanc_mlp_big_forward.4} parent=35 // loop_footer_branch
                %119 = sbr.rel target = $region38
              $region43: #{kanc_mlp_big_forward.4} parent=35 // loop_exit
                _
            $region36: #{kanc_mlp_big_forward.4} parent=27 // pred_fallthru
              _
          $region28: #{kanc_mlp_big_forward.4} parent=23 // pred_fallthru
            _
          %163 = vnop
        $region24: #{kanc_mlp_big_forward.4} parent=19 // pred_fallthru
          _
      $region20: #{kanc_mlp_big_forward.4} parent=5 // pred_fallthru
        _
      %p164 = scmp.le.s32.totalorder 1, %s8
      %p165 = scmp.lt.s32.totalorder %s8, 3
      %p166 = pnand %p164, %p165
      %p167 = pneg %p166
      // Predicated region
      $region59: #{kanc_mlp_big_forward.4} parent=5 // pred_check
        _
      $region60: #{kanc_mlp_big_forward.4} parent=5 // pred_check_branch
        %169 = sbr.rel (%p166) target = $region62
      $region61: #{kanc_mlp_big_forward.4} parent=5 // pred_region
        %s170 = ssub.s32 %s8, 1
        %s171 = sand.u32 %s21, 1
        %s172 = sand.u32 %s21, 1
        %s173 = smul.addr %s172, 48
        %s174 = scalar_lea.vmem [#allocation3], %s173
        // Predicated region
        $region63: #{kanc_mlp_big_forward.4} parent=61 // pred_check
          %p175 = pneg %p34
        $region64: #{kanc_mlp_big_forward.4} parent=61 // pred_check_branch
          %177 = sbr.rel (%p175) target = $region66
        $region65: #{kanc_mlp_big_forward.4} parent=61 // pred_region
          _
        $region66: #{kanc_mlp_big_forward.4} parent=61 // pred_fallthru
          _
        %s178 = sand.u32 %s21, 1
        %s179 = sand.u32 %s21, 1
        %s180 = smul.addr %s179, 48
        %s181 = scalar_lea.vmem [#allocation3], %s180
        %p182 = pneg %p34
        %p183 = pneg %p31
        %p184 = pneg %p55
        %p185 = pneg %p52
        %p186 = pneg %p81
        %p187 = pneg %p78
        %s188 = sand.u32 %s68, 1
        %s189 = sand.u32 %s68, 1
        %s190 = smul.addr %s189, 16
        %s191 = scalar_lea.vmem [#allocation4], %s190
        %v192 = vld [vmem:[%s174] sm:$0xff]
        %v193 = vsub.f32 0.0, %v192
        %v194 = vmul.f32 %v193, 1.442695
        %v195 = vpow.pop %v194
        %v196 = vadd.f32 %v195, 1.0
        %v197 = vrcp.pop %v196
        %v198 = vmul.f32 %v192, %v197
        %199 = vst [vmem:[#allocation2] sm:$0xff] %v198
        %vm200 = vcmp.ge.f32.partialorder %v192, -2.2
        %v201 = vsel %vm200, 1, 0
        %v202 = vcvt.s32.f32 %v201
        %vm203 = vcmp.ge.f32.partialorder %v192, -1.8
        %v204 = vsel %vm203, 1, 0
        %v205 = vcvt.s32.f32 %v204
        %vm206 = vcmp.ge.f32.partialorder %v192, -1.4
        %v207 = vsel %vm206, 1, 0
        %v208 = vcvt.s32.f32 %v207
        %vm209 = vcmp.ge.f32.partialorder %v192, -1.0
        %v210 = vsel %vm209, 1, 0
        %v211 = vcvt.s32.f32 %v210
        %vm212 = vcmp.ge.f32.partialorder %v192, -0.6
        %v213 = vsel %vm212, 1, 0
        %v214 = vcvt.s32.f32 %v213
        %vm215 = vcmp.ge.f32.partialorder %v192, -0.2
        %v216 = vsel %vm215, 1, 0
        %v217 = vcvt.s32.f32 %v216
        %vm218 = vcmp.ge.f32.partialorder %v192, 0.2
        %v219 = vsel %vm218, 1, 0
        %v220 = vcvt.s32.f32 %v219
        %vm221 = vcmp.ge.f32.partialorder %v192, 0.6
        %v222 = vsel %vm221, 1, 0
        %v223 = vcvt.s32.f32 %v222
        %vm224 = vcmp.ge.f32.partialorder %v192, 1.0
        %v225 = vsel %vm224, 1, 0
        %v226 = vcvt.s32.f32 %v225
        %vm227 = vcmp.ge.f32.partialorder %v192, 1.4
        %v228 = vsel %vm227, 1, 0
        %v229 = vcvt.s32.f32 %v228
        %vm230 = vcmp.ge.f32.partialorder %v192, 1.8
        %v231 = vsel %vm230, 1, 0
        %v232 = vcvt.s32.f32 %v231
        %vm233 = vcmp.ge.f32.partialorder %v192, 2.2
        %v234 = vsel %vm233, 1, 0
        %v235 = vcvt.s32.f32 %v234
        %v236 = vsub.f32 %v202, %v205
        %v237 = vsub.f32 %v205, %v208
        %v238 = vsub.f32 %v208, %v211
        %v239 = vsub.f32 %v211, %v214
        %v240 = vsub.f32 %v214, %v217
        %v241 = vsub.f32 %v217, %v220
        %v242 = vsub.f32 %v220, %v223
        %v243 = vsub.f32 %v223, %v226
        %v244 = vsub.f32 %v226, %v229
        %v245 = vsub.f32 %v229, %v232
        %v246 = vsub.f32 %v232, %v235
        %v247 = vsub.f32 %v192, -2.2
        %v248 = vsub.f32 %v192, -1.8
        %v249 = vsub.f32 %v192, -1.4
        %v250 = vsub.f32 %v192, -1.0
        %v251 = vsub.f32 %v192, -0.6
        %v252 = vsub.f32 %v192, -0.2
        %v253 = vsub.f32 %v192, 0.2
        %v254 = vsub.f32 %v192, 0.6
        %v255 = vsub.f32 %v192, 1.0
        %v256 = vsub.f32 %v192, 1.4
        %v257 = vsub.f32 %v192, 1.8
        %v258 = vsub.f32 %v192, 2.2
        %v259 = vmul.f32 %v247, %v236
        %v260 = vmul.f32 %v249, %v237
        %v261 = vsub.f32 %v259, %v260
        %v262 = vmul.f32 %v248, %v237
        %v263 = vmul.f32 %v250, %v238
        %v264 = vsub.f32 %v262, %v263
        %v265 = vmul.f32 %v249, %v238
        %v266 = vmul.f32 %v251, %v239
        %v267 = vsub.f32 %v265, %v266
        %v268 = vmul.f32 %v250, %v239
        %v269 = vmul.f32 %v252, %v240
        %v270 = vsub.f32 %v268, %v269
        %v271 = vmul.f32 %v251, %v240
        %v272 = vmul.f32 %v253, %v241
        %v273 = vsub.f32 %v271, %v272
        %v274 = vmul.f32 %v252, %v241
        %v275 = vmul.f32 %v254, %v242
        %v276 = vsub.f32 %v274, %v275
        %v277 = vmul.f32 %v253, %v242
        %v278 = vmul.f32 %v255, %v243
        %v279 = vsub.f32 %v277, %v278
        %v280 = vmul.f32 %v254, %v243
        %v281 = vmul.f32 %v256, %v244
        %v282 = vsub.f32 %v280, %v281
        %v283 = vmul.f32 %v255, %v244
        %v284 = vmul.f32 %v257, %v245
        %v285 = vsub.f32 %v283, %v284
        %v286 = vmul.f32 %v256, %v245
        %v287 = vmul.f32 %v258, %v246
        %v288 = vsub.f32 %v286, %v287
        %v289 = vmul.f32 %v247, %v261
        %v290 = vmul.f32 %v250, %v264
        %v291 = vsub.f32 %v289, %v290
        %v292 = vmul.f32 %v248, %v264
        %v293 = vmul.f32 %v251, %v267
        %v294 = vsub.f32 %v292, %v293
        %v295 = vmul.f32 %v249, %v267
        %v296 = vmul.f32 %v252, %v270
        %v297 = vsub.f32 %v295, %v296
        %v298 = vmul.f32 %v250, %v270
        %v299 = vmul.f32 %v253, %v273
        %v300 = vsub.f32 %v298, %v299
        %v301 = vmul.f32 %v251, %v273
        %v302 = vmul.f32 %v254, %v276
        %v303 = vsub.f32 %v301, %v302
        %v304 = vmul.f32 %v252, %v276
        %v305 = vmul.f32 %v255, %v279
        %v306 = vsub.f32 %v304, %v305
        %v307 = vmul.f32 %v253, %v279
        %v308 = vmul.f32 %v256, %v282
        %v309 = vsub.f32 %v307, %v308
        %v310 = vmul.f32 %v254, %v282
        %v311 = vmul.f32 %v257, %v285
        %v312 = vsub.f32 %v310, %v311
        %v313 = vmul.f32 %v255, %v285
        %v314 = vmul.f32 %v258, %v288
        %v315 = vsub.f32 %v313, %v314
        %v316 = vmul.f32 %v247, %v291
        %v317 = vmul.f32 %v251, %v294
        %v318 = vsub.f32 %v316, %v317
        %v319 = vmul.f32 %v248, %v294
        %v320 = vmul.f32 %v252, %v297
        %v321 = vsub.f32 %v319, %v320
        %v322 = vmul.f32 %v249, %v297
        %v323 = vmul.f32 %v253, %v300
        %v324 = vsub.f32 %v322, %v323
        %v325 = vmul.f32 %v250, %v300
        %v326 = vmul.f32 %v254, %v303
        %v327 = vsub.f32 %v325, %v326
        %v328 = vmul.f32 %v251, %v303
        %v329 = vmul.f32 %v255, %v306
        %v330 = vsub.f32 %v328, %v329
        %v331 = vmul.f32 %v252, %v306
        %v332 = vmul.f32 %v256, %v309
        %v333 = vsub.f32 %v331, %v332
        %v334 = vmul.f32 %v253, %v309
        %v335 = vmul.f32 %v257, %v312
        %v336 = vsub.f32 %v334, %v335
        %v337 = vmul.f32 %v254, %v312
        %v338 = vmul.f32 %v258, %v315
        %v339 = vsub.f32 %v337, %v338
        %340 = vst [vmem:[#allocation2 + $0x30] sm:$0xff] %v318
        %341 = vst [vmem:[#allocation2 + $0x60] sm:$0xff] %v321
        %342 = vst [vmem:[#allocation2 + $0x90] sm:$0xff] %v324
        %343 = vst [vmem:[#allocation2 + $0xc0] sm:$0xff] %v327
        %344 = vst [vmem:[#allocation2 + $0xf0] sm:$0xff] %v330
        %345 = vst [vmem:[#allocation2 + $0x120] sm:$0xff] %v333
        %346 = vst [vmem:[#allocation2 + $0x150] sm:$0xff] %v336
        %347 = vst [vmem:[#allocation2 + $0x180] sm:$0xff] %v339
        %v348 = vld [vmem:[%s174 + $0x8] sm:$0xff]
        %v349 = vsub.f32 0.0, %v348
        %v350 = vmul.f32 %v349, 1.442695
        %v351 = vpow.pop %v350
        %v352 = vadd.f32 %v351, 1.0
        %v353 = vrcp.pop %v352
        %v354 = vmul.f32 %v348, %v353
        %355 = vst [vmem:[#allocation2 + $0x8] sm:$0xff] %v354
        %vm356 = vcmp.ge.f32.partialorder %v348, -2.2
        %v357 = vsel %vm356, 1, 0
        %v358 = vcvt.s32.f32 %v357
        %vm359 = vcmp.ge.f32.partialorder %v348, -1.8
        %v360 = vsel %vm359, 1, 0
        %v361 = vcvt.s32.f32 %v360
        %vm362 = vcmp.ge.f32.partialorder %v348, -1.4
        %v363 = vsel %vm362, 1, 0
        %v364 = vcvt.s32.f32 %v363
        %vm365 = vcmp.ge.f32.partialorder %v348, -1.0
        %v366 = vsel %vm365, 1, 0
        %v367 = vcvt.s32.f32 %v366
        %vm368 = vcmp.ge.f32.partialorder %v348, -0.6
        %v369 = vsel %vm368, 1, 0
        %v370 = vcvt.s32.f32 %v369
        %vm371 = vcmp.ge.f32.partialorder %v348, -0.2
        %v372 = vsel %vm371, 1, 0
        %v373 = vcvt.s32.f32 %v372
        %vm374 = vcmp.ge.f32.partialorder %v348, 0.2
        %v375 = vsel %vm374, 1, 0
        %v376 = vcvt.s32.f32 %v375
        %vm377 = vcmp.ge.f32.partialorder %v348, 0.6
        %v378 = vsel %vm377, 1, 0
        %v379 = vcvt.s32.f32 %v378
        %vm380 = vcmp.ge.f32.partialorder %v348, 1.0
        %v381 = vsel %vm380, 1, 0
        %v382 = vcvt.s32.f32 %v381
        %vm383 = vcmp.ge.f32.partialorder %v348, 1.4
        %v384 = vsel %vm383, 1, 0
        %v385 = vcvt.s32.f32 %v384
        %vm386 = vcmp.ge.f32.partialorder %v348, 1.8
        %v387 = vsel %vm386, 1, 0
        %v388 = vcvt.s32.f32 %v387
        %vm389 = vcmp.ge.f32.partialorder %v348, 2.2
        %v390 = vsel %vm389, 1, 0
        %v391 = vcvt.s32.f32 %v390
        %v392 = vsub.f32 %v358, %v361
        %v393 = vsub.f32 %v361, %v364
        %v394 = vsub.f32 %v364, %v367
        %v395 = vsub.f32 %v367, %v370
        %v396 = vsub.f32 %v370, %v373
        %v397 = vsub.f32 %v373, %v376
        %v398 = vsub.f32 %v376, %v379
        %v399 = vsub.f32 %v379, %v382
        %v400 = vsub.f32 %v382, %v385
        %v401 = vsub.f32 %v385, %v388
        %v402 = vsub.f32 %v388, %v391
        %v403 = vsub.f32 %v348, -2.2
        %v404 = vsub.f32 %v348, -1.8
        %v405 = vsub.f32 %v348, -1.4
        %v406 = vsub.f32 %v348, -1.0
        %v407 = vsub.f32 %v348, -0.6
        %v408 = vsub.f32 %v348, -0.2
        %v409 = vsub.f32 %v348, 0.2
        %v410 = vsub.f32 %v348, 0.6
        %v411 = vsub.f32 %v348, 1.0
        %v412 = vsub.f32 %v348, 1.4
        %v413 = vsub.f32 %v348, 1.8
        %v414 = vsub.f32 %v348, 2.2
        %v415 = vmul.f32 %v403, %v392
        %v416 = vmul.f32 %v405, %v393
        %v417 = vsub.f32 %v415, %v416
        %v418 = vmul.f32 %v404, %v393
        %v419 = vmul.f32 %v406, %v394
        %v420 = vsub.f32 %v418, %v419
        %v421 = vmul.f32 %v405, %v394
        %v422 = vmul.f32 %v407, %v395
        %v423 = vsub.f32 %v421, %v422
        %v424 = vmul.f32 %v406, %v395
        %v425 = vmul.f32 %v408, %v396
        %v426 = vsub.f32 %v424, %v425
        %v427 = vmul.f32 %v407, %v396
        %v428 = vmul.f32 %v409, %v397
        %v429 = vsub.f32 %v427, %v428
        %v430 = vmul.f32 %v408, %v397
        %v431 = vmul.f32 %v410, %v398
        %v432 = vsub.f32 %v430, %v431
        %v433 = vmul.f32 %v409, %v398
        %v434 = vmul.f32 %v411, %v399
        %v435 = vsub.f32 %v433, %v434
        %v436 = vmul.f32 %v410, %v399
        %v437 = vmul.f32 %v412, %v400
        %v438 = vsub.f32 %v436, %v437
        %v439 = vmul.f32 %v411, %v400
        %v440 = vmul.f32 %v413, %v401
        %v441 = vsub.f32 %v439, %v440
        %v442 = vmul.f32 %v412, %v401
        %v443 = vmul.f32 %v414, %v402
        %v444 = vsub.f32 %v442, %v443
        %v445 = vmul.f32 %v403, %v417
        %v446 = vmul.f32 %v406, %v420
        %v447 = vsub.f32 %v445, %v446
        %v448 = vmul.f32 %v404, %v420
        %v449 = vmul.f32 %v407, %v423
        %v450 = vsub.f32 %v448, %v449
        %v451 = vmul.f32 %v405, %v423
        %v452 = vmul.f32 %v408, %v426
        %v453 = vsub.f32 %v451, %v452
        %v454 = vmul.f32 %v406, %v426
        %v455 = vmul.f32 %v409, %v429
        %v456 = vsub.f32 %v454, %v455
        %v457 = vmul.f32 %v407, %v429
        %v458 = vmul.f32 %v410, %v432
        %v459 = vsub.f32 %v457, %v458
        %v460 = vmul.f32 %v408, %v432
        %v461 = vmul.f32 %v411, %v435
        %v462 = vsub.f32 %v460, %v461
        %v463 = vmul.f32 %v409, %v435
        %v464 = vmul.f32 %v412, %v438
        %v465 = vsub.f32 %v463, %v464
        %v466 = vmul.f32 %v410, %v438
        %v467 = vmul.f32 %v413, %v441
        %v468 = vsub.f32 %v466, %v467
        %v469 = vmul.f32 %v411, %v441
        %v470 = vmul.f32 %v414, %v444
        %v471 = vsub.f32 %v469, %v470
        %v472 = vmul.f32 %v403, %v447
        %v473 = vmul.f32 %v407, %v450
        %v474 = vsub.f32 %v472, %v473
        %v475 = vmul.f32 %v404, %v450
        %v476 = vmul.f32 %v408, %v453
        %v477 = vsub.f32 %v475, %v476
        %v478 = vmul.f32 %v405, %v453
        %v479 = vmul.f32 %v409, %v456
        %v480 = vsub.f32 %v478, %v479
        %v481 = vmul.f32 %v406, %v456
        %v482 = vmul.f32 %v410, %v459
        %v483 = vsub.f32 %v481, %v482
        %v484 = vmul.f32 %v407, %v459
        %v485 = vmul.f32 %v411, %v462
        %v486 = vsub.f32 %v484, %v485
        %v487 = vmul.f32 %v408, %v462
        %v488 = vmul.f32 %v412, %v465
        %v489 = vsub.f32 %v487, %v488
        %v490 = vmul.f32 %v409, %v465
        %v491 = vmul.f32 %v413, %v468
        %v492 = vsub.f32 %v490, %v491
        %v493 = vmul.f32 %v410, %v468
        %v494 = vmul.f32 %v414, %v471
        %v495 = vsub.f32 %v493, %v494
        %496 = vst [vmem:[#allocation2 + $0x38] sm:$0xff] %v474
        %497 = vst [vmem:[#allocation2 + $0x68] sm:$0xff] %v477
        %498 = vst [vmem:[#allocation2 + $0x98] sm:$0xff] %v480
        %499 = vst [vmem:[#allocation2 + $0xc8] sm:$0xff] %v483
        %500 = vst [vmem:[#allocation2 + $0xf8] sm:$0xff] %v486
        %501 = vst [vmem:[#allocation2 + $0x128] sm:$0xff] %v489
        %502 = vst [vmem:[#allocation2 + $0x158] sm:$0xff] %v492
        %503 = vst [vmem:[#allocation2 + $0x188] sm:$0xff] %v495
        %v504 = vld [vmem:[%s174 + $0x10] sm:$0xff]
        %v505 = vsub.f32 0.0, %v504
        %v506 = vmul.f32 %v505, 1.442695
        %v507 = vpow.pop %v506
        %v508 = vadd.f32 %v507, 1.0
        %v509 = vrcp.pop %v508
        %v510 = vmul.f32 %v504, %v509
        %511 = vst [vmem:[#allocation2 + $0x10] sm:$0xff] %v510
        %vm512 = vcmp.ge.f32.partialorder %v504, -2.2
        %v513 = vsel %vm512, 1, 0
        %v514 = vcvt.s32.f32 %v513
        %vm515 = vcmp.ge.f32.partialorder %v504, -1.8
        %v516 = vsel %vm515, 1, 0
        %v517 = vcvt.s32.f32 %v516
        %vm518 = vcmp.ge.f32.partialorder %v504, -1.4
        %v519 = vsel %vm518, 1, 0
        %v520 = vcvt.s32.f32 %v519
        %vm521 = vcmp.ge.f32.partialorder %v504, -1.0
        %v522 = vsel %vm521, 1, 0
        %v523 = vcvt.s32.f32 %v522
        %vm524 = vcmp.ge.f32.partialorder %v504, -0.6
        %v525 = vsel %vm524, 1, 0
        %v526 = vcvt.s32.f32 %v525
        %vm527 = vcmp.ge.f32.partialorder %v504, -0.2
        %v528 = vsel %vm527, 1, 0
        %v529 = vcvt.s32.f32 %v528
        %vm530 = vcmp.ge.f32.partialorder %v504, 0.2
        %v531 = vsel %vm530, 1, 0
        %v532 = vcvt.s32.f32 %v531
        %vm533 = vcmp.ge.f32.partialorder %v504, 0.6
        %v534 = vsel %vm533, 1, 0
        %v535 = vcvt.s32.f32 %v534
        %vm536 = vcmp.ge.f32.partialorder %v504, 1.0
        %v537 = vsel %vm536, 1, 0
        %v538 = vcvt.s32.f32 %v537
        %vm539 = vcmp.ge.f32.partialorder %v504, 1.4
        %v540 = vsel %vm539, 1, 0
        %v541 = vcvt.s32.f32 %v540
        %vm542 = vcmp.ge.f32.partialorder %v504, 1.8
        %v543 = vsel %vm542, 1, 0
        %v544 = vcvt.s32.f32 %v543
        %vm545 = vcmp.ge.f32.partialorder %v504, 2.2
        %v546 = vsel %vm545, 1, 0
        %v547 = vcvt.s32.f32 %v546
        %v548 = vsub.f32 %v514, %v517
        %v549 = vsub.f32 %v517, %v520
        %v550 = vsub.f32 %v520, %v523
        %v551 = vsub.f32 %v523, %v526
        %v552 = vsub.f32 %v526, %v529
        %v553 = vsub.f32 %v529, %v532
        %v554 = vsub.f32 %v532, %v535
        %v555 = vsub.f32 %v535, %v538
        %v556 = vsub.f32 %v538, %v541
        %v557 = vsub.f32 %v541, %v544
        %v558 = vsub.f32 %v544, %v547
        %v559 = vsub.f32 %v504, -2.2
        %v560 = vsub.f32 %v504, -1.8
        %v561 = vsub.f32 %v504, -1.4
        %v562 = vsub.f32 %v504, -1.0
        %v563 = vsub.f32 %v504, -0.6
        %v564 = vsub.f32 %v504, -0.2
        %v565 = vsub.f32 %v504, 0.2
        %v566 = vsub.f32 %v504, 0.6
        %v567 = vsub.f32 %v504, 1.0
        %v568 = vsub.f32 %v504, 1.4
        %v569 = vsub.f32 %v504, 1.8
        %v570 = vsub.f32 %v504, 2.2
        %v571 = vmul.f32 %v559, %v548
        %v572 = vmul.f32 %v561, %v549
        %v573 = vsub.f32 %v571, %v572
        %v574 = vmul.f32 %v560, %v549
        %v575 = vmul.f32 %v562, %v550
        %v576 = vsub.f32 %v574, %v575
        %v577 = vmul.f32 %v561, %v550
        %v578 = vmul.f32 %v563, %v551
        %v579 = vsub.f32 %v577, %v578
        %v580 = vmul.f32 %v562, %v551
        %v581 = vmul.f32 %v564, %v552
        %v582 = vsub.f32 %v580, %v581
        %v583 = vmul.f32 %v563, %v552
        %v584 = vmul.f32 %v565, %v553
        %v585 = vsub.f32 %v583, %v584
        %v586 = vmul.f32 %v564, %v553
        %v587 = vmul.f32 %v566, %v554
        %v588 = vsub.f32 %v586, %v587
        %v589 = vmul.f32 %v565, %v554
        %v590 = vmul.f32 %v567, %v555
        %v591 = vsub.f32 %v589, %v590
        %v592 = vmul.f32 %v566, %v555
        %v593 = vmul.f32 %v568, %v556
        %v594 = vsub.f32 %v592, %v593
        %v595 = vmul.f32 %v567, %v556
        %v596 = vmul.f32 %v569, %v557
        %v597 = vsub.f32 %v595, %v596
        %v598 = vmul.f32 %v568, %v557
        %v599 = vmul.f32 %v570, %v558
        %v600 = vsub.f32 %v598, %v599
        %v601 = vmul.f32 %v559, %v573
        %v602 = vmul.f32 %v562, %v576
        %v603 = vsub.f32 %v601, %v602
        %v604 = vmul.f32 %v560, %v576
        %v605 = vmul.f32 %v563, %v579
        %v606 = vsub.f32 %v604, %v605
        %v607 = vmul.f32 %v561, %v579
        %v608 = vmul.f32 %v564, %v582
        %v609 = vsub.f32 %v607, %v608
        %v610 = vmul.f32 %v562, %v582
        %v611 = vmul.f32 %v565, %v585
        %v612 = vsub.f32 %v610, %v611
        %v613 = vmul.f32 %v563, %v585
        %v614 = vmul.f32 %v566, %v588
        %v615 = vsub.f32 %v613, %v614
        %v616 = vmul.f32 %v564, %v588
        %v617 = vmul.f32 %v567, %v591
        %v618 = vsub.f32 %v616, %v617
        %v619 = vmul.f32 %v565, %v591
        %v620 = vmul.f32 %v568, %v594
        %v621 = vsub.f32 %v619, %v620
        %v622 = vmul.f32 %v566, %v594
        %v623 = vmul.f32 %v569, %v597
        %v624 = vsub.f32 %v622, %v623
        %v625 = vmul.f32 %v567, %v597
        %v626 = vmul.f32 %v570, %v600
        %v627 = vsub.f32 %v625, %v626
        %v628 = vmul.f32 %v559, %v603
        %v629 = vmul.f32 %v563, %v606
        %v630 = vsub.f32 %v628, %v629
        %v631 = vmul.f32 %v560, %v606
        %v632 = vmul.f32 %v564, %v609
        %v633 = vsub.f32 %v631, %v632
        %v634 = vmul.f32 %v561, %v609
        %v635 = vmul.f32 %v565, %v612
        %v636 = vsub.f32 %v634, %v635
        %v637 = vmul.f32 %v562, %v612
        %v638 = vmul.f32 %v566, %v615
        %v639 = vsub.f32 %v637, %v638
        %v640 = vmul.f32 %v563, %v615
        %v641 = vmul.f32 %v567, %v618
        %v642 = vsub.f32 %v640, %v641
        %v643 = vmul.f32 %v564, %v618
        %v644 = vmul.f32 %v568, %v621
        %v645 = vsub.f32 %v643, %v644
        %v646 = vmul.f32 %v565, %v621
        %v647 = vmul.f32 %v569, %v624
        %v648 = vsub.f32 %v646, %v647
        %v649 = vmul.f32 %v566, %v624
        %v650 = vmul.f32 %v570, %v627
        %v651 = vsub.f32 %v649, %v650
        %652 = vst [vmem:[#allocation2 + $0x40] sm:$0xff] %v630
        %653 = vst [vmem:[#allocation2 + $0x70] sm:$0xff] %v633
        %654 = vst [vmem:[#allocation2 + $0xa0] sm:$0xff] %v636
        %655 = vst [vmem:[#allocation2 + $0xd0] sm:$0xff] %v639
        %656 = vst [vmem:[#allocation2 + $0x100] sm:$0xff] %v642
        %657 = vst [vmem:[#allocation2 + $0x130] sm:$0xff] %v645
        %658 = vst [vmem:[#allocation2 + $0x160] sm:$0xff] %v648
        %659 = vst [vmem:[#allocation2 + $0x190] sm:$0xff] %v651
        %v660 = vld [vmem:[%s174 + $0x18] sm:$0xff]
        %v661 = vsub.f32 0.0, %v660
        %v662 = vmul.f32 %v661, 1.442695
        %v663 = vpow.pop %v662
        %v664 = vadd.f32 %v663, 1.0
        %v665 = vrcp.pop %v664
        %v666 = vmul.f32 %v660, %v665
        %667 = vst [vmem:[#allocation2 + $0x18] sm:$0xff] %v666
        %vm668 = vcmp.ge.f32.partialorder %v660, -2.2
        %v669 = vsel %vm668, 1, 0
        %v670 = vcvt.s32.f32 %v669
        %vm671 = vcmp.ge.f32.partialorder %v660, -1.8
        %v672 = vsel %vm671, 1, 0
        %v673 = vcvt.s32.f32 %v672
        %vm674 = vcmp.ge.f32.partialorder %v660, -1.4
        %v675 = vsel %vm674, 1, 0
        %v676 = vcvt.s32.f32 %v675
        %vm677 = vcmp.ge.f32.partialorder %v660, -1.0
        %v678 = vsel %vm677, 1, 0
        %v679 = vcvt.s32.f32 %v678
        %vm680 = vcmp.ge.f32.partialorder %v660, -0.6
        %v681 = vsel %vm680, 1, 0
        %v682 = vcvt.s32.f32 %v681
        %vm683 = vcmp.ge.f32.partialorder %v660, -0.2
        %v684 = vsel %vm683, 1, 0
        %v685 = vcvt.s32.f32 %v684
        %vm686 = vcmp.ge.f32.partialorder %v660, 0.2
        %v687 = vsel %vm686, 1, 0
        %v688 = vcvt.s32.f32 %v687
        %vm689 = vcmp.ge.f32.partialorder %v660, 0.6
        %v690 = vsel %vm689, 1, 0
        %v691 = vcvt.s32.f32 %v690
        %vm692 = vcmp.ge.f32.partialorder %v660, 1.0
        %v693 = vsel %vm692, 1, 0
        %v694 = vcvt.s32.f32 %v693
        %vm695 = vcmp.ge.f32.partialorder %v660, 1.4
        %v696 = vsel %vm695, 1, 0
        %v697 = vcvt.s32.f32 %v696
        %vm698 = vcmp.ge.f32.partialorder %v660, 1.8
        %v699 = vsel %vm698, 1, 0
        %v700 = vcvt.s32.f32 %v699
        %vm701 = vcmp.ge.f32.partialorder %v660, 2.2
        %v702 = vsel %vm701, 1, 0
        %v703 = vcvt.s32.f32 %v702
        %v704 = vsub.f32 %v670, %v673
        %v705 = vsub.f32 %v673, %v676
        %v706 = vsub.f32 %v676, %v679
        %v707 = vsub.f32 %v679, %v682
        %v708 = vsub.f32 %v682, %v685
        %v709 = vsub.f32 %v685, %v688
        %v710 = vsub.f32 %v688, %v691
        %v711 = vsub.f32 %v691, %v694
        %v712 = vsub.f32 %v694, %v697
        %v713 = vsub.f32 %v697, %v700
        %v714 = vsub.f32 %v700, %v703
        %v715 = vsub.f32 %v660, -2.2
        %v716 = vsub.f32 %v660, -1.8
        %v717 = vsub.f32 %v660, -1.4
        %v718 = vsub.f32 %v660, -1.0
        %v719 = vsub.f32 %v660, -0.6
        %v720 = vsub.f32 %v660, -0.2
        %v721 = vsub.f32 %v660, 0.2
        %v722 = vsub.f32 %v660, 0.6
        %v723 = vsub.f32 %v660, 1.0
        %v724 = vsub.f32 %v660, 1.4
        %v725 = vsub.f32 %v660, 1.8
        %v726 = vsub.f32 %v660, 2.2
        %v727 = vmul.f32 %v715, %v704
        %v728 = vmul.f32 %v717, %v705
        %v729 = vsub.f32 %v727, %v728
        %v730 = vmul.f32 %v716, %v705
        %v731 = vmul.f32 %v718, %v706
        %v732 = vsub.f32 %v730, %v731
        %v733 = vmul.f32 %v717, %v706
        %v734 = vmul.f32 %v719, %v707
        %v735 = vsub.f32 %v733, %v734
        %v736 = vmul.f32 %v718, %v707
        %v737 = vmul.f32 %v720, %v708
        %v738 = vsub.f32 %v736, %v737
        %v739 = vmul.f32 %v719, %v708
        %v740 = vmul.f32 %v721, %v709
        %v741 = vsub.f32 %v739, %v740
        %v742 = vmul.f32 %v720, %v709
        %v743 = vmul.f32 %v722, %v710
        %v744 = vsub.f32 %v742, %v743
        %v745 = vmul.f32 %v721, %v710
        %v746 = vmul.f32 %v723, %v711
        %v747 = vsub.f32 %v745, %v746
        %v748 = vmul.f32 %v722, %v711
        %v749 = vmul.f32 %v724, %v712
        %v750 = vsub.f32 %v748, %v749
        %v751 = vmul.f32 %v723, %v712
        %v752 = vmul.f32 %v725, %v713
        %v753 = vsub.f32 %v751, %v752
        %v754 = vmul.f32 %v724, %v713
        %v755 = vmul.f32 %v726, %v714
        %v756 = vsub.f32 %v754, %v755
        %v757 = vmul.f32 %v715, %v729
        %v758 = vmul.f32 %v718, %v732
        %v759 = vsub.f32 %v757, %v758
        %v760 = vmul.f32 %v716, %v732
        %v761 = vmul.f32 %v719, %v735
        %v762 = vsub.f32 %v760, %v761
        %v763 = vmul.f32 %v717, %v735
        %v764 = vmul.f32 %v720, %v738
        %v765 = vsub.f32 %v763, %v764
        %v766 = vmul.f32 %v718, %v738
        %v767 = vmul.f32 %v721, %v741
        %v768 = vsub.f32 %v766, %v767
        %v769 = vmul.f32 %v719, %v741
        %v770 = vmul.f32 %v722, %v744
        %v771 = vsub.f32 %v769, %v770
        %v772 = vmul.f32 %v720, %v744
        %v773 = vmul.f32 %v723, %v747
        %v774 = vsub.f32 %v772, %v773
        %v775 = vmul.f32 %v721, %v747
        %v776 = vmul.f32 %v724, %v750
        %v777 = vsub.f32 %v775, %v776
        %v778 = vmul.f32 %v722, %v750
        %v779 = vmul.f32 %v725, %v753
        %v780 = vsub.f32 %v778, %v779
        %v781 = vmul.f32 %v723, %v753
        %v782 = vmul.f32 %v726, %v756
        %v783 = vsub.f32 %v781, %v782
        %v784 = vmul.f32 %v715, %v759
        %v785 = vmul.f32 %v719, %v762
        %v786 = vsub.f32 %v784, %v785
        %v787 = vmul.f32 %v716, %v762
        %v788 = vmul.f32 %v720, %v765
        %v789 = vsub.f32 %v787, %v788
        %v790 = vmul.f32 %v717, %v765
        %v791 = vmul.f32 %v721, %v768
        %v792 = vsub.f32 %v790, %v791
        %v793 = vmul.f32 %v718, %v768
        %v794 = vmul.f32 %v722, %v771
        %v795 = vsub.f32 %v793, %v794
        %v796 = vmul.f32 %v719, %v771
        %v797 = vmul.f32 %v723, %v774
        %v798 = vsub.f32 %v796, %v797
        %v799 = vmul.f32 %v720, %v774
        %v800 = vmul.f32 %v724, %v777
        %v801 = vsub.f32 %v799, %v800
        %v802 = vmul.f32 %v721, %v777
        %v803 = vmul.f32 %v725, %v780
        %v804 = vsub.f32 %v802, %v803
        %v805 = vmul.f32 %v722, %v780
        %v806 = vmul.f32 %v726, %v783
        %v807 = vsub.f32 %v805, %v806
        %808 = vst [vmem:[#allocation2 + $0x48] sm:$0xff] %v786
        %809 = vst [vmem:[#allocation2 + $0x78] sm:$0xff] %v789
        %810 = vst [vmem:[#allocation2 + $0xa8] sm:$0xff] %v792
        %811 = vst [vmem:[#allocation2 + $0xd8] sm:$0xff] %v795
        %812 = vst [vmem:[#allocation2 + $0x108] sm:$0xff] %v798
        %813 = vst [vmem:[#allocation2 + $0x138] sm:$0xff] %v801
        %814 = vst [vmem:[#allocation2 + $0x168] sm:$0xff] %v804
        %815 = vst [vmem:[#allocation2 + $0x198] sm:$0xff] %v807
        %v816 = vld [vmem:[%s174 + $0x20] sm:$0xff]
        %v817 = vsub.f32 0.0, %v816
        %v818 = vmul.f32 %v817, 1.442695
        %v819 = vpow.pop %v818
        %v820 = vadd.f32 %v819, 1.0
        %v821 = vrcp.pop %v820
        %v822 = vmul.f32 %v816, %v821
        %823 = vst [vmem:[#allocation2 + $0x20] sm:$0xff] %v822
        %vm824 = vcmp.ge.f32.partialorder %v816, -2.2
        %v825 = vsel %vm824, 1, 0
        %v826 = vcvt.s32.f32 %v825
        %vm827 = vcmp.ge.f32.partialorder %v816, -1.8
        %v828 = vsel %vm827, 1, 0
        %v829 = vcvt.s32.f32 %v828
        %vm830 = vcmp.ge.f32.partialorder %v816, -1.4
        %v831 = vsel %vm830, 1, 0
        %v832 = vcvt.s32.f32 %v831
        %vm833 = vcmp.ge.f32.partialorder %v816, -1.0
        %v834 = vsel %vm833, 1, 0
        %v835 = vcvt.s32.f32 %v834
        %vm836 = vcmp.ge.f32.partialorder %v816, -0.6
        %v837 = vsel %vm836, 1, 0
        %v838 = vcvt.s32.f32 %v837
        %vm839 = vcmp.ge.f32.partialorder %v816, -0.2
        %v840 = vsel %vm839, 1, 0
        %v841 = vcvt.s32.f32 %v840
        %vm842 = vcmp.ge.f32.partialorder %v816, 0.2
        %v843 = vsel %vm842, 1, 0
        %v844 = vcvt.s32.f32 %v843
        %vm845 = vcmp.ge.f32.partialorder %v816, 0.6
        %v846 = vsel %vm845, 1, 0
        %v847 = vcvt.s32.f32 %v846
        %vm848 = vcmp.ge.f32.partialorder %v816, 1.0
        %v849 = vsel %vm848, 1, 0
        %v850 = vcvt.s32.f32 %v849
        %vm851 = vcmp.ge.f32.partialorder %v816, 1.4
        %v852 = vsel %vm851, 1, 0
        %v853 = vcvt.s32.f32 %v852
        %vm854 = vcmp.ge.f32.partialorder %v816, 1.8
        %v855 = vsel %vm854, 1, 0
        %v856 = vcvt.s32.f32 %v855
        %vm857 = vcmp.ge.f32.partialorder %v816, 2.2
        %v858 = vsel %vm857, 1, 0
        %v859 = vcvt.s32.f32 %v858
        %v860 = vsub.f32 %v826, %v829
        %v861 = vsub.f32 %v829, %v832
        %v862 = vsub.f32 %v832, %v835
        %v863 = vsub.f32 %v835, %v838
        %v864 = vsub.f32 %v838, %v841
        %v865 = vsub.f32 %v841, %v844
        %v866 = vsub.f32 %v844, %v847
        %v867 = vsub.f32 %v847, %v850
        %v868 = vsub.f32 %v850, %v853
        %v869 = vsub.f32 %v853, %v856
        %v870 = vsub.f32 %v856, %v859
        %v871 = vsub.f32 %v816, -2.2
        %v872 = vsub.f32 %v816, -1.8
        %v873 = vsub.f32 %v816, -1.4
        %v874 = vsub.f32 %v816, -1.0
        %v875 = vsub.f32 %v816, -0.6
        %v876 = vsub.f32 %v816, -0.2
        %v877 = vsub.f32 %v816, 0.2
        %v878 = vsub.f32 %v816, 0.6
        %v879 = vsub.f32 %v816, 1.0
        %v880 = vsub.f32 %v816, 1.4
        %v881 = vsub.f32 %v816, 1.8
        %v882 = vsub.f32 %v816, 2.2
        %v883 = vmul.f32 %v871, %v860
        %v884 = vmul.f32 %v873, %v861
        %v885 = vsub.f32 %v883, %v884
        %v886 = vmul.f32 %v872, %v861
        %v887 = vmul.f32 %v874, %v862
        %v888 = vsub.f32 %v886, %v887
        %v889 = vmul.f32 %v873, %v862
        %v890 = vmul.f32 %v875, %v863
        %v891 = vsub.f32 %v889, %v890
        %v892 = vmul.f32 %v874, %v863
        %v893 = vmul.f32 %v876, %v864
        %v894 = vsub.f32 %v892, %v893
        %v895 = vmul.f32 %v875, %v864
        %v896 = vmul.f32 %v877, %v865
        %v897 = vsub.f32 %v895, %v896
        %v898 = vmul.f32 %v876, %v865
        %v899 = vmul.f32 %v878, %v866
        %v900 = vsub.f32 %v898, %v899
        %v901 = vmul.f32 %v877, %v866
        %v902 = vmul.f32 %v879, %v867
        %v903 = vsub.f32 %v901, %v902
        %v904 = vmul.f32 %v878, %v867
        %v905 = vmul.f32 %v880, %v868
        %v906 = vsub.f32 %v904, %v905
        %v907 = vmul.f32 %v879, %v868
        %v908 = vmul.f32 %v881, %v869
        %v909 = vsub.f32 %v907, %v908
        %v910 = vmul.f32 %v880, %v869
        %v911 = vmul.f32 %v882, %v870
        %v912 = vsub.f32 %v910, %v911
        %v913 = vmul.f32 %v871, %v885
        %v914 = vmul.f32 %v874, %v888
        %v915 = vsub.f32 %v913, %v914
        %v916 = vmul.f32 %v872, %v888
        %v917 = vmul.f32 %v875, %v891
        %v918 = vsub.f32 %v916, %v917
        %v919 = vmul.f32 %v873, %v891
        %v920 = vmul.f32 %v876, %v894
        %v921 = vsub.f32 %v919, %v920
        %v922 = vmul.f32 %v874, %v894
        %v923 = vmul.f32 %v877, %v897
        %v924 = vsub.f32 %v922, %v923
        %v925 = vmul.f32 %v875, %v897
        %v926 = vmul.f32 %v878, %v900
        %v927 = vsub.f32 %v925, %v926
        %v928 = vmul.f32 %v876, %v900
        %v929 = vmul.f32 %v879, %v903
        %v930 = vsub.f32 %v928, %v929
        %v931 = vmul.f32 %v877, %v903
        %v932 = vmul.f32 %v880, %v906
        %v933 = vsub.f32 %v931, %v932
        %v934 = vmul.f32 %v878, %v906
        %v935 = vmul.f32 %v881, %v909
        %v936 = vsub.f32 %v934, %v935
        %v937 = vmul.f32 %v879, %v909
        %v938 = vmul.f32 %v882, %v912
        %v939 = vsub.f32 %v937, %v938
        %v940 = vmul.f32 %v871, %v915
        %v941 = vmul.f32 %v875, %v918
        %v942 = vsub.f32 %v940, %v941
        %v943 = vmul.f32 %v872, %v918
        %v944 = vmul.f32 %v876, %v921
        %v945 = vsub.f32 %v943, %v944
        %v946 = vmul.f32 %v873, %v921
        %v947 = vmul.f32 %v877, %v924
        %v948 = vsub.f32 %v946, %v947
        %v949 = vmul.f32 %v874, %v924
        %v950 = vmul.f32 %v878, %v927
        %v951 = vsub.f32 %v949, %v950
        %v952 = vmul.f32 %v875, %v927
        %v953 = vmul.f32 %v879, %v930
        %v954 = vsub.f32 %v952, %v953
        %v955 = vmul.f32 %v876, %v930
        %v956 = vmul.f32 %v880, %v933
        %v957 = vsub.f32 %v955, %v956
        %v958 = vmul.f32 %v877, %v933
        %v959 = vmul.f32 %v881, %v936
        %v960 = vsub.f32 %v958, %v959
        %v961 = vmul.f32 %v878, %v936
        %v962 = vmul.f32 %v882, %v939
        %v963 = vsub.f32 %v961, %v962
        %964 = vst [vmem:[#allocation2 + $0x50] sm:$0xff] %v942
        %965 = vst [vmem:[#allocation2 + $0x80] sm:$0xff] %v945
        %966 = vst [vmem:[#allocation2 + $0xb0] sm:$0xff] %v948
        %967 = vst [vmem:[#allocation2 + $0xe0] sm:$0xff] %v951
        %968 = vst [vmem:[#allocation2 + $0x110] sm:$0xff] %v954
        %969 = vst [vmem:[#allocation2 + $0x140] sm:$0xff] %v957
        %970 = vst [vmem:[#allocation2 + $0x170] sm:$0xff] %v960
        %971 = vst [vmem:[#allocation2 + $0x1a0] sm:$0xff] %v963
        %v972 = vld [vmem:[%s174 + $0x28] sm:$0xff]
        %v973 = vsub.f32 0.0, %v972
        %v974 = vmul.f32 %v973, 1.442695
        %v975 = vpow.pop %v974
        %v976 = vadd.f32 %v975, 1.0
        %v977 = vrcp.pop %v976
        %v978 = vmul.f32 %v972, %v977
        %979 = vst [vmem:[#allocation2 + $0x28] sm:$0xff] %v978
        %vm980 = vcmp.ge.f32.partialorder %v972, -2.2
        %v981 = vsel %vm980, 1, 0
        %v982 = vcvt.s32.f32 %v981
        %vm983 = vcmp.ge.f32.partialorder %v972, -1.8
        %v984 = vsel %vm983, 1, 0
        %v985 = vcvt.s32.f32 %v984
        %vm986 = vcmp.ge.f32.partialorder %v972, -1.4
        %v987 = vsel %vm986, 1, 0
        %v988 = vcvt.s32.f32 %v987
        %vm989 = vcmp.ge.f32.partialorder %v972, -1.0
        %v990 = vsel %vm989, 1, 0
        %v991 = vcvt.s32.f32 %v990
        %vm992 = vcmp.ge.f32.partialorder %v972, -0.6
        %v993 = vsel %vm992, 1, 0
        %v994 = vcvt.s32.f32 %v993
        %vm995 = vcmp.ge.f32.partialorder %v972, -0.2
        %v996 = vsel %vm995, 1, 0
        %v997 = vcvt.s32.f32 %v996
        %vm998 = vcmp.ge.f32.partialorder %v972, 0.2
        %v999 = vsel %vm998, 1, 0
        %v1000 = vcvt.s32.f32 %v999
        %vm1001 = vcmp.ge.f32.partialorder %v972, 0.6
        %v1002 = vsel %vm1001, 1, 0
        %v1003 = vcvt.s32.f32 %v1002
        %vm1004 = vcmp.ge.f32.partialorder %v972, 1.0
        %v1005 = vsel %vm1004, 1, 0
        %v1006 = vcvt.s32.f32 %v1005
        %vm1007 = vcmp.ge.f32.partialorder %v972, 1.4
        %v1008 = vsel %vm1007, 1, 0
        %v1009 = vcvt.s32.f32 %v1008
        %vm1010 = vcmp.ge.f32.partialorder %v972, 1.8
        %v1011 = vsel %vm1010, 1, 0
        %v1012 = vcvt.s32.f32 %v1011
        %vm1013 = vcmp.ge.f32.partialorder %v972, 2.2
        %v1014 = vsel %vm1013, 1, 0
        %v1015 = vcvt.s32.f32 %v1014
        %v1016 = vsub.f32 %v982, %v985
        %v1017 = vsub.f32 %v985, %v988
        %v1018 = vsub.f32 %v988, %v991
        %v1019 = vsub.f32 %v991, %v994
        %v1020 = vsub.f32 %v994, %v997
        %v1021 = vsub.f32 %v997, %v1000
        %v1022 = vsub.f32 %v1000, %v1003
        %v1023 = vsub.f32 %v1003, %v1006
        %v1024 = vsub.f32 %v1006, %v1009
        %v1025 = vsub.f32 %v1009, %v1012
        %v1026 = vsub.f32 %v1012, %v1015
        %v1027 = vsub.f32 %v972, -2.2
        %v1028 = vsub.f32 %v972, -1.8
        %v1029 = vsub.f32 %v972, -1.4
        %v1030 = vsub.f32 %v972, -1.0
        %v1031 = vsub.f32 %v972, -0.6
        %v1032 = vsub.f32 %v972, -0.2
        %v1033 = vsub.f32 %v972, 0.2
        %v1034 = vsub.f32 %v972, 0.6
        %v1035 = vsub.f32 %v972, 1.0
        %v1036 = vsub.f32 %v972, 1.4
        %v1037 = vsub.f32 %v972, 1.8
        %v1038 = vsub.f32 %v972, 2.2
        %v1039 = vmul.f32 %v1027, %v1016
        %v1040 = vmul.f32 %v1029, %v1017
        %v1041 = vsub.f32 %v1039, %v1040
        %v1042 = vmul.f32 %v1028, %v1017
        %v1043 = vmul.f32 %v1030, %v1018
        %v1044 = vsub.f32 %v1042, %v1043
        %v1045 = vmul.f32 %v1029, %v1018
        %v1046 = vmul.f32 %v1031, %v1019
        %v1047 = vsub.f32 %v1045, %v1046
        %v1048 = vmul.f32 %v1030, %v1019
        %v1049 = vmul.f32 %v1032, %v1020
        %v1050 = vsub.f32 %v1048, %v1049
        %v1051 = vmul.f32 %v1031, %v1020
        %v1052 = vmul.f32 %v1033, %v1021
        %v1053 = vsub.f32 %v1051, %v1052
        %v1054 = vmul.f32 %v1032, %v1021
        %v1055 = vmul.f32 %v1034, %v1022
        %v1056 = vsub.f32 %v1054, %v1055
        %v1057 = vmul.f32 %v1033, %v1022
        %v1058 = vmul.f32 %v1035, %v1023
        %v1059 = vsub.f32 %v1057, %v1058
        %v1060 = vmul.f32 %v1034, %v1023
        %v1061 = vmul.f32 %v1036, %v1024
        %v1062 = vsub.f32 %v1060, %v1061
        %v1063 = vmul.f32 %v1035, %v1024
        %v1064 = vmul.f32 %v1037, %v1025
        %v1065 = vsub.f32 %v1063, %v1064
        %v1066 = vmul.f32 %v1036, %v1025
        %v1067 = vmul.f32 %v1038, %v1026
        %v1068 = vsub.f32 %v1066, %v1067
        %v1069 = vmul.f32 %v1027, %v1041
        %v1070 = vmul.f32 %v1030, %v1044
        %v1071 = vsub.f32 %v1069, %v1070
        %v1072 = vmul.f32 %v1028, %v1044
        %v1073 = vmul.f32 %v1031, %v1047
        %v1074 = vsub.f32 %v1072, %v1073
        %v1075 = vmul.f32 %v1029, %v1047
        %v1076 = vmul.f32 %v1032, %v1050
        %v1077 = vsub.f32 %v1075, %v1076
        %v1078 = vmul.f32 %v1030, %v1050
        %v1079 = vmul.f32 %v1033, %v1053
        %v1080 = vsub.f32 %v1078, %v1079
        %v1081 = vmul.f32 %v1031, %v1053
        %v1082 = vmul.f32 %v1034, %v1056
        %v1083 = vsub.f32 %v1081, %v1082
        %v1084 = vmul.f32 %v1032, %v1056
        %v1085 = vmul.f32 %v1035, %v1059
        %v1086 = vsub.f32 %v1084, %v1085
        %v1087 = vmul.f32 %v1033, %v1059
        %v1088 = vmul.f32 %v1036, %v1062
        %v1089 = vsub.f32 %v1087, %v1088
        %v1090 = vmul.f32 %v1034, %v1062
        %v1091 = vmul.f32 %v1037, %v1065
        %v1092 = vsub.f32 %v1090, %v1091
        %v1093 = vmul.f32 %v1035, %v1065
        %v1094 = vmul.f32 %v1038, %v1068
        %v1095 = vsub.f32 %v1093, %v1094
        %v1096 = vmul.f32 %v1027, %v1071
        %v1097 = vmul.f32 %v1031, %v1074
        %v1098 = vsub.f32 %v1096, %v1097
        %v1099 = vmul.f32 %v1028, %v1074
        %v1100 = vmul.f32 %v1032, %v1077
        %v1101 = vsub.f32 %v1099, %v1100
        %v1102 = vmul.f32 %v1029, %v1077
        %v1103 = vmul.f32 %v1033, %v1080
        %v1104 = vsub.f32 %v1102, %v1103
        %v1105 = vmul.f32 %v1030, %v1080
        %v1106 = vmul.f32 %v1034, %v1083
        %v1107 = vsub.f32 %v1105, %v1106
        %v1108 = vmul.f32 %v1031, %v1083
        %v1109 = vmul.f32 %v1035, %v1086
        %v1110 = vsub.f32 %v1108, %v1109
        %v1111 = vmul.f32 %v1032, %v1086
        %v1112 = vmul.f32 %v1036, %v1089
        %v1113 = vsub.f32 %v1111, %v1112
        %v1114 = vmul.f32 %v1033, %v1089
        %v1115 = vmul.f32 %v1037, %v1092
        %v1116 = vsub.f32 %v1114, %v1115
        %v1117 = vmul.f32 %v1034, %v1092
        %v1118 = vmul.f32 %v1038, %v1095
        %v1119 = vsub.f32 %v1117, %v1118
        %1120 = vst [vmem:[#allocation2 + $0x58] sm:$0xff] %v1098
        %1121 = vst [vmem:[#allocation2 + $0x88] sm:$0xff] %v1101
        %1122 = vst [vmem:[#allocation2 + $0xb8] sm:$0xff] %v1104
        %1123 = vst [vmem:[#allocation2 + $0xe8] sm:$0xff] %v1107
        %1124 = vst [vmem:[#allocation2 + $0x118] sm:$0xff] %v1110
        %1125 = vst [vmem:[#allocation2 + $0x148] sm:$0xff] %v1113
        %1126 = vst [vmem:[#allocation2 + $0x178] sm:$0xff] %v1116
        %1127 = vst [vmem:[#allocation2 + $0x1a8] sm:$0xff] %v1119
        %v1128 = vld [vmem:[%s1] sm:$0xff]
        %v1129 = vld [vmem:[%s1 + $0x8] sm:$0xff]
        %v1130 = vld [vmem:[%s1 + $0x10] sm:$0xff]
        %v1131 = vld [vmem:[%s1 + $0x18] sm:$0xff]
        %v1132 = vld [vmem:[%s1 + $0x20] sm:$0x3]
        %v1133 = vld [vmem:[%s1 + $0x28] sm:$0x3]
        %v1134 = vld [vmem:[%s1 + $0x30] sm:$0x3]
        %v1135 = vld [vmem:[%s1 + $0x38] sm:$0x3]
        %v1136 = vld [vmem:[#allocation2] sm:$0xff]
        %v1137 = vld [vmem:[#allocation2 + $0x8] sm:$0xff]
        %v1138 = vld [vmem:[#allocation2 + $0x10] sm:$0xff]
        %v1139 = vld [vmem:[#allocation2 + $0x18] sm:$0xff]
        %v1140 = vld [vmem:[#allocation2 + $0x20] sm:$0xff]
        %v1141 = vld [vmem:[#allocation2 + $0x28] sm:$0xff]
        %v1142 = vld [vmem:[#allocation2 + $0x30] sm:$0xff]
        %v1143 = vld [vmem:[#allocation2 + $0x38] sm:$0xff]
        %v1144 = vld [vmem:[#allocation2 + $0x40] sm:$0xff]
        %v1145 = vld [vmem:[#allocation2 + $0x48] sm:$0xff]
        %v1146 = vld [vmem:[#allocation2 + $0x50] sm:$0xff]
        %v1147 = vld [vmem:[#allocation2 + $0x58] sm:$0xff]
        %v1148 = vld [vmem:[#allocation2 + $0x60] sm:$0xff]
        %v1149 = vld [vmem:[#allocation2 + $0x68] sm:$0xff]
        %v1150 = vld [vmem:[#allocation2 + $0x70] sm:$0xff]
        %v1151 = vld [vmem:[#allocation2 + $0x78] sm:$0xff]
        %v1152 = vld [vmem:[#allocation2 + $0x80] sm:$0xff]
        %v1153 = vld [vmem:[#allocation2 + $0x88] sm:$0xff]
        %v1154 = vld [vmem:[#allocation2 + $0x90] sm:$0xff]
        %v1155 = vld [vmem:[#allocation2 + $0x98] sm:$0xff]
        %v1156 = vld [vmem:[#allocation2 + $0xa0] sm:$0xff]
        %v1157 = vld [vmem:[#allocation2 + $0xa8] sm:$0xff]
        %v1158 = vld [vmem:[#allocation2 + $0xb0] sm:$0xff]
        %v1159 = vld [vmem:[#allocation2 + $0xb8] sm:$0xff]
        %v1160 = vld [vmem:[#allocation2 + $0xc0] sm:$0xff]
        %v1161 = vld [vmem:[#allocation2 + $0xc8] sm:$0xff]
        %v1162 = vld [vmem:[#allocation2 + $0xd0] sm:$0xff]
        %v1163 = vld [vmem:[#allocation2 + $0xd8] sm:$0xff]
        %v1164 = vld [vmem:[#allocation2 + $0xe0] sm:$0xff]
        %v1165 = vld [vmem:[#allocation2 + $0xe8] sm:$0xff]
        %v1166 = vld [vmem:[#allocation2 + $0xf0] sm:$0xff]
        %v1167 = vld [vmem:[#allocation2 + $0xf8] sm:$0xff]
        %v1168 = vld [vmem:[#allocation2 + $0x100] sm:$0xff]
        %v1169 = vld [vmem:[#allocation2 + $0x108] sm:$0xff]
        %v1170 = vld [vmem:[#allocation2 + $0x110] sm:$0xff]
        %v1171 = vld [vmem:[#allocation2 + $0x118] sm:$0xff]
        %v1172 = vld [vmem:[#allocation2 + $0x120] sm:$0xff]
        %v1173 = vld [vmem:[#allocation2 + $0x128] sm:$0xff]
        %v1174 = vld [vmem:[#allocation2 + $0x130] sm:$0xff]
        %v1175 = vld [vmem:[#allocation2 + $0x138] sm:$0xff]
        %v1176 = vld [vmem:[#allocation2 + $0x140] sm:$0xff]
        %v1177 = vld [vmem:[#allocation2 + $0x148] sm:$0xff]
        %v1178 = vld [vmem:[#allocation2 + $0x150] sm:$0xff]
        %v1179 = vld [vmem:[#allocation2 + $0x158] sm:$0xff]
        %v1180 = vld [vmem:[#allocation2 + $0x160] sm:$0xff]
        %v1181 = vld [vmem:[#allocation2 + $0x168] sm:$0xff]
        %v1182 = vld [vmem:[#allocation2 + $0x170] sm:$0xff]
        %v1183 = vld [vmem:[#allocation2 + $0x178] sm:$0xff]
        %v1184 = vld [vmem:[#allocation2 + $0x180] sm:$0xff]
        %v1185 = vld [vmem:[#allocation2 + $0x188] sm:$0xff]
        %v1186 = vld [vmem:[#allocation2 + $0x190] sm:$0xff]
        %v1187 = vld [vmem:[#allocation2 + $0x198] sm:$0xff]
        %v1188 = vld [vmem:[#allocation2 + $0x1a0] sm:$0xff]
        %v1189 = vld [vmem:[#allocation2 + $0x1a8] sm:$0xff]
        %vm1190 = vcmask 392192
        %v1192 = vsel %vm1190, %v1131, 0
        %v1195 = vsel %vm1190, %v1135, 0
        %1197 = vmatprep.subr.mxu0 0.0
        %1198 = vmatpush1.msra.mxu0 %v1136
        %1199 = vmatprep.subr.mxu0 0.0
        %1200 = vmatpush1.msra.mxu0 %v1137
        %1201 = vmatprep.subr.mxu0 0.0
        %1202 = vmatpush1.msra.mxu0 %v1138
        %1203 = vmatprep.subr.mxu0 0.0
        %1204 = vmatpush1.msra.mxu0 %v1139
        %1205 = vmatprep.subr.mxu0 0.0
        %1206 = vmatpush1.msra.mxu0 %v1140
        %1207 = vmatprep.subr.mxu0 0.0
        %1208 = vmatpush1.msra.mxu0 %v1141
        %1209 = vmatprep.subr.mxu0 0.0
        %1210 = vmatpush1.msra.mxu0 %v1142
        %1211 = vmatprep.subr.mxu0 0.0
        %1212 = vmatpush1.msra.mxu0 %v1143
        %1213 = vmatprep.subr.mxu0 0.0
        %1214 = vmatpush1.msra.mxu0 %v1144
        %1215 = vmatprep.subr.mxu0 0.0
        %1216 = vmatpush1.msra.mxu0 %v1145
        %1217 = vmatprep.subr.mxu0 0.0
        %1218 = vmatpush1.msra.mxu0 %v1146
        %1219 = vmatprep.subr.mxu0 0.0
        %1220 = vmatpush1.msra.mxu0 %v1147
        %1221 = vmatprep.subr.mxu0 0.0
        %1222 = vmatpush1.msra.mxu0 %v1148
        %1223 = vmatprep.subr.mxu0 0.0
        %1224 = vmatpush1.msra.mxu0 %v1149
        %1225 = vmatprep.subr.mxu0 0.0
        %1226 = vmatpush1.msra.mxu0 %v1150
        %1227 = vmatprep.subr.mxu0 0.0
        %1228 = vmatpush1.msra.mxu0 %v1151
        %1229 = vmatprep.subr.mxu0 0.0
        %1230 = vmatpush1.msra.mxu0 %v1152
        %1231 = vmatprep.subr.mxu0 0.0
        %1232 = vmatpush1.msra.mxu0 %v1153
        %1233 = vmatprep.subr.mxu0 0.0
        %1234 = vmatpush1.msra.mxu0 %v1154
        %1235 = vmatprep.subr.mxu0 0.0
        %1236 = vmatpush1.msra.mxu0 %v1155
        %1237 = vmatprep.subr.mxu0 0.0
        %1238 = vmatpush1.msra.mxu0 %v1156
        %1239 = vmatprep.subr.mxu0 0.0
        %1240 = vmatpush1.msra.mxu0 %v1157
        %1241 = vmatprep.subr.mxu0 0.0
        %1242 = vmatpush1.msra.mxu0 %v1158
        %1243 = vmatprep.subr.mxu0 0.0
        %1244 = vmatpush1.msra.mxu0 %v1159
        %1245 = vmatprep.subr.mxu0 0.0
        %1246 = vmatpush1.msra.mxu0 %v1160
        %1247 = vmatprep.subr.mxu0 0.0
        %1248 = vmatpush1.msra.mxu0 %v1161
        %1249 = vmatprep.subr.mxu0 0.0
        %1250 = vmatpush1.msra.mxu0 %v1162
        %1251 = vmatprep.subr.mxu0 0.0
        %1252 = vmatpush1.msra.mxu0 %v1163
        %1253 = vmatprep.subr.mxu0 0.0
        %1254 = vmatpush1.msra.mxu0 %v1164
        %1255 = vmatprep.subr.mxu0 0.0
        %1256 = vmatpush1.msra.mxu0 %v1165
        %1257 = vmatprep.subr.mxu0 0.0
        %1258 = vmatpush1.msra.mxu0 %v1166
        %1259 = vmatprep.subr.mxu0 0.0
        %1260 = vmatpush1.msra.mxu0 %v1167
        %1261 = vmatprep.mubr.f32.mxu0 %v1129
        %1262 = vmatmul.mubr.f32.gmra.mrb[0].mxu0 %v1128
        %v1263 = vpop.f32.mrb[0].mxu0
        %v1264 = vadd.f32 0.0, %v1263
        %v1265 = vpop.f32.mrb[0].mxu0
        %1266 = vmatprep.mubr.f32.mxu0 %v1133
        %1267 = vmatmul.mubr.f32.gmra.mrb[0].mxu0 %v1132
        %v1268 = vpop.f32.mrb[0].mxu0
        %v1269 = vadd.f32 0.0, %v1268
        %v1270 = vpop.f32.mrb[0].mxu0
        %1271 = vdwg.mxu0
        %1272 = vmatprep.subr.mxu0 0.0
        %1273 = vmatpush1.msra.mxu0 %v1168
        %1274 = vmatprep.subr.mxu0 0.0
        %1275 = vmatpush1.msra.mxu0 %v1169
        %1276 = vmatprep.subr.mxu0 0.0
        %1277 = vmatpush1.msra.mxu0 %v1170
        %1278 = vmatprep.subr.mxu0 0.0
        %1279 = vmatpush1.msra.mxu0 %v1171
        %1280 = vmatprep.subr.mxu0 0.0
        %1281 = vmatpush1.msra.mxu0 %v1172
        %1282 = vmatprep.subr.mxu0 0.0
        %1283 = vmatpush1.msra.mxu0 %v1173
        %1284 = vmatprep.subr.mxu0 0.0
        %1285 = vmatpush1.msra.mxu0 %v1174
        %1286 = vmatprep.subr.mxu0 0.0
        %1287 = vmatpush1.msra.mxu0 %v1175
        %1288 = vmatprep.subr.mxu0 0.0
        %1289 = vmatpush1.msra.mxu0 %v1176
        %1290 = vmatprep.subr.mxu0 0.0
        %1291 = vmatpush1.msra.mxu0 %v1177
        %1292 = vmatprep.subr.mxu0 0.0
        %1293 = vmatpush1.msra.mxu0 %v1178
        %1294 = vmatprep.subr.mxu0 0.0
        %1295 = vmatpush1.msra.mxu0 %v1179
        %1296 = vmatprep.subr.mxu0 0.0
        %1297 = vmatpush1.msra.mxu0 %v1180
        %1298 = vmatprep.subr.mxu0 0.0
        %1299 = vmatpush1.msra.mxu0 %v1181
        %1300 = vmatprep.subr.mxu0 0.0
        %1301 = vmatpush1.msra.mxu0 %v1182
        %1302 = vmatprep.subr.mxu0 0.0
        %1303 = vmatpush1.msra.mxu0 %v1183
        %1304 = vmatprep.subr.mxu0 0.0
        %1305 = vmatpush1.msra.mxu0 %v1184
        %1306 = vmatprep.subr.mxu0 0.0
        %1307 = vmatpush1.msra.mxu0 %v1185
        %1308 = vmatprep.subr.mxu0 0.0
        %1309 = vmatpush1.msra.mxu0 %v1186
        %1310 = vmatprep.subr.mxu0 0.0
        %1311 = vmatpush1.msra.mxu0 %v1187
        %1312 = vmatprep.subr.mxu0 0.0
        %1313 = vmatpush1.msra.mxu0 %v1188
        %1314 = vmatprep.subr.mxu0 0.0
        %1315 = vmatpush1.msra.mxu0 %v1189
        %1316 = vmatprep.subr.mxu0 0.0
        %1317 = vmatpush1.msra.mxu0 0.0
        %1318 = vmatprep.subr.mxu0 0.0
        %1319 = vmatpush1.msra.mxu0 0.0
        %1320 = vmatprep.subr.mxu0 0.0
        %1321 = vmatpush1.msra.mxu0 0.0
        %1322 = vmatprep.subr.mxu0 0.0
        %1323 = vmatpush1.msra.mxu0 0.0
        %1324 = vmatprep.subr.mxu0 0.0
        %1325 = vmatpush1.msra.mxu0 0.0
        %1326 = vmatprep.subr.mxu0 0.0
        %1327 = vmatpush1.msra.mxu0 0.0
        %1328 = vmatprep.subr.mxu0 0.0
        %1329 = vmatpush1.msra.mxu0 0.0
        %1330 = vmatprep.subr.mxu0 0.0
        %1331 = vmatpush1.msra.mxu0 0.0
        %1332 = vmatprep.subr.mxu0 0.0
        %1333 = vmatpush1.msra.mxu0 0.0
        %1334 = vmatprep.subr.mxu0 0.0
        %1335 = vmatpush1.msra.mxu0 0.0
        %1336 = vmatprep.mubr.f32.mxu0 %v1192
        %1337 = vmatmul.mubr.f32.gmra.mrb[0].mxu0 %v1130
        %v1338 = vpop.f32.mrb[0].mxu0
        %v1339 = vadd.f32 %v1264, %v1338
        %v1340 = vpop.f32.mrb[0].mxu0
        %1341 = vmatprep.mubr.f32.mxu0 %v1195
        %1342 = vmatmul.mubr.f32.gmra.mrb[0].mxu0 %v1134
        %v1343 = vpop.f32.mrb[0].mxu0
        %v1344 = vadd.f32 %v1269, %v1343
        %v1345 = vpop.f32.mrb[0].mxu0
        %1346 = vdwg.mxu0
        %1347 = vst [vmem:[%s191] sm:$0xff] %v1339
        %1348 = vst [vmem:[%s191 + $0x8] sm:$0x3] %v1344
        %s1349 = sand.u32 %s68, 1
        %s1350 = sand.u32 %s68, 1
        %s1351 = smul.addr %s1350, 16
        %s1352 = scalar_lea.vmem [#allocation4], %s1351
        // Predicated region
        $region67: #{kanc_mlp_big_forward.4} parent=61 // pred_check
          %p1353 = pneg %p78
        $region68: #{kanc_mlp_big_forward.4} parent=61 // pred_check_branch
          %1355 = sbr.rel (%p1353) target = $region70
        $region69: #{kanc_mlp_big_forward.4} parent=61 // pred_region
          %s1356 = smul.addr %s13, 8
          %s1357 = scalar_lea.vmem %s2, %s1356
          // Predicated region
          $region71: #{kanc_mlp_big_forward.4} parent=69 // pred_check
            _
          $region72: #{kanc_mlp_big_forward.4} parent=69 // pred_check_branch
            %1359 = sbr.rel (0) target = $region74
          $region73: #{kanc_mlp_big_forward.4} parent=69 // pred_region
            // Predicated region
            $region75: #{kanc_mlp_big_forward.4} parent=73 // pred_check
              _
            $region76: #{kanc_mlp_big_forward.4} parent=73 // pred_check_branch
              %1361 = sbr.rel (0) target = $region78
            $region77: #{kanc_mlp_big_forward.4} parent=73 // pred_region
              // Predicated region
              $region90: #{kanc_mlp_big_forward.4} parent=77 // pred_check
                _
              $region91: #{kanc_mlp_big_forward.4} parent=77 // pred_check_branch
                %1378 = sbr.rel (0) target = $region93
              $region92: #{kanc_mlp_big_forward.4} parent=77 // pred_region
                loop: start=0, step=1, limit=1
                $region94: #{kanc_mlp_big_forward.4} parent=92 // loop_pre_header
                  _
                $region95: #{kanc_mlp_big_forward.4} parent=92 // loop_header
                  %s1380 = sphi 0, %s1384
                  %p1381 = scmp.ge.s32.totalorder %s1380, 1
                  %s1385 = sphi %s1352, %s1352
                  %s1386 = sphi %s1357, %s1357
                $region96: #{kanc_mlp_big_forward.4} parent=92 // loop_header_branch
                  %1383 = sbr.rel (%p1381) target = $region100
                $region97: #{kanc_mlp_big_forward.4} parent=92 // loop_body
                  %v1387 = vld [vmem:[%s1385] sm:$0xff]
                  %1388 = vst [vmem:[%s1386] sm:$0xff] %v1387
                  %v1389 = vld [vmem:[%s1385 + $0x8] sm:$0xff]
                  %1390 = vst [vmem:[%s1386 + $0x10] sm:$0xff] %v1389
                $region98: #{kanc_mlp_big_forward.4} parent=92 // loop_footer
                  %s1384 = sadd.s32 1, %s1380
                $region99: #{kanc_mlp_big_forward.4} parent=92 // loop_footer_branch
                  %1379 = sbr.rel target = $region95
                $region100: #{kanc_mlp_big_forward.4} parent=92 // loop_exit
                  _
              $region93: #{kanc_mlp_big_forward.4} parent=77 // pred_fallthru
                _
              // Predicated region
              $region101: #{kanc_mlp_big_forward.4} parent=77 // pred_check
                _
              $region102: #{kanc_mlp_big_forward.4} parent=77 // pred_check_branch
                %1392 = sbr.rel target = $region104
              $region103: #{kanc_mlp_big_forward.4} parent=77 // pred_region
                _
              $region104: #{kanc_mlp_big_forward.4} parent=77 // pred_fallthru
                _
            $region78: #{kanc_mlp_big_forward.4} parent=73 // pred_fallthru
              _
            // Predicated region
            $region79: #{kanc_mlp_big_forward.4} parent=73 // pred_check
              _
            $region80: #{kanc_mlp_big_forward.4} parent=73 // pred_check_branch
              %1363 = sbr.rel target = $region82
            $region81: #{kanc_mlp_big_forward.4} parent=73 // pred_region
              loop: start=0, step=1, limit=1
              $region83: #{kanc_mlp_big_forward.4} parent=81 // loop_pre_header
                _
              $region84: #{kanc_mlp_big_forward.4} parent=81 // loop_header
                %s1366 = sphi 0, %s1370
                %p1367 = scmp.ge.s32.totalorder %s1366, 1
                %s1371 = sphi %s1352, %s1352
                %s1372 = sphi %s1357, %s1357
              $region85: #{kanc_mlp_big_forward.4} parent=81 // loop_header_branch
                %1369 = sbr.rel (%p1367) target = $region89
              $region86: #{kanc_mlp_big_forward.4} parent=81 // loop_body
                %v1373 = vld [vmem:[%s1371] sm:$0xff]
                %1374 = vst [vmem:[%s1372] sm:$0xff] %v1373
                %v1375 = vld [vmem:[%s1371 + $0x8] sm:$0xff]
                %1376 = vst [vmem:[%s1372 + $0x10] sm:$0xff] %v1375
              $region87: #{kanc_mlp_big_forward.4} parent=81 // loop_footer
                %s1370 = sadd.s32 1, %s1366
              $region88: #{kanc_mlp_big_forward.4} parent=81 // loop_footer_branch
                %1365 = sbr.rel target = $region84
              $region89: #{kanc_mlp_big_forward.4} parent=81 // loop_exit
                _
            $region82: #{kanc_mlp_big_forward.4} parent=73 // pred_fallthru
              _
          $region74: #{kanc_mlp_big_forward.4} parent=69 // pred_fallthru
            _
          %1393 = vnop
        $region70: #{kanc_mlp_big_forward.4} parent=61 // pred_fallthru
          _
      $region62: #{kanc_mlp_big_forward.4} parent=5 // pred_fallthru
        _
      %p1394 = scmp.le.s32.totalorder 2, %s8
      // Predicated region
      $region105: #{kanc_mlp_big_forward.4} parent=5 // pred_check
        %p1395 = pneg %p1394
      $region106: #{kanc_mlp_big_forward.4} parent=5 // pred_check_branch
        %1397 = sbr.rel (%p1395) target = $region108
      $region107: #{kanc_mlp_big_forward.4} parent=5 // pred_region
        %s1398 = ssub.s32 %s8, 2
        // Predicated region
        $region109: #{kanc_mlp_big_forward.4} parent=107 // pred_check
          %p1399 = pneg %p84
        $region110: #{kanc_mlp_big_forward.4} parent=107 // pred_check_branch
          %1401 = sbr.rel (%p1399) target = $region112
        $region111: #{kanc_mlp_big_forward.4} parent=107 // pred_region
          %s1402 = sand.u32 %s69, 1
          %s1403 = sand.u32 %s69, 1
          %s1404 = smul.addr %s1403, 16
          %s1405 = scalar_lea.vmem [#allocation4], %s1404
        $region112: #{kanc_mlp_big_forward.4} parent=107 // pred_fallthru
          _
      $region108: #{kanc_mlp_big_forward.4} parent=5 // pred_fallthru
        _
    $region6: #{kanc_mlp_big_forward.4} parent=1 // loop_footer
      %s12 = sadd.s32 1, %s8
    $region7: #{kanc_mlp_big_forward.4} parent=1 // loop_footer_branch
      %7 = sbr.rel target = $region3
    $region8: #{kanc_mlp_big_forward.4} parent=1 // loop_exit
      _

// kernel: kanc_mlp_big_forward.5
$region0: #{kanc_mlp_big_forward.5}
  #allocation0 [shape = 'u32[]', space=smem, size = 0x4, offset = 0x4, fixed_abs, tag = 'smem constant byte address 0x4 - core index']
  #allocation1 [shape = 'u32[144,128]{1,0:T(1,128)}', space=vmem, size = 0x12000, scoped, tag = 'internal scratch']
  %s0 = inlined_call_operand.vmem [shape: f32[2,250], index: 0, kind: input, shape index: {}]
  %s1 = inlined_call_operand.vmem [shape: f32[250,100], index: 1, kind: input, shape index: {}]
  %s2 = inlined_call_operand.vmem [shape: f32[1,100], index: 2, kind: input, shape index: {}]
  %s3 = inlined_call_operand.vmem [shape: f32[100,10], index: 3, kind: input, shape index: {}]
  %s4 = inlined_call_operand.vmem [shape: f32[1,10], index: 4, kind: input, shape index: {}]
  %s5 = inlined_call_operand.hbm [shape: f32[2,10], index: 5, kind: output, shape index: {}]
  %s6 = sld [smem:[#allocation0]]
  $region30: #{kanc_mlp_big_forward.5} parent=0
    _
  %s8 = ssub.s32 1, %s6
  %s9 = scalar_select 0, %s8, %s6
  $region1: #{kanc_mlp_big_forward.5} parent=0
    #allocation2 [shape = 'u8[1024]{0}', space=vmem, size = 0x400, scoped, tag = 'output window, operand 0, single buffered']
    #allocation3 [shape = 's32[1]{0}', space=sflag, size = 0x4, scoped, tag = 'scoped memory for kanc_mlp_big_forward.5']
    %10 = vsyncpa [#allocation3], 0
    // Predicated region
    $region2: #{kanc_mlp_big_forward.5} parent=1 // pred_check
      _
    $region3: #{kanc_mlp_big_forward.5} parent=1 // pred_check_branch
      %12 = sbr.rel (0) target = $region5
    $region4: #{kanc_mlp_big_forward.5} parent=1 // pred_region
      _
    $region5: #{kanc_mlp_big_forward.5} parent=1 // pred_fallthru
      _
    // Predicated region
    $region6: #{kanc_mlp_big_forward.5} parent=1 // pred_check
      _
    $region7: #{kanc_mlp_big_forward.5} parent=1 // pred_check_branch
      %14 = sbr.rel (0) target = $region9
    $region8: #{kanc_mlp_big_forward.5} parent=1 // pred_region
      _
    $region9: #{kanc_mlp_big_forward.5} parent=1 // pred_fallthru
      _
    // Predicated region
    $region10: #{kanc_mlp_big_forward.5} parent=1 // pred_check
      _
    $region11: #{kanc_mlp_big_forward.5} parent=1 // pred_check_branch
      %16 = sbr.rel (0) target = $region13
    $region12: #{kanc_mlp_big_forward.5} parent=1 // pred_region
      _
    $region13: #{kanc_mlp_big_forward.5} parent=1 // pred_fallthru
      _
    // Predicated region
    $region14: #{kanc_mlp_big_forward.5} parent=1 // pred_check
      _
    $region15: #{kanc_mlp_big_forward.5} parent=1 // pred_check_branch
      %18 = sbr.rel (0) target = $region17
    $region16: #{kanc_mlp_big_forward.5} parent=1 // pred_region
      _
    $region17: #{kanc_mlp_big_forward.5} parent=1 // pred_fallthru
      _
    // Predicated region
    $region18: #{kanc_mlp_big_forward.5} parent=1 // pred_check
      _
    $region19: #{kanc_mlp_big_forward.5} parent=1 // pred_check_branch
      %20 = sbr.rel (0) target = $region21
    $region20: #{kanc_mlp_big_forward.5} parent=1 // pred_region
      _
    $region21: #{kanc_mlp_big_forward.5} parent=1 // pred_fallthru
      _
    %v21 = vld [vmem:[%s0] sm:$0xf]
    %v22 = vld [vmem:[%s1] sm:$0xff]
    %v23 = vld [vmem:[%s1 + $0x8] sm:$0xff]
    %v24 = vld [vmem:[%s1 + $0x10] sm:$0xff]
    %v25 = vld [vmem:[%s1 + $0x18] sm:$0xff]
    %v26 = vld [vmem:[%s1 + $0x20] sm:$0xff]
    %v27 = vld [vmem:[%s1 + $0x28] sm:$0xff]
    %v28 = vld [vmem:[%s1 + $0x30] sm:$0xff]
    %v29 = vld [vmem:[%s1 + $0x38] sm:$0xff]
    %v30 = vld [vmem:[%s1 + $0x40] sm:$0xff]
    %v31 = vld [vmem:[%s1 + $0x48] sm:$0xff]
    %v32 = vld [vmem:[%s1 + $0x50] sm:$0xff]
    %v33 = vld [vmem:[%s1 + $0x58] sm:$0xff]
    %v34 = vld [vmem:[%s1 + $0x60] sm:$0xff]
    %v35 = vld [vmem:[%s1 + $0x68] sm:$0xff]
    %v36 = vld [vmem:[%s1 + $0x70] sm:$0xff]
    %v37 = vld [vmem:[%s1 + $0x78] sm:$0xff]
    %v38 = vld [vmem:[%s1 + $0x80] sm:$0xff]
    %v39 = vld [vmem:[%s1 + $0x88] sm:$0xff]
    %v40 = vld [vmem:[%s1 + $0x90] sm:$0xff]
    %v41 = vld [vmem:[%s1 + $0x98] sm:$0xff]
    %v42 = vld [vmem:[%s1 + $0xa0] sm:$0xff]
    %v43 = vld [vmem:[%s1 + $0xa8] sm:$0xff]
    %v44 = vld [vmem:[%s1 + $0xb0] sm:$0xff]
    %v45 = vld [vmem:[%s1 + $0xb8] sm:$0xff]
    %v46 = vld [vmem:[%s1 + $0xc0] sm:$0xff]
    %v47 = vld [vmem:[%s1 + $0xc8] sm:$0xff]
    %v48 = vld [vmem:[%s1 + $0xd0] sm:$0xff]
    %v49 = vld [vmem:[%s1 + $0xd8] sm:$0xff]
    %v50 = vld [vmem:[%s1 + $0xe0] sm:$0xff]
    %v51 = vld [vmem:[%s1 + $0xe8] sm:$0xff]
    %v52 = vld [vmem:[%s1 + $0xf0] sm:$0xff]
    %v53 = vld [vmem:[%s1 + $0xf8] sm:$0x3]
    %v54 = vld [vmem:[%s2] sm:$0x1]
    %v56 = vlaneseq
    %v57 = vshrl.u32 %v56, 7
    %v58 = vsub.s32 0, %v57
    %v59 = vrot.slane %v54, %v58
    %v63 = vunpack.c.l.s4 1983009808
    %v64 = vunpack.c.0.s8 %v63
    %v65 = vlaneseq
    %v66 = vshrl.u32 %v65, 7
    %v67 = vsub.s32 %v64, %v66
    %v68 = vrot.slane %v21, %v67
    %v69 = vcombine.high %v68, %v68
    %vm71 = vcmask 998400
    %v72 = vsel %vm71, %v69, 0
    %vm74 = vcmask 1041408
    %v76 = vsel %vm74, %v53, 0
    %78 = vmatprep.subr.mxu0 0.0
    %79 = vmatpush1.msra.mxu0 %v22
    %80 = vmatprep.subr.mxu0 0.0
    %81 = vmatpush1.msra.mxu0 %v23
    %82 = vmatprep.subr.mxu0 0.0
    %83 = vmatpush1.msra.mxu0 %v24
    %84 = vmatprep.subr.mxu0 0.0
    %85 = vmatpush1.msra.mxu0 %v25
    %86 = vmatprep.subr.mxu0 0.0
    %87 = vmatpush1.msra.mxu0 %v26
    %88 = vmatprep.subr.mxu0 0.0
    %89 = vmatpush1.msra.mxu0 %v27
    %90 = vmatprep.subr.mxu0 0.0
    %91 = vmatpush1.msra.mxu0 %v28
    %92 = vmatprep.subr.mxu0 0.0
    %93 = vmatpush1.msra.mxu0 %v29
    %94 = vmatprep.subr.mxu0 0.0
    %95 = vmatpush1.msra.mxu0 %v30
    %96 = vmatprep.subr.mxu0 0.0
    %97 = vmatpush1.msra.mxu0 %v31
    %98 = vmatprep.subr.mxu0 0.0
    %99 = vmatpush1.msra.mxu0 %v32
    %100 = vmatprep.subr.mxu0 0.0
    %101 = vmatpush1.msra.mxu0 %v33
    %102 = vmatprep.subr.mxu0 0.0
    %103 = vmatpush1.msra.mxu0 %v34
    %104 = vmatprep.subr.mxu0 0.0
    %105 = vmatpush1.msra.mxu0 %v35
    %106 = vmatprep.subr.mxu0 0.0
    %107 = vmatpush1.msra.mxu0 %v36
    %108 = vmatprep.subr.mxu0 0.0
    %109 = vmatpush1.msra.mxu0 %v37
    %110 = vmatprep.subr.mxu0 0.0
    %111 = vmatpush1.msra.mxu0 %v38
    %112 = vmatprep.subr.mxu0 0.0
    %113 = vmatpush1.msra.mxu0 %v39
    %114 = vmatprep.subr.mxu0 0.0
    %115 = vmatpush1.msra.mxu0 %v40
    %116 = vmatprep.subr.mxu0 0.0
    %117 = vmatpush1.msra.mxu0 %v41
    %118 = vmatprep.subr.mxu0 0.0
    %119 = vmatpush1.msra.mxu0 %v42
    %120 = vmatprep.subr.mxu0 0.0
    %121 = vmatpush1.msra.mxu0 %v43
    %122 = vmatprep.subr.mxu0 0.0
    %123 = vmatpush1.msra.mxu0 %v44
    %124 = vmatprep.subr.mxu0 0.0
    %125 = vmatpush1.msra.mxu0 %v45
    %126 = vmatprep.subr.mxu0 0.0
    %127 = vmatpush1.msra.mxu0 %v46
    %128 = vmatprep.subr.mxu0 0.0
    %129 = vmatpush1.msra.mxu0 %v47
    %130 = vmatprep.subr.mxu0 0.0
    %131 = vmatpush1.msra.mxu0 %v48
    %132 = vmatprep.subr.mxu0 0.0
    %133 = vmatpush1.msra.mxu0 %v49
    %134 = vmatprep.subr.mxu0 0.0
    %135 = vmatpush1.msra.mxu0 %v50
    %136 = vmatprep.subr.mxu0 0.0
    %137 = vmatpush1.msra.mxu0 %v51
    %138 = vmatprep.subr.mxu0 0.0
    %139 = vmatpush1.msra.mxu0 %v52
    %140 = vmatprep.subr.mxu0 0.0
    %141 = vmatpush1.msra.mxu0 %v76
    %142 = vmatprep.mubr.f32.mxu0 %v72
    %143 = vmatmul.mubr.f32.gmra.mrb[0].mxu0 %v68
    %v144 = vpop.f32.mrb[0].mxu0
    %v145 = vadd.f32 %v59, %v144
    %v146 = vpop.f32.mrb[0].mxu0
    %147 = vdwg.mxu0
    %v148 = vld [vmem:[%s3] sm:$0xff]
    %v149 = vld [vmem:[%s3 + $0x8] sm:$0xff]
    %v150 = vld [vmem:[%s3 + $0x10] sm:$0xff]
    %v151 = vld [vmem:[%s3 + $0x18] sm:$0xff]
    %v152 = vld [vmem:[%s3 + $0x20] sm:$0xff]
    %v153 = vld [vmem:[%s3 + $0x28] sm:$0xff]
    %v154 = vld [vmem:[%s3 + $0x30] sm:$0xff]
    %v155 = vld [vmem:[%s3 + $0x38] sm:$0xff]
    %v156 = vld [vmem:[%s3 + $0x40] sm:$0xff]
    %v157 = vld [vmem:[%s3 + $0x48] sm:$0xff]
    %v158 = vld [vmem:[%s3 + $0x50] sm:$0xff]
    %v159 = vld [vmem:[%s3 + $0x58] sm:$0xff]
    %v160 = vld [vmem:[%s3 + $0x60] sm:$0xf]
    %v161 = vld [vmem:[%s4] sm:$0x1]
    %v163 = vlaneseq
    %v164 = vshrl.u32 %v163, 7
    %v165 = vsub.s32 0, %v164
    %v166 = vrot.slane %v161, %v165
    %vm168 = vcmask 818176
    %v170 = vsel %vm168, %v145, 0
    %vm172 = vcmask 1043456
    %v174 = vsel %vm172, %v160, 0
    %176 = vmatprep.subr.mxu0 0.0
    %177 = vmatpush1.msra.mxu0 %v148
    %178 = vmatprep.subr.mxu0 0.0
    %179 = vmatpush1.msra.mxu0 %v149
    %180 = vmatprep.subr.mxu0 0.0
    %181 = vmatpush1.msra.mxu0 %v150
    %182 = vmatprep.subr.mxu0 0.0
    %183 = vmatpush1.msra.mxu0 %v151
    %184 = vmatprep.subr.mxu0 0.0
    %185 = vmatpush1.msra.mxu0 %v152
    %186 = vmatprep.subr.mxu0 0.0
    %187 = vmatpush1.msra.mxu0 %v153
    %188 = vmatprep.subr.mxu0 0.0
    %189 = vmatpush1.msra.mxu0 %v154
    %190 = vmatprep.subr.mxu0 0.0
    %191 = vmatpush1.msra.mxu0 %v155
    %192 = vmatprep.subr.mxu0 0.0
    %193 = vmatpush1.msra.mxu0 %v156
    %194 = vmatprep.subr.mxu0 0.0
    %195 = vmatpush1.msra.mxu0 %v157
    %196 = vmatprep.subr.mxu0 0.0
    %197 = vmatpush1.msra.mxu0 %v158
    %198 = vmatprep.subr.mxu0 0.0
    %199 = vmatpush1.msra.mxu0 %v159
    %200 = vmatprep.subr.mxu0 0.0
    %201 = vmatpush1.msra.mxu0 %v174
    %202 = vmatprep.subr.mxu0 0.0
    %203 = vmatpush1.msra.mxu0 0.0
    %204 = vmatprep.subr.mxu0 0.0
    %205 = vmatpush1.msra.mxu0 0.0
    %206 = vmatprep.subr.mxu0 0.0
    %207 = vmatpush1.msra.mxu0 0.0
    %208 = vmatprep.subr.mxu0 0.0
    %209 = vmatpush1.msra.mxu0 0.0
    %210 = vmatprep.subr.mxu0 0.0
    %211 = vmatpush1.msra.mxu0 0.0
    %212 = vmatprep.subr.mxu0 0.0
    %213 = vmatpush1.msra.mxu0 0.0
    %214 = vmatprep.subr.mxu0 0.0
    %215 = vmatpush1.msra.mxu0 0.0
    %216 = vmatprep.subr.mxu0 0.0
    %217 = vmatpush1.msra.mxu0 0.0
    %218 = vmatprep.subr.mxu0 0.0
    %219 = vmatpush1.msra.mxu0 0.0
    %220 = vmatprep.subr.mxu0 0.0
    %221 = vmatpush1.msra.mxu0 0.0
    %222 = vmatprep.subr.mxu0 0.0
    %223 = vmatpush1.msra.mxu0 0.0
    %224 = vmatprep.subr.mxu0 0.0
    %225 = vmatpush1.msra.mxu0 0.0
    %226 = vmatprep.subr.mxu0 0.0
    %227 = vmatpush1.msra.mxu0 0.0
    %228 = vmatprep.subr.mxu0 0.0
    %229 = vmatpush1.msra.mxu0 0.0
    %230 = vmatprep.subr.mxu0 0.0
    %231 = vmatpush1.msra.mxu0 0.0
    %232 = vmatprep.subr.mxu0 0.0
    %233 = vmatpush1.msra.mxu0 0.0
    %234 = vmatprep.subr.mxu0 0.0
    %235 = vmatpush1.msra.mxu0 0.0
    %236 = vmatprep.subr.mxu0 0.0
    %237 = vmatpush1.msra.mxu0 0.0
    %238 = vmatprep.subr.mxu0 0.0
    %239 = vmatpush1.msra.mxu0 0.0
    %240 = vmatprep.mubr.f32.mxu0 0.0
    %241 = vmatmul.mubr.f32.gmra.mrb[0].mxu0 %v170
    %v242 = vpop.f32.mrb[0].mxu0
    %v243 = vadd.f32 %v166, %v242
    %v244 = vpop.f32.mrb[0].mxu0
    %245 = vdwg.mxu0
    %vm246 = vcmask 74752
    %v247 = vsel %vm246, %v243, -inf
    %248 = vmax.xlane.f32.xlu0 %v247
    %v249 = vpop.xlane.xlu0 %248
    %v250 = vsub.f32 %v243, %v249
    %v251 = vmul.f32 %v250, 1.442695
    %v252 = vpow.pop %v251
    %v253 = vsel %vm246, %v252, 0.0
    %254 = vadd.xlane.f32.xlu0 %v253
    %v255 = vpop.xlane.xlu0 %254
    %v256 = vlog2.pop %v255
    %v257 = vmul.f32 %v256, 0.6931472
    %v258 = vsub.f32 %v250, %v257
    %259 = vst.msk [vmem:[#allocation2] sm:$0x3] %vm246, %v258
    // Predicated region
    $region22: #{kanc_mlp_big_forward.5} parent=1 // pred_check
      _
    $region23: #{kanc_mlp_big_forward.5} parent=1 // pred_check_branch
      %261 = sbr.rel (0) target = $region25
    $region24: #{kanc_mlp_big_forward.5} parent=1 // pred_region
      %s263 = ssub.s32 32, 32
      %264 = vsyncadd [#allocation3], %s263
      %s266 = sshll.u32 [#allocation2], 4
      %s267 = int_to_ptr.vmem [resolvable:$true] %s266
      %269 = dma.vmem_to_hbm [thread:$0]  %s267, 32, %s5, [#allocation3]
    $region25: #{kanc_mlp_big_forward.5} parent=1 // pred_fallthru
      _
    // Predicated region
    $region26: #{kanc_mlp_big_forward.5} parent=1 // pred_check
      _
    $region27: #{kanc_mlp_big_forward.5} parent=1 // pred_check_branch
      %271 = sbr.rel (0) target = $region29
    $region28: #{kanc_mlp_big_forward.5} parent=1 // pred_region
      %272 = dma.done [#allocation3], 32
    $region29: #{kanc_mlp_big_forward.5} parent=1 // pred_fallthru
      _
    %273 = vsyncpa [#allocation3], 1

</llo_original>
